<compile_context>
chip_gen: v7x
topology: tpu7x:2x2x1
jax: 0.10.0
libtpu: 0.0.40
codegen_flags: <defaults>
</compile_context>

<pallas_src>
import functools

import jax
import jax.numpy as jnp
from jax.experimental import pallas as pl
from jax.experimental.pallas import tpu as pltpu


def _round_up(v, m):
    return (v + m - 1) // m * m


# ----------------------------------------------------------------------------
# In-kernel helpers
# ----------------------------------------------------------------------------

def _embed_fm(v, n_freqs):
    """Feature-major positional embedding, reordered to [x | sins | coses].

    v: (3, TN) f32 -> (3 + 6*n_freqs, TN) f32.  Two transcendental call sites.
    Matches Embedding(logscale=True) up to a column permutation that is applied
    to the consuming weight matrices once at pack time.
    """
    scaled = jnp.concatenate([(2.0 ** k) * v for k in range(n_freqs)], axis=0)
    return jnp.concatenate([v, jnp.sin(scaled), jnp.cos(scaled)], axis=0)


def _dot(a, b):
    return jnp.dot(a, b, preferred_element_type=jnp.float32)


def _nerf_kernel(inp_ref,
                 w_fc, b_fc, w01x, b0, b1, w1h,
                 w_sig, b_sig, w_cl_d, w_cl_h, b_cl, w_co, b_co,
                 out_ref, *, x_freq, d_freq, w_hidden):
    """One tile of TN points.  Activations are (features, TN); TN lane-dense.

    inp_ref rows: [x(3) | d(3) | f_c(28)].  out_ref: (4, TN); row 0 = sigma,
    rows 1..3 = sigmoid(color).
    """
    md = w_fc.dtype                         # matmul operand dtype (bf16 or f32)

    inp = inp_ref[...]                      # (34, TN) f32
    xT = inp[0:3, :]
    dT = inp[3:6, :]
    fcT = inp[6:, :]                        # (28, TN) = [f | c]

    # Embeddings in f32 (sin(512*x) needs f32 phase precision).
    x_emb = _embed_fm(xT, x_freq)           # (63, TN)
    d_emb = _embed_fm(dT, d_freq)           # (27, TN)

    # f_c_encoder (Linear, no activation), unsplit K=28 weight.
    fc = _dot(w_fc[...], fcT.astype(md)) + b_fc[...]                     # (W, TN)

    # Layers 0/1: single stacked matmul over the shared x_emb stream.
    z = _dot(w01x[...], x_emb.astype(md))                                # (2W, TN)
    h = jnp.maximum(z[:w_hidden, :] + b0[...], 0.0) * fc                 # layer 0
    h = jnp.maximum(z[w_hidden:, :] + _dot(w1h[...], h.astype(md)) + b1[...],
                    0.0) * fc                                            # layer 1 (skip)

    # sigma head (M=1): VPU broadcast-multiply + sublane sum instead of an MXU pass.
    sigma = jnp.sum(h * w_sig[...], axis=0, keepdims=True) + b_sig[...]  # (1, TN)

    # color branch: extra f_c gate, cat([d_embed, h]) folded into split weights.
    h2 = h * fc
    c_emb = (_dot(w_cl_d[...], d_emb.astype(md))
             + _dot(w_cl_h[...], h2.astype(md)) + b_cl[...])             # (W, TN)

    # color head (M=3) also off the MXU.
    w_co_v = w_co[...]                      # (W, 3) f32
    color = jnp.concatenate(
        [jnp.sum(c_emb * w_co_v[:, i:i + 1], axis=0, keepdims=True) for i in range(3)],
        axis=0) + b_co[...]                                              # (3, TN)
    color = jax.nn.sigmoid(color)

    out_ref[0:1, :] = sigma.astype(out_ref.dtype)
    out_ref[1:4, :] = color.astype(out_ref.dtype)


# ----------------------------------------------------------------------------
# Wrapper
# ----------------------------------------------------------------------------

def nerf_forward(x, d, f, c, packed, *, x_freq=10, d_freq=4, w_hidden=64,
                 block_n=2048):
    """x:(N,3) d:(N,3) f:(N,f_ch) c:(N,3*num_image) -> (sigma (N,), color (N,3))."""
    n = x.shape[0]
    # Tile size: as large as block_n allows, but keep >= 2 grid steps when n
    # permits (v7x megacore) and lane-align to 128.
    bn = _round_up(max(1, min(block_n, pl.cdiv(n, 2))), 128)
    n_pad = _round_up(n, bn)

    # Single input stream: concat once, pad once, transpose once.
    # TODO(synk): for large N, fuse this prep into the upstream producer of
    # x/d/f/c (or DMA row-major blocks and transpose on the XLU in-kernel) to
    # avoid the extra HBM round trip.
    inp = jnp.concatenate([x, d, f, c], axis=-1).astype(jnp.float32)     # (n, 34)
    if n_pad != n:
        inp = jnp.pad(inp, ((0, n_pad - n), (0, 0)))
    inp_t = jnp.transpose(inp)                                           # (34, n_pad)

    feat = inp_t.shape[0]
    in_specs = [pl.BlockSpec((feat, bn), lambda i: (0, i))]
    # Weights are tiny; constant index maps keep them resident across the grid.
    in_specs += [pl.BlockSpec(w.shape, lambda i: (0, 0)) for w in packed]

    kernel = functools.partial(_nerf_kernel, x_freq=x_freq, d_freq=d_freq,
                               w_hidden=w_hidden)

    out = pl.pallas_call(
        kernel,
        out_shape=jax.ShapeDtypeStruct((4, n_pad), jnp.float32),
        grid=(n_pad // bn,),
        in_specs=in_specs,
        out_specs=pl.BlockSpec((4, bn), lambda i: (0, i)),
        compiler_params=pltpu.CompilerParams(
            dimension_semantics=("parallel",),
            # v5e's default scoped-VMEM limit is 16 MiB; 32 MiB covers block_n up
            # to ~4096 in f32 on every generation (raise when sweeping higher).
            vmem_limit_bytes=32 * 1024 * 1024,
        ),
    )(inp_t, *packed)

    sigma = out[0, :n]
    color = jnp.transpose(out[1:4, :n])
    return sigma, color


# ----------------------------------------------------------------------------
# Parameters (PyTorch nn.Linear layout) and packing for the kernel
# ----------------------------------------------------------------------------

def init_params(key, *, W=64, x_freq=10, d_freq=4, f_channel=16, num_image=4):
    x_ch = 3 + 6 * x_freq
    d_ch = 3 + 6 * d_freq
    f_c_ch = f_channel + 3 * num_image
    keys = iter(jax.random.split(key, 12))

    def linear(cin, cout):
        bound = float(cin) ** -0.5
        w = jax.random.uniform(next(keys), (cout, cin), jnp.float32, -bound, bound)
        b = jax.random.uniform(next(keys), (cout,), jnp.float32, -bound, bound)
        return w, b

    w_fc, b_fc = linear(f_c_ch, W)          # f_c_encoder
    w0, b0 = linear(x_ch, W)                # layers[0]
    w1, b1 = linear(x_ch + W, W)            # layers[1] (skip)
    w_sigma, b_sigma = linear(W, 1)         # sigma_out
    w_cl, b_cl = linear(d_ch + W, W)        # color_layer
    w_co, b_co = linear(W, 3)               # color_out
    return dict(w_fc=w_fc, b_fc=b_fc, w0=w0, b0=b0, w1=w1, b1=b1,
                w_sigma=w_sigma, b_sigma=b_sigma, w_cl=w_cl, b_cl=b_cl,
                w_co=w_co, b_co=b_co)


def pack_params(params, *, x_freq=10, d_freq=4, matmul_dtype=jnp.bfloat16):
    """PyTorch-layout params -> kernel layout (splits, stacking, column perm, cast)."""
    x_ch = 3 + 6 * x_freq
    d_ch = 3 + 6 * d_freq
    md = matmul_dtype
    f32 = jnp.float32

    def emb_perm(nf):
        # original columns: [x, sin(f0), cos(f0), sin(f1), cos(f1), ...]
        # new columns     : [x, sin(f0..f_{nf-1}), cos(f0..f_{nf-1})]
        sin_cols = [3 + 6 * k + j for k in range(nf) for j in range(3)]
        cos_cols = [3 + 6 * k + 3 + j for k in range(nf) for j in range(3)]
        return jnp.asarray([0, 1, 2] + sin_cols + cos_cols, dtype=jnp.int32)

    xp, dp = emb_perm(x_freq), emb_perm(d_freq)

    w0 = params['w0'][:, xp]
    w1x = params['w1'][:, :x_ch][:, xp]
    w1h = params['w1'][:, x_ch:]
    w_cl_d = params['w_cl'][:, :d_ch][:, dp]
    w_cl_h = params['w_cl'][:, d_ch:]

    col = lambda b: jnp.reshape(b, (-1, 1)).astype(f32)

    return (
        params['w_fc'].astype(md), col(params['b_fc']),
        jnp.concatenate([w0, w1x], axis=0).astype(md),      # stacked (2W, x_ch)
        col(params['b0']), col(params['b1']),
        w1h.astype(md),
        jnp.reshape(params['w_sigma'], (-1, 1)).astype(f32),  # (W, 1) — VPU head
        col(params['b_sigma']),
        w_cl_d.astype(md), w_cl_h.astype(md), col(params['b_cl']),
        jnp.transpose(params['w_co']).astype(f32),             # (W, 3) — VPU head
        col(params['b_co']),
    )


# ----------------------------------------------------------------------------
# Pure-JAX reference (mirrors the PyTorch forward exactly, row-major)
# ----------------------------------------------------------------------------

def nerf_reference(x, d, f, c, params, *, x_freq=10, d_freq=4):
    def embed(v, nf):
        out = [v]
        for k in range(nf):
            s = 2.0 ** k
            out += [jnp.sin(s * v), jnp.cos(s * v)]
        return jnp.concatenate(out, axis=-1)

    x_emb = embed(x, x_freq)
    d_emb = embed(d, d_freq)
    fc = jnp.concatenate([f, c], -1) @ params['w_fc'].T + params['b_fc']
    h = jax.nn.relu(x_emb @ params['w0'].T + params['b0']) * fc
    h = jax.nn.relu(jnp.concatenate([x_emb, h], -1) @ params['w1'].T + params['b1']) * fc
    sigma = (h @ params['w_sigma'].T + params['b_sigma'])[:, 0]
    h2 = h * fc
    c_emb = jnp.concatenate([d_emb, h2], -1) @ params['w_cl'].T + params['b_cl']
    color = jax.nn.sigmoid(c_emb @ params['w_co'].T + params['b_co'])
    return sigma, color


# ----------------------------------------------------------------------------
# Demo
# ----------------------------------------------------------------------------

if __name__ == "__main__":
    # Module defaults: D=2, W=64, x_freq=10, d_freq=4, f_channel=16, num_image=4, skips=[1]
    N = 1024
    X_FREQ, D_FREQ, F_CH, NUM_IMG, HID_W = 10, 4, 16, 4, 64

    key = jax.random.PRNGKey(0)
    kx, kd, kf, kc, kp = jax.random.split(key, 5)
    x = jax.random.uniform(kx, (N, 3), jnp.float32, -1.0, 1.0)
    d = jax.random.normal(kd, (N, 3), jnp.float32)
    d = d / jnp.linalg.norm(d, axis=-1, keepdims=True)
    f = jax.random.normal(kf, (N, F_CH), jnp.float32)
    c = jax.random.normal(kc, (N, 3 * NUM_IMG), jnp.float32)
    params = init_params(kp, W=HID_W, x_freq=X_FREQ, d_freq=D_FREQ,
                         f_channel=F_CH, num_image=NUM_IMG)

    # Reference at full f32 matmul precision (avoid XLA's default bf16 passes).
    with jax.default_matmul_precision("highest"):
        ref_sigma, ref_color = nerf_reference(x, d, f, c, params,
                                              x_freq=X_FREQ, d_freq=D_FREQ)

    fwd = jax.jit(functools.partial(nerf_forward, x_freq=X_FREQ, d_freq=D_FREQ,
                                    w_hidden=HID_W, block_n=2048))

    # 1) f32 matmul path: tight check — catches any layout / split / permutation bug.
    packed_f32 = pack_params(params, x_freq=X_FREQ, d_freq=D_FREQ,
                             matmul_dtype=jnp.float32)
    sigma32, color32 = fwd(x, d, f, c, packed_f32)
    jax.block_until_ready((sigma32, color32))
    assert sigma32.shape == (N,), sigma32.shape
    assert color32.shape == (N, 3), color32.shape
    assert bool(jnp.all(jnp.isfinite(sigma32))) and bool(jnp.all(jnp.isfinite(color32)))
    assert bool(jnp.allclose(sigma32, ref_sigma, rtol=1e-3, atol=1e-3))
    assert bool(jnp.allclose(color32, ref_color, rtol=1e-3, atol=1e-3))

    # 2) bf16 matmul-operand path (the fast path on v6e/v7x): loose numeric check.
    packed_bf16 = pack_params(params, x_freq=X_FREQ, d_freq=D_FREQ,
                              matmul_dtype=jnp.bfloat16)
    sigma16, color16 = fwd(x, d, f, c, packed_bf16)
    jax.block_until_ready((sigma16, color16))
    assert bool(jnp.all(jnp.isfinite(sigma16))) and bool(jnp.all(jnp.isfinite(color16)))
    assert bool(jnp.allclose(sigma16, ref_sigma, rtol=1e-1, atol=1e-1))
    assert bool(jnp.allclose(color16, ref_color, rtol=1e-1, atol=1e-1))

    print("KERNEL_OK")
</pallas_src>

<mosaic_0001>
module attributes {stable_mosaic.version = 11 : i64} {
  func.func @_nerf_kernel(%arg0: i32, %arg1: memref<34x512xf32, #tpu.memory_space<vmem>>, %arg2: memref<64x28xf32, #tpu.memory_space<vmem>>, %arg3: memref<64x1xf32, #tpu.memory_space<vmem>>, %arg4: memref<128x63xf32, #tpu.memory_space<vmem>>, %arg5: memref<64x1xf32, #tpu.memory_space<vmem>>, %arg6: memref<64x1xf32, #tpu.memory_space<vmem>>, %arg7: memref<64x64xf32, #tpu.memory_space<vmem>>, %arg8: memref<64x1xf32, #tpu.memory_space<vmem>>, %arg9: memref<1x1xf32, #tpu.memory_space<vmem>>, %arg10: memref<64x27xf32, #tpu.memory_space<vmem>>, %arg11: memref<64x64xf32, #tpu.memory_space<vmem>>, %arg12: memref<64x1xf32, #tpu.memory_space<vmem>>, %arg13: memref<64x3xf32, #tpu.memory_space<vmem>>, %arg14: memref<3x1xf32, #tpu.memory_space<vmem>>, %arg15: memref<4x512xf32, #tpu.memory_space<vmem>>) attributes {dimension_semantics = [#tpu.dimension_semantics<parallel>], iteration_bounds = array<i64: 2>, scalar_prefetch = 0 : i64, scratch_operands = 0 : i64, tpu.core_type = #tpu.core_type<tc>, window_params = [{transform_indices = @transform_0, window_bounds = array<i64: 34, 512>}, {pipeline_mode = #tpu.pipeline_mode<synchronous>, transform_indices = @transform_1, window_bounds = array<i64: 64, 28>}, {pipeline_mode = #tpu.pipeline_mode<synchronous>, transform_indices = @transform_2, window_bounds = array<i64: 64, 1>}, {pipeline_mode = #tpu.pipeline_mode<synchronous>, transform_indices = @transform_3, window_bounds = array<i64: 128, 63>}, {pipeline_mode = #tpu.pipeline_mode<synchronous>, transform_indices = @transform_4, window_bounds = array<i64: 64, 1>}, {pipeline_mode = #tpu.pipeline_mode<synchronous>, transform_indices = @transform_5, window_bounds = array<i64: 64, 1>}, {pipeline_mode = #tpu.pipeline_mode<synchronous>, transform_indices = @transform_6, window_bounds = array<i64: 64, 64>}, {pipeline_mode = #tpu.pipeline_mode<synchronous>, transform_indices = @transform_7, window_bounds = array<i64: 64, 1>}, {pipeline_mode = #tpu.pipeline_mode<synchronous>, transform_indices = @transform_8, window_bounds = array<i64: 1, 1>}, {pipeline_mode = #tpu.pipeline_mode<synchronous>, transform_indices = @transform_9, window_bounds = array<i64: 64, 27>}, {pipeline_mode = #tpu.pipeline_mode<synchronous>, transform_indices = @transform_10, window_bounds = array<i64: 64, 64>}, {pipeline_mode = #tpu.pipeline_mode<synchronous>, transform_indices = @transform_11, window_bounds = array<i64: 64, 1>}, {pipeline_mode = #tpu.pipeline_mode<synchronous>, transform_indices = @transform_12, window_bounds = array<i64: 64, 3>}, {pipeline_mode = #tpu.pipeline_mode<synchronous>, transform_indices = @transform_13, window_bounds = array<i64: 3, 1>}, {transform_indices = @transform_14, window_bounds = array<i64: 4, 512>}]} {
    %c0 = arith.constant 0 : index
    %c0_0 = arith.constant 0 : index
    %0 = vector.load %arg1[%c0, %c0_0] : memref<34x512xf32, #tpu.memory_space<vmem>>, vector<34x512xf32>
    %1 = vector.extract_strided_slice %0 {offsets = [0, 0], sizes = [3, 512], strides = [1, 1]} : vector<34x512xf32> to vector<3x512xf32>
    %2 = vector.extract_strided_slice %0 {offsets = [3, 0], sizes = [3, 512], strides = [1, 1]} : vector<34x512xf32> to vector<3x512xf32>
    %3 = vector.extract_strided_slice %0 {offsets = [6, 0], sizes = [28, 512], strides = [1, 1]} : vector<34x512xf32> to vector<28x512xf32>
    %cst = arith.constant 1.000000e+00 : f32
    %4 = vector.broadcast %cst : f32 to vector<3x512xf32>
    %5 = arith.mulf %4, %1 : vector<3x512xf32>
    %cst_1 = arith.constant 2.000000e+00 : f32
    %6 = vector.broadcast %cst_1 : f32 to vector<3x512xf32>
    %7 = arith.mulf %6, %1 : vector<3x512xf32>
    %cst_2 = arith.constant 4.000000e+00 : f32
    %8 = vector.broadcast %cst_2 : f32 to vector<3x512xf32>
    %9 = arith.mulf %8, %1 : vector<3x512xf32>
    %cst_3 = arith.constant 8.000000e+00 : f32
    %10 = vector.broadcast %cst_3 : f32 to vector<3x512xf32>
    %11 = arith.mulf %10, %1 : vector<3x512xf32>
    %cst_4 = arith.constant 1.600000e+01 : f32
    %12 = vector.broadcast %cst_4 : f32 to vector<3x512xf32>
    %13 = arith.mulf %12, %1 : vector<3x512xf32>
    %cst_5 = arith.constant 3.200000e+01 : f32
    %14 = vector.broadcast %cst_5 : f32 to vector<3x512xf32>
    %15 = arith.mulf %14, %1 : vector<3x512xf32>
    %cst_6 = arith.constant 6.400000e+01 : f32
    %16 = vector.broadcast %cst_6 : f32 to vector<3x512xf32>
    %17 = arith.mulf %16, %1 : vector<3x512xf32>
    %cst_7 = arith.constant 1.280000e+02 : f32
    %18 = vector.broadcast %cst_7 : f32 to vector<3x512xf32>
    %19 = arith.mulf %18, %1 : vector<3x512xf32>
    %cst_8 = arith.constant 2.560000e+02 : f32
    %20 = vector.broadcast %cst_8 : f32 to vector<3x512xf32>
    %21 = arith.mulf %20, %1 : vector<3x512xf32>
    %cst_9 = arith.constant 5.120000e+02 : f32
    %22 = vector.broadcast %cst_9 : f32 to vector<3x512xf32>
    %23 = arith.mulf %22, %1 : vector<3x512xf32>
    %24 = tpu.concatenate %5, %7, %9, %11, %13, %15, %17, %19, %21, %23 in 0 : vector<3x512xf32>, vector<3x512xf32>, vector<3x512xf32>, vector<3x512xf32>, vector<3x512xf32>, vector<3x512xf32>, vector<3x512xf32>, vector<3x512xf32>, vector<3x512xf32>, vector<3x512xf32> -> vector<30x512xf32>
    %25 = math.sin %24 : vector<30x512xf32>
    %26 = math.cos %24 : vector<30x512xf32>
    %27 = tpu.concatenate %1, %25, %26 in 0 : vector<3x512xf32>, vector<30x512xf32>, vector<30x512xf32> -> vector<63x512xf32>
    %cst_10 = arith.constant 1.000000e+00 : f32
    %28 = vector.broadcast %cst_10 : f32 to vector<3x512xf32>
    %29 = arith.mulf %28, %2 : vector<3x512xf32>
    %cst_11 = arith.constant 2.000000e+00 : f32
    %30 = vector.broadcast %cst_11 : f32 to vector<3x512xf32>
    %31 = arith.mulf %30, %2 : vector<3x512xf32>
    %cst_12 = arith.constant 4.000000e+00 : f32
    %32 = vector.broadcast %cst_12 : f32 to vector<3x512xf32>
    %33 = arith.mulf %32, %2 : vector<3x512xf32>
    %cst_13 = arith.constant 8.000000e+00 : f32
    %34 = vector.broadcast %cst_13 : f32 to vector<3x512xf32>
    %35 = arith.mulf %34, %2 : vector<3x512xf32>
    %36 = tpu.concatenate %29, %31, %33, %35 in 0 : vector<3x512xf32>, vector<3x512xf32>, vector<3x512xf32>, vector<3x512xf32> -> vector<12x512xf32>
    %37 = math.sin %36 : vector<12x512xf32>
    %38 = math.cos %36 : vector<12x512xf32>
    %39 = tpu.concatenate %2, %37, %38 in 0 : vector<3x512xf32>, vector<12x512xf32>, vector<12x512xf32> -> vector<27x512xf32>
    %c0_14 = arith.constant 0 : index
    %c0_15 = arith.constant 0 : index
    %40 = vector.load %arg2[%c0_14, %c0_15] : memref<64x28xf32, #tpu.memory_space<vmem>>, vector<64x28xf32>
    %cst_16 = arith.constant dense<0.000000e+00> : vector<64x512xf32>
    %41 = tpu.matmul %40, %3, %cst_16 {dimension_numbers = #tpu.dot_dimension_numbers<[1], [0], [0], [1], [0, 0, 1, 1], [], []>} : vector<64x28xf32>, vector<28x512xf32>, vector<64x512xf32> -> vector<64x512xf32>
    %c0_17 = arith.constant 0 : index
    %c0_18 = arith.constant 0 : index
    %42 = vector.load %arg3[%c0_17, %c0_18] : memref<64x1xf32, #tpu.memory_space<vmem>>, vector<64x1xf32>
    %43 = vector.broadcast %42 : vector<64x1xf32> to vector<64x512xf32>
    %44 = arith.addf %41, %43 : vector<64x512xf32>
    %c0_19 = arith.constant 0 : index
    %c0_20 = arith.constant 0 : index
    %45 = vector.load %arg4[%c0_19, %c0_20] : memref<128x63xf32, #tpu.memory_space<vmem>>, vector<128x63xf32>
    %cst_21 = arith.constant dense<0.000000e+00> : vector<128x512xf32>
    %46 = tpu.matmul %45, %27, %cst_21 {dimension_numbers = #tpu.dot_dimension_numbers<[1], [0], [0], [1], [0, 0, 1, 1], [], []>} : vector<128x63xf32>, vector<63x512xf32>, vector<128x512xf32> -> vector<128x512xf32>
    %47 = vector.extract_strided_slice %46 {offsets = [0, 0], sizes = [64, 512], strides = [1, 1]} : vector<128x512xf32> to vector<64x512xf32>
    %c0_22 = arith.constant 0 : index
    %c0_23 = arith.constant 0 : index
    %48 = vector.load %arg5[%c0_22, %c0_23] : memref<64x1xf32, #tpu.memory_space<vmem>>, vector<64x1xf32>
    %49 = vector.broadcast %48 : vector<64x1xf32> to vector<64x512xf32>
    %50 = arith.addf %47, %49 : vector<64x512xf32>
    %cst_24 = arith.constant 0.000000e+00 : f32
    %51 = vector.broadcast %cst_24 : f32 to vector<64x512xf32>
    %52 = arith.maximumf %50, %51 : vector<64x512xf32>
    %53 = arith.mulf %52, %44 : vector<64x512xf32>
    %54 = vector.extract_strided_slice %46 {offsets = [64, 0], sizes = [64, 512], strides = [1, 1]} : vector<128x512xf32> to vector<64x512xf32>
    %c0_25 = arith.constant 0 : index
    %c0_26 = arith.constant 0 : index
    %55 = vector.load %arg7[%c0_25, %c0_26] : memref<64x64xf32, #tpu.memory_space<vmem>>, vector<64x64xf32>
    %cst_27 = arith.constant dense<0.000000e+00> : vector<64x512xf32>
    %56 = tpu.matmul %55, %53, %cst_27 {dimension_numbers = #tpu.dot_dimension_numbers<[1], [0], [0], [1], [0, 0, 1, 1], [], []>} : vector<64x64xf32>, vector<64x512xf32>, vector<64x512xf32> -> vector<64x512xf32>
    %57 = arith.addf %54, %56 : vector<64x512xf32>
    %c0_28 = arith.constant 0 : index
    %c0_29 = arith.constant 0 : index
    %58 = vector.load %arg6[%c0_28, %c0_29] : memref<64x1xf32, #tpu.memory_space<vmem>>, vector<64x1xf32>
    %59 = vector.broadcast %58 : vector<64x1xf32> to vector<64x512xf32>
    %60 = arith.addf %57, %59 : vector<64x512xf32>
    %cst_30 = arith.constant 0.000000e+00 : f32
    %61 = vector.broadcast %cst_30 : f32 to vector<64x512xf32>
    %62 = arith.maximumf %60, %61 : vector<64x512xf32>
    %63 = arith.mulf %62, %44 : vector<64x512xf32>
    %c0_31 = arith.constant 0 : index
    %c0_32 = arith.constant 0 : index
    %64 = vector.load %arg8[%c0_31, %c0_32] : memref<64x1xf32, #tpu.memory_space<vmem>>, vector<64x1xf32>
    %65 = vector.broadcast %64 : vector<64x1xf32> to vector<64x512xf32>
    %66 = arith.mulf %63, %65 : vector<64x512xf32>
    %cst_33 = arith.constant dense<0.000000e+00> : vector<512xf32>
    %67 = vector.multi_reduction <add>, %66, %cst_33 [0] : vector<64x512xf32> to vector<512xf32>
    %68 = vector.shape_cast %67 : vector<512xf32> to vector<1x512xf32>
    %c0_34 = arith.constant 0 : index
    %c0_35 = arith.constant 0 : index
    %69 = vector.load %arg9[%c0_34, %c0_35] : memref<1x1xf32, #tpu.memory_space<vmem>>, vector<1x1xf32>
    %70 = vector.broadcast %69 : vector<1x1xf32> to vector<1x512xf32>
    %71 = arith.addf %68, %70 : vector<1x512xf32>
    %72 = arith.mulf %63, %44 : vector<64x512xf32>
    %c0_36 = arith.constant 0 : index
    %c0_37 = arith.constant 0 : index
    %73 = vector.load %arg10[%c0_36, %c0_37] : memref<64x27xf32, #tpu.memory_space<vmem>>, vector<64x27xf32>
    %cst_38 = arith.constant dense<0.000000e+00> : vector<64x512xf32>
    %74 = tpu.matmul %73, %39, %cst_38 {dimension_numbers = #tpu.dot_dimension_numbers<[1], [0], [0], [1], [0, 0, 1, 1], [], []>} : vector<64x27xf32>, vector<27x512xf32>, vector<64x512xf32> -> vector<64x512xf32>
    %c0_39 = arith.constant 0 : index
    %c0_40 = arith.constant 0 : index
    %75 = vector.load %arg11[%c0_39, %c0_40] : memref<64x64xf32, #tpu.memory_space<vmem>>, vector<64x64xf32>
    %cst_41 = arith.constant dense<0.000000e+00> : vector<64x512xf32>
    %76 = tpu.matmul %75, %72, %cst_41 {dimension_numbers = #tpu.dot_dimension_numbers<[1], [0], [0], [1], [0, 0, 1, 1], [], []>} : vector<64x64xf32>, vector<64x512xf32>, vector<64x512xf32> -> vector<64x512xf32>
    %77 = arith.addf %74, %76 : vector<64x512xf32>
    %c0_42 = arith.constant 0 : index
    %c0_43 = arith.constant 0 : index
    %78 = vector.load %arg12[%c0_42, %c0_43] : memref<64x1xf32, #tpu.memory_space<vmem>>, vector<64x1xf32>
    %79 = vector.broadcast %78 : vector<64x1xf32> to vector<64x512xf32>
    %80 = arith.addf %77, %79 : vector<64x512xf32>
    %c0_44 = arith.constant 0 : index
    %c0_45 = arith.constant 0 : index
    %81 = vector.load %arg13[%c0_44, %c0_45] : memref<64x3xf32, #tpu.memory_space<vmem>>, vector<64x3xf32>
    %82 = vector.extract_strided_slice %81 {offsets = [0, 0], sizes = [64, 1], strides = [1, 1]} : vector<64x3xf32> to vector<64x1xf32>
    %83 = vector.broadcast %82 : vector<64x1xf32> to vector<64x512xf32>
    %84 = arith.mulf %80, %83 : vector<64x512xf32>
    %cst_46 = arith.constant dense<0.000000e+00> : vector<512xf32>
    %85 = vector.multi_reduction <add>, %84, %cst_46 [0] : vector<64x512xf32> to vector<512xf32>
    %86 = vector.shape_cast %85 : vector<512xf32> to vector<1x512xf32>
    %87 = vector.extract_strided_slice %81 {offsets = [0, 1], sizes = [64, 1], strides = [1, 1]} : vector<64x3xf32> to vector<64x1xf32>
    %88 = vector.broadcast %87 : vector<64x1xf32> to vector<64x512xf32>
    %89 = arith.mulf %80, %88 : vector<64x512xf32>
    %cst_47 = arith.constant dense<0.000000e+00> : vector<512xf32>
    %90 = vector.multi_reduction <add>, %89, %cst_47 [0] : vector<64x512xf32> to vector<512xf32>
    %91 = vector.shape_cast %90 : vector<512xf32> to vector<1x512xf32>
    %92 = vector.extract_strided_slice %81 {offsets = [0, 2], sizes = [64, 1], strides = [1, 1]} : vector<64x3xf32> to vector<64x1xf32>
    %93 = vector.broadcast %92 : vector<64x1xf32> to vector<64x512xf32>
    %94 = arith.mulf %80, %93 : vector<64x512xf32>
    %cst_48 = arith.constant dense<0.000000e+00> : vector<512xf32>
    %95 = vector.multi_reduction <add>, %94, %cst_48 [0] : vector<64x512xf32> to vector<512xf32>
    %96 = vector.shape_cast %95 : vector<512xf32> to vector<1x512xf32>
    %97 = tpu.concatenate %86, %91, %96 in 0 : vector<1x512xf32>, vector<1x512xf32>, vector<1x512xf32> -> vector<3x512xf32>
    %c0_49 = arith.constant 0 : index
    %c0_50 = arith.constant 0 : index
    %98 = vector.load %arg14[%c0_49, %c0_50] : memref<3x1xf32, #tpu.memory_space<vmem>>, vector<3x1xf32>
    %99 = vector.broadcast %98 : vector<3x1xf32> to vector<3x512xf32>
    %100 = arith.addf %97, %99 : vector<3x512xf32>
    %101 = arith.negf %100 : vector<3x512xf32>
    %102 = math.exp %101 : vector<3x512xf32>
    %cst_51 = arith.constant 1.000000e+00 : f32
    %103 = vector.broadcast %cst_51 : f32 to vector<3x512xf32>
    %104 = arith.addf %103, %102 : vector<3x512xf32>
    %105 = arith.divf %103, %104 : vector<3x512xf32>
    %c0_52 = arith.constant 0 : index
    %c0_53 = arith.constant 0 : index
    %106 = vector.load %arg15[%c0_52, %c0_53] : memref<4x512xf32, #tpu.memory_space<vmem>>, vector<1x512xf32>
    tpu.vector_store %arg15[%c0_52, %c0_53], %71 {strides = array<i32>} : memref<4x512xf32, #tpu.memory_space<vmem>>, vector<1x512xf32>,
    %c1 = arith.constant 1 : index
    %c0_54 = arith.constant 0 : index
    %107 = vector.load %arg15[%c1, %c0_54] : memref<4x512xf32, #tpu.memory_space<vmem>>, vector<3x512xf32>
    tpu.vector_store %arg15[%c1, %c0_54], %105 {strides = array<i32>} : memref<4x512xf32, #tpu.memory_space<vmem>>, vector<3x512xf32>,
    return
  }
  func.func @transform_0(%arg0: i32) -> (i32, i32) {
    %c0_i32 = arith.constant 0 : i32
    %c0_i32_0 = arith.constant 0 : i32
    return %c0_i32, %arg0 : i32, i32
  }
  func.func @transform_1(%arg0: i32) -> (i32, i32) {
    %c0_i32 = arith.constant 0 : i32
    %c0_i32_0 = arith.constant 0 : i32
    %c0_i32_1 = arith.constant 0 : i32
    return %c0_i32, %c0_i32_0 : i32, i32
  }
  func.func @transform_2(%arg0: i32) -> (i32, i32) {
    %c0_i32 = arith.constant 0 : i32
    %c0_i32_0 = arith.constant 0 : i32
    %c0_i32_1 = arith.constant 0 : i32
    return %c0_i32, %c0_i32_0 : i32, i32
  }
  func.func @transform_3(%arg0: i32) -> (i32, i32) {
    %c0_i32 = arith.constant 0 : i32
    %c0_i32_0 = arith.constant 0 : i32
    %c0_i32_1 = arith.constant 0 : i32
    return %c0_i32, %c0_i32_0 : i32, i32
  }
  func.func @transform_4(%arg0: i32) -> (i32, i32) {
    %c0_i32 = arith.constant 0 : i32
    %c0_i32_0 = arith.constant 0 : i32
    %c0_i32_1 = arith.constant 0 : i32
    return %c0_i32, %c0_i32_0 : i32, i32
  }
  func.func @transform_5(%arg0: i32) -> (i32, i32) {
    %c0_i32 = arith.constant 0 : i32
    %c0_i32_0 = arith.constant 0 : i32
    %c0_i32_1 = arith.constant 0 : i32
    return %c0_i32, %c0_i32_0 : i32, i32
  }
  func.func @transform_6(%arg0: i32) -> (i32, i32) {
    %c0_i32 = arith.constant 0 : i32
    %c0_i32_0 = arith.constant 0 : i32
    %c0_i32_1 = arith.constant 0 : i32
    return %c0_i32, %c0_i32_0 : i32, i32
  }
  func.func @transform_7(%arg0: i32) -> (i32, i32) {
    %c0_i32 = arith.constant 0 : i32
    %c0_i32_0 = arith.constant 0 : i32
    %c0_i32_1 = arith.constant 0 : i32
    return %c0_i32, %c0_i32_0 : i32, i32
  }
  func.func @transform_8(%arg0: i32) -> (i32, i32) {
    %c0_i32 = arith.constant 0 : i32
    %c0_i32_0 = arith.constant 0 : i32
    %c0_i32_1 = arith.constant 0 : i32
    return %c0_i32, %c0_i32_0 : i32, i32
  }
  func.func @transform_9(%arg0: i32) -> (i32, i32) {
    %c0_i32 = arith.constant 0 : i32
    %c0_i32_0 = arith.constant 0 : i32
    %c0_i32_1 = arith.constant 0 : i32
    return %c0_i32, %c0_i32_0 : i32, i32
  }
  func.func @transform_10(%arg0: i32) -> (i32, i32) {
    %c0_i32 = arith.constant 0 : i32
    %c0_i32_0 = arith.constant 0 : i32
    %c0_i32_1 = arith.constant 0 : i32
    return %c0_i32, %c0_i32_0 : i32, i32
  }
  func.func @transform_11(%arg0: i32) -> (i32, i32) {
    %c0_i32 = arith.constant 0 : i32
    %c0_i32_0 = arith.constant 0 : i32
    %c0_i32_1 = arith.constant 0 : i32
    return %c0_i32, %c0_i32_0 : i32, i32
  }
  func.func @transform_12(%arg0: i32) -> (i32, i32) {
    %c0_i32 = arith.constant 0 : i32
    %c0_i32_0 = arith.constant 0 : i32
    %c0_i32_1 = arith.constant 0 : i32
    return %c0_i32, %c0_i32_0 : i32, i32
  }
  func.func @transform_13(%arg0: i32) -> (i32, i32) {
    %c0_i32 = arith.constant 0 : i32
    %c0_i32_0 = arith.constant 0 : i32
    %c0_i32_1 = arith.constant 0 : i32
    return %c0_i32, %c0_i32_0 : i32, i32
  }
  func.func @transform_14(%arg0: i32) -> (i32, i32) {
    %c0_i32 = arith.constant 0 : i32
    %c0_i32_0 = arith.constant 0 : i32
    return %c0_i32, %arg0 : i32, i32
  }
}

</mosaic_0001>

<llo_original>
// kernel: nerf_forward.1
$region0: #{nerf_forward.1}
  #allocation0 [shape = 'u32[]', space=smem, size = 0x4, offset = 0x4, fixed_abs, tag = 'smem constant byte address 0x4 - core index']
  #allocation1 [shape = 'u32[144,128]{1,0:T(1,128)}', space=vmem, size = 0x12000, scoped, tag = 'internal scratch']
  #allocation2 [shape = 'f32[1,1]{1,0:T(1,128)S(1)}', space=vmem, size = 0x200, scoped, tag = 'scoped memory for nerf_forward.1']
  %s0 = inlined_call_operand.vmem [shape: f32[34,1024], index: 0, kind: input, shape index: {}]
  %s1 = inlined_call_operand.vmem [shape: f32[64,28], index: 1, kind: input, shape index: {}]
  %s2 = inlined_call_operand.vmem [shape: f32[64,1], index: 2, kind: input, shape index: {}]
  %s3 = inlined_call_operand.vmem [shape: f32[128,63], index: 3, kind: input, shape index: {}]
  %s4 = inlined_call_operand.vmem [shape: f32[64,1], index: 4, kind: input, shape index: {}]
  %s5 = inlined_call_operand.vmem [shape: f32[64,1], index: 5, kind: input, shape index: {}]
  %s6 = inlined_call_operand.vmem [shape: f32[64,64], index: 6, kind: input, shape index: {}]
  %s7 = inlined_call_operand.vmem [shape: f32[64,1], index: 7, kind: input, shape index: {}]
  %s8 = inlined_call_operand.<no memory space> [shape: f32[1,1], index: 8, kind: input, shape index: {}]
  %s9 = inlined_call_operand.vmem [shape: f32[64,27], index: 9, kind: input, shape index: {}]
  %s10 = inlined_call_operand.vmem [shape: f32[64,64], index: 10, kind: input, shape index: {}]
  %s11 = inlined_call_operand.vmem [shape: f32[64,1], index: 11, kind: input, shape index: {}]
  %s12 = inlined_call_operand.vmem [shape: f32[64,3], index: 12, kind: input, shape index: {}]
  %s13 = inlined_call_operand.vmem [shape: f32[3,1], index: 13, kind: input, shape index: {}]
  %s14 = inlined_call_operand.vmem [shape: f32[4,1024], index: 14, kind: output, shape index: {}]
  %s15 = sld [smem:[#allocation0]]
  $region112: #{nerf_forward.1} parent=0
    _
  %s17 = ssub.s32 1, %s15
  %s18 = scalar_select 0, %s17, %s15
  %v19 = vstv %s8
  %20 = vst [vmem:[#allocation2] sm:$0x1] %v19
  $region1: #{nerf_forward.1} parent=0
    #allocation3 [shape = 'u8[163840]{0}', space=vmem, size = 0x28000, scoped, tag = 'input window, operand 0']
    loop: start=0, step=1, limit=4
    $region2: #{nerf_forward.1} parent=1 // loop_pre_header
      _
    $region3: #{nerf_forward.1} parent=1 // loop_header
      %s22 = sphi 0, %s26
      %p23 = scmp.ge.s32.totalorder %s22, 4
      %s32 = sphi 0, %s34
      %s35 = sphi 0, %s32
      %s36 = sphi 0, %s35
      %s52 = sphi 0, %s36
      %s56 = sphi 0, %s56
      %s58 = sphi 0, %s56
      %s59 = sphi 0, %s58
      %s73 = sphi 0, %s59
      %s77 = sphi 0, %s77
      %s79 = sphi 0, %s77
      %s80 = sphi 0, %s79
      %s94 = sphi 0, %s80
      %s98 = sphi 0, %s98
      %s100 = sphi 0, %s98
      %s101 = sphi 0, %s100
      %s115 = sphi 0, %s101
      %s119 = sphi 0, %s119
      %s121 = sphi 0, %s119
      %s122 = sphi 0, %s121
      %s136 = sphi 0, %s122
      %s140 = sphi 0, %s140
      %s142 = sphi 0, %s140
      %s143 = sphi 0, %s142
      %s157 = sphi 0, %s143
      %s161 = sphi 0, %s161
      %s163 = sphi 0, %s161
      %s164 = sphi 0, %s163
      %s178 = sphi 0, %s164
      %s182 = sphi 0, %s182
      %s184 = sphi 0, %s182
      %s185 = sphi 0, %s184
      %s199 = sphi 0, %s185
      %s203 = sphi 0, %s203
      %s205 = sphi 0, %s203
      %s206 = sphi 0, %s205
      %s220 = sphi 0, %s206
      %s224 = sphi 0, %s224
      %s226 = sphi 0, %s224
      %s227 = sphi 0, %s226
      %s241 = sphi 0, %s227
      %s245 = sphi 0, %s245
      %s247 = sphi 0, %s245
      %s248 = sphi 0, %s247
      %s262 = sphi 0, %s248
      %s266 = sphi 0, %s266
      %s268 = sphi 0, %s266
      %s269 = sphi 0, %s268
      %s283 = sphi 0, %s269
      %s287 = sphi 0, %s287
      %s289 = sphi 0, %s287
      %s290 = sphi 0, %s289
      %s304 = sphi 0, %s290
      %s308 = sphi 0, %s308
      %s310 = sphi 0, %s308
      %s311 = sphi 0, %s310
      %s325 = sphi 0, %s311
      %s331 = sphi 0, %s333
      %s334 = sphi 0, %s331
      %s335 = sphi 0, %s334
      %s351 = sphi 0, %s335
    $region4: #{nerf_forward.1} parent=1 // loop_header_branch
      %25 = sbr.rel (%p23) target = $region8
    $region5: #{nerf_forward.1} parent=1 // loop_body
      %s27 = ssub.s32 %s22, 1
      %s28 = ssub.s32 %s22, 2
      %s29 = sadd.s32 %s22, 1
      %s30 = ssub.s32 %s22, %s29
      %p31 = scmp.eq.s32.totalorder %s30, 0
      %s33 = sadd.s32 %s32, 1
      %s34 = scalar_select %p31, %s32, %s33
      %p37 = pneg %p31
      %p38 = scmp.eq.s32.totalorder %s22, 1
      %p39 = por %p37, %p38
      %p40 = scmp.ne.s32.totalorder %s32, %s35
      %p41 = scmp.eq.s32.totalorder %s22, 0
      %p42 = por %p40, %p41
      %p43 = scmp.ne.s32.totalorder %s32, %s35
      %p44 = scmp.eq.s32.totalorder %s27, 1
      %p45 = por %p43, %p44
      %p46 = scmp.ne.s32.totalorder %s35, %s36
      %p47 = scmp.eq.s32.totalorder %s27, 0
      %p48 = por %p46, %p47
      %p49 = scmp.ne.s32.totalorder %s35, %s36
      %p50 = scmp.eq.s32.totalorder %s28, 1
      %p51 = por %p49, %p50
      %p53 = scmp.ne.s32.totalorder %s36, %s52
      %p54 = scmp.eq.s32.totalorder %s28, 0
      %p55 = por %p53, %p54
      %s57 = sadd.s32 %s56, 1
      %p60 = scmp.eq.s32.totalorder %s22, 1
      %p61 = scmp.ne.s32.totalorder %s56, %s58
      %p62 = scmp.eq.s32.totalorder %s22, 0
      %p63 = por %p61, %p62
      %p64 = scmp.ne.s32.totalorder %s56, %s58
      %p65 = scmp.eq.s32.totalorder %s27, 1
      %p66 = por %p64, %p65
      %p67 = scmp.ne.s32.totalorder %s58, %s59
      %p68 = scmp.eq.s32.totalorder %s27, 0
      %p69 = por %p67, %p68
      %p70 = scmp.ne.s32.totalorder %s58, %s59
      %p71 = scmp.eq.s32.totalorder %s28, 1
      %p72 = por %p70, %p71
      %p74 = scmp.ne.s32.totalorder %s59, %s73
      %p75 = scmp.eq.s32.totalorder %s28, 0
      %p76 = por %p74, %p75
      %s78 = sadd.s32 %s77, 1
      %p81 = scmp.eq.s32.totalorder %s22, 1
      %p82 = scmp.ne.s32.totalorder %s77, %s79
      %p83 = scmp.eq.s32.totalorder %s22, 0
      %p84 = por %p82, %p83
      %p85 = scmp.ne.s32.totalorder %s77, %s79
      %p86 = scmp.eq.s32.totalorder %s27, 1
      %p87 = por %p85, %p86
      %p88 = scmp.ne.s32.totalorder %s79, %s80
      %p89 = scmp.eq.s32.totalorder %s27, 0
      %p90 = por %p88, %p89
      %p91 = scmp.ne.s32.totalorder %s79, %s80
      %p92 = scmp.eq.s32.totalorder %s28, 1
      %p93 = por %p91, %p92
      %p95 = scmp.ne.s32.totalorder %s80, %s94
      %p96 = scmp.eq.s32.totalorder %s28, 0
      %p97 = por %p95, %p96
      %s99 = sadd.s32 %s98, 1
      %p102 = scmp.eq.s32.totalorder %s22, 1
      %p103 = scmp.ne.s32.totalorder %s98, %s100
      %p104 = scmp.eq.s32.totalorder %s22, 0
      %p105 = por %p103, %p104
      %p106 = scmp.ne.s32.totalorder %s98, %s100
      %p107 = scmp.eq.s32.totalorder %s27, 1
      %p108 = por %p106, %p107
      %p109 = scmp.ne.s32.totalorder %s100, %s101
      %p110 = scmp.eq.s32.totalorder %s27, 0
      %p111 = por %p109, %p110
      %p112 = scmp.ne.s32.totalorder %s100, %s101
      %p113 = scmp.eq.s32.totalorder %s28, 1
      %p114 = por %p112, %p113
      %p116 = scmp.ne.s32.totalorder %s101, %s115
      %p117 = scmp.eq.s32.totalorder %s28, 0
      %p118 = por %p116, %p117
      %s120 = sadd.s32 %s119, 1
      %p123 = scmp.eq.s32.totalorder %s22, 1
      %p124 = scmp.ne.s32.totalorder %s119, %s121
      %p125 = scmp.eq.s32.totalorder %s22, 0
      %p126 = por %p124, %p125
      %p127 = scmp.ne.s32.totalorder %s119, %s121
      %p128 = scmp.eq.s32.totalorder %s27, 1
      %p129 = por %p127, %p128
      %p130 = scmp.ne.s32.totalorder %s121, %s122
      %p131 = scmp.eq.s32.totalorder %s27, 0
      %p132 = por %p130, %p131
      %p133 = scmp.ne.s32.totalorder %s121, %s122
      %p134 = scmp.eq.s32.totalorder %s28, 1
      %p135 = por %p133, %p134
      %p137 = scmp.ne.s32.totalorder %s122, %s136
      %p138 = scmp.eq.s32.totalorder %s28, 0
      %p139 = por %p137, %p138
      %s141 = sadd.s32 %s140, 1
      %p144 = scmp.eq.s32.totalorder %s22, 1
      %p145 = scmp.ne.s32.totalorder %s140, %s142
      %p146 = scmp.eq.s32.totalorder %s22, 0
      %p147 = por %p145, %p146
      %p148 = scmp.ne.s32.totalorder %s140, %s142
      %p149 = scmp.eq.s32.totalorder %s27, 1
      %p150 = por %p148, %p149
      %p151 = scmp.ne.s32.totalorder %s142, %s143
      %p152 = scmp.eq.s32.totalorder %s27, 0
      %p153 = por %p151, %p152
      %p154 = scmp.ne.s32.totalorder %s142, %s143
      %p155 = scmp.eq.s32.totalorder %s28, 1
      %p156 = por %p154, %p155
      %p158 = scmp.ne.s32.totalorder %s143, %s157
      %p159 = scmp.eq.s32.totalorder %s28, 0
      %p160 = por %p158, %p159
      %s162 = sadd.s32 %s161, 1
      %p165 = scmp.eq.s32.totalorder %s22, 1
      %p166 = scmp.ne.s32.totalorder %s161, %s163
      %p167 = scmp.eq.s32.totalorder %s22, 0
      %p168 = por %p166, %p167
      %p169 = scmp.ne.s32.totalorder %s161, %s163
      %p170 = scmp.eq.s32.totalorder %s27, 1
      %p171 = por %p169, %p170
      %p172 = scmp.ne.s32.totalorder %s163, %s164
      %p173 = scmp.eq.s32.totalorder %s27, 0
      %p174 = por %p172, %p173
      %p175 = scmp.ne.s32.totalorder %s163, %s164
      %p176 = scmp.eq.s32.totalorder %s28, 1
      %p177 = por %p175, %p176
      %p179 = scmp.ne.s32.totalorder %s164, %s178
      %p180 = scmp.eq.s32.totalorder %s28, 0
      %p181 = por %p179, %p180
      %s183 = sadd.s32 %s182, 1
      %p186 = scmp.eq.s32.totalorder %s22, 1
      %p187 = scmp.ne.s32.totalorder %s182, %s184
      %p188 = scmp.eq.s32.totalorder %s22, 0
      %p189 = por %p187, %p188
      %p190 = scmp.ne.s32.totalorder %s182, %s184
      %p191 = scmp.eq.s32.totalorder %s27, 1
      %p192 = por %p190, %p191
      %p193 = scmp.ne.s32.totalorder %s184, %s185
      %p194 = scmp.eq.s32.totalorder %s27, 0
      %p195 = por %p193, %p194
      %p196 = scmp.ne.s32.totalorder %s184, %s185
      %p197 = scmp.eq.s32.totalorder %s28, 1
      %p198 = por %p196, %p197
      %p200 = scmp.ne.s32.totalorder %s185, %s199
      %p201 = scmp.eq.s32.totalorder %s28, 0
      %p202 = por %p200, %p201
      %s204 = sadd.s32 %s203, 1
      %p207 = scmp.eq.s32.totalorder %s22, 1
      %p208 = scmp.ne.s32.totalorder %s203, %s205
      %p209 = scmp.eq.s32.totalorder %s22, 0
      %p210 = por %p208, %p209
      %p211 = scmp.ne.s32.totalorder %s203, %s205
      %p212 = scmp.eq.s32.totalorder %s27, 1
      %p213 = por %p211, %p212
      %p214 = scmp.ne.s32.totalorder %s205, %s206
      %p215 = scmp.eq.s32.totalorder %s27, 0
      %p216 = por %p214, %p215
      %p217 = scmp.ne.s32.totalorder %s205, %s206
      %p218 = scmp.eq.s32.totalorder %s28, 1
      %p219 = por %p217, %p218
      %p221 = scmp.ne.s32.totalorder %s206, %s220
      %p222 = scmp.eq.s32.totalorder %s28, 0
      %p223 = por %p221, %p222
      %s225 = sadd.s32 %s224, 1
      %p228 = scmp.eq.s32.totalorder %s22, 1
      %p229 = scmp.ne.s32.totalorder %s224, %s226
      %p230 = scmp.eq.s32.totalorder %s22, 0
      %p231 = por %p229, %p230
      %p232 = scmp.ne.s32.totalorder %s224, %s226
      %p233 = scmp.eq.s32.totalorder %s27, 1
      %p234 = por %p232, %p233
      %p235 = scmp.ne.s32.totalorder %s226, %s227
      %p236 = scmp.eq.s32.totalorder %s27, 0
      %p237 = por %p235, %p236
      %p238 = scmp.ne.s32.totalorder %s226, %s227
      %p239 = scmp.eq.s32.totalorder %s28, 1
      %p240 = por %p238, %p239
      %p242 = scmp.ne.s32.totalorder %s227, %s241
      %p243 = scmp.eq.s32.totalorder %s28, 0
      %p244 = por %p242, %p243
      %s246 = sadd.s32 %s245, 1
      %p249 = scmp.eq.s32.totalorder %s22, 1
      %p250 = scmp.ne.s32.totalorder %s245, %s247
      %p251 = scmp.eq.s32.totalorder %s22, 0
      %p252 = por %p250, %p251
      %p253 = scmp.ne.s32.totalorder %s245, %s247
      %p254 = scmp.eq.s32.totalorder %s27, 1
      %p255 = por %p253, %p254
      %p256 = scmp.ne.s32.totalorder %s247, %s248
      %p257 = scmp.eq.s32.totalorder %s27, 0
      %p258 = por %p256, %p257
      %p259 = scmp.ne.s32.totalorder %s247, %s248
      %p260 = scmp.eq.s32.totalorder %s28, 1
      %p261 = por %p259, %p260
      %p263 = scmp.ne.s32.totalorder %s248, %s262
      %p264 = scmp.eq.s32.totalorder %s28, 0
      %p265 = por %p263, %p264
      %s267 = sadd.s32 %s266, 1
      %p270 = scmp.eq.s32.totalorder %s22, 1
      %p271 = scmp.ne.s32.totalorder %s266, %s268
      %p272 = scmp.eq.s32.totalorder %s22, 0
      %p273 = por %p271, %p272
      %p274 = scmp.ne.s32.totalorder %s266, %s268
      %p275 = scmp.eq.s32.totalorder %s27, 1
      %p276 = por %p274, %p275
      %p277 = scmp.ne.s32.totalorder %s268, %s269
      %p278 = scmp.eq.s32.totalorder %s27, 0
      %p279 = por %p277, %p278
      %p280 = scmp.ne.s32.totalorder %s268, %s269
      %p281 = scmp.eq.s32.totalorder %s28, 1
      %p282 = por %p280, %p281
      %p284 = scmp.ne.s32.totalorder %s269, %s283
      %p285 = scmp.eq.s32.totalorder %s28, 0
      %p286 = por %p284, %p285
      %s288 = sadd.s32 %s287, 1
      %p291 = scmp.eq.s32.totalorder %s22, 1
      %p292 = scmp.ne.s32.totalorder %s287, %s289
      %p293 = scmp.eq.s32.totalorder %s22, 0
      %p294 = por %p292, %p293
      %p295 = scmp.ne.s32.totalorder %s287, %s289
      %p296 = scmp.eq.s32.totalorder %s27, 1
      %p297 = por %p295, %p296
      %p298 = scmp.ne.s32.totalorder %s289, %s290
      %p299 = scmp.eq.s32.totalorder %s27, 0
      %p300 = por %p298, %p299
      %p301 = scmp.ne.s32.totalorder %s289, %s290
      %p302 = scmp.eq.s32.totalorder %s28, 1
      %p303 = por %p301, %p302
      %p305 = scmp.ne.s32.totalorder %s290, %s304
      %p306 = scmp.eq.s32.totalorder %s28, 0
      %p307 = por %p305, %p306
      %s309 = sadd.s32 %s308, 1
      %p312 = scmp.eq.s32.totalorder %s22, 1
      %p313 = scmp.ne.s32.totalorder %s308, %s310
      %p314 = scmp.eq.s32.totalorder %s22, 0
      %p315 = por %p313, %p314
      %p316 = scmp.ne.s32.totalorder %s308, %s310
      %p317 = scmp.eq.s32.totalorder %s27, 1
      %p318 = por %p316, %p317
      %p319 = scmp.ne.s32.totalorder %s310, %s311
      %p320 = scmp.eq.s32.totalorder %s27, 0
      %p321 = por %p319, %p320
      %p322 = scmp.ne.s32.totalorder %s310, %s311
      %p323 = scmp.eq.s32.totalorder %s28, 1
      %p324 = por %p322, %p323
      %p326 = scmp.ne.s32.totalorder %s311, %s325
      %p327 = scmp.eq.s32.totalorder %s28, 0
      %p328 = por %p326, %p327
      %s329 = ssub.s32 %s22, %s29
      %p330 = scmp.eq.s32.totalorder %s329, 0
      %s332 = sadd.s32 %s331, 1
      %s333 = scalar_select %p330, %s331, %s332
      %p336 = pneg %p330
      %p337 = scmp.eq.s32.totalorder %s22, 1
      %p338 = por %p336, %p337
      %p339 = scmp.ne.s32.totalorder %s331, %s334
      %p340 = scmp.eq.s32.totalorder %s22, 0
      %p341 = por %p339, %p340
      %p342 = scmp.ne.s32.totalorder %s331, %s334
      %p343 = scmp.eq.s32.totalorder %s27, 1
      %p344 = por %p342, %p343
      %p345 = scmp.ne.s32.totalorder %s334, %s335
      %p346 = scmp.eq.s32.totalorder %s27, 0
      %p347 = por %p345, %p346
      %p348 = scmp.ne.s32.totalorder %s334, %s335
      %p349 = scmp.eq.s32.totalorder %s28, 1
      %p350 = por %p348, %p349
      %p352 = scmp.ne.s32.totalorder %s335, %s351
      %p353 = scmp.eq.s32.totalorder %s28, 0
      %p354 = por %p352, %p353
      %p355 = scmp.le.s32.totalorder 1, %s22
      %p356 = scmp.lt.s32.totalorder %s22, 3
      %p357 = pnand %p355, %p356
      %p358 = pneg %p357
      // Predicated region
      $region9: #{nerf_forward.1} parent=5 // pred_check
        _
      $region10: #{nerf_forward.1} parent=5 // pred_check_branch
        %360 = sbr.rel (%p357) target = $region12
      $region11: #{nerf_forward.1} parent=5 // pred_region
        %s361 = ssub.s32 %s22, 1
        // Predicated region
        $region13: #{nerf_forward.1} parent=11 // pred_check
          %p362 = pneg %p69
        $region14: #{nerf_forward.1} parent=11 // pred_check_branch
          %364 = sbr.rel (%p362) target = $region16
        $region15: #{nerf_forward.1} parent=11 // pred_region
          _
        $region16: #{nerf_forward.1} parent=11 // pred_fallthru
          _
        // Predicated region
        $region17: #{nerf_forward.1} parent=11 // pred_check
          %p365 = pneg %p90
        $region18: #{nerf_forward.1} parent=11 // pred_check_branch
          %367 = sbr.rel (%p365) target = $region20
        $region19: #{nerf_forward.1} parent=11 // pred_region
          _
        $region20: #{nerf_forward.1} parent=11 // pred_fallthru
          _
        // Predicated region
        $region21: #{nerf_forward.1} parent=11 // pred_check
          %p368 = pneg %p111
        $region22: #{nerf_forward.1} parent=11 // pred_check_branch
          %370 = sbr.rel (%p368) target = $region24
        $region23: #{nerf_forward.1} parent=11 // pred_region
          _
        $region24: #{nerf_forward.1} parent=11 // pred_fallthru
          _
        // Predicated region
        $region25: #{nerf_forward.1} parent=11 // pred_check
          %p371 = pneg %p132
        $region26: #{nerf_forward.1} parent=11 // pred_check_branch
          %373 = sbr.rel (%p371) target = $region28
        $region27: #{nerf_forward.1} parent=11 // pred_region
          _
        $region28: #{nerf_forward.1} parent=11 // pred_fallthru
          _
        // Predicated region
        $region29: #{nerf_forward.1} parent=11 // pred_check
          %p374 = pneg %p153
        $region30: #{nerf_forward.1} parent=11 // pred_check_branch
          %376 = sbr.rel (%p374) target = $region32
        $region31: #{nerf_forward.1} parent=11 // pred_region
          _
        $region32: #{nerf_forward.1} parent=11 // pred_fallthru
          _
        // Predicated region
        $region33: #{nerf_forward.1} parent=11 // pred_check
          %p377 = pneg %p174
        $region34: #{nerf_forward.1} parent=11 // pred_check_branch
          %379 = sbr.rel (%p377) target = $region36
        $region35: #{nerf_forward.1} parent=11 // pred_region
          _
        $region36: #{nerf_forward.1} parent=11 // pred_fallthru
          _
        // Predicated region
        $region37: #{nerf_forward.1} parent=11 // pred_check
          %p380 = pneg %p195
        $region38: #{nerf_forward.1} parent=11 // pred_check_branch
          %382 = sbr.rel (%p380) target = $region40
        $region39: #{nerf_forward.1} parent=11 // pred_region
          _
        $region40: #{nerf_forward.1} parent=11 // pred_fallthru
          _
        // Predicated region
        $region41: #{nerf_forward.1} parent=11 // pred_check
          %p383 = pneg %p216
        $region42: #{nerf_forward.1} parent=11 // pred_check_branch
          %385 = sbr.rel (%p383) target = $region44
        $region43: #{nerf_forward.1} parent=11 // pred_region
          _
        $region44: #{nerf_forward.1} parent=11 // pred_fallthru
          _
        // Predicated region
        $region45: #{nerf_forward.1} parent=11 // pred_check
          %p386 = pneg %p237
        $region46: #{nerf_forward.1} parent=11 // pred_check_branch
          %388 = sbr.rel (%p386) target = $region48
        $region47: #{nerf_forward.1} parent=11 // pred_region
          _
        $region48: #{nerf_forward.1} parent=11 // pred_fallthru
          _
        // Predicated region
        $region49: #{nerf_forward.1} parent=11 // pred_check
          %p389 = pneg %p258
        $region50: #{nerf_forward.1} parent=11 // pred_check_branch
          %391 = sbr.rel (%p389) target = $region52
        $region51: #{nerf_forward.1} parent=11 // pred_region
          _
        $region52: #{nerf_forward.1} parent=11 // pred_fallthru
          _
        // Predicated region
        $region53: #{nerf_forward.1} parent=11 // pred_check
          %p392 = pneg %p279
        $region54: #{nerf_forward.1} parent=11 // pred_check_branch
          %394 = sbr.rel (%p392) target = $region56
        $region55: #{nerf_forward.1} parent=11 // pred_region
          _
        $region56: #{nerf_forward.1} parent=11 // pred_fallthru
          _
        // Predicated region
        $region57: #{nerf_forward.1} parent=11 // pred_check
          %p395 = pneg %p300
        $region58: #{nerf_forward.1} parent=11 // pred_check_branch
          %397 = sbr.rel (%p395) target = $region60
        $region59: #{nerf_forward.1} parent=11 // pred_region
          _
        $region60: #{nerf_forward.1} parent=11 // pred_fallthru
          _
        // Predicated region
        $region61: #{nerf_forward.1} parent=11 // pred_check
          %p398 = pneg %p321
        $region62: #{nerf_forward.1} parent=11 // pred_check_branch
          %400 = sbr.rel (%p398) target = $region64
        $region63: #{nerf_forward.1} parent=11 // pred_region
          _
        $region64: #{nerf_forward.1} parent=11 // pred_fallthru
          _
      $region12: #{nerf_forward.1} parent=5 // pred_fallthru
        _
      %p401 = scmp.lt.s32.totalorder %s22, 2
      // Predicated region
      $region65: #{nerf_forward.1} parent=5 // pred_check
        %p402 = pneg %p401
      $region66: #{nerf_forward.1} parent=5 // pred_check_branch
        %404 = sbr.rel (%p402) target = $region68
      $region67: #{nerf_forward.1} parent=5 // pred_region
        // Predicated region
        $region69: #{nerf_forward.1} parent=67 // pred_check
          %p405 = pneg %p42
        $region70: #{nerf_forward.1} parent=67 // pred_check_branch
          %407 = sbr.rel (%p405) target = $region72
        $region71: #{nerf_forward.1} parent=67 // pred_region
          %s408 = sand.u32 %s32, 1
          %s409 = sand.u32 %s32, 1
          %s410 = smul.addr %s409, 160
          %s411 = scalar_lea.vmem [#allocation3], %s410
          %s412 = smul.u32 4, %s22
          %s413 = smul.addr %s412, 8
          %s414 = scalar_lea.vmem %s0, %s413
          // Predicated region
          $region73: #{nerf_forward.1} parent=71 // pred_check
            _
          $region74: #{nerf_forward.1} parent=71 // pred_check_branch
            %416 = sbr.rel (0) target = $region76
          $region75: #{nerf_forward.1} parent=71 // pred_region
            // Predicated region
            $region77: #{nerf_forward.1} parent=75 // pred_check
              _
            $region78: #{nerf_forward.1} parent=75 // pred_check_branch
              %418 = sbr.rel (0) target = $region80
            $region79: #{nerf_forward.1} parent=75 // pred_region
              loop: start=0, step=1, limit=1
              $region81: #{nerf_forward.1} parent=79 // loop_pre_header
                _
              $region82: #{nerf_forward.1} parent=79 // loop_header
                %s420 = sphi 0, %s424
                %p421 = scmp.ge.s32.totalorder %s420, 1
                %s425 = sphi %s414, %s414
                %s426 = sphi %s411, %s411
              $region83: #{nerf_forward.1} parent=79 // loop_header_branch
                %423 = sbr.rel (%p421) target = $region87
              $region84: #{nerf_forward.1} parent=79 // loop_body
                %v427 = vld [vmem:[%s425] sm:$0xff]
                %428 = vst [vmem:[%s426] sm:$0xff] %v427
                %v429 = vld [vmem:[%s425 + $0x8] sm:$0xff]
                %430 = vst [vmem:[%s426 + $0x8] sm:$0xff] %v429
                %v431 = vld [vmem:[%s425 + $0x10] sm:$0xff]
                %432 = vst [vmem:[%s426 + $0x10] sm:$0xff] %v431
                %v433 = vld [vmem:[%s425 + $0x18] sm:$0xff]
                %434 = vst [vmem:[%s426 + $0x18] sm:$0xff] %v433
                %v435 = vld [vmem:[%s425 + $0x40] sm:$0xff]
                %436 = vst [vmem:[%s426 + $0x20] sm:$0xff] %v435
                %v437 = vld [vmem:[%s425 + $0x48] sm:$0xff]
                %438 = vst [vmem:[%s426 + $0x28] sm:$0xff] %v437
                %v439 = vld [vmem:[%s425 + $0x50] sm:$0xff]
                %440 = vst [vmem:[%s426 + $0x30] sm:$0xff] %v439
                %v441 = vld [vmem:[%s425 + $0x58] sm:$0xff]
                %442 = vst [vmem:[%s426 + $0x38] sm:$0xff] %v441
                %v443 = vld [vmem:[%s425 + $0x80] sm:$0xff]
                %444 = vst [vmem:[%s426 + $0x40] sm:$0xff] %v443
                %v445 = vld [vmem:[%s425 + $0x88] sm:$0xff]
                %446 = vst [vmem:[%s426 + $0x48] sm:$0xff] %v445
                %v447 = vld [vmem:[%s425 + $0x90] sm:$0xff]
                %448 = vst [vmem:[%s426 + $0x50] sm:$0xff] %v447
                %v449 = vld [vmem:[%s425 + $0x98] sm:$0xff]
                %450 = vst [vmem:[%s426 + $0x58] sm:$0xff] %v449
                %v451 = vld [vmem:[%s425 + $0xc0] sm:$0xff]
                %452 = vst [vmem:[%s426 + $0x60] sm:$0xff] %v451
                %v453 = vld [vmem:[%s425 + $0xc8] sm:$0xff]
                %454 = vst [vmem:[%s426 + $0x68] sm:$0xff] %v453
                %v455 = vld [vmem:[%s425 + $0xd0] sm:$0xff]
                %456 = vst [vmem:[%s426 + $0x70] sm:$0xff] %v455
                %v457 = vld [vmem:[%s425 + $0xd8] sm:$0xff]
                %458 = vst [vmem:[%s426 + $0x78] sm:$0xff] %v457
                %v459 = vld [vmem:[%s425 + $0x100] sm:$0xff]
                %460 = vst [vmem:[%s426 + $0x80] sm:$0xff] %v459
                %v461 = vld [vmem:[%s425 + $0x108] sm:$0xff]
                %462 = vst [vmem:[%s426 + $0x88] sm:$0xff] %v461
                %v463 = vld [vmem:[%s425 + $0x110] sm:$0xff]
                %464 = vst [vmem:[%s426 + $0x90] sm:$0xff] %v463
                %v465 = vld [vmem:[%s425 + $0x118] sm:$0xff]
                %466 = vst [vmem:[%s426 + $0x98] sm:$0xff] %v465
              $region85: #{nerf_forward.1} parent=79 // loop_footer
                %s424 = sadd.s32 1, %s420
              $region86: #{nerf_forward.1} parent=79 // loop_footer_branch
                %419 = sbr.rel target = $region82
              $region87: #{nerf_forward.1} parent=79 // loop_exit
                _
            $region80: #{nerf_forward.1} parent=75 // pred_fallthru
              _
            // Predicated region
            $region88: #{nerf_forward.1} parent=75 // pred_check
              _
            $region89: #{nerf_forward.1} parent=75 // pred_check_branch
              %468 = sbr.rel target = $region91
            $region90: #{nerf_forward.1} parent=75 // pred_region
              _
            $region91: #{nerf_forward.1} parent=75 // pred_fallthru
              _
          $region76: #{nerf_forward.1} parent=71 // pred_fallthru
            _
          %469 = vnop
        $region72: #{nerf_forward.1} parent=67 // pred_fallthru
          _
      $region68: #{nerf_forward.1} parent=5 // pred_fallthru
        _
      %p470 = scmp.le.s32.totalorder 1, %s22
      %p471 = scmp.lt.s32.totalorder %s22, 3
      %p472 = pnand %p470, %p471
      %p473 = pneg %p472
      // Predicated region
      $region92: #{nerf_forward.1} parent=5 // pred_check
        _
      $region93: #{nerf_forward.1} parent=5 // pred_check_branch
        %475 = sbr.rel (%p472) target = $region95
      $region94: #{nerf_forward.1} parent=5 // pred_region
        %s476 = ssub.s32 %s22, 1
        %s477 = sand.u32 %s35, 1
        %s478 = sand.u32 %s35, 1
        %s479 = smul.addr %s478, 160
        %s480 = scalar_lea.vmem [#allocation3], %s479
        // Predicated region
        $region96: #{nerf_forward.1} parent=94 // pred_check
          %p481 = pneg %p48
        $region97: #{nerf_forward.1} parent=94 // pred_check_branch
          %483 = sbr.rel (%p481) target = $region99
        $region98: #{nerf_forward.1} parent=94 // pred_region
          _
        $region99: #{nerf_forward.1} parent=94 // pred_fallthru
          _
        %s484 = sand.u32 %s35, 1
        %s485 = sand.u32 %s35, 1
        %s486 = smul.addr %s485, 160
        %s487 = scalar_lea.vmem [#allocation3], %s486
        %p488 = pneg %p48
        %p489 = pneg %p45
        %p490 = pneg %p69
        %p491 = pneg %p66
        %p492 = pneg %p90
        %p493 = pneg %p87
        %p494 = pneg %p111
        %p495 = pneg %p108
        %p496 = pneg %p132
        %p497 = pneg %p129
        %p498 = pneg %p153
        %p499 = pneg %p150
        %p500 = pneg %p174
        %p501 = pneg %p171
        %p502 = pneg %p195
        %p503 = pneg %p192
        %p504 = pneg %p216
        %p505 = pneg %p213
        %p506 = pneg %p237
        %p507 = pneg %p234
        %p508 = pneg %p258
        %p509 = pneg %p255
        %p510 = pneg %p279
        %p511 = pneg %p276
        %p512 = pneg %p300
        %p513 = pneg %p297
        %p514 = pneg %p321
        %p515 = pneg %p318
        %p516 = pneg %p347
        %p517 = pneg %p344
        %s518 = smul.u32 4, %s27
        %p519 = scmp.lt.s32.totalorder %s518, 7
        %s520 = scalar_select %p519, %s518, 7
        %s521 = smul.addr %s520, 4
        %s522 = scalar_lea.vmem %s14, %s521
        %s523 = smul.u32 4, %s27
        %s524 = smul.u32 4, %s27
        %p525 = scmp.lt.s32.totalorder %s524, 7
        %s526 = scalar_select %p525, %s524, 7
        %s527 = smul.addr %s526, 4
        %s528 = scalar_lea.vmem %s14, %s527
        %s529 = smul.u32 4, %s27
        %v530 = vld [vmem:[%s480] sm:$0xff]
        %v531 = vld [vmem:[%s480 + $0x8] sm:$0xff]
        %v532 = vld [vmem:[%s480 + $0x10] sm:$0xff]
        %v533 = vld [vmem:[%s480 + $0x18] sm:$0xff]
        %v534 = vld [vmem:[%s480 + $0x20] sm:$0xff]
        %v535 = vld [vmem:[%s480 + $0x28] sm:$0xff]
        %v536 = vld [vmem:[%s480 + $0x30] sm:$0xff]
        %v537 = vld [vmem:[%s480 + $0x38] sm:$0xff]
        %v538 = vld [vmem:[%s480 + $0x40] sm:$0xff]
        %v539 = vld [vmem:[%s480 + $0x48] sm:$0xff]
        %v540 = vld [vmem:[%s480 + $0x50] sm:$0xff]
        %v541 = vld [vmem:[%s480 + $0x58] sm:$0xff]
        %v542 = vld [vmem:[%s480 + $0x60] sm:$0xff]
        %v543 = vld [vmem:[%s480 + $0x68] sm:$0xff]
        %v544 = vld [vmem:[%s480 + $0x70] sm:$0xff]
        %v545 = vld [vmem:[%s480 + $0x78] sm:$0xff]
        %v546 = vld [vmem:[%s480 + $0x80] sm:$0x3]
        %v547 = vld [vmem:[%s480 + $0x88] sm:$0x3]
        %v548 = vld [vmem:[%s480 + $0x90] sm:$0x3]
        %v549 = vld [vmem:[%s480 + $0x98] sm:$0x3]
        %v550 = vmul.f32 %v530, 2.0
        %v551 = vmul.f32 %v531, 2.0
        %v552 = vmul.f32 %v532, 2.0
        %v553 = vmul.f32 %v533, 2.0
        %v554 = vmul.f32 %v530, 4.0
        %v555 = vmul.f32 %v531, 4.0
        %v556 = vmul.f32 %v532, 4.0
        %v557 = vmul.f32 %v533, 4.0
        %v558 = vmul.f32 %v530, 8.0
        %v559 = vmul.f32 %v531, 8.0
        %v560 = vmul.f32 %v532, 8.0
        %v561 = vmul.f32 %v533, 8.0
        %v562 = vmul.f32 %v530, 16.0
        %v563 = vmul.f32 %v531, 16.0
        %v564 = vmul.f32 %v532, 16.0
        %v565 = vmul.f32 %v533, 16.0
        %v566 = vmul.f32 %v530, 32.0
        %v567 = vmul.f32 %v531, 32.0
        %v568 = vmul.f32 %v532, 32.0
        %v569 = vmul.f32 %v533, 32.0
        %v570 = vmul.f32 %v530, 64.0
        %v571 = vmul.f32 %v531, 64.0
        %v572 = vmul.f32 %v532, 64.0
        %v573 = vmul.f32 %v533, 64.0
        %v574 = vmul.f32 %v530, 128.0
        %v575 = vmul.f32 %v531, 128.0
        %v576 = vmul.f32 %v532, 128.0
        %v577 = vmul.f32 %v533, 128.0
        %v578 = vmul.f32 %v530, 256.0
        %v579 = vmul.f32 %v531, 256.0
        %v580 = vmul.f32 %v532, 256.0
        %v581 = vmul.f32 %v533, 256.0
        %v582 = vmul.f32 %v530, 512.0
        %v583 = vmul.f32 %v531, 512.0
        %v584 = vmul.f32 %v532, 512.0
        %v585 = vmul.f32 %v533, 512.0
        %v590 = vrot.slane %v550, 5
        %v591 = vrot.slane %v551, 5
        %v592 = vrot.slane %v552, 5
        %v593 = vrot.slane %v553, 5
        %v602 = vrot.slane %v554, 2
        %v603 = vrot.slane %v555, 2
        %v604 = vrot.slane %v556, 2
        %v605 = vrot.slane %v557, 2
        %v614 = vrot.slane %v558, 7
        %v615 = vrot.slane %v559, 7
        %v616 = vrot.slane %v560, 7
        %v617 = vrot.slane %v561, 7
        %v626 = vrot.slane %v562, 4
        %v627 = vrot.slane %v563, 4
        %v628 = vrot.slane %v564, 4
        %v629 = vrot.slane %v565, 4
        %v638 = vrot.slane %v566, 1
        %v639 = vrot.slane %v567, 1
        %v640 = vrot.slane %v568, 1
        %v641 = vrot.slane %v569, 1
        %v650 = vrot.slane %v570, 6
        %v651 = vrot.slane %v571, 6
        %v652 = vrot.slane %v572, 6
        %v653 = vrot.slane %v573, 6
        %v662 = vrot.slane %v574, 3
        %v663 = vrot.slane %v575, 3
        %v664 = vrot.slane %v576, 3
        %v665 = vrot.slane %v577, 3
        %v674 = vrot.slane %v582, 5
        %v675 = vrot.slane %v583, 5
        %v676 = vrot.slane %v584, 5
        %v677 = vrot.slane %v585, 5
        %vm682 = vcmask 1042432
        %v683 = vsel %vm682, %v530, %v590
        %v684 = vsel %vm682, %v531, %v591
        %v685 = vsel %vm682, %v532, %v592
        %v686 = vsel %vm682, %v533, %v593
        %vm687 = vcmask 1045504
        %v688 = vsel %vm687, %v683, %v602
        %v689 = vsel %vm687, %v684, %v603
        %v690 = vsel %vm687, %v685, %v604
        %v691 = vsel %vm687, %v686, %v605
        %vm692 = vcmask 1040384
        %v693 = vsel %vm692, %v602, %v614
        %v694 = vsel %vm692, %v603, %v615
        %v695 = vsel %vm692, %v604, %v616
        %v696 = vsel %vm692, %v605, %v617
        %vm697 = vcmask 1043456
        %v698 = vsel %vm697, %v693, %v626
        %v699 = vsel %vm697, %v694, %v627
        %v700 = vsel %vm697, %v695, %v628
        %v701 = vsel %vm697, %v696, %v629
        %vm702 = vcmask 1046528
        %v703 = vsel %vm702, %v698, %v638
        %v704 = vsel %vm702, %v699, %v639
        %v705 = vsel %vm702, %v700, %v640
        %v706 = vsel %vm702, %v701, %v641
        %vm707 = vcmask 1041408
        %v708 = vsel %vm707, %v638, %v650
        %v709 = vsel %vm707, %v639, %v651
        %v710 = vsel %vm707, %v640, %v652
        %v711 = vsel %vm707, %v641, %v653
        %vm712 = vcmask 1044480
        %v713 = vsel %vm712, %v708, %v662
        %v714 = vsel %vm712, %v709, %v663
        %v715 = vsel %vm712, %v710, %v664
        %v716 = vsel %vm712, %v711, %v665
        %v717 = vsel %vm682, %v578, %v674
        %v718 = vsel %vm682, %v579, %v675
        %v719 = vsel %vm682, %v580, %v676
        %v720 = vsel %vm682, %v581, %v677
        %v721 = vand.u32 2147483647, %v688
        %vm722 = vcmp.le.f32.partialorder %v721, 0.7853982
        %vm723 = vcmp.lt.s32.totalorder %v688, 0
        %v724 = vand.u32 %v688, 2139095040
        %v725 = vshrl.u32 %v724, 23
        %v726 = vsub.s32 %v725, 127
        %v727 = vand.u32 2147483647, %v688
        %v728 = vand.u32 %v727, 8388607
        %v729 = vor.u32 %v728, 8388608
        %v730 = vsub.s32 0, %v729
        %v731 = vadd.s32 %v726, 1
        %vm732 = vcmp.gt.s32.totalorder %v731, 0
        %v733 = vsel %vm732, %v731, 0
        %v734 = vshrl.u32 %v733, 5
        %v735 = vand.u32 %v733, 31
        %v736 = vsub.s32 32, %v735
        %v737 = vshrl.u32 683565275, %v736
        %v738 = vshll.u32 683565275, %v735
        %v739 = vshrl.u32 2475754826, %v736
        %v740 = vor.u32 %v738, %v739
        %v741 = vshll.u32 2475754826, %v735
        %v742 = vshrl.u32 2131351028, %v736
        %v743 = vor.u32 %v741, %v742
        %v744 = vshll.u32 2131351028, %v735
        %v745 = vshrl.u32 2102212464, %v736
        %v746 = vor.u32 %v744, %v745
        %v747 = vshll.u32 2102212464, %v735
        %v748 = vshrl.u32 920167782, %v736
        %v749 = vor.u32 %v747, %v748
        %v750 = vshll.u32 920167782, %v735
        %v751 = vshrl.u32 1326507024, %v736
        %v752 = vor.u32 %v750, %v751
        %vm753 = vcmp.lt.s32.totalorder %v734, 1
        %vm754 = vcmp.lt.s32.totalorder %v734, 2
        %vm755 = vcmp.lt.s32.totalorder %v734, 3
        %vm756 = vcmp.lt.s32.totalorder %v734, 4
        %v757 = vsel %vm753, %v737, %v740
        %v758 = vsel %vm756, %v746, 2102212464
        %v759 = vsel %vm755, %v743, %v758
        %v760 = vsel %vm754, %v757, %v759
        %v761 = vsel %vm753, %v740, %v743
        %v762 = vsel %vm756, %v749, 920167782
        %v763 = vsel %vm755, %v746, %v762
        %v764 = vsel %vm754, %v761, %v763
        %v765 = vsel %vm753, %v743, %v746
        %v766 = vsel %vm756, %v752, 1326507024
        %v767 = vsel %vm755, %v749, %v766
        %v768 = vsel %vm754, %v765, %v767
        %v769 = vshll.u32 %v729, 8
        %v770 = vmul.u32.u64.compose %v769, %v768
        %v771 = vextract.low.u32 %v770
        %v772 = vextract.high.u32 %v770
        %v773 = vmul.u32.u64.compose %v769, %v764
        %v774 = vextract.low.u32 %v773
        %v775 = vextract.high.u32 %v773
        %v776 = vmul.u32 %v769, %v760
        %v777 = vadd.s32 %v772, %v774
        %vm778 = vc.u32 %v772, %v774
        %v779 = vadd.s32 %v775, 1
        %v780 = vsel %vm778, %v779, %v775
        %v781 = vadd.s32 %v776, %v780
        %v782 = vadd.s32 %v781, 536870912
        %v783 = vshrl.u32 %v782, 30
        %v784 = vshll.u32 %v783, 30
        %v785 = vsub.s32 %v781, %v784
        %vm786 = vcmp.lt.s32.totalorder %v785, 0
        %v787 = vsub.s32 0, %v785
        %v788 = vsel %vm786, %v787, %v785
        %v789 = vclz %v788
        %v790 = vsub.s32 %v789, 2
        %vm791 = vcmp.gt.s32.totalorder 0, %v790
        %v792 = vsel %vm791, 0, %v790
        %v793 = vsub.s32 32, %v792
        %v794 = vshll.u32 %v785, %v792
        %v795 = vshrl.u32 %v777, %v793
        %v796 = vor.u32 %v794, %v795
        %v797 = vsub.s32 4294967266, %v792
        %v798 = vadd.s32 %v797, 127
        %v799 = vshll.u32 %v798, 23
        %v800 = vor.u32 4788187, %v799
        %v801 = vand.u32 2147483647, %v800
        %v803 = vcvt.s32.f32 %v796
        %v804 = vmul.f32 %v803, %v801
        %v805 = vxor.u32 %v804, 2147483648
        %v806 = vsel %vm723, %v805, %v804
        %v807 = vsub.s32 4, %v783
        %v808 = vsel %vm723, %v807, %v783
        %v809 = vsel %vm722, %v688, %v806
        %v810 = vsel %vm722, 0, %v808
        %v811 = vcosq.f32.pop %v809
        %v812 = vsinq.f32.pop %v809
        %vm813 = vweird.f32 %v688
        %v814 = vadd.s32 %v810, 3
        %v815 = vand.u32 %v814, 3
        %vm816 = vcmp.lt.s32.totalorder %v815, 2
        %vm817 = vcmp.eq.s32.totalorder %v815, 0
        %v818 = vxor.u32 %v812, 2147483648
        %v819 = vsel %vm817, %v811, %v818
        %vm820 = vcmp.eq.s32.totalorder %v815, 2
        %v821 = vxor.u32 %v811, 2147483648
        %v822 = vsel %vm820, %v821, %v812
        %v823 = vsel %vm816, %v819, %v822
        %v824 = vsel %vm813, nan, %v823
        %v825 = vand.u32 2147483647, %v689
        %vm826 = vcmp.le.f32.partialorder %v825, 0.7853982
        %vm827 = vcmp.lt.s32.totalorder %v689, 0
        %v828 = vand.u32 %v689, 2139095040
        %v829 = vshrl.u32 %v828, 23
        %v830 = vsub.s32 %v829, 127
        %v831 = vand.u32 2147483647, %v689
        %v832 = vand.u32 %v831, 8388607
        %v833 = vor.u32 %v832, 8388608
        %v834 = vsub.s32 0, %v833
        %v835 = vadd.s32 %v830, 1
        %vm836 = vcmp.gt.s32.totalorder %v835, 0
        %v837 = vsel %vm836, %v835, 0
        %v838 = vshrl.u32 %v837, 5
        %v839 = vand.u32 %v837, 31
        %v840 = vsub.s32 32, %v839
        %v841 = vshrl.u32 683565275, %v840
        %v842 = vshll.u32 683565275, %v839
        %v843 = vshrl.u32 2475754826, %v840
        %v844 = vor.u32 %v842, %v843
        %v845 = vshll.u32 2475754826, %v839
        %v846 = vshrl.u32 2131351028, %v840
        %v847 = vor.u32 %v845, %v846
        %v848 = vshll.u32 2131351028, %v839
        %v849 = vshrl.u32 2102212464, %v840
        %v850 = vor.u32 %v848, %v849
        %v851 = vshll.u32 2102212464, %v839
        %v852 = vshrl.u32 920167782, %v840
        %v853 = vor.u32 %v851, %v852
        %v854 = vshll.u32 920167782, %v839
        %v855 = vshrl.u32 1326507024, %v840
        %v856 = vor.u32 %v854, %v855
        %vm857 = vcmp.lt.s32.totalorder %v838, 1
        %vm858 = vcmp.lt.s32.totalorder %v838, 2
        %vm859 = vcmp.lt.s32.totalorder %v838, 3
        %vm860 = vcmp.lt.s32.totalorder %v838, 4
        %v861 = vsel %vm857, %v841, %v844
        %v862 = vsel %vm860, %v850, 2102212464
        %v863 = vsel %vm859, %v847, %v862
        %v864 = vsel %vm858, %v861, %v863
        %v865 = vsel %vm857, %v844, %v847
        %v866 = vsel %vm860, %v853, 920167782
        %v867 = vsel %vm859, %v850, %v866
        %v868 = vsel %vm858, %v865, %v867
        %v869 = vsel %vm857, %v847, %v850
        %v870 = vsel %vm860, %v856, 1326507024
        %v871 = vsel %vm859, %v853, %v870
        %v872 = vsel %vm858, %v869, %v871
        %v873 = vshll.u32 %v833, 8
        %v874 = vmul.u32.u64.compose %v873, %v872
        %v875 = vextract.low.u32 %v874
        %v876 = vextract.high.u32 %v874
        %v877 = vmul.u32.u64.compose %v873, %v868
        %v878 = vextract.low.u32 %v877
        %v879 = vextract.high.u32 %v877
        %v880 = vmul.u32 %v873, %v864
        %v881 = vadd.s32 %v876, %v878
        %vm882 = vc.u32 %v876, %v878
        %v883 = vadd.s32 %v879, 1
        %v884 = vsel %vm882, %v883, %v879
        %v885 = vadd.s32 %v880, %v884
        %v886 = vadd.s32 %v885, 536870912
        %v887 = vshrl.u32 %v886, 30
        %v888 = vshll.u32 %v887, 30
        %v889 = vsub.s32 %v885, %v888
        %vm890 = vcmp.lt.s32.totalorder %v889, 0
        %v891 = vsub.s32 0, %v889
        %v892 = vsel %vm890, %v891, %v889
        %v893 = vclz %v892
        %v894 = vsub.s32 %v893, 2
        %vm895 = vcmp.gt.s32.totalorder 0, %v894
        %v896 = vsel %vm895, 0, %v894
        %v897 = vsub.s32 32, %v896
        %v898 = vshll.u32 %v889, %v896
        %v899 = vshrl.u32 %v881, %v897
        %v900 = vor.u32 %v898, %v899
        %v901 = vsub.s32 4294967266, %v896
        %v902 = vadd.s32 %v901, 127
        %v903 = vshll.u32 %v902, 23
        %v904 = vor.u32 4788187, %v903
        %v905 = vand.u32 2147483647, %v904
        %v907 = vcvt.s32.f32 %v900
        %v908 = vmul.f32 %v907, %v905
        %v909 = vxor.u32 %v908, 2147483648
        %v910 = vsel %vm827, %v909, %v908
        %v911 = vsub.s32 4, %v887
        %v912 = vsel %vm827, %v911, %v887
        %v913 = vsel %vm826, %v689, %v910
        %v914 = vsel %vm826, 0, %v912
        %v915 = vcosq.f32.pop %v913
        %v916 = vsinq.f32.pop %v913
        %vm917 = vweird.f32 %v689
        %v918 = vadd.s32 %v914, 3
        %v919 = vand.u32 %v918, 3
        %vm920 = vcmp.lt.s32.totalorder %v919, 2
        %vm921 = vcmp.eq.s32.totalorder %v919, 0
        %v922 = vxor.u32 %v916, 2147483648
        %v923 = vsel %vm921, %v915, %v922
        %vm924 = vcmp.eq.s32.totalorder %v919, 2
        %v925 = vxor.u32 %v915, 2147483648
        %v926 = vsel %vm924, %v925, %v916
        %v927 = vsel %vm920, %v923, %v926
        %v928 = vsel %vm917, nan, %v927
        %v929 = vand.u32 2147483647, %v690
        %vm930 = vcmp.le.f32.partialorder %v929, 0.7853982
        %vm931 = vcmp.lt.s32.totalorder %v690, 0
        %v932 = vand.u32 %v690, 2139095040
        %v933 = vshrl.u32 %v932, 23
        %v934 = vsub.s32 %v933, 127
        %v935 = vand.u32 2147483647, %v690
        %v936 = vand.u32 %v935, 8388607
        %v937 = vor.u32 %v936, 8388608
        %v938 = vsub.s32 0, %v937
        %v939 = vadd.s32 %v934, 1
        %vm940 = vcmp.gt.s32.totalorder %v939, 0
        %v941 = vsel %vm940, %v939, 0
        %v942 = vshrl.u32 %v941, 5
        %v943 = vand.u32 %v941, 31
        %v944 = vsub.s32 32, %v943
        %v945 = vshrl.u32 683565275, %v944
        %v946 = vshll.u32 683565275, %v943
        %v947 = vshrl.u32 2475754826, %v944
        %v948 = vor.u32 %v946, %v947
        %v949 = vshll.u32 2475754826, %v943
        %v950 = vshrl.u32 2131351028, %v944
        %v951 = vor.u32 %v949, %v950
        %v952 = vshll.u32 2131351028, %v943
        %v953 = vshrl.u32 2102212464, %v944
        %v954 = vor.u32 %v952, %v953
        %v955 = vshll.u32 2102212464, %v943
        %v956 = vshrl.u32 920167782, %v944
        %v957 = vor.u32 %v955, %v956
        %v958 = vshll.u32 920167782, %v943
        %v959 = vshrl.u32 1326507024, %v944
        %v960 = vor.u32 %v958, %v959
        %vm961 = vcmp.lt.s32.totalorder %v942, 1
        %vm962 = vcmp.lt.s32.totalorder %v942, 2
        %vm963 = vcmp.lt.s32.totalorder %v942, 3
        %vm964 = vcmp.lt.s32.totalorder %v942, 4
        %v965 = vsel %vm961, %v945, %v948
        %v966 = vsel %vm964, %v954, 2102212464
        %v967 = vsel %vm963, %v951, %v966
        %v968 = vsel %vm962, %v965, %v967
        %v969 = vsel %vm961, %v948, %v951
        %v970 = vsel %vm964, %v957, 920167782
        %v971 = vsel %vm963, %v954, %v970
        %v972 = vsel %vm962, %v969, %v971
        %v973 = vsel %vm961, %v951, %v954
        %v974 = vsel %vm964, %v960, 1326507024
        %v975 = vsel %vm963, %v957, %v974
        %v976 = vsel %vm962, %v973, %v975
        %v977 = vshll.u32 %v937, 8
        %v978 = vmul.u32.u64.compose %v977, %v976
        %v979 = vextract.low.u32 %v978
        %v980 = vextract.high.u32 %v978
        %v981 = vmul.u32.u64.compose %v977, %v972
        %v982 = vextract.low.u32 %v981
        %v983 = vextract.high.u32 %v981
        %v984 = vmul.u32 %v977, %v968
        %v985 = vadd.s32 %v980, %v982
        %vm986 = vc.u32 %v980, %v982
        %v987 = vadd.s32 %v983, 1
        %v988 = vsel %vm986, %v987, %v983
        %v989 = vadd.s32 %v984, %v988
        %v990 = vadd.s32 %v989, 536870912
        %v991 = vshrl.u32 %v990, 30
        %v992 = vshll.u32 %v991, 30
        %v993 = vsub.s32 %v989, %v992
        %vm994 = vcmp.lt.s32.totalorder %v993, 0
        %v995 = vsub.s32 0, %v993
        %v996 = vsel %vm994, %v995, %v993
        %v997 = vclz %v996
        %v998 = vsub.s32 %v997, 2
        %vm999 = vcmp.gt.s32.totalorder 0, %v998
        %v1000 = vsel %vm999, 0, %v998
        %v1001 = vsub.s32 32, %v1000
        %v1002 = vshll.u32 %v993, %v1000
        %v1003 = vshrl.u32 %v985, %v1001
        %v1004 = vor.u32 %v1002, %v1003
        %v1005 = vsub.s32 4294967266, %v1000
        %v1006 = vadd.s32 %v1005, 127
        %v1007 = vshll.u32 %v1006, 23
        %v1008 = vor.u32 4788187, %v1007
        %v1009 = vand.u32 2147483647, %v1008
        %v1011 = vcvt.s32.f32 %v1004
        %v1012 = vmul.f32 %v1011, %v1009
        %v1013 = vxor.u32 %v1012, 2147483648
        %v1014 = vsel %vm931, %v1013, %v1012
        %v1015 = vsub.s32 4, %v991
        %v1016 = vsel %vm931, %v1015, %v991
        %v1017 = vsel %vm930, %v690, %v1014
        %v1018 = vsel %vm930, 0, %v1016
        %v1019 = vcosq.f32.pop %v1017
        %v1020 = vsinq.f32.pop %v1017
        %vm1021 = vweird.f32 %v690
        %v1022 = vadd.s32 %v1018, 3
        %v1023 = vand.u32 %v1022, 3
        %vm1024 = vcmp.lt.s32.totalorder %v1023, 2
        %vm1025 = vcmp.eq.s32.totalorder %v1023, 0
        %v1026 = vxor.u32 %v1020, 2147483648
        %v1027 = vsel %vm1025, %v1019, %v1026
        %vm1028 = vcmp.eq.s32.totalorder %v1023, 2
        %v1029 = vxor.u32 %v1019, 2147483648
        %v1030 = vsel %vm1028, %v1029, %v1020
        %v1031 = vsel %vm1024, %v1027, %v1030
        %v1032 = vsel %vm1021, nan, %v1031
        %v1033 = vand.u32 2147483647, %v691
        %vm1034 = vcmp.le.f32.partialorder %v1033, 0.7853982
        %vm1035 = vcmp.lt.s32.totalorder %v691, 0
        %v1036 = vand.u32 %v691, 2139095040
        %v1037 = vshrl.u32 %v1036, 23
        %v1038 = vsub.s32 %v1037, 127
        %v1039 = vand.u32 2147483647, %v691
        %v1040 = vand.u32 %v1039, 8388607
        %v1041 = vor.u32 %v1040, 8388608
        %v1042 = vsub.s32 0, %v1041
        %v1043 = vadd.s32 %v1038, 1
        %vm1044 = vcmp.gt.s32.totalorder %v1043, 0
        %v1045 = vsel %vm1044, %v1043, 0
        %v1046 = vshrl.u32 %v1045, 5
        %v1047 = vand.u32 %v1045, 31
        %v1048 = vsub.s32 32, %v1047
        %v1049 = vshrl.u32 683565275, %v1048
        %v1050 = vshll.u32 683565275, %v1047
        %v1051 = vshrl.u32 2475754826, %v1048
        %v1052 = vor.u32 %v1050, %v1051
        %v1053 = vshll.u32 2475754826, %v1047
        %v1054 = vshrl.u32 2131351028, %v1048
        %v1055 = vor.u32 %v1053, %v1054
        %v1056 = vshll.u32 2131351028, %v1047
        %v1057 = vshrl.u32 2102212464, %v1048
        %v1058 = vor.u32 %v1056, %v1057
        %v1059 = vshll.u32 2102212464, %v1047
        %v1060 = vshrl.u32 920167782, %v1048
        %v1061 = vor.u32 %v1059, %v1060
        %v1062 = vshll.u32 920167782, %v1047
        %v1063 = vshrl.u32 1326507024, %v1048
        %v1064 = vor.u32 %v1062, %v1063
        %vm1065 = vcmp.lt.s32.totalorder %v1046, 1
        %vm1066 = vcmp.lt.s32.totalorder %v1046, 2
        %vm1067 = vcmp.lt.s32.totalorder %v1046, 3
        %vm1068 = vcmp.lt.s32.totalorder %v1046, 4
        %v1069 = vsel %vm1065, %v1049, %v1052
        %v1070 = vsel %vm1068, %v1058, 2102212464
        %v1071 = vsel %vm1067, %v1055, %v1070
        %v1072 = vsel %vm1066, %v1069, %v1071
        %v1073 = vsel %vm1065, %v1052, %v1055
        %v1074 = vsel %vm1068, %v1061, 920167782
        %v1075 = vsel %vm1067, %v1058, %v1074
        %v1076 = vsel %vm1066, %v1073, %v1075
        %v1077 = vsel %vm1065, %v1055, %v1058
        %v1078 = vsel %vm1068, %v1064, 1326507024
        %v1079 = vsel %vm1067, %v1061, %v1078
        %v1080 = vsel %vm1066, %v1077, %v1079
        %v1081 = vshll.u32 %v1041, 8
        %v1082 = vmul.u32.u64.compose %v1081, %v1080
        %v1083 = vextract.low.u32 %v1082
        %v1084 = vextract.high.u32 %v1082
        %v1085 = vmul.u32.u64.compose %v1081, %v1076
        %v1086 = vextract.low.u32 %v1085
        %v1087 = vextract.high.u32 %v1085
        %v1088 = vmul.u32 %v1081, %v1072
        %v1089 = vadd.s32 %v1084, %v1086
        %vm1090 = vc.u32 %v1084, %v1086
        %v1091 = vadd.s32 %v1087, 1
        %v1092 = vsel %vm1090, %v1091, %v1087
        %v1093 = vadd.s32 %v1088, %v1092
        %v1094 = vadd.s32 %v1093, 536870912
        %v1095 = vshrl.u32 %v1094, 30
        %v1096 = vshll.u32 %v1095, 30
        %v1097 = vsub.s32 %v1093, %v1096
        %vm1098 = vcmp.lt.s32.totalorder %v1097, 0
        %v1099 = vsub.s32 0, %v1097
        %v1100 = vsel %vm1098, %v1099, %v1097
        %v1101 = vclz %v1100
        %v1102 = vsub.s32 %v1101, 2
        %vm1103 = vcmp.gt.s32.totalorder 0, %v1102
        %v1104 = vsel %vm1103, 0, %v1102
        %v1105 = vsub.s32 32, %v1104
        %v1106 = vshll.u32 %v1097, %v1104
        %v1107 = vshrl.u32 %v1089, %v1105
        %v1108 = vor.u32 %v1106, %v1107
        %v1109 = vsub.s32 4294967266, %v1104
        %v1110 = vadd.s32 %v1109, 127
        %v1111 = vshll.u32 %v1110, 23
        %v1112 = vor.u32 4788187, %v1111
        %v1113 = vand.u32 2147483647, %v1112
        %v1115 = vcvt.s32.f32 %v1108
        %v1116 = vmul.f32 %v1115, %v1113
        %v1117 = vxor.u32 %v1116, 2147483648
        %v1118 = vsel %vm1035, %v1117, %v1116
        %v1119 = vsub.s32 4, %v1095
        %v1120 = vsel %vm1035, %v1119, %v1095
        %v1121 = vsel %vm1034, %v691, %v1118
        %v1122 = vsel %vm1034, 0, %v1120
        %v1123 = vcosq.f32.pop %v1121
        %v1124 = vsinq.f32.pop %v1121
        %vm1125 = vweird.f32 %v691
        %v1126 = vadd.s32 %v1122, 3
        %v1127 = vand.u32 %v1126, 3
        %vm1128 = vcmp.lt.s32.totalorder %v1127, 2
        %vm1129 = vcmp.eq.s32.totalorder %v1127, 0
        %v1130 = vxor.u32 %v1124, 2147483648
        %v1131 = vsel %vm1129, %v1123, %v1130
        %vm1132 = vcmp.eq.s32.totalorder %v1127, 2
        %v1133 = vxor.u32 %v1123, 2147483648
        %v1134 = vsel %vm1132, %v1133, %v1124
        %v1135 = vsel %vm1128, %v1131, %v1134
        %v1136 = vsel %vm1125, nan, %v1135
        %v1137 = vand.u32 2147483647, %v703
        %vm1138 = vcmp.le.f32.partialorder %v1137, 0.7853982
        %vm1139 = vcmp.lt.s32.totalorder %v703, 0
        %v1140 = vand.u32 %v703, 2139095040
        %v1141 = vshrl.u32 %v1140, 23
        %v1142 = vsub.s32 %v1141, 127
        %v1143 = vand.u32 2147483647, %v703
        %v1144 = vand.u32 %v1143, 8388607
        %v1145 = vor.u32 %v1144, 8388608
        %v1146 = vsub.s32 0, %v1145
        %v1147 = vadd.s32 %v1142, 1
        %vm1148 = vcmp.gt.s32.totalorder %v1147, 0
        %v1149 = vsel %vm1148, %v1147, 0
        %v1150 = vshrl.u32 %v1149, 5
        %v1151 = vand.u32 %v1149, 31
        %v1152 = vsub.s32 32, %v1151
        %v1153 = vshrl.u32 683565275, %v1152
        %v1154 = vshll.u32 683565275, %v1151
        %v1155 = vshrl.u32 2475754826, %v1152
        %v1156 = vor.u32 %v1154, %v1155
        %v1157 = vshll.u32 2475754826, %v1151
        %v1158 = vshrl.u32 2131351028, %v1152
        %v1159 = vor.u32 %v1157, %v1158
        %v1160 = vshll.u32 2131351028, %v1151
        %v1161 = vshrl.u32 2102212464, %v1152
        %v1162 = vor.u32 %v1160, %v1161
        %v1163 = vshll.u32 2102212464, %v1151
        %v1164 = vshrl.u32 920167782, %v1152
        %v1165 = vor.u32 %v1163, %v1164
        %v1166 = vshll.u32 920167782, %v1151
        %v1167 = vshrl.u32 1326507024, %v1152
        %v1168 = vor.u32 %v1166, %v1167
        %vm1169 = vcmp.lt.s32.totalorder %v1150, 1
        %vm1170 = vcmp.lt.s32.totalorder %v1150, 2
        %vm1171 = vcmp.lt.s32.totalorder %v1150, 3
        %vm1172 = vcmp.lt.s32.totalorder %v1150, 4
        %v1173 = vsel %vm1169, %v1153, %v1156
        %v1174 = vsel %vm1172, %v1162, 2102212464
        %v1175 = vsel %vm1171, %v1159, %v1174
        %v1176 = vsel %vm1170, %v1173, %v1175
        %v1177 = vsel %vm1169, %v1156, %v1159
        %v1178 = vsel %vm1172, %v1165, 920167782
        %v1179 = vsel %vm1171, %v1162, %v1178
        %v1180 = vsel %vm1170, %v1177, %v1179
        %v1181 = vsel %vm1169, %v1159, %v1162
        %v1182 = vsel %vm1172, %v1168, 1326507024
        %v1183 = vsel %vm1171, %v1165, %v1182
        %v1184 = vsel %vm1170, %v1181, %v1183
        %v1185 = vshll.u32 %v1145, 8
        %v1186 = vmul.u32.u64.compose %v1185, %v1184
        %v1187 = vextract.low.u32 %v1186
        %v1188 = vextract.high.u32 %v1186
        %v1189 = vmul.u32.u64.compose %v1185, %v1180
        %v1190 = vextract.low.u32 %v1189
        %v1191 = vextract.high.u32 %v1189
        %v1192 = vmul.u32 %v1185, %v1176
        %v1193 = vadd.s32 %v1188, %v1190
        %vm1194 = vc.u32 %v1188, %v1190
        %v1195 = vadd.s32 %v1191, 1
        %v1196 = vsel %vm1194, %v1195, %v1191
        %v1197 = vadd.s32 %v1192, %v1196
        %v1198 = vadd.s32 %v1197, 536870912
        %v1199 = vshrl.u32 %v1198, 30
        %v1200 = vshll.u32 %v1199, 30
        %v1201 = vsub.s32 %v1197, %v1200
        %vm1202 = vcmp.lt.s32.totalorder %v1201, 0
        %v1203 = vsub.s32 0, %v1201
        %v1204 = vsel %vm1202, %v1203, %v1201
        %v1205 = vclz %v1204
        %v1206 = vsub.s32 %v1205, 2
        %vm1207 = vcmp.gt.s32.totalorder 0, %v1206
        %v1208 = vsel %vm1207, 0, %v1206
        %v1209 = vsub.s32 32, %v1208
        %v1210 = vshll.u32 %v1201, %v1208
        %v1211 = vshrl.u32 %v1193, %v1209
        %v1212 = vor.u32 %v1210, %v1211
        %v1213 = vsub.s32 4294967266, %v1208
        %v1214 = vadd.s32 %v1213, 127
        %v1215 = vshll.u32 %v1214, 23
        %v1216 = vor.u32 4788187, %v1215
        %v1217 = vand.u32 2147483647, %v1216
        %v1219 = vcvt.s32.f32 %v1212
        %v1220 = vmul.f32 %v1219, %v1217
        %v1221 = vxor.u32 %v1220, 2147483648
        %v1222 = vsel %vm1139, %v1221, %v1220
        %v1223 = vsub.s32 4, %v1199
        %v1224 = vsel %vm1139, %v1223, %v1199
        %v1225 = vsel %vm1138, %v703, %v1222
        %v1226 = vsel %vm1138, 0, %v1224
        %v1227 = vcosq.f32.pop %v1225
        %v1228 = vsinq.f32.pop %v1225
        %vm1229 = vweird.f32 %v703
        %v1230 = vadd.s32 %v1226, 3
        %v1231 = vand.u32 %v1230, 3
        %vm1232 = vcmp.lt.s32.totalorder %v1231, 2
        %vm1233 = vcmp.eq.s32.totalorder %v1231, 0
        %v1234 = vxor.u32 %v1228, 2147483648
        %v1235 = vsel %vm1233, %v1227, %v1234
        %vm1236 = vcmp.eq.s32.totalorder %v1231, 2
        %v1237 = vxor.u32 %v1227, 2147483648
        %v1238 = vsel %vm1236, %v1237, %v1228
        %v1239 = vsel %vm1232, %v1235, %v1238
        %v1240 = vsel %vm1229, nan, %v1239
        %v1241 = vand.u32 2147483647, %v704
        %vm1242 = vcmp.le.f32.partialorder %v1241, 0.7853982
        %vm1243 = vcmp.lt.s32.totalorder %v704, 0
        %v1244 = vand.u32 %v704, 2139095040
        %v1245 = vshrl.u32 %v1244, 23
        %v1246 = vsub.s32 %v1245, 127
        %v1247 = vand.u32 2147483647, %v704
        %v1248 = vand.u32 %v1247, 8388607
        %v1249 = vor.u32 %v1248, 8388608
        %v1250 = vsub.s32 0, %v1249
        %v1251 = vadd.s32 %v1246, 1
        %vm1252 = vcmp.gt.s32.totalorder %v1251, 0
        %v1253 = vsel %vm1252, %v1251, 0
        %v1254 = vshrl.u32 %v1253, 5
        %v1255 = vand.u32 %v1253, 31
        %v1256 = vsub.s32 32, %v1255
        %v1257 = vshrl.u32 683565275, %v1256
        %v1258 = vshll.u32 683565275, %v1255
        %v1259 = vshrl.u32 2475754826, %v1256
        %v1260 = vor.u32 %v1258, %v1259
        %v1261 = vshll.u32 2475754826, %v1255
        %v1262 = vshrl.u32 2131351028, %v1256
        %v1263 = vor.u32 %v1261, %v1262
        %v1264 = vshll.u32 2131351028, %v1255
        %v1265 = vshrl.u32 2102212464, %v1256
        %v1266 = vor.u32 %v1264, %v1265
        %v1267 = vshll.u32 2102212464, %v1255
        %v1268 = vshrl.u32 920167782, %v1256
        %v1269 = vor.u32 %v1267, %v1268
        %v1270 = vshll.u32 920167782, %v1255
        %v1271 = vshrl.u32 1326507024, %v1256
        %v1272 = vor.u32 %v1270, %v1271
        %vm1273 = vcmp.lt.s32.totalorder %v1254, 1
        %vm1274 = vcmp.lt.s32.totalorder %v1254, 2
        %vm1275 = vcmp.lt.s32.totalorder %v1254, 3
        %vm1276 = vcmp.lt.s32.totalorder %v1254, 4
        %v1277 = vsel %vm1273, %v1257, %v1260
        %v1278 = vsel %vm1276, %v1266, 2102212464
        %v1279 = vsel %vm1275, %v1263, %v1278
        %v1280 = vsel %vm1274, %v1277, %v1279
        %v1281 = vsel %vm1273, %v1260, %v1263
        %v1282 = vsel %vm1276, %v1269, 920167782
        %v1283 = vsel %vm1275, %v1266, %v1282
        %v1284 = vsel %vm1274, %v1281, %v1283
        %v1285 = vsel %vm1273, %v1263, %v1266
        %v1286 = vsel %vm1276, %v1272, 1326507024
        %v1287 = vsel %vm1275, %v1269, %v1286
        %v1288 = vsel %vm1274, %v1285, %v1287
        %v1289 = vshll.u32 %v1249, 8
        %v1290 = vmul.u32.u64.compose %v1289, %v1288
        %v1291 = vextract.low.u32 %v1290
        %v1292 = vextract.high.u32 %v1290
        %v1293 = vmul.u32.u64.compose %v1289, %v1284
        %v1294 = vextract.low.u32 %v1293
        %v1295 = vextract.high.u32 %v1293
        %v1296 = vmul.u32 %v1289, %v1280
        %v1297 = vadd.s32 %v1292, %v1294
        %vm1298 = vc.u32 %v1292, %v1294
        %v1299 = vadd.s32 %v1295, 1
        %v1300 = vsel %vm1298, %v1299, %v1295
        %v1301 = vadd.s32 %v1296, %v1300
        %v1302 = vadd.s32 %v1301, 536870912
        %v1303 = vshrl.u32 %v1302, 30
        %v1304 = vshll.u32 %v1303, 30
        %v1305 = vsub.s32 %v1301, %v1304
        %vm1306 = vcmp.lt.s32.totalorder %v1305, 0
        %v1307 = vsub.s32 0, %v1305
        %v1308 = vsel %vm1306, %v1307, %v1305
        %v1309 = vclz %v1308
        %v1310 = vsub.s32 %v1309, 2
        %vm1311 = vcmp.gt.s32.totalorder 0, %v1310
        %v1312 = vsel %vm1311, 0, %v1310
        %v1313 = vsub.s32 32, %v1312
        %v1314 = vshll.u32 %v1305, %v1312
        %v1315 = vshrl.u32 %v1297, %v1313
        %v1316 = vor.u32 %v1314, %v1315
        %v1317 = vsub.s32 4294967266, %v1312
        %v1318 = vadd.s32 %v1317, 127
        %v1319 = vshll.u32 %v1318, 23
        %v1320 = vor.u32 4788187, %v1319
        %v1321 = vand.u32 2147483647, %v1320
        %v1323 = vcvt.s32.f32 %v1316
        %v1324 = vmul.f32 %v1323, %v1321
        %v1325 = vxor.u32 %v1324, 2147483648
        %v1326 = vsel %vm1243, %v1325, %v1324
        %v1327 = vsub.s32 4, %v1303
        %v1328 = vsel %vm1243, %v1327, %v1303
        %v1329 = vsel %vm1242, %v704, %v1326
        %v1330 = vsel %vm1242, 0, %v1328
        %v1331 = vcosq.f32.pop %v1329
        %v1332 = vsinq.f32.pop %v1329
        %vm1333 = vweird.f32 %v704
        %v1334 = vadd.s32 %v1330, 3
        %v1335 = vand.u32 %v1334, 3
        %vm1336 = vcmp.lt.s32.totalorder %v1335, 2
        %vm1337 = vcmp.eq.s32.totalorder %v1335, 0
        %v1338 = vxor.u32 %v1332, 2147483648
        %v1339 = vsel %vm1337, %v1331, %v1338
        %vm1340 = vcmp.eq.s32.totalorder %v1335, 2
        %v1341 = vxor.u32 %v1331, 2147483648
        %v1342 = vsel %vm1340, %v1341, %v1332
        %v1343 = vsel %vm1336, %v1339, %v1342
        %v1344 = vsel %vm1333, nan, %v1343
        %v1345 = vand.u32 2147483647, %v705
        %vm1346 = vcmp.le.f32.partialorder %v1345, 0.7853982
        %vm1347 = vcmp.lt.s32.totalorder %v705, 0
        %v1348 = vand.u32 %v705, 2139095040
        %v1349 = vshrl.u32 %v1348, 23
        %v1350 = vsub.s32 %v1349, 127
        %v1351 = vand.u32 2147483647, %v705
        %v1352 = vand.u32 %v1351, 8388607
        %v1353 = vor.u32 %v1352, 8388608
        %v1354 = vsub.s32 0, %v1353
        %v1355 = vadd.s32 %v1350, 1
        %vm1356 = vcmp.gt.s32.totalorder %v1355, 0
        %v1357 = vsel %vm1356, %v1355, 0
        %v1358 = vshrl.u32 %v1357, 5
        %v1359 = vand.u32 %v1357, 31
        %v1360 = vsub.s32 32, %v1359
        %v1361 = vshrl.u32 683565275, %v1360
        %v1362 = vshll.u32 683565275, %v1359
        %v1363 = vshrl.u32 2475754826, %v1360
        %v1364 = vor.u32 %v1362, %v1363
        %v1365 = vshll.u32 2475754826, %v1359
        %v1366 = vshrl.u32 2131351028, %v1360
        %v1367 = vor.u32 %v1365, %v1366
        %v1368 = vshll.u32 2131351028, %v1359
        %v1369 = vshrl.u32 2102212464, %v1360
        %v1370 = vor.u32 %v1368, %v1369
        %v1371 = vshll.u32 2102212464, %v1359
        %v1372 = vshrl.u32 920167782, %v1360
        %v1373 = vor.u32 %v1371, %v1372
        %v1374 = vshll.u32 920167782, %v1359
        %v1375 = vshrl.u32 1326507024, %v1360
        %v1376 = vor.u32 %v1374, %v1375
        %vm1377 = vcmp.lt.s32.totalorder %v1358, 1
        %vm1378 = vcmp.lt.s32.totalorder %v1358, 2
        %vm1379 = vcmp.lt.s32.totalorder %v1358, 3
        %vm1380 = vcmp.lt.s32.totalorder %v1358, 4
        %v1381 = vsel %vm1377, %v1361, %v1364
        %v1382 = vsel %vm1380, %v1370, 2102212464
        %v1383 = vsel %vm1379, %v1367, %v1382
        %v1384 = vsel %vm1378, %v1381, %v1383
        %v1385 = vsel %vm1377, %v1364, %v1367
        %v1386 = vsel %vm1380, %v1373, 920167782
        %v1387 = vsel %vm1379, %v1370, %v1386
        %v1388 = vsel %vm1378, %v1385, %v1387
        %v1389 = vsel %vm1377, %v1367, %v1370
        %v1390 = vsel %vm1380, %v1376, 1326507024
        %v1391 = vsel %vm1379, %v1373, %v1390
        %v1392 = vsel %vm1378, %v1389, %v1391
        %v1393 = vshll.u32 %v1353, 8
        %v1394 = vmul.u32.u64.compose %v1393, %v1392
        %v1395 = vextract.low.u32 %v1394
        %v1396 = vextract.high.u32 %v1394
        %v1397 = vmul.u32.u64.compose %v1393, %v1388
        %v1398 = vextract.low.u32 %v1397
        %v1399 = vextract.high.u32 %v1397
        %v1400 = vmul.u32 %v1393, %v1384
        %v1401 = vadd.s32 %v1396, %v1398
        %vm1402 = vc.u32 %v1396, %v1398
        %v1403 = vadd.s32 %v1399, 1
        %v1404 = vsel %vm1402, %v1403, %v1399
        %v1405 = vadd.s32 %v1400, %v1404
        %v1406 = vadd.s32 %v1405, 536870912
        %v1407 = vshrl.u32 %v1406, 30
        %v1408 = vshll.u32 %v1407, 30
        %v1409 = vsub.s32 %v1405, %v1408
        %vm1410 = vcmp.lt.s32.totalorder %v1409, 0
        %v1411 = vsub.s32 0, %v1409
        %v1412 = vsel %vm1410, %v1411, %v1409
        %v1413 = vclz %v1412
        %v1414 = vsub.s32 %v1413, 2
        %vm1415 = vcmp.gt.s32.totalorder 0, %v1414
        %v1416 = vsel %vm1415, 0, %v1414
        %v1417 = vsub.s32 32, %v1416
        %v1418 = vshll.u32 %v1409, %v1416
        %v1419 = vshrl.u32 %v1401, %v1417
        %v1420 = vor.u32 %v1418, %v1419
        %v1421 = vsub.s32 4294967266, %v1416
        %v1422 = vadd.s32 %v1421, 127
        %v1423 = vshll.u32 %v1422, 23
        %v1424 = vor.u32 4788187, %v1423
        %v1425 = vand.u32 2147483647, %v1424
        %v1427 = vcvt.s32.f32 %v1420
        %v1428 = vmul.f32 %v1427, %v1425
        %v1429 = vxor.u32 %v1428, 2147483648
        %v1430 = vsel %vm1347, %v1429, %v1428
        %v1431 = vsub.s32 4, %v1407
        %v1432 = vsel %vm1347, %v1431, %v1407
        %v1433 = vsel %vm1346, %v705, %v1430
        %v1434 = vsel %vm1346, 0, %v1432
        %v1435 = vcosq.f32.pop %v1433
        %v1436 = vsinq.f32.pop %v1433
        %vm1437 = vweird.f32 %v705
        %v1438 = vadd.s32 %v1434, 3
        %v1439 = vand.u32 %v1438, 3
        %vm1440 = vcmp.lt.s32.totalorder %v1439, 2
        %vm1441 = vcmp.eq.s32.totalorder %v1439, 0
        %v1442 = vxor.u32 %v1436, 2147483648
        %v1443 = vsel %vm1441, %v1435, %v1442
        %vm1444 = vcmp.eq.s32.totalorder %v1439, 2
        %v1445 = vxor.u32 %v1435, 2147483648
        %v1446 = vsel %vm1444, %v1445, %v1436
        %v1447 = vsel %vm1440, %v1443, %v1446
        %v1448 = vsel %vm1437, nan, %v1447
        %v1449 = vand.u32 2147483647, %v706
        %vm1450 = vcmp.le.f32.partialorder %v1449, 0.7853982
        %vm1451 = vcmp.lt.s32.totalorder %v706, 0
        %v1452 = vand.u32 %v706, 2139095040
        %v1453 = vshrl.u32 %v1452, 23
        %v1454 = vsub.s32 %v1453, 127
        %v1455 = vand.u32 2147483647, %v706
        %v1456 = vand.u32 %v1455, 8388607
        %v1457 = vor.u32 %v1456, 8388608
        %v1458 = vsub.s32 0, %v1457
        %v1459 = vadd.s32 %v1454, 1
        %vm1460 = vcmp.gt.s32.totalorder %v1459, 0
        %v1461 = vsel %vm1460, %v1459, 0
        %v1462 = vshrl.u32 %v1461, 5
        %v1463 = vand.u32 %v1461, 31
        %v1464 = vsub.s32 32, %v1463
        %v1465 = vshrl.u32 683565275, %v1464
        %v1466 = vshll.u32 683565275, %v1463
        %v1467 = vshrl.u32 2475754826, %v1464
        %v1468 = vor.u32 %v1466, %v1467
        %v1469 = vshll.u32 2475754826, %v1463
        %v1470 = vshrl.u32 2131351028, %v1464
        %v1471 = vor.u32 %v1469, %v1470
        %v1472 = vshll.u32 2131351028, %v1463
        %v1473 = vshrl.u32 2102212464, %v1464
        %v1474 = vor.u32 %v1472, %v1473
        %v1475 = vshll.u32 2102212464, %v1463
        %v1476 = vshrl.u32 920167782, %v1464
        %v1477 = vor.u32 %v1475, %v1476
        %v1478 = vshll.u32 920167782, %v1463
        %v1479 = vshrl.u32 1326507024, %v1464
        %v1480 = vor.u32 %v1478, %v1479
        %vm1481 = vcmp.lt.s32.totalorder %v1462, 1
        %vm1482 = vcmp.lt.s32.totalorder %v1462, 2
        %vm1483 = vcmp.lt.s32.totalorder %v1462, 3
        %vm1484 = vcmp.lt.s32.totalorder %v1462, 4
        %v1485 = vsel %vm1481, %v1465, %v1468
        %v1486 = vsel %vm1484, %v1474, 2102212464
        %v1487 = vsel %vm1483, %v1471, %v1486
        %v1488 = vsel %vm1482, %v1485, %v1487
        %v1489 = vsel %vm1481, %v1468, %v1471
        %v1490 = vsel %vm1484, %v1477, 920167782
        %v1491 = vsel %vm1483, %v1474, %v1490
        %v1492 = vsel %vm1482, %v1489, %v1491
        %v1493 = vsel %vm1481, %v1471, %v1474
        %v1494 = vsel %vm1484, %v1480, 1326507024
        %v1495 = vsel %vm1483, %v1477, %v1494
        %v1496 = vsel %vm1482, %v1493, %v1495
        %v1497 = vshll.u32 %v1457, 8
        %v1498 = vmul.u32.u64.compose %v1497, %v1496
        %v1499 = vextract.low.u32 %v1498
        %v1500 = vextract.high.u32 %v1498
        %v1501 = vmul.u32.u64.compose %v1497, %v1492
        %v1502 = vextract.low.u32 %v1501
        %v1503 = vextract.high.u32 %v1501
        %v1504 = vmul.u32 %v1497, %v1488
        %v1505 = vadd.s32 %v1500, %v1502
        %vm1506 = vc.u32 %v1500, %v1502
        %v1507 = vadd.s32 %v1503, 1
        %v1508 = vsel %vm1506, %v1507, %v1503
        %v1509 = vadd.s32 %v1504, %v1508
        %v1510 = vadd.s32 %v1509, 536870912
        %v1511 = vshrl.u32 %v1510, 30
        %v1512 = vshll.u32 %v1511, 30
        %v1513 = vsub.s32 %v1509, %v1512
        %vm1514 = vcmp.lt.s32.totalorder %v1513, 0
        %v1515 = vsub.s32 0, %v1513
        %v1516 = vsel %vm1514, %v1515, %v1513
        %v1517 = vclz %v1516
        %v1518 = vsub.s32 %v1517, 2
        %vm1519 = vcmp.gt.s32.totalorder 0, %v1518
        %v1520 = vsel %vm1519, 0, %v1518
        %v1521 = vsub.s32 32, %v1520
        %v1522 = vshll.u32 %v1513, %v1520
        %v1523 = vshrl.u32 %v1505, %v1521
        %v1524 = vor.u32 %v1522, %v1523
        %v1525 = vsub.s32 4294967266, %v1520
        %v1526 = vadd.s32 %v1525, 127
        %v1527 = vshll.u32 %v1526, 23
        %v1528 = vor.u32 4788187, %v1527
        %v1529 = vand.u32 2147483647, %v1528
        %v1531 = vcvt.s32.f32 %v1524
        %v1532 = vmul.f32 %v1531, %v1529
        %v1533 = vxor.u32 %v1532, 2147483648
        %v1534 = vsel %vm1451, %v1533, %v1532
        %v1535 = vsub.s32 4, %v1511
        %v1536 = vsel %vm1451, %v1535, %v1511
        %v1537 = vsel %vm1450, %v706, %v1534
        %v1538 = vsel %vm1450, 0, %v1536
        %v1539 = vcosq.f32.pop %v1537
        %v1540 = vsinq.f32.pop %v1537
        %vm1541 = vweird.f32 %v706
        %v1542 = vadd.s32 %v1538, 3
        %v1543 = vand.u32 %v1542, 3
        %vm1544 = vcmp.lt.s32.totalorder %v1543, 2
        %vm1545 = vcmp.eq.s32.totalorder %v1543, 0
        %v1546 = vxor.u32 %v1540, 2147483648
        %v1547 = vsel %vm1545, %v1539, %v1546
        %vm1548 = vcmp.eq.s32.totalorder %v1543, 2
        %v1549 = vxor.u32 %v1539, 2147483648
        %v1550 = vsel %vm1548, %v1549, %v1540
        %v1551 = vsel %vm1544, %v1547, %v1550
        %v1552 = vsel %vm1541, nan, %v1551
        %v1553 = vand.u32 2147483647, %v713
        %vm1554 = vcmp.le.f32.partialorder %v1553, 0.7853982
        %vm1555 = vcmp.lt.s32.totalorder %v713, 0
        %v1556 = vand.u32 %v713, 2139095040
        %v1557 = vshrl.u32 %v1556, 23
        %v1558 = vsub.s32 %v1557, 127
        %v1559 = vand.u32 2147483647, %v713
        %v1560 = vand.u32 %v1559, 8388607
        %v1561 = vor.u32 %v1560, 8388608
        %v1562 = vsub.s32 0, %v1561
        %v1563 = vadd.s32 %v1558, 1
        %vm1564 = vcmp.gt.s32.totalorder %v1563, 0
        %v1565 = vsel %vm1564, %v1563, 0
        %v1566 = vshrl.u32 %v1565, 5
        %v1567 = vand.u32 %v1565, 31
        %v1568 = vsub.s32 32, %v1567
        %v1569 = vshrl.u32 683565275, %v1568
        %v1570 = vshll.u32 683565275, %v1567
        %v1571 = vshrl.u32 2475754826, %v1568
        %v1572 = vor.u32 %v1570, %v1571
        %v1573 = vshll.u32 2475754826, %v1567
        %v1574 = vshrl.u32 2131351028, %v1568
        %v1575 = vor.u32 %v1573, %v1574
        %v1576 = vshll.u32 2131351028, %v1567
        %v1577 = vshrl.u32 2102212464, %v1568
        %v1578 = vor.u32 %v1576, %v1577
        %v1579 = vshll.u32 2102212464, %v1567
        %v1580 = vshrl.u32 920167782, %v1568
        %v1581 = vor.u32 %v1579, %v1580
        %v1582 = vshll.u32 920167782, %v1567
        %v1583 = vshrl.u32 1326507024, %v1568
        %v1584 = vor.u32 %v1582, %v1583
        %vm1585 = vcmp.lt.s32.totalorder %v1566, 1
        %vm1586 = vcmp.lt.s32.totalorder %v1566, 2
        %vm1587 = vcmp.lt.s32.totalorder %v1566, 3
        %vm1588 = vcmp.lt.s32.totalorder %v1566, 4
        %v1589 = vsel %vm1585, %v1569, %v1572
        %v1590 = vsel %vm1588, %v1578, 2102212464
        %v1591 = vsel %vm1587, %v1575, %v1590
        %v1592 = vsel %vm1586, %v1589, %v1591
        %v1593 = vsel %vm1585, %v1572, %v1575
        %v1594 = vsel %vm1588, %v1581, 920167782
        %v1595 = vsel %vm1587, %v1578, %v1594
        %v1596 = vsel %vm1586, %v1593, %v1595
        %v1597 = vsel %vm1585, %v1575, %v1578
        %v1598 = vsel %vm1588, %v1584, 1326507024
        %v1599 = vsel %vm1587, %v1581, %v1598
        %v1600 = vsel %vm1586, %v1597, %v1599
        %v1601 = vshll.u32 %v1561, 8
        %v1602 = vmul.u32.u64.compose %v1601, %v1600
        %v1603 = vextract.low.u32 %v1602
        %v1604 = vextract.high.u32 %v1602
        %v1605 = vmul.u32.u64.compose %v1601, %v1596
        %v1606 = vextract.low.u32 %v1605
        %v1607 = vextract.high.u32 %v1605
        %v1608 = vmul.u32 %v1601, %v1592
        %v1609 = vadd.s32 %v1604, %v1606
        %vm1610 = vc.u32 %v1604, %v1606
        %v1611 = vadd.s32 %v1607, 1
        %v1612 = vsel %vm1610, %v1611, %v1607
        %v1613 = vadd.s32 %v1608, %v1612
        %v1614 = vadd.s32 %v1613, 536870912
        %v1615 = vshrl.u32 %v1614, 30
        %v1616 = vshll.u32 %v1615, 30
        %v1617 = vsub.s32 %v1613, %v1616
        %vm1618 = vcmp.lt.s32.totalorder %v1617, 0
        %v1619 = vsub.s32 0, %v1617
        %v1620 = vsel %vm1618, %v1619, %v1617
        %v1621 = vclz %v1620
        %v1622 = vsub.s32 %v1621, 2
        %vm1623 = vcmp.gt.s32.totalorder 0, %v1622
        %v1624 = vsel %vm1623, 0, %v1622
        %v1625 = vsub.s32 32, %v1624
        %v1626 = vshll.u32 %v1617, %v1624
        %v1627 = vshrl.u32 %v1609, %v1625
        %v1628 = vor.u32 %v1626, %v1627
        %v1629 = vsub.s32 4294967266, %v1624
        %v1630 = vadd.s32 %v1629, 127
        %v1631 = vshll.u32 %v1630, 23
        %v1632 = vor.u32 4788187, %v1631
        %v1633 = vand.u32 2147483647, %v1632
        %v1635 = vcvt.s32.f32 %v1628
        %v1636 = vmul.f32 %v1635, %v1633
        %v1637 = vxor.u32 %v1636, 2147483648
        %v1638 = vsel %vm1555, %v1637, %v1636
        %v1639 = vsub.s32 4, %v1615
        %v1640 = vsel %vm1555, %v1639, %v1615
        %v1641 = vsel %vm1554, %v713, %v1638
        %v1642 = vsel %vm1554, 0, %v1640
        %v1643 = vcosq.f32.pop %v1641
        %v1644 = vsinq.f32.pop %v1641
        %vm1645 = vweird.f32 %v713
        %v1646 = vadd.s32 %v1642, 3
        %v1647 = vand.u32 %v1646, 3
        %vm1648 = vcmp.lt.s32.totalorder %v1647, 2
        %vm1649 = vcmp.eq.s32.totalorder %v1647, 0
        %v1650 = vxor.u32 %v1644, 2147483648
        %v1651 = vsel %vm1649, %v1643, %v1650
        %vm1652 = vcmp.eq.s32.totalorder %v1647, 2
        %v1653 = vxor.u32 %v1643, 2147483648
        %v1654 = vsel %vm1652, %v1653, %v1644
        %v1655 = vsel %vm1648, %v1651, %v1654
        %v1656 = vsel %vm1645, nan, %v1655
        %v1657 = vand.u32 2147483647, %v714
        %vm1658 = vcmp.le.f32.partialorder %v1657, 0.7853982
        %vm1659 = vcmp.lt.s32.totalorder %v714, 0
        %v1660 = vand.u32 %v714, 2139095040
        %v1661 = vshrl.u32 %v1660, 23
        %v1662 = vsub.s32 %v1661, 127
        %v1663 = vand.u32 2147483647, %v714
        %v1664 = vand.u32 %v1663, 8388607
        %v1665 = vor.u32 %v1664, 8388608
        %v1666 = vsub.s32 0, %v1665
        %v1667 = vadd.s32 %v1662, 1
        %vm1668 = vcmp.gt.s32.totalorder %v1667, 0
        %v1669 = vsel %vm1668, %v1667, 0
        %v1670 = vshrl.u32 %v1669, 5
        %v1671 = vand.u32 %v1669, 31
        %v1672 = vsub.s32 32, %v1671
        %v1673 = vshrl.u32 683565275, %v1672
        %v1674 = vshll.u32 683565275, %v1671
        %v1675 = vshrl.u32 2475754826, %v1672
        %v1676 = vor.u32 %v1674, %v1675
        %v1677 = vshll.u32 2475754826, %v1671
        %v1678 = vshrl.u32 2131351028, %v1672
        %v1679 = vor.u32 %v1677, %v1678
        %v1680 = vshll.u32 2131351028, %v1671
        %v1681 = vshrl.u32 2102212464, %v1672
        %v1682 = vor.u32 %v1680, %v1681
        %v1683 = vshll.u32 2102212464, %v1671
        %v1684 = vshrl.u32 920167782, %v1672
        %v1685 = vor.u32 %v1683, %v1684
        %v1686 = vshll.u32 920167782, %v1671
        %v1687 = vshrl.u32 1326507024, %v1672
        %v1688 = vor.u32 %v1686, %v1687
        %vm1689 = vcmp.lt.s32.totalorder %v1670, 1
        %vm1690 = vcmp.lt.s32.totalorder %v1670, 2
        %vm1691 = vcmp.lt.s32.totalorder %v1670, 3
        %vm1692 = vcmp.lt.s32.totalorder %v1670, 4
        %v1693 = vsel %vm1689, %v1673, %v1676
        %v1694 = vsel %vm1692, %v1682, 2102212464
        %v1695 = vsel %vm1691, %v1679, %v1694
        %v1696 = vsel %vm1690, %v1693, %v1695
        %v1697 = vsel %vm1689, %v1676, %v1679
        %v1698 = vsel %vm1692, %v1685, 920167782
        %v1699 = vsel %vm1691, %v1682, %v1698
        %v1700 = vsel %vm1690, %v1697, %v1699
        %v1701 = vsel %vm1689, %v1679, %v1682
        %v1702 = vsel %vm1692, %v1688, 1326507024
        %v1703 = vsel %vm1691, %v1685, %v1702
        %v1704 = vsel %vm1690, %v1701, %v1703
        %v1705 = vshll.u32 %v1665, 8
        %v1706 = vmul.u32.u64.compose %v1705, %v1704
        %v1707 = vextract.low.u32 %v1706
        %v1708 = vextract.high.u32 %v1706
        %v1709 = vmul.u32.u64.compose %v1705, %v1700
        %v1710 = vextract.low.u32 %v1709
        %v1711 = vextract.high.u32 %v1709
        %v1712 = vmul.u32 %v1705, %v1696
        %v1713 = vadd.s32 %v1708, %v1710
        %vm1714 = vc.u32 %v1708, %v1710
        %v1715 = vadd.s32 %v1711, 1
        %v1716 = vsel %vm1714, %v1715, %v1711
        %v1717 = vadd.s32 %v1712, %v1716
        %v1718 = vadd.s32 %v1717, 536870912
        %v1719 = vshrl.u32 %v1718, 30
        %v1720 = vshll.u32 %v1719, 30
        %v1721 = vsub.s32 %v1717, %v1720
        %vm1722 = vcmp.lt.s32.totalorder %v1721, 0
        %v1723 = vsub.s32 0, %v1721
        %v1724 = vsel %vm1722, %v1723, %v1721
        %v1725 = vclz %v1724
        %v1726 = vsub.s32 %v1725, 2
        %vm1727 = vcmp.gt.s32.totalorder 0, %v1726
        %v1728 = vsel %vm1727, 0, %v1726
        %v1729 = vsub.s32 32, %v1728
        %v1730 = vshll.u32 %v1721, %v1728
        %v1731 = vshrl.u32 %v1713, %v1729
        %v1732 = vor.u32 %v1730, %v1731
        %v1733 = vsub.s32 4294967266, %v1728
        %v1734 = vadd.s32 %v1733, 127
        %v1735 = vshll.u32 %v1734, 23
        %v1736 = vor.u32 4788187, %v1735
        %v1737 = vand.u32 2147483647, %v1736
        %v1739 = vcvt.s32.f32 %v1732
        %v1740 = vmul.f32 %v1739, %v1737
        %v1741 = vxor.u32 %v1740, 2147483648
        %v1742 = vsel %vm1659, %v1741, %v1740
        %v1743 = vsub.s32 4, %v1719
        %v1744 = vsel %vm1659, %v1743, %v1719
        %v1745 = vsel %vm1658, %v714, %v1742
        %v1746 = vsel %vm1658, 0, %v1744
        %v1747 = vcosq.f32.pop %v1745
        %v1748 = vsinq.f32.pop %v1745
        %vm1749 = vweird.f32 %v714
        %v1750 = vadd.s32 %v1746, 3
        %v1751 = vand.u32 %v1750, 3
        %vm1752 = vcmp.lt.s32.totalorder %v1751, 2
        %vm1753 = vcmp.eq.s32.totalorder %v1751, 0
        %v1754 = vxor.u32 %v1748, 2147483648
        %v1755 = vsel %vm1753, %v1747, %v1754
        %vm1756 = vcmp.eq.s32.totalorder %v1751, 2
        %v1757 = vxor.u32 %v1747, 2147483648
        %v1758 = vsel %vm1756, %v1757, %v1748
        %v1759 = vsel %vm1752, %v1755, %v1758
        %v1760 = vsel %vm1749, nan, %v1759
        %v1761 = vand.u32 2147483647, %v715
        %vm1762 = vcmp.le.f32.partialorder %v1761, 0.7853982
        %vm1763 = vcmp.lt.s32.totalorder %v715, 0
        %v1764 = vand.u32 %v715, 2139095040
        %v1765 = vshrl.u32 %v1764, 23
        %v1766 = vsub.s32 %v1765, 127
        %v1767 = vand.u32 2147483647, %v715
        %v1768 = vand.u32 %v1767, 8388607
        %v1769 = vor.u32 %v1768, 8388608
        %v1770 = vsub.s32 0, %v1769
        %v1771 = vadd.s32 %v1766, 1
        %vm1772 = vcmp.gt.s32.totalorder %v1771, 0
        %v1773 = vsel %vm1772, %v1771, 0
        %v1774 = vshrl.u32 %v1773, 5
        %v1775 = vand.u32 %v1773, 31
        %v1776 = vsub.s32 32, %v1775
        %v1777 = vshrl.u32 683565275, %v1776
        %v1778 = vshll.u32 683565275, %v1775
        %v1779 = vshrl.u32 2475754826, %v1776
        %v1780 = vor.u32 %v1778, %v1779
        %v1781 = vshll.u32 2475754826, %v1775
        %v1782 = vshrl.u32 2131351028, %v1776
        %v1783 = vor.u32 %v1781, %v1782
        %v1784 = vshll.u32 2131351028, %v1775
        %v1785 = vshrl.u32 2102212464, %v1776
        %v1786 = vor.u32 %v1784, %v1785
        %v1787 = vshll.u32 2102212464, %v1775
        %v1788 = vshrl.u32 920167782, %v1776
        %v1789 = vor.u32 %v1787, %v1788
        %v1790 = vshll.u32 920167782, %v1775
        %v1791 = vshrl.u32 1326507024, %v1776
        %v1792 = vor.u32 %v1790, %v1791
        %vm1793 = vcmp.lt.s32.totalorder %v1774, 1
        %vm1794 = vcmp.lt.s32.totalorder %v1774, 2
        %vm1795 = vcmp.lt.s32.totalorder %v1774, 3
        %vm1796 = vcmp.lt.s32.totalorder %v1774, 4
        %v1797 = vsel %vm1793, %v1777, %v1780
        %v1798 = vsel %vm1796, %v1786, 2102212464
        %v1799 = vsel %vm1795, %v1783, %v1798
        %v1800 = vsel %vm1794, %v1797, %v1799
        %v1801 = vsel %vm1793, %v1780, %v1783
        %v1802 = vsel %vm1796, %v1789, 920167782
        %v1803 = vsel %vm1795, %v1786, %v1802
        %v1804 = vsel %vm1794, %v1801, %v1803
        %v1805 = vsel %vm1793, %v1783, %v1786
        %v1806 = vsel %vm1796, %v1792, 1326507024
        %v1807 = vsel %vm1795, %v1789, %v1806
        %v1808 = vsel %vm1794, %v1805, %v1807
        %v1809 = vshll.u32 %v1769, 8
        %v1810 = vmul.u32.u64.compose %v1809, %v1808
        %v1811 = vextract.low.u32 %v1810
        %v1812 = vextract.high.u32 %v1810
        %v1813 = vmul.u32.u64.compose %v1809, %v1804
        %v1814 = vextract.low.u32 %v1813
        %v1815 = vextract.high.u32 %v1813
        %v1816 = vmul.u32 %v1809, %v1800
        %v1817 = vadd.s32 %v1812, %v1814
        %vm1818 = vc.u32 %v1812, %v1814
        %v1819 = vadd.s32 %v1815, 1
        %v1820 = vsel %vm1818, %v1819, %v1815
        %v1821 = vadd.s32 %v1816, %v1820
        %v1822 = vadd.s32 %v1821, 536870912
        %v1823 = vshrl.u32 %v1822, 30
        %v1824 = vshll.u32 %v1823, 30
        %v1825 = vsub.s32 %v1821, %v1824
        %vm1826 = vcmp.lt.s32.totalorder %v1825, 0
        %v1827 = vsub.s32 0, %v1825
        %v1828 = vsel %vm1826, %v1827, %v1825
        %v1829 = vclz %v1828
        %v1830 = vsub.s32 %v1829, 2
        %vm1831 = vcmp.gt.s32.totalorder 0, %v1830
        %v1832 = vsel %vm1831, 0, %v1830
        %v1833 = vsub.s32 32, %v1832
        %v1834 = vshll.u32 %v1825, %v1832
        %v1835 = vshrl.u32 %v1817, %v1833
        %v1836 = vor.u32 %v1834, %v1835
        %v1837 = vsub.s32 4294967266, %v1832
        %v1838 = vadd.s32 %v1837, 127
        %v1839 = vshll.u32 %v1838, 23
        %v1840 = vor.u32 4788187, %v1839
        %v1841 = vand.u32 2147483647, %v1840
        %v1843 = vcvt.s32.f32 %v1836
        %v1844 = vmul.f32 %v1843, %v1841
        %v1845 = vxor.u32 %v1844, 2147483648
        %v1846 = vsel %vm1763, %v1845, %v1844
        %v1847 = vsub.s32 4, %v1823
        %v1848 = vsel %vm1763, %v1847, %v1823
        %v1849 = vsel %vm1762, %v715, %v1846
        %v1850 = vsel %vm1762, 0, %v1848
        %v1851 = vcosq.f32.pop %v1849
        %v1852 = vsinq.f32.pop %v1849
        %vm1853 = vweird.f32 %v715
        %v1854 = vadd.s32 %v1850, 3
        %v1855 = vand.u32 %v1854, 3
        %vm1856 = vcmp.lt.s32.totalorder %v1855, 2
        %vm1857 = vcmp.eq.s32.totalorder %v1855, 0
        %v1858 = vxor.u32 %v1852, 2147483648
        %v1859 = vsel %vm1857, %v1851, %v1858
        %vm1860 = vcmp.eq.s32.totalorder %v1855, 2
        %v1861 = vxor.u32 %v1851, 2147483648
        %v1862 = vsel %vm1860, %v1861, %v1852
        %v1863 = vsel %vm1856, %v1859, %v1862
        %v1864 = vsel %vm1853, nan, %v1863
        %v1865 = vand.u32 2147483647, %v716
        %vm1866 = vcmp.le.f32.partialorder %v1865, 0.7853982
        %vm1867 = vcmp.lt.s32.totalorder %v716, 0
        %v1868 = vand.u32 %v716, 2139095040
        %v1869 = vshrl.u32 %v1868, 23
        %v1870 = vsub.s32 %v1869, 127
        %v1871 = vand.u32 2147483647, %v716
        %v1872 = vand.u32 %v1871, 8388607
        %v1873 = vor.u32 %v1872, 8388608
        %v1874 = vsub.s32 0, %v1873
        %v1875 = vadd.s32 %v1870, 1
        %vm1876 = vcmp.gt.s32.totalorder %v1875, 0
        %v1877 = vsel %vm1876, %v1875, 0
        %v1878 = vshrl.u32 %v1877, 5
        %v1879 = vand.u32 %v1877, 31
        %v1880 = vsub.s32 32, %v1879
        %v1881 = vshrl.u32 683565275, %v1880
        %v1882 = vshll.u32 683565275, %v1879
        %v1883 = vshrl.u32 2475754826, %v1880
        %v1884 = vor.u32 %v1882, %v1883
        %v1885 = vshll.u32 2475754826, %v1879
        %v1886 = vshrl.u32 2131351028, %v1880
        %v1887 = vor.u32 %v1885, %v1886
        %v1888 = vshll.u32 2131351028, %v1879
        %v1889 = vshrl.u32 2102212464, %v1880
        %v1890 = vor.u32 %v1888, %v1889
        %v1891 = vshll.u32 2102212464, %v1879
        %v1892 = vshrl.u32 920167782, %v1880
        %v1893 = vor.u32 %v1891, %v1892
        %v1894 = vshll.u32 920167782, %v1879
        %v1895 = vshrl.u32 1326507024, %v1880
        %v1896 = vor.u32 %v1894, %v1895
        %vm1897 = vcmp.lt.s32.totalorder %v1878, 1
        %vm1898 = vcmp.lt.s32.totalorder %v1878, 2
        %vm1899 = vcmp.lt.s32.totalorder %v1878, 3
        %vm1900 = vcmp.lt.s32.totalorder %v1878, 4
        %v1901 = vsel %vm1897, %v1881, %v1884
        %v1902 = vsel %vm1900, %v1890, 2102212464
        %v1903 = vsel %vm1899, %v1887, %v1902
        %v1904 = vsel %vm1898, %v1901, %v1903
        %v1905 = vsel %vm1897, %v1884, %v1887
        %v1906 = vsel %vm1900, %v1893, 920167782
        %v1907 = vsel %vm1899, %v1890, %v1906
        %v1908 = vsel %vm1898, %v1905, %v1907
        %v1909 = vsel %vm1897, %v1887, %v1890
        %v1910 = vsel %vm1900, %v1896, 1326507024
        %v1911 = vsel %vm1899, %v1893, %v1910
        %v1912 = vsel %vm1898, %v1909, %v1911
        %v1913 = vshll.u32 %v1873, 8
        %v1914 = vmul.u32.u64.compose %v1913, %v1912
        %v1915 = vextract.low.u32 %v1914
        %v1916 = vextract.high.u32 %v1914
        %v1917 = vmul.u32.u64.compose %v1913, %v1908
        %v1918 = vextract.low.u32 %v1917
        %v1919 = vextract.high.u32 %v1917
        %v1920 = vmul.u32 %v1913, %v1904
        %v1921 = vadd.s32 %v1916, %v1918
        %vm1922 = vc.u32 %v1916, %v1918
        %v1923 = vadd.s32 %v1919, 1
        %v1924 = vsel %vm1922, %v1923, %v1919
        %v1925 = vadd.s32 %v1920, %v1924
        %v1926 = vadd.s32 %v1925, 536870912
        %v1927 = vshrl.u32 %v1926, 30
        %v1928 = vshll.u32 %v1927, 30
        %v1929 = vsub.s32 %v1925, %v1928
        %vm1930 = vcmp.lt.s32.totalorder %v1929, 0
        %v1931 = vsub.s32 0, %v1929
        %v1932 = vsel %vm1930, %v1931, %v1929
        %v1933 = vclz %v1932
        %v1934 = vsub.s32 %v1933, 2
        %vm1935 = vcmp.gt.s32.totalorder 0, %v1934
        %v1936 = vsel %vm1935, 0, %v1934
        %v1937 = vsub.s32 32, %v1936
        %v1938 = vshll.u32 %v1929, %v1936
        %v1939 = vshrl.u32 %v1921, %v1937
        %v1940 = vor.u32 %v1938, %v1939
        %v1941 = vsub.s32 4294967266, %v1936
        %v1942 = vadd.s32 %v1941, 127
        %v1943 = vshll.u32 %v1942, 23
        %v1944 = vor.u32 4788187, %v1943
        %v1945 = vand.u32 2147483647, %v1944
        %v1947 = vcvt.s32.f32 %v1940
        %v1948 = vmul.f32 %v1947, %v1945
        %v1949 = vxor.u32 %v1948, 2147483648
        %v1950 = vsel %vm1867, %v1949, %v1948
        %v1951 = vsub.s32 4, %v1927
        %v1952 = vsel %vm1867, %v1951, %v1927
        %v1953 = vsel %vm1866, %v716, %v1950
        %v1954 = vsel %vm1866, 0, %v1952
        %v1955 = vcosq.f32.pop %v1953
        %v1956 = vsinq.f32.pop %v1953
        %vm1957 = vweird.f32 %v716
        %v1958 = vadd.s32 %v1954, 3
        %v1959 = vand.u32 %v1958, 3
        %vm1960 = vcmp.lt.s32.totalorder %v1959, 2
        %vm1961 = vcmp.eq.s32.totalorder %v1959, 0
        %v1962 = vxor.u32 %v1956, 2147483648
        %v1963 = vsel %vm1961, %v1955, %v1962
        %vm1964 = vcmp.eq.s32.totalorder %v1959, 2
        %v1965 = vxor.u32 %v1955, 2147483648
        %v1966 = vsel %vm1964, %v1965, %v1956
        %v1967 = vsel %vm1960, %v1963, %v1966
        %v1968 = vsel %vm1957, nan, %v1967
        %v1969 = vand.u32 2147483647, %v717
        %vm1970 = vcmp.le.f32.partialorder %v1969, 0.7853982
        %vm1971 = vcmp.lt.s32.totalorder %v717, 0
        %v1972 = vand.u32 %v717, 2139095040
        %v1973 = vshrl.u32 %v1972, 23
        %v1974 = vsub.s32 %v1973, 127
        %v1975 = vand.u32 2147483647, %v717
        %v1976 = vand.u32 %v1975, 8388607
        %v1977 = vor.u32 %v1976, 8388608
        %v1978 = vsub.s32 0, %v1977
        %v1979 = vadd.s32 %v1974, 1
        %vm1980 = vcmp.gt.s32.totalorder %v1979, 0
        %v1981 = vsel %vm1980, %v1979, 0
        %v1982 = vshrl.u32 %v1981, 5
        %v1983 = vand.u32 %v1981, 31
        %v1984 = vsub.s32 32, %v1983
        %v1985 = vshrl.u32 683565275, %v1984
        %v1986 = vshll.u32 683565275, %v1983
        %v1987 = vshrl.u32 2475754826, %v1984
        %v1988 = vor.u32 %v1986, %v1987
        %v1989 = vshll.u32 2475754826, %v1983
        %v1990 = vshrl.u32 2131351028, %v1984
        %v1991 = vor.u32 %v1989, %v1990
        %v1992 = vshll.u32 2131351028, %v1983
        %v1993 = vshrl.u32 2102212464, %v1984
        %v1994 = vor.u32 %v1992, %v1993
        %v1995 = vshll.u32 2102212464, %v1983
        %v1996 = vshrl.u32 920167782, %v1984
        %v1997 = vor.u32 %v1995, %v1996
        %v1998 = vshll.u32 920167782, %v1983
        %v1999 = vshrl.u32 1326507024, %v1984
        %v2000 = vor.u32 %v1998, %v1999
        %vm2001 = vcmp.lt.s32.totalorder %v1982, 1
        %vm2002 = vcmp.lt.s32.totalorder %v1982, 2
        %vm2003 = vcmp.lt.s32.totalorder %v1982, 3
        %vm2004 = vcmp.lt.s32.totalorder %v1982, 4
        %v2005 = vsel %vm2001, %v1985, %v1988
        %v2006 = vsel %vm2004, %v1994, 2102212464
        %v2007 = vsel %vm2003, %v1991, %v2006
        %v2008 = vsel %vm2002, %v2005, %v2007
        %v2009 = vsel %vm2001, %v1988, %v1991
        %v2010 = vsel %vm2004, %v1997, 920167782
        %v2011 = vsel %vm2003, %v1994, %v2010
        %v2012 = vsel %vm2002, %v2009, %v2011
        %v2013 = vsel %vm2001, %v1991, %v1994
        %v2014 = vsel %vm2004, %v2000, 1326507024
        %v2015 = vsel %vm2003, %v1997, %v2014
        %v2016 = vsel %vm2002, %v2013, %v2015
        %v2017 = vshll.u32 %v1977, 8
        %v2018 = vmul.u32.u64.compose %v2017, %v2016
        %v2019 = vextract.low.u32 %v2018
        %v2020 = vextract.high.u32 %v2018
        %v2021 = vmul.u32.u64.compose %v2017, %v2012
        %v2022 = vextract.low.u32 %v2021
        %v2023 = vextract.high.u32 %v2021
        %v2024 = vmul.u32 %v2017, %v2008
        %v2025 = vadd.s32 %v2020, %v2022
        %vm2026 = vc.u32 %v2020, %v2022
        %v2027 = vadd.s32 %v2023, 1
        %v2028 = vsel %vm2026, %v2027, %v2023
        %v2029 = vadd.s32 %v2024, %v2028
        %v2030 = vadd.s32 %v2029, 536870912
        %v2031 = vshrl.u32 %v2030, 30
        %v2032 = vshll.u32 %v2031, 30
        %v2033 = vsub.s32 %v2029, %v2032
        %vm2034 = vcmp.lt.s32.totalorder %v2033, 0
        %v2035 = vsub.s32 0, %v2033
        %v2036 = vsel %vm2034, %v2035, %v2033
        %v2037 = vclz %v2036
        %v2038 = vsub.s32 %v2037, 2
        %vm2039 = vcmp.gt.s32.totalorder 0, %v2038
        %v2040 = vsel %vm2039, 0, %v2038
        %v2041 = vsub.s32 32, %v2040
        %v2042 = vshll.u32 %v2033, %v2040
        %v2043 = vshrl.u32 %v2025, %v2041
        %v2044 = vor.u32 %v2042, %v2043
        %v2045 = vsub.s32 4294967266, %v2040
        %v2046 = vadd.s32 %v2045, 127
        %v2047 = vshll.u32 %v2046, 23
        %v2048 = vor.u32 4788187, %v2047
        %v2049 = vand.u32 2147483647, %v2048
        %v2051 = vcvt.s32.f32 %v2044
        %v2052 = vmul.f32 %v2051, %v2049
        %v2053 = vxor.u32 %v2052, 2147483648
        %v2054 = vsel %vm1971, %v2053, %v2052
        %v2055 = vsub.s32 4, %v2031
        %v2056 = vsel %vm1971, %v2055, %v2031
        %v2057 = vsel %vm1970, %v717, %v2054
        %v2058 = vsel %vm1970, 0, %v2056
        %v2059 = vcosq.f32.pop %v2057
        %v2060 = vsinq.f32.pop %v2057
        %vm2061 = vweird.f32 %v717
        %v2062 = vadd.s32 %v2058, 3
        %v2063 = vand.u32 %v2062, 3
        %vm2064 = vcmp.lt.s32.totalorder %v2063, 2
        %vm2065 = vcmp.eq.s32.totalorder %v2063, 0
        %v2066 = vxor.u32 %v2060, 2147483648
        %v2067 = vsel %vm2065, %v2059, %v2066
        %vm2068 = vcmp.eq.s32.totalorder %v2063, 2
        %v2069 = vxor.u32 %v2059, 2147483648
        %v2070 = vsel %vm2068, %v2069, %v2060
        %v2071 = vsel %vm2064, %v2067, %v2070
        %v2072 = vsel %vm2061, nan, %v2071
        %v2073 = vand.u32 2147483647, %v718
        %vm2074 = vcmp.le.f32.partialorder %v2073, 0.7853982
        %vm2075 = vcmp.lt.s32.totalorder %v718, 0
        %v2076 = vand.u32 %v718, 2139095040
        %v2077 = vshrl.u32 %v2076, 23
        %v2078 = vsub.s32 %v2077, 127
        %v2079 = vand.u32 2147483647, %v718
        %v2080 = vand.u32 %v2079, 8388607
        %v2081 = vor.u32 %v2080, 8388608
        %v2082 = vsub.s32 0, %v2081
        %v2083 = vadd.s32 %v2078, 1
        %vm2084 = vcmp.gt.s32.totalorder %v2083, 0
        %v2085 = vsel %vm2084, %v2083, 0
        %v2086 = vshrl.u32 %v2085, 5
        %v2087 = vand.u32 %v2085, 31
        %v2088 = vsub.s32 32, %v2087
        %v2089 = vshrl.u32 683565275, %v2088
        %v2090 = vshll.u32 683565275, %v2087
        %v2091 = vshrl.u32 2475754826, %v2088
        %v2092 = vor.u32 %v2090, %v2091
        %v2093 = vshll.u32 2475754826, %v2087
        %v2094 = vshrl.u32 2131351028, %v2088
        %v2095 = vor.u32 %v2093, %v2094
        %v2096 = vshll.u32 2131351028, %v2087
        %v2097 = vshrl.u32 2102212464, %v2088
        %v2098 = vor.u32 %v2096, %v2097
        %v2099 = vshll.u32 2102212464, %v2087
        %v2100 = vshrl.u32 920167782, %v2088
        %v2101 = vor.u32 %v2099, %v2100
        %v2102 = vshll.u32 920167782, %v2087
        %v2103 = vshrl.u32 1326507024, %v2088
        %v2104 = vor.u32 %v2102, %v2103
        %vm2105 = vcmp.lt.s32.totalorder %v2086, 1
        %vm2106 = vcmp.lt.s32.totalorder %v2086, 2
        %vm2107 = vcmp.lt.s32.totalorder %v2086, 3
        %vm2108 = vcmp.lt.s32.totalorder %v2086, 4
        %v2109 = vsel %vm2105, %v2089, %v2092
        %v2110 = vsel %vm2108, %v2098, 2102212464
        %v2111 = vsel %vm2107, %v2095, %v2110
        %v2112 = vsel %vm2106, %v2109, %v2111
        %v2113 = vsel %vm2105, %v2092, %v2095
        %v2114 = vsel %vm2108, %v2101, 920167782
        %v2115 = vsel %vm2107, %v2098, %v2114
        %v2116 = vsel %vm2106, %v2113, %v2115
        %v2117 = vsel %vm2105, %v2095, %v2098
        %v2118 = vsel %vm2108, %v2104, 1326507024
        %v2119 = vsel %vm2107, %v2101, %v2118
        %v2120 = vsel %vm2106, %v2117, %v2119
        %v2121 = vshll.u32 %v2081, 8
        %v2122 = vmul.u32.u64.compose %v2121, %v2120
        %v2123 = vextract.low.u32 %v2122
        %v2124 = vextract.high.u32 %v2122
        %v2125 = vmul.u32.u64.compose %v2121, %v2116
        %v2126 = vextract.low.u32 %v2125
        %v2127 = vextract.high.u32 %v2125
        %v2128 = vmul.u32 %v2121, %v2112
        %v2129 = vadd.s32 %v2124, %v2126
        %vm2130 = vc.u32 %v2124, %v2126
        %v2131 = vadd.s32 %v2127, 1
        %v2132 = vsel %vm2130, %v2131, %v2127
        %v2133 = vadd.s32 %v2128, %v2132
        %v2134 = vadd.s32 %v2133, 536870912
        %v2135 = vshrl.u32 %v2134, 30
        %v2136 = vshll.u32 %v2135, 30
        %v2137 = vsub.s32 %v2133, %v2136
        %vm2138 = vcmp.lt.s32.totalorder %v2137, 0
        %v2139 = vsub.s32 0, %v2137
        %v2140 = vsel %vm2138, %v2139, %v2137
        %v2141 = vclz %v2140
        %v2142 = vsub.s32 %v2141, 2
        %vm2143 = vcmp.gt.s32.totalorder 0, %v2142
        %v2144 = vsel %vm2143, 0, %v2142
        %v2145 = vsub.s32 32, %v2144
        %v2146 = vshll.u32 %v2137, %v2144
        %v2147 = vshrl.u32 %v2129, %v2145
        %v2148 = vor.u32 %v2146, %v2147
        %v2149 = vsub.s32 4294967266, %v2144
        %v2150 = vadd.s32 %v2149, 127
        %v2151 = vshll.u32 %v2150, 23
        %v2152 = vor.u32 4788187, %v2151
        %v2153 = vand.u32 2147483647, %v2152
        %v2155 = vcvt.s32.f32 %v2148
        %v2156 = vmul.f32 %v2155, %v2153
        %v2157 = vxor.u32 %v2156, 2147483648
        %v2158 = vsel %vm2075, %v2157, %v2156
        %v2159 = vsub.s32 4, %v2135
        %v2160 = vsel %vm2075, %v2159, %v2135
        %v2161 = vsel %vm2074, %v718, %v2158
        %v2162 = vsel %vm2074, 0, %v2160
        %v2163 = vcosq.f32.pop %v2161
        %v2164 = vsinq.f32.pop %v2161
        %vm2165 = vweird.f32 %v718
        %v2166 = vadd.s32 %v2162, 3
        %v2167 = vand.u32 %v2166, 3
        %vm2168 = vcmp.lt.s32.totalorder %v2167, 2
        %vm2169 = vcmp.eq.s32.totalorder %v2167, 0
        %v2170 = vxor.u32 %v2164, 2147483648
        %v2171 = vsel %vm2169, %v2163, %v2170
        %vm2172 = vcmp.eq.s32.totalorder %v2167, 2
        %v2173 = vxor.u32 %v2163, 2147483648
        %v2174 = vsel %vm2172, %v2173, %v2164
        %v2175 = vsel %vm2168, %v2171, %v2174
        %v2176 = vsel %vm2165, nan, %v2175
        %v2177 = vand.u32 2147483647, %v719
        %vm2178 = vcmp.le.f32.partialorder %v2177, 0.7853982
        %vm2179 = vcmp.lt.s32.totalorder %v719, 0
        %v2180 = vand.u32 %v719, 2139095040
        %v2181 = vshrl.u32 %v2180, 23
        %v2182 = vsub.s32 %v2181, 127
        %v2183 = vand.u32 2147483647, %v719
        %v2184 = vand.u32 %v2183, 8388607
        %v2185 = vor.u32 %v2184, 8388608
        %v2186 = vsub.s32 0, %v2185
        %v2187 = vadd.s32 %v2182, 1
        %vm2188 = vcmp.gt.s32.totalorder %v2187, 0
        %v2189 = vsel %vm2188, %v2187, 0
        %v2190 = vshrl.u32 %v2189, 5
        %v2191 = vand.u32 %v2189, 31
        %v2192 = vsub.s32 32, %v2191
        %v2193 = vshrl.u32 683565275, %v2192
        %v2194 = vshll.u32 683565275, %v2191
        %v2195 = vshrl.u32 2475754826, %v2192
        %v2196 = vor.u32 %v2194, %v2195
        %v2197 = vshll.u32 2475754826, %v2191
        %v2198 = vshrl.u32 2131351028, %v2192
        %v2199 = vor.u32 %v2197, %v2198
        %v2200 = vshll.u32 2131351028, %v2191
        %v2201 = vshrl.u32 2102212464, %v2192
        %v2202 = vor.u32 %v2200, %v2201
        %v2203 = vshll.u32 2102212464, %v2191
        %v2204 = vshrl.u32 920167782, %v2192
        %v2205 = vor.u32 %v2203, %v2204
        %v2206 = vshll.u32 920167782, %v2191
        %v2207 = vshrl.u32 1326507024, %v2192
        %v2208 = vor.u32 %v2206, %v2207
        %vm2209 = vcmp.lt.s32.totalorder %v2190, 1
        %vm2210 = vcmp.lt.s32.totalorder %v2190, 2
        %vm2211 = vcmp.lt.s32.totalorder %v2190, 3
        %vm2212 = vcmp.lt.s32.totalorder %v2190, 4
        %v2213 = vsel %vm2209, %v2193, %v2196
        %v2214 = vsel %vm2212, %v2202, 2102212464
        %v2215 = vsel %vm2211, %v2199, %v2214
        %v2216 = vsel %vm2210, %v2213, %v2215
        %v2217 = vsel %vm2209, %v2196, %v2199
        %v2218 = vsel %vm2212, %v2205, 920167782
        %v2219 = vsel %vm2211, %v2202, %v2218
        %v2220 = vsel %vm2210, %v2217, %v2219
        %v2221 = vsel %vm2209, %v2199, %v2202
        %v2222 = vsel %vm2212, %v2208, 1326507024
        %v2223 = vsel %vm2211, %v2205, %v2222
        %v2224 = vsel %vm2210, %v2221, %v2223
        %v2225 = vshll.u32 %v2185, 8
        %v2226 = vmul.u32.u64.compose %v2225, %v2224
        %v2227 = vextract.low.u32 %v2226
        %v2228 = vextract.high.u32 %v2226
        %v2229 = vmul.u32.u64.compose %v2225, %v2220
        %v2230 = vextract.low.u32 %v2229
        %v2231 = vextract.high.u32 %v2229
        %v2232 = vmul.u32 %v2225, %v2216
        %v2233 = vadd.s32 %v2228, %v2230
        %vm2234 = vc.u32 %v2228, %v2230
        %v2235 = vadd.s32 %v2231, 1
        %v2236 = vsel %vm2234, %v2235, %v2231
        %v2237 = vadd.s32 %v2232, %v2236
        %v2238 = vadd.s32 %v2237, 536870912
        %v2239 = vshrl.u32 %v2238, 30
        %v2240 = vshll.u32 %v2239, 30
        %v2241 = vsub.s32 %v2237, %v2240
        %vm2242 = vcmp.lt.s32.totalorder %v2241, 0
        %v2243 = vsub.s32 0, %v2241
        %v2244 = vsel %vm2242, %v2243, %v2241
        %v2245 = vclz %v2244
        %v2246 = vsub.s32 %v2245, 2
        %vm2247 = vcmp.gt.s32.totalorder 0, %v2246
        %v2248 = vsel %vm2247, 0, %v2246
        %v2249 = vsub.s32 32, %v2248
        %v2250 = vshll.u32 %v2241, %v2248
        %v2251 = vshrl.u32 %v2233, %v2249
        %v2252 = vor.u32 %v2250, %v2251
        %v2253 = vsub.s32 4294967266, %v2248
        %v2254 = vadd.s32 %v2253, 127
        %v2255 = vshll.u32 %v2254, 23
        %v2256 = vor.u32 4788187, %v2255
        %v2257 = vand.u32 2147483647, %v2256
        %v2259 = vcvt.s32.f32 %v2252
        %v2260 = vmul.f32 %v2259, %v2257
        %v2261 = vxor.u32 %v2260, 2147483648
        %v2262 = vsel %vm2179, %v2261, %v2260
        %v2263 = vsub.s32 4, %v2239
        %v2264 = vsel %vm2179, %v2263, %v2239
        %v2265 = vsel %vm2178, %v719, %v2262
        %v2266 = vsel %vm2178, 0, %v2264
        %v2267 = vcosq.f32.pop %v2265
        %v2268 = vsinq.f32.pop %v2265
        %vm2269 = vweird.f32 %v719
        %v2270 = vadd.s32 %v2266, 3
        %v2271 = vand.u32 %v2270, 3
        %vm2272 = vcmp.lt.s32.totalorder %v2271, 2
        %vm2273 = vcmp.eq.s32.totalorder %v2271, 0
        %v2274 = vxor.u32 %v2268, 2147483648
        %v2275 = vsel %vm2273, %v2267, %v2274
        %vm2276 = vcmp.eq.s32.totalorder %v2271, 2
        %v2277 = vxor.u32 %v2267, 2147483648
        %v2278 = vsel %vm2276, %v2277, %v2268
        %v2279 = vsel %vm2272, %v2275, %v2278
        %v2280 = vsel %vm2269, nan, %v2279
        %v2281 = vand.u32 2147483647, %v720
        %vm2282 = vcmp.le.f32.partialorder %v2281, 0.7853982
        %vm2283 = vcmp.lt.s32.totalorder %v720, 0
        %v2284 = vand.u32 %v720, 2139095040
        %v2285 = vshrl.u32 %v2284, 23
        %v2286 = vsub.s32 %v2285, 127
        %v2287 = vand.u32 2147483647, %v720
        %v2288 = vand.u32 %v2287, 8388607
        %v2289 = vor.u32 %v2288, 8388608
        %v2290 = vsub.s32 0, %v2289
        %v2291 = vadd.s32 %v2286, 1
        %vm2292 = vcmp.gt.s32.totalorder %v2291, 0
        %v2293 = vsel %vm2292, %v2291, 0
        %v2294 = vshrl.u32 %v2293, 5
        %v2295 = vand.u32 %v2293, 31
        %v2296 = vsub.s32 32, %v2295
        %v2297 = vshrl.u32 683565275, %v2296
        %v2298 = vshll.u32 683565275, %v2295
        %v2299 = vshrl.u32 2475754826, %v2296
        %v2300 = vor.u32 %v2298, %v2299
        %v2301 = vshll.u32 2475754826, %v2295
        %v2302 = vshrl.u32 2131351028, %v2296
        %v2303 = vor.u32 %v2301, %v2302
        %v2304 = vshll.u32 2131351028, %v2295
        %v2305 = vshrl.u32 2102212464, %v2296
        %v2306 = vor.u32 %v2304, %v2305
        %v2307 = vshll.u32 2102212464, %v2295
        %v2308 = vshrl.u32 920167782, %v2296
        %v2309 = vor.u32 %v2307, %v2308
        %v2310 = vshll.u32 920167782, %v2295
        %v2311 = vshrl.u32 1326507024, %v2296
        %v2312 = vor.u32 %v2310, %v2311
        %vm2313 = vcmp.lt.s32.totalorder %v2294, 1
        %vm2314 = vcmp.lt.s32.totalorder %v2294, 2
        %vm2315 = vcmp.lt.s32.totalorder %v2294, 3
        %vm2316 = vcmp.lt.s32.totalorder %v2294, 4
        %v2317 = vsel %vm2313, %v2297, %v2300
        %v2318 = vsel %vm2316, %v2306, 2102212464
        %v2319 = vsel %vm2315, %v2303, %v2318
        %v2320 = vsel %vm2314, %v2317, %v2319
        %v2321 = vsel %vm2313, %v2300, %v2303
        %v2322 = vsel %vm2316, %v2309, 920167782
        %v2323 = vsel %vm2315, %v2306, %v2322
        %v2324 = vsel %vm2314, %v2321, %v2323
        %v2325 = vsel %vm2313, %v2303, %v2306
        %v2326 = vsel %vm2316, %v2312, 1326507024
        %v2327 = vsel %vm2315, %v2309, %v2326
        %v2328 = vsel %vm2314, %v2325, %v2327
        %v2329 = vshll.u32 %v2289, 8
        %v2330 = vmul.u32.u64.compose %v2329, %v2328
        %v2331 = vextract.low.u32 %v2330
        %v2332 = vextract.high.u32 %v2330
        %v2333 = vmul.u32.u64.compose %v2329, %v2324
        %v2334 = vextract.low.u32 %v2333
        %v2335 = vextract.high.u32 %v2333
        %v2336 = vmul.u32 %v2329, %v2320
        %v2337 = vadd.s32 %v2332, %v2334
        %vm2338 = vc.u32 %v2332, %v2334
        %v2339 = vadd.s32 %v2335, 1
        %v2340 = vsel %vm2338, %v2339, %v2335
        %v2341 = vadd.s32 %v2336, %v2340
        %v2342 = vadd.s32 %v2341, 536870912
        %v2343 = vshrl.u32 %v2342, 30
        %v2344 = vshll.u32 %v2343, 30
        %v2345 = vsub.s32 %v2341, %v2344
        %vm2346 = vcmp.lt.s32.totalorder %v2345, 0
        %v2347 = vsub.s32 0, %v2345
        %v2348 = vsel %vm2346, %v2347, %v2345
        %v2349 = vclz %v2348
        %v2350 = vsub.s32 %v2349, 2
        %vm2351 = vcmp.gt.s32.totalorder 0, %v2350
        %v2352 = vsel %vm2351, 0, %v2350
        %v2353 = vsub.s32 32, %v2352
        %v2354 = vshll.u32 %v2345, %v2352
        %v2355 = vshrl.u32 %v2337, %v2353
        %v2356 = vor.u32 %v2354, %v2355
        %v2357 = vsub.s32 4294967266, %v2352
        %v2358 = vadd.s32 %v2357, 127
        %v2359 = vshll.u32 %v2358, 23
        %v2360 = vor.u32 4788187, %v2359
        %v2361 = vand.u32 2147483647, %v2360
        %v2363 = vcvt.s32.f32 %v2356
        %v2364 = vmul.f32 %v2363, %v2361
        %v2365 = vxor.u32 %v2364, 2147483648
        %v2366 = vsel %vm2283, %v2365, %v2364
        %v2367 = vsub.s32 4, %v2343
        %v2368 = vsel %vm2283, %v2367, %v2343
        %v2369 = vsel %vm2282, %v720, %v2366
        %v2370 = vsel %vm2282, 0, %v2368
        %v2371 = vcosq.f32.pop %v2369
        %v2372 = vsinq.f32.pop %v2369
        %vm2373 = vweird.f32 %v720
        %v2374 = vadd.s32 %v2370, 3
        %v2375 = vand.u32 %v2374, 3
        %vm2376 = vcmp.lt.s32.totalorder %v2375, 2
        %vm2377 = vcmp.eq.s32.totalorder %v2375, 0
        %v2378 = vxor.u32 %v2372, 2147483648
        %v2379 = vsel %vm2377, %v2371, %v2378
        %vm2380 = vcmp.eq.s32.totalorder %v2375, 2
        %v2381 = vxor.u32 %v2371, 2147483648
        %v2382 = vsel %vm2380, %v2381, %v2372
        %v2383 = vsel %vm2376, %v2379, %v2382
        %v2384 = vsel %vm2373, nan, %v2383
        %v2385 = vand.u32 2147483647, %v688
        %vm2386 = vcmp.le.f32.partialorder %v2385, 0.7853982
        %vm2387 = vcmp.lt.s32.totalorder %v688, 0
        %v2388 = vand.u32 %v688, 2139095040
        %v2389 = vshrl.u32 %v2388, 23
        %v2390 = vsub.s32 %v2389, 127
        %v2391 = vand.u32 2147483647, %v688
        %v2392 = vand.u32 %v2391, 8388607
        %v2393 = vor.u32 %v2392, 8388608
        %v2394 = vsub.s32 0, %v2393
        %v2395 = vadd.s32 %v2390, 1
        %vm2396 = vcmp.gt.s32.totalorder %v2395, 0
        %v2397 = vsel %vm2396, %v2395, 0
        %v2398 = vshrl.u32 %v2397, 5
        %v2399 = vand.u32 %v2397, 31
        %v2400 = vsub.s32 32, %v2399
        %v2401 = vshrl.u32 683565275, %v2400
        %v2402 = vshll.u32 683565275, %v2399
        %v2403 = vshrl.u32 2475754826, %v2400
        %v2404 = vor.u32 %v2402, %v2403
        %v2405 = vshll.u32 2475754826, %v2399
        %v2406 = vshrl.u32 2131351028, %v2400
        %v2407 = vor.u32 %v2405, %v2406
        %v2408 = vshll.u32 2131351028, %v2399
        %v2409 = vshrl.u32 2102212464, %v2400
        %v2410 = vor.u32 %v2408, %v2409
        %v2411 = vshll.u32 2102212464, %v2399
        %v2412 = vshrl.u32 920167782, %v2400
        %v2413 = vor.u32 %v2411, %v2412
        %v2414 = vshll.u32 920167782, %v2399
        %v2415 = vshrl.u32 1326507024, %v2400
        %v2416 = vor.u32 %v2414, %v2415
        %vm2417 = vcmp.lt.s32.totalorder %v2398, 1
        %vm2418 = vcmp.lt.s32.totalorder %v2398, 2
        %vm2419 = vcmp.lt.s32.totalorder %v2398, 3
        %vm2420 = vcmp.lt.s32.totalorder %v2398, 4
        %v2421 = vsel %vm2417, %v2401, %v2404
        %v2422 = vsel %vm2420, %v2410, 2102212464
        %v2423 = vsel %vm2419, %v2407, %v2422
        %v2424 = vsel %vm2418, %v2421, %v2423
        %v2425 = vsel %vm2417, %v2404, %v2407
        %v2426 = vsel %vm2420, %v2413, 920167782
        %v2427 = vsel %vm2419, %v2410, %v2426
        %v2428 = vsel %vm2418, %v2425, %v2427
        %v2429 = vsel %vm2417, %v2407, %v2410
        %v2430 = vsel %vm2420, %v2416, 1326507024
        %v2431 = vsel %vm2419, %v2413, %v2430
        %v2432 = vsel %vm2418, %v2429, %v2431
        %v2433 = vshll.u32 %v2393, 8
        %v2434 = vmul.u32.u64.compose %v2433, %v2432
        %v2435 = vextract.low.u32 %v2434
        %v2436 = vextract.high.u32 %v2434
        %v2437 = vmul.u32.u64.compose %v2433, %v2428
        %v2438 = vextract.low.u32 %v2437
        %v2439 = vextract.high.u32 %v2437
        %v2440 = vmul.u32 %v2433, %v2424
        %v2441 = vadd.s32 %v2436, %v2438
        %vm2442 = vc.u32 %v2436, %v2438
        %v2443 = vadd.s32 %v2439, 1
        %v2444 = vsel %vm2442, %v2443, %v2439
        %v2445 = vadd.s32 %v2440, %v2444
        %v2446 = vadd.s32 %v2445, 536870912
        %v2447 = vshrl.u32 %v2446, 30
        %v2448 = vshll.u32 %v2447, 30
        %v2449 = vsub.s32 %v2445, %v2448
        %vm2450 = vcmp.lt.s32.totalorder %v2449, 0
        %v2451 = vsub.s32 0, %v2449
        %v2452 = vsel %vm2450, %v2451, %v2449
        %v2453 = vclz %v2452
        %v2454 = vsub.s32 %v2453, 2
        %vm2455 = vcmp.gt.s32.totalorder 0, %v2454
        %v2456 = vsel %vm2455, 0, %v2454
        %v2457 = vsub.s32 32, %v2456
        %v2458 = vshll.u32 %v2449, %v2456
        %v2459 = vshrl.u32 %v2441, %v2457
        %v2460 = vor.u32 %v2458, %v2459
        %v2461 = vsub.s32 4294967266, %v2456
        %v2462 = vadd.s32 %v2461, 127
        %v2463 = vshll.u32 %v2462, 23
        %v2464 = vor.u32 4788187, %v2463
        %v2465 = vand.u32 2147483647, %v2464
        %v2467 = vcvt.s32.f32 %v2460
        %v2468 = vmul.f32 %v2467, %v2465
        %v2469 = vxor.u32 %v2468, 2147483648
        %v2470 = vsel %vm2387, %v2469, %v2468
        %v2471 = vsub.s32 4, %v2447
        %v2472 = vsel %vm2387, %v2471, %v2447
        %v2473 = vsel %vm2386, %v688, %v2470
        %v2474 = vsel %vm2386, 0, %v2472
        %v2475 = vcosq.f32.pop %v2473
        %v2476 = vsinq.f32.pop %v2473
        %vm2477 = vweird.f32 %v688
        %v2478 = vand.u32 %v2474, 3
        %vm2479 = vcmp.lt.s32.totalorder %v2478, 2
        %vm2480 = vcmp.eq.s32.totalorder %v2478, 0
        %v2481 = vxor.u32 %v2476, 2147483648
        %v2482 = vsel %vm2480, %v2475, %v2481
        %vm2483 = vcmp.eq.s32.totalorder %v2478, 2
        %v2484 = vxor.u32 %v2475, 2147483648
        %v2485 = vsel %vm2483, %v2484, %v2476
        %v2486 = vsel %vm2479, %v2482, %v2485
        %v2487 = vsel %vm2477, nan, %v2486
        %v2488 = vand.u32 2147483647, %v689
        %vm2489 = vcmp.le.f32.partialorder %v2488, 0.7853982
        %vm2490 = vcmp.lt.s32.totalorder %v689, 0
        %v2491 = vand.u32 %v689, 2139095040
        %v2492 = vshrl.u32 %v2491, 23
        %v2493 = vsub.s32 %v2492, 127
        %v2494 = vand.u32 2147483647, %v689
        %v2495 = vand.u32 %v2494, 8388607
        %v2496 = vor.u32 %v2495, 8388608
        %v2497 = vsub.s32 0, %v2496
        %v2498 = vadd.s32 %v2493, 1
        %vm2499 = vcmp.gt.s32.totalorder %v2498, 0
        %v2500 = vsel %vm2499, %v2498, 0
        %v2501 = vshrl.u32 %v2500, 5
        %v2502 = vand.u32 %v2500, 31
        %v2503 = vsub.s32 32, %v2502
        %v2504 = vshrl.u32 683565275, %v2503
        %v2505 = vshll.u32 683565275, %v2502
        %v2506 = vshrl.u32 2475754826, %v2503
        %v2507 = vor.u32 %v2505, %v2506
        %v2508 = vshll.u32 2475754826, %v2502
        %v2509 = vshrl.u32 2131351028, %v2503
        %v2510 = vor.u32 %v2508, %v2509
        %v2511 = vshll.u32 2131351028, %v2502
        %v2512 = vshrl.u32 2102212464, %v2503
        %v2513 = vor.u32 %v2511, %v2512
        %v2514 = vshll.u32 2102212464, %v2502
        %v2515 = vshrl.u32 920167782, %v2503
        %v2516 = vor.u32 %v2514, %v2515
        %v2517 = vshll.u32 920167782, %v2502
        %v2518 = vshrl.u32 1326507024, %v2503
        %v2519 = vor.u32 %v2517, %v2518
        %vm2520 = vcmp.lt.s32.totalorder %v2501, 1
        %vm2521 = vcmp.lt.s32.totalorder %v2501, 2
        %vm2522 = vcmp.lt.s32.totalorder %v2501, 3
        %vm2523 = vcmp.lt.s32.totalorder %v2501, 4
        %v2524 = vsel %vm2520, %v2504, %v2507
        %v2525 = vsel %vm2523, %v2513, 2102212464
        %v2526 = vsel %vm2522, %v2510, %v2525
        %v2527 = vsel %vm2521, %v2524, %v2526
        %v2528 = vsel %vm2520, %v2507, %v2510
        %v2529 = vsel %vm2523, %v2516, 920167782
        %v2530 = vsel %vm2522, %v2513, %v2529
        %v2531 = vsel %vm2521, %v2528, %v2530
        %v2532 = vsel %vm2520, %v2510, %v2513
        %v2533 = vsel %vm2523, %v2519, 1326507024
        %v2534 = vsel %vm2522, %v2516, %v2533
        %v2535 = vsel %vm2521, %v2532, %v2534
        %v2536 = vshll.u32 %v2496, 8
        %v2537 = vmul.u32.u64.compose %v2536, %v2535
        %v2538 = vextract.low.u32 %v2537
        %v2539 = vextract.high.u32 %v2537
        %v2540 = vmul.u32.u64.compose %v2536, %v2531
        %v2541 = vextract.low.u32 %v2540
        %v2542 = vextract.high.u32 %v2540
        %v2543 = vmul.u32 %v2536, %v2527
        %v2544 = vadd.s32 %v2539, %v2541
        %vm2545 = vc.u32 %v2539, %v2541
        %v2546 = vadd.s32 %v2542, 1
        %v2547 = vsel %vm2545, %v2546, %v2542
        %v2548 = vadd.s32 %v2543, %v2547
        %v2549 = vadd.s32 %v2548, 536870912
        %v2550 = vshrl.u32 %v2549, 30
        %v2551 = vshll.u32 %v2550, 30
        %v2552 = vsub.s32 %v2548, %v2551
        %vm2553 = vcmp.lt.s32.totalorder %v2552, 0
        %v2554 = vsub.s32 0, %v2552
        %v2555 = vsel %vm2553, %v2554, %v2552
        %v2556 = vclz %v2555
        %v2557 = vsub.s32 %v2556, 2
        %vm2558 = vcmp.gt.s32.totalorder 0, %v2557
        %v2559 = vsel %vm2558, 0, %v2557
        %v2560 = vsub.s32 32, %v2559
        %v2561 = vshll.u32 %v2552, %v2559
        %v2562 = vshrl.u32 %v2544, %v2560
        %v2563 = vor.u32 %v2561, %v2562
        %v2564 = vsub.s32 4294967266, %v2559
        %v2565 = vadd.s32 %v2564, 127
        %v2566 = vshll.u32 %v2565, 23
        %v2567 = vor.u32 4788187, %v2566
        %v2568 = vand.u32 2147483647, %v2567
        %v2570 = vcvt.s32.f32 %v2563
        %v2571 = vmul.f32 %v2570, %v2568
        %v2572 = vxor.u32 %v2571, 2147483648
        %v2573 = vsel %vm2490, %v2572, %v2571
        %v2574 = vsub.s32 4, %v2550
        %v2575 = vsel %vm2490, %v2574, %v2550
        %v2576 = vsel %vm2489, %v689, %v2573
        %v2577 = vsel %vm2489, 0, %v2575
        %v2578 = vcosq.f32.pop %v2576
        %v2579 = vsinq.f32.pop %v2576
        %vm2580 = vweird.f32 %v689
        %v2581 = vand.u32 %v2577, 3
        %vm2582 = vcmp.lt.s32.totalorder %v2581, 2
        %vm2583 = vcmp.eq.s32.totalorder %v2581, 0
        %v2584 = vxor.u32 %v2579, 2147483648
        %v2585 = vsel %vm2583, %v2578, %v2584
        %vm2586 = vcmp.eq.s32.totalorder %v2581, 2
        %v2587 = vxor.u32 %v2578, 2147483648
        %v2588 = vsel %vm2586, %v2587, %v2579
        %v2589 = vsel %vm2582, %v2585, %v2588
        %v2590 = vsel %vm2580, nan, %v2589
        %v2591 = vand.u32 2147483647, %v690
        %vm2592 = vcmp.le.f32.partialorder %v2591, 0.7853982
        %vm2593 = vcmp.lt.s32.totalorder %v690, 0
        %v2594 = vand.u32 %v690, 2139095040
        %v2595 = vshrl.u32 %v2594, 23
        %v2596 = vsub.s32 %v2595, 127
        %v2597 = vand.u32 2147483647, %v690
        %v2598 = vand.u32 %v2597, 8388607
        %v2599 = vor.u32 %v2598, 8388608
        %v2600 = vsub.s32 0, %v2599
        %v2601 = vadd.s32 %v2596, 1
        %vm2602 = vcmp.gt.s32.totalorder %v2601, 0
        %v2603 = vsel %vm2602, %v2601, 0
        %v2604 = vshrl.u32 %v2603, 5
        %v2605 = vand.u32 %v2603, 31
        %v2606 = vsub.s32 32, %v2605
        %v2607 = vshrl.u32 683565275, %v2606
        %v2608 = vshll.u32 683565275, %v2605
        %v2609 = vshrl.u32 2475754826, %v2606
        %v2610 = vor.u32 %v2608, %v2609
        %v2611 = vshll.u32 2475754826, %v2605
        %v2612 = vshrl.u32 2131351028, %v2606
        %v2613 = vor.u32 %v2611, %v2612
        %v2614 = vshll.u32 2131351028, %v2605
        %v2615 = vshrl.u32 2102212464, %v2606
        %v2616 = vor.u32 %v2614, %v2615
        %v2617 = vshll.u32 2102212464, %v2605
        %v2618 = vshrl.u32 920167782, %v2606
        %v2619 = vor.u32 %v2617, %v2618
        %v2620 = vshll.u32 920167782, %v2605
        %v2621 = vshrl.u32 1326507024, %v2606
        %v2622 = vor.u32 %v2620, %v2621
        %vm2623 = vcmp.lt.s32.totalorder %v2604, 1
        %vm2624 = vcmp.lt.s32.totalorder %v2604, 2
        %vm2625 = vcmp.lt.s32.totalorder %v2604, 3
        %vm2626 = vcmp.lt.s32.totalorder %v2604, 4
        %v2627 = vsel %vm2623, %v2607, %v2610
        %v2628 = vsel %vm2626, %v2616, 2102212464
        %v2629 = vsel %vm2625, %v2613, %v2628
        %v2630 = vsel %vm2624, %v2627, %v2629
        %v2631 = vsel %vm2623, %v2610, %v2613
        %v2632 = vsel %vm2626, %v2619, 920167782
        %v2633 = vsel %vm2625, %v2616, %v2632
        %v2634 = vsel %vm2624, %v2631, %v2633
        %v2635 = vsel %vm2623, %v2613, %v2616
        %v2636 = vsel %vm2626, %v2622, 1326507024
        %v2637 = vsel %vm2625, %v2619, %v2636
        %v2638 = vsel %vm2624, %v2635, %v2637
        %v2639 = vshll.u32 %v2599, 8
        %v2640 = vmul.u32.u64.compose %v2639, %v2638
        %v2641 = vextract.low.u32 %v2640
        %v2642 = vextract.high.u32 %v2640
        %v2643 = vmul.u32.u64.compose %v2639, %v2634
        %v2644 = vextract.low.u32 %v2643
        %v2645 = vextract.high.u32 %v2643
        %v2646 = vmul.u32 %v2639, %v2630
        %v2647 = vadd.s32 %v2642, %v2644
        %vm2648 = vc.u32 %v2642, %v2644
        %v2649 = vadd.s32 %v2645, 1
        %v2650 = vsel %vm2648, %v2649, %v2645
        %v2651 = vadd.s32 %v2646, %v2650
        %v2652 = vadd.s32 %v2651, 536870912
        %v2653 = vshrl.u32 %v2652, 30
        %v2654 = vshll.u32 %v2653, 30
        %v2655 = vsub.s32 %v2651, %v2654
        %vm2656 = vcmp.lt.s32.totalorder %v2655, 0
        %v2657 = vsub.s32 0, %v2655
        %v2658 = vsel %vm2656, %v2657, %v2655
        %v2659 = vclz %v2658
        %v2660 = vsub.s32 %v2659, 2
        %vm2661 = vcmp.gt.s32.totalorder 0, %v2660
        %v2662 = vsel %vm2661, 0, %v2660
        %v2663 = vsub.s32 32, %v2662
        %v2664 = vshll.u32 %v2655, %v2662
        %v2665 = vshrl.u32 %v2647, %v2663
        %v2666 = vor.u32 %v2664, %v2665
        %v2667 = vsub.s32 4294967266, %v2662
        %v2668 = vadd.s32 %v2667, 127
        %v2669 = vshll.u32 %v2668, 23
        %v2670 = vor.u32 4788187, %v2669
        %v2671 = vand.u32 2147483647, %v2670
        %v2673 = vcvt.s32.f32 %v2666
        %v2674 = vmul.f32 %v2673, %v2671
        %v2675 = vxor.u32 %v2674, 2147483648
        %v2676 = vsel %vm2593, %v2675, %v2674
        %v2677 = vsub.s32 4, %v2653
        %v2678 = vsel %vm2593, %v2677, %v2653
        %v2679 = vsel %vm2592, %v690, %v2676
        %v2680 = vsel %vm2592, 0, %v2678
        %v2681 = vcosq.f32.pop %v2679
        %v2682 = vsinq.f32.pop %v2679
        %vm2683 = vweird.f32 %v690
        %v2684 = vand.u32 %v2680, 3
        %vm2685 = vcmp.lt.s32.totalorder %v2684, 2
        %vm2686 = vcmp.eq.s32.totalorder %v2684, 0
        %v2687 = vxor.u32 %v2682, 2147483648
        %v2688 = vsel %vm2686, %v2681, %v2687
        %vm2689 = vcmp.eq.s32.totalorder %v2684, 2
        %v2690 = vxor.u32 %v2681, 2147483648
        %v2691 = vsel %vm2689, %v2690, %v2682
        %v2692 = vsel %vm2685, %v2688, %v2691
        %v2693 = vsel %vm2683, nan, %v2692
        %v2694 = vand.u32 2147483647, %v691
        %vm2695 = vcmp.le.f32.partialorder %v2694, 0.7853982
        %vm2696 = vcmp.lt.s32.totalorder %v691, 0
        %v2697 = vand.u32 %v691, 2139095040
        %v2698 = vshrl.u32 %v2697, 23
        %v2699 = vsub.s32 %v2698, 127
        %v2700 = vand.u32 2147483647, %v691
        %v2701 = vand.u32 %v2700, 8388607
        %v2702 = vor.u32 %v2701, 8388608
        %v2703 = vsub.s32 0, %v2702
        %v2704 = vadd.s32 %v2699, 1
        %vm2705 = vcmp.gt.s32.totalorder %v2704, 0
        %v2706 = vsel %vm2705, %v2704, 0
        %v2707 = vshrl.u32 %v2706, 5
        %v2708 = vand.u32 %v2706, 31
        %v2709 = vsub.s32 32, %v2708
        %v2710 = vshrl.u32 683565275, %v2709
        %v2711 = vshll.u32 683565275, %v2708
        %v2712 = vshrl.u32 2475754826, %v2709
        %v2713 = vor.u32 %v2711, %v2712
        %v2714 = vshll.u32 2475754826, %v2708
        %v2715 = vshrl.u32 2131351028, %v2709
        %v2716 = vor.u32 %v2714, %v2715
        %v2717 = vshll.u32 2131351028, %v2708
        %v2718 = vshrl.u32 2102212464, %v2709
        %v2719 = vor.u32 %v2717, %v2718
        %v2720 = vshll.u32 2102212464, %v2708
        %v2721 = vshrl.u32 920167782, %v2709
        %v2722 = vor.u32 %v2720, %v2721
        %v2723 = vshll.u32 920167782, %v2708
        %v2724 = vshrl.u32 1326507024, %v2709
        %v2725 = vor.u32 %v2723, %v2724
        %vm2726 = vcmp.lt.s32.totalorder %v2707, 1
        %vm2727 = vcmp.lt.s32.totalorder %v2707, 2
        %vm2728 = vcmp.lt.s32.totalorder %v2707, 3
        %vm2729 = vcmp.lt.s32.totalorder %v2707, 4
        %v2730 = vsel %vm2726, %v2710, %v2713
        %v2731 = vsel %vm2729, %v2719, 2102212464
        %v2732 = vsel %vm2728, %v2716, %v2731
        %v2733 = vsel %vm2727, %v2730, %v2732
        %v2734 = vsel %vm2726, %v2713, %v2716
        %v2735 = vsel %vm2729, %v2722, 920167782
        %v2736 = vsel %vm2728, %v2719, %v2735
        %v2737 = vsel %vm2727, %v2734, %v2736
        %v2738 = vsel %vm2726, %v2716, %v2719
        %v2739 = vsel %vm2729, %v2725, 1326507024
        %v2740 = vsel %vm2728, %v2722, %v2739
        %v2741 = vsel %vm2727, %v2738, %v2740
        %v2742 = vshll.u32 %v2702, 8
        %v2743 = vmul.u32.u64.compose %v2742, %v2741
        %v2744 = vextract.low.u32 %v2743
        %v2745 = vextract.high.u32 %v2743
        %v2746 = vmul.u32.u64.compose %v2742, %v2737
        %v2747 = vextract.low.u32 %v2746
        %v2748 = vextract.high.u32 %v2746
        %v2749 = vmul.u32 %v2742, %v2733
        %v2750 = vadd.s32 %v2745, %v2747
        %vm2751 = vc.u32 %v2745, %v2747
        %v2752 = vadd.s32 %v2748, 1
        %v2753 = vsel %vm2751, %v2752, %v2748
        %v2754 = vadd.s32 %v2749, %v2753
        %v2755 = vadd.s32 %v2754, 536870912
        %v2756 = vshrl.u32 %v2755, 30
        %v2757 = vshll.u32 %v2756, 30
        %v2758 = vsub.s32 %v2754, %v2757
        %vm2759 = vcmp.lt.s32.totalorder %v2758, 0
        %v2760 = vsub.s32 0, %v2758
        %v2761 = vsel %vm2759, %v2760, %v2758
        %v2762 = vclz %v2761
        %v2763 = vsub.s32 %v2762, 2
        %vm2764 = vcmp.gt.s32.totalorder 0, %v2763
        %v2765 = vsel %vm2764, 0, %v2763
        %v2766 = vsub.s32 32, %v2765
        %v2767 = vshll.u32 %v2758, %v2765
        %v2768 = vshrl.u32 %v2750, %v2766
        %v2769 = vor.u32 %v2767, %v2768
        %v2770 = vsub.s32 4294967266, %v2765
        %v2771 = vadd.s32 %v2770, 127
        %v2772 = vshll.u32 %v2771, 23
        %v2773 = vor.u32 4788187, %v2772
        %v2774 = vand.u32 2147483647, %v2773
        %v2776 = vcvt.s32.f32 %v2769
        %v2777 = vmul.f32 %v2776, %v2774
        %v2778 = vxor.u32 %v2777, 2147483648
        %v2779 = vsel %vm2696, %v2778, %v2777
        %v2780 = vsub.s32 4, %v2756
        %v2781 = vsel %vm2696, %v2780, %v2756
        %v2782 = vsel %vm2695, %v691, %v2779
        %v2783 = vsel %vm2695, 0, %v2781
        %v2784 = vcosq.f32.pop %v2782
        %v2785 = vsinq.f32.pop %v2782
        %vm2786 = vweird.f32 %v691
        %v2787 = vand.u32 %v2783, 3
        %vm2788 = vcmp.lt.s32.totalorder %v2787, 2
        %vm2789 = vcmp.eq.s32.totalorder %v2787, 0
        %v2790 = vxor.u32 %v2785, 2147483648
        %v2791 = vsel %vm2789, %v2784, %v2790
        %vm2792 = vcmp.eq.s32.totalorder %v2787, 2
        %v2793 = vxor.u32 %v2784, 2147483648
        %v2794 = vsel %vm2792, %v2793, %v2785
        %v2795 = vsel %vm2788, %v2791, %v2794
        %v2796 = vsel %vm2786, nan, %v2795
        %v2797 = vand.u32 2147483647, %v703
        %vm2798 = vcmp.le.f32.partialorder %v2797, 0.7853982
        %vm2799 = vcmp.lt.s32.totalorder %v703, 0
        %v2800 = vand.u32 %v703, 2139095040
        %v2801 = vshrl.u32 %v2800, 23
        %v2802 = vsub.s32 %v2801, 127
        %v2803 = vand.u32 2147483647, %v703
        %v2804 = vand.u32 %v2803, 8388607
        %v2805 = vor.u32 %v2804, 8388608
        %v2806 = vsub.s32 0, %v2805
        %v2807 = vadd.s32 %v2802, 1
        %vm2808 = vcmp.gt.s32.totalorder %v2807, 0
        %v2809 = vsel %vm2808, %v2807, 0
        %v2810 = vshrl.u32 %v2809, 5
        %v2811 = vand.u32 %v2809, 31
        %v2812 = vsub.s32 32, %v2811
        %v2813 = vshrl.u32 683565275, %v2812
        %v2814 = vshll.u32 683565275, %v2811
        %v2815 = vshrl.u32 2475754826, %v2812
        %v2816 = vor.u32 %v2814, %v2815
        %v2817 = vshll.u32 2475754826, %v2811
        %v2818 = vshrl.u32 2131351028, %v2812
        %v2819 = vor.u32 %v2817, %v2818
        %v2820 = vshll.u32 2131351028, %v2811
        %v2821 = vshrl.u32 2102212464, %v2812
        %v2822 = vor.u32 %v2820, %v2821
        %v2823 = vshll.u32 2102212464, %v2811
        %v2824 = vshrl.u32 920167782, %v2812
        %v2825 = vor.u32 %v2823, %v2824
        %v2826 = vshll.u32 920167782, %v2811
        %v2827 = vshrl.u32 1326507024, %v2812
        %v2828 = vor.u32 %v2826, %v2827
        %vm2829 = vcmp.lt.s32.totalorder %v2810, 1
        %vm2830 = vcmp.lt.s32.totalorder %v2810, 2
        %vm2831 = vcmp.lt.s32.totalorder %v2810, 3
        %vm2832 = vcmp.lt.s32.totalorder %v2810, 4
        %v2833 = vsel %vm2829, %v2813, %v2816
        %v2834 = vsel %vm2832, %v2822, 2102212464
        %v2835 = vsel %vm2831, %v2819, %v2834
        %v2836 = vsel %vm2830, %v2833, %v2835
        %v2837 = vsel %vm2829, %v2816, %v2819
        %v2838 = vsel %vm2832, %v2825, 920167782
        %v2839 = vsel %vm2831, %v2822, %v2838
        %v2840 = vsel %vm2830, %v2837, %v2839
        %v2841 = vsel %vm2829, %v2819, %v2822
        %v2842 = vsel %vm2832, %v2828, 1326507024
        %v2843 = vsel %vm2831, %v2825, %v2842
        %v2844 = vsel %vm2830, %v2841, %v2843
        %v2845 = vshll.u32 %v2805, 8
        %v2846 = vmul.u32.u64.compose %v2845, %v2844
        %v2847 = vextract.low.u32 %v2846
        %v2848 = vextract.high.u32 %v2846
        %v2849 = vmul.u32.u64.compose %v2845, %v2840
        %v2850 = vextract.low.u32 %v2849
        %v2851 = vextract.high.u32 %v2849
        %v2852 = vmul.u32 %v2845, %v2836
        %v2853 = vadd.s32 %v2848, %v2850
        %vm2854 = vc.u32 %v2848, %v2850
        %v2855 = vadd.s32 %v2851, 1
        %v2856 = vsel %vm2854, %v2855, %v2851
        %v2857 = vadd.s32 %v2852, %v2856
        %v2858 = vadd.s32 %v2857, 536870912
        %v2859 = vshrl.u32 %v2858, 30
        %v2860 = vshll.u32 %v2859, 30
        %v2861 = vsub.s32 %v2857, %v2860
        %vm2862 = vcmp.lt.s32.totalorder %v2861, 0
        %v2863 = vsub.s32 0, %v2861
        %v2864 = vsel %vm2862, %v2863, %v2861
        %v2865 = vclz %v2864
        %v2866 = vsub.s32 %v2865, 2
        %vm2867 = vcmp.gt.s32.totalorder 0, %v2866
        %v2868 = vsel %vm2867, 0, %v2866
        %v2869 = vsub.s32 32, %v2868
        %v2870 = vshll.u32 %v2861, %v2868
        %v2871 = vshrl.u32 %v2853, %v2869
        %v2872 = vor.u32 %v2870, %v2871
        %v2873 = vsub.s32 4294967266, %v2868
        %v2874 = vadd.s32 %v2873, 127
        %v2875 = vshll.u32 %v2874, 23
        %v2876 = vor.u32 4788187, %v2875
        %v2877 = vand.u32 2147483647, %v2876
        %v2879 = vcvt.s32.f32 %v2872
        %v2880 = vmul.f32 %v2879, %v2877
        %v2881 = vxor.u32 %v2880, 2147483648
        %v2882 = vsel %vm2799, %v2881, %v2880
        %v2883 = vsub.s32 4, %v2859
        %v2884 = vsel %vm2799, %v2883, %v2859
        %v2885 = vsel %vm2798, %v703, %v2882
        %v2886 = vsel %vm2798, 0, %v2884
        %v2887 = vcosq.f32.pop %v2885
        %v2888 = vsinq.f32.pop %v2885
        %vm2889 = vweird.f32 %v703
        %v2890 = vand.u32 %v2886, 3
        %vm2891 = vcmp.lt.s32.totalorder %v2890, 2
        %vm2892 = vcmp.eq.s32.totalorder %v2890, 0
        %v2893 = vxor.u32 %v2888, 2147483648
        %v2894 = vsel %vm2892, %v2887, %v2893
        %vm2895 = vcmp.eq.s32.totalorder %v2890, 2
        %v2896 = vxor.u32 %v2887, 2147483648
        %v2897 = vsel %vm2895, %v2896, %v2888
        %v2898 = vsel %vm2891, %v2894, %v2897
        %v2899 = vsel %vm2889, nan, %v2898
        %v2900 = vand.u32 2147483647, %v704
        %vm2901 = vcmp.le.f32.partialorder %v2900, 0.7853982
        %vm2902 = vcmp.lt.s32.totalorder %v704, 0
        %v2903 = vand.u32 %v704, 2139095040
        %v2904 = vshrl.u32 %v2903, 23
        %v2905 = vsub.s32 %v2904, 127
        %v2906 = vand.u32 2147483647, %v704
        %v2907 = vand.u32 %v2906, 8388607
        %v2908 = vor.u32 %v2907, 8388608
        %v2909 = vsub.s32 0, %v2908
        %v2910 = vadd.s32 %v2905, 1
        %vm2911 = vcmp.gt.s32.totalorder %v2910, 0
        %v2912 = vsel %vm2911, %v2910, 0
        %v2913 = vshrl.u32 %v2912, 5
        %v2914 = vand.u32 %v2912, 31
        %v2915 = vsub.s32 32, %v2914
        %v2916 = vshrl.u32 683565275, %v2915
        %v2917 = vshll.u32 683565275, %v2914
        %v2918 = vshrl.u32 2475754826, %v2915
        %v2919 = vor.u32 %v2917, %v2918
        %v2920 = vshll.u32 2475754826, %v2914
        %v2921 = vshrl.u32 2131351028, %v2915
        %v2922 = vor.u32 %v2920, %v2921
        %v2923 = vshll.u32 2131351028, %v2914
        %v2924 = vshrl.u32 2102212464, %v2915
        %v2925 = vor.u32 %v2923, %v2924
        %v2926 = vshll.u32 2102212464, %v2914
        %v2927 = vshrl.u32 920167782, %v2915
        %v2928 = vor.u32 %v2926, %v2927
        %v2929 = vshll.u32 920167782, %v2914
        %v2930 = vshrl.u32 1326507024, %v2915
        %v2931 = vor.u32 %v2929, %v2930
        %vm2932 = vcmp.lt.s32.totalorder %v2913, 1
        %vm2933 = vcmp.lt.s32.totalorder %v2913, 2
        %vm2934 = vcmp.lt.s32.totalorder %v2913, 3
        %vm2935 = vcmp.lt.s32.totalorder %v2913, 4
        %v2936 = vsel %vm2932, %v2916, %v2919
        %v2937 = vsel %vm2935, %v2925, 2102212464
        %v2938 = vsel %vm2934, %v2922, %v2937
        %v2939 = vsel %vm2933, %v2936, %v2938
        %v2940 = vsel %vm2932, %v2919, %v2922
        %v2941 = vsel %vm2935, %v2928, 920167782
        %v2942 = vsel %vm2934, %v2925, %v2941
        %v2943 = vsel %vm2933, %v2940, %v2942
        %v2944 = vsel %vm2932, %v2922, %v2925
        %v2945 = vsel %vm2935, %v2931, 1326507024
        %v2946 = vsel %vm2934, %v2928, %v2945
        %v2947 = vsel %vm2933, %v2944, %v2946
        %v2948 = vshll.u32 %v2908, 8
        %v2949 = vmul.u32.u64.compose %v2948, %v2947
        %v2950 = vextract.low.u32 %v2949
        %v2951 = vextract.high.u32 %v2949
        %v2952 = vmul.u32.u64.compose %v2948, %v2943
        %v2953 = vextract.low.u32 %v2952
        %v2954 = vextract.high.u32 %v2952
        %v2955 = vmul.u32 %v2948, %v2939
        %v2956 = vadd.s32 %v2951, %v2953
        %vm2957 = vc.u32 %v2951, %v2953
        %v2958 = vadd.s32 %v2954, 1
        %v2959 = vsel %vm2957, %v2958, %v2954
        %v2960 = vadd.s32 %v2955, %v2959
        %v2961 = vadd.s32 %v2960, 536870912
        %v2962 = vshrl.u32 %v2961, 30
        %v2963 = vshll.u32 %v2962, 30
        %v2964 = vsub.s32 %v2960, %v2963
        %vm2965 = vcmp.lt.s32.totalorder %v2964, 0
        %v2966 = vsub.s32 0, %v2964
        %v2967 = vsel %vm2965, %v2966, %v2964
        %v2968 = vclz %v2967
        %v2969 = vsub.s32 %v2968, 2
        %vm2970 = vcmp.gt.s32.totalorder 0, %v2969
        %v2971 = vsel %vm2970, 0, %v2969
        %v2972 = vsub.s32 32, %v2971
        %v2973 = vshll.u32 %v2964, %v2971
        %v2974 = vshrl.u32 %v2956, %v2972
        %v2975 = vor.u32 %v2973, %v2974
        %v2976 = vsub.s32 4294967266, %v2971
        %v2977 = vadd.s32 %v2976, 127
        %v2978 = vshll.u32 %v2977, 23
        %v2979 = vor.u32 4788187, %v2978
        %v2980 = vand.u32 2147483647, %v2979
        %v2982 = vcvt.s32.f32 %v2975
        %v2983 = vmul.f32 %v2982, %v2980
        %v2984 = vxor.u32 %v2983, 2147483648
        %v2985 = vsel %vm2902, %v2984, %v2983
        %v2986 = vsub.s32 4, %v2962
        %v2987 = vsel %vm2902, %v2986, %v2962
        %v2988 = vsel %vm2901, %v704, %v2985
        %v2989 = vsel %vm2901, 0, %v2987
        %v2990 = vcosq.f32.pop %v2988
        %v2991 = vsinq.f32.pop %v2988
        %vm2992 = vweird.f32 %v704
        %v2993 = vand.u32 %v2989, 3
        %vm2994 = vcmp.lt.s32.totalorder %v2993, 2
        %vm2995 = vcmp.eq.s32.totalorder %v2993, 0
        %v2996 = vxor.u32 %v2991, 2147483648
        %v2997 = vsel %vm2995, %v2990, %v2996
        %vm2998 = vcmp.eq.s32.totalorder %v2993, 2
        %v2999 = vxor.u32 %v2990, 2147483648
        %v3000 = vsel %vm2998, %v2999, %v2991
        %v3001 = vsel %vm2994, %v2997, %v3000
        %v3002 = vsel %vm2992, nan, %v3001
        %v3003 = vand.u32 2147483647, %v705
        %vm3004 = vcmp.le.f32.partialorder %v3003, 0.7853982
        %vm3005 = vcmp.lt.s32.totalorder %v705, 0
        %v3006 = vand.u32 %v705, 2139095040
        %v3007 = vshrl.u32 %v3006, 23
        %v3008 = vsub.s32 %v3007, 127
        %v3009 = vand.u32 2147483647, %v705
        %v3010 = vand.u32 %v3009, 8388607
        %v3011 = vor.u32 %v3010, 8388608
        %v3012 = vsub.s32 0, %v3011
        %v3013 = vadd.s32 %v3008, 1
        %vm3014 = vcmp.gt.s32.totalorder %v3013, 0
        %v3015 = vsel %vm3014, %v3013, 0
        %v3016 = vshrl.u32 %v3015, 5
        %v3017 = vand.u32 %v3015, 31
        %v3018 = vsub.s32 32, %v3017
        %v3019 = vshrl.u32 683565275, %v3018
        %v3020 = vshll.u32 683565275, %v3017
        %v3021 = vshrl.u32 2475754826, %v3018
        %v3022 = vor.u32 %v3020, %v3021
        %v3023 = vshll.u32 2475754826, %v3017
        %v3024 = vshrl.u32 2131351028, %v3018
        %v3025 = vor.u32 %v3023, %v3024
        %v3026 = vshll.u32 2131351028, %v3017
        %v3027 = vshrl.u32 2102212464, %v3018
        %v3028 = vor.u32 %v3026, %v3027
        %v3029 = vshll.u32 2102212464, %v3017
        %v3030 = vshrl.u32 920167782, %v3018
        %v3031 = vor.u32 %v3029, %v3030
        %v3032 = vshll.u32 920167782, %v3017
        %v3033 = vshrl.u32 1326507024, %v3018
        %v3034 = vor.u32 %v3032, %v3033
        %vm3035 = vcmp.lt.s32.totalorder %v3016, 1
        %vm3036 = vcmp.lt.s32.totalorder %v3016, 2
        %vm3037 = vcmp.lt.s32.totalorder %v3016, 3
        %vm3038 = vcmp.lt.s32.totalorder %v3016, 4
        %v3039 = vsel %vm3035, %v3019, %v3022
        %v3040 = vsel %vm3038, %v3028, 2102212464
        %v3041 = vsel %vm3037, %v3025, %v3040
        %v3042 = vsel %vm3036, %v3039, %v3041
        %v3043 = vsel %vm3035, %v3022, %v3025
        %v3044 = vsel %vm3038, %v3031, 920167782
        %v3045 = vsel %vm3037, %v3028, %v3044
        %v3046 = vsel %vm3036, %v3043, %v3045
        %v3047 = vsel %vm3035, %v3025, %v3028
        %v3048 = vsel %vm3038, %v3034, 1326507024
        %v3049 = vsel %vm3037, %v3031, %v3048
        %v3050 = vsel %vm3036, %v3047, %v3049
        %v3051 = vshll.u32 %v3011, 8
        %v3052 = vmul.u32.u64.compose %v3051, %v3050
        %v3053 = vextract.low.u32 %v3052
        %v3054 = vextract.high.u32 %v3052
        %v3055 = vmul.u32.u64.compose %v3051, %v3046
        %v3056 = vextract.low.u32 %v3055
        %v3057 = vextract.high.u32 %v3055
        %v3058 = vmul.u32 %v3051, %v3042
        %v3059 = vadd.s32 %v3054, %v3056
        %vm3060 = vc.u32 %v3054, %v3056
        %v3061 = vadd.s32 %v3057, 1
        %v3062 = vsel %vm3060, %v3061, %v3057
        %v3063 = vadd.s32 %v3058, %v3062
        %v3064 = vadd.s32 %v3063, 536870912
        %v3065 = vshrl.u32 %v3064, 30
        %v3066 = vshll.u32 %v3065, 30
        %v3067 = vsub.s32 %v3063, %v3066
        %vm3068 = vcmp.lt.s32.totalorder %v3067, 0
        %v3069 = vsub.s32 0, %v3067
        %v3070 = vsel %vm3068, %v3069, %v3067
        %v3071 = vclz %v3070
        %v3072 = vsub.s32 %v3071, 2
        %vm3073 = vcmp.gt.s32.totalorder 0, %v3072
        %v3074 = vsel %vm3073, 0, %v3072
        %v3075 = vsub.s32 32, %v3074
        %v3076 = vshll.u32 %v3067, %v3074
        %v3077 = vshrl.u32 %v3059, %v3075
        %v3078 = vor.u32 %v3076, %v3077
        %v3079 = vsub.s32 4294967266, %v3074
        %v3080 = vadd.s32 %v3079, 127
        %v3081 = vshll.u32 %v3080, 23
        %v3082 = vor.u32 4788187, %v3081
        %v3083 = vand.u32 2147483647, %v3082
        %v3085 = vcvt.s32.f32 %v3078
        %v3086 = vmul.f32 %v3085, %v3083
        %v3087 = vxor.u32 %v3086, 2147483648
        %v3088 = vsel %vm3005, %v3087, %v3086
        %v3089 = vsub.s32 4, %v3065
        %v3090 = vsel %vm3005, %v3089, %v3065
        %v3091 = vsel %vm3004, %v705, %v3088
        %v3092 = vsel %vm3004, 0, %v3090
        %v3093 = vcosq.f32.pop %v3091
        %v3094 = vsinq.f32.pop %v3091
        %vm3095 = vweird.f32 %v705
        %v3096 = vand.u32 %v3092, 3
        %vm3097 = vcmp.lt.s32.totalorder %v3096, 2
        %vm3098 = vcmp.eq.s32.totalorder %v3096, 0
        %v3099 = vxor.u32 %v3094, 2147483648
        %v3100 = vsel %vm3098, %v3093, %v3099
        %vm3101 = vcmp.eq.s32.totalorder %v3096, 2
        %v3102 = vxor.u32 %v3093, 2147483648
        %v3103 = vsel %vm3101, %v3102, %v3094
        %v3104 = vsel %vm3097, %v3100, %v3103
        %v3105 = vsel %vm3095, nan, %v3104
        %v3106 = vand.u32 2147483647, %v706
        %vm3107 = vcmp.le.f32.partialorder %v3106, 0.7853982
        %vm3108 = vcmp.lt.s32.totalorder %v706, 0
        %v3109 = vand.u32 %v706, 2139095040
        %v3110 = vshrl.u32 %v3109, 23
        %v3111 = vsub.s32 %v3110, 127
        %v3112 = vand.u32 2147483647, %v706
        %v3113 = vand.u32 %v3112, 8388607
        %v3114 = vor.u32 %v3113, 8388608
        %v3115 = vsub.s32 0, %v3114
        %v3116 = vadd.s32 %v3111, 1
        %vm3117 = vcmp.gt.s32.totalorder %v3116, 0
        %v3118 = vsel %vm3117, %v3116, 0
        %v3119 = vshrl.u32 %v3118, 5
        %v3120 = vand.u32 %v3118, 31
        %v3121 = vsub.s32 32, %v3120
        %v3122 = vshrl.u32 683565275, %v3121
        %v3123 = vshll.u32 683565275, %v3120
        %v3124 = vshrl.u32 2475754826, %v3121
        %v3125 = vor.u32 %v3123, %v3124
        %v3126 = vshll.u32 2475754826, %v3120
        %v3127 = vshrl.u32 2131351028, %v3121
        %v3128 = vor.u32 %v3126, %v3127
        %v3129 = vshll.u32 2131351028, %v3120
        %v3130 = vshrl.u32 2102212464, %v3121
        %v3131 = vor.u32 %v3129, %v3130
        %v3132 = vshll.u32 2102212464, %v3120
        %v3133 = vshrl.u32 920167782, %v3121
        %v3134 = vor.u32 %v3132, %v3133
        %v3135 = vshll.u32 920167782, %v3120
        %v3136 = vshrl.u32 1326507024, %v3121
        %v3137 = vor.u32 %v3135, %v3136
        %vm3138 = vcmp.lt.s32.totalorder %v3119, 1
        %vm3139 = vcmp.lt.s32.totalorder %v3119, 2
        %vm3140 = vcmp.lt.s32.totalorder %v3119, 3
        %vm3141 = vcmp.lt.s32.totalorder %v3119, 4
        %v3142 = vsel %vm3138, %v3122, %v3125
        %v3143 = vsel %vm3141, %v3131, 2102212464
        %v3144 = vsel %vm3140, %v3128, %v3143
        %v3145 = vsel %vm3139, %v3142, %v3144
        %v3146 = vsel %vm3138, %v3125, %v3128
        %v3147 = vsel %vm3141, %v3134, 920167782
        %v3148 = vsel %vm3140, %v3131, %v3147
        %v3149 = vsel %vm3139, %v3146, %v3148
        %v3150 = vsel %vm3138, %v3128, %v3131
        %v3151 = vsel %vm3141, %v3137, 1326507024
        %v3152 = vsel %vm3140, %v3134, %v3151
        %v3153 = vsel %vm3139, %v3150, %v3152
        %v3154 = vshll.u32 %v3114, 8
        %v3155 = vmul.u32.u64.compose %v3154, %v3153
        %v3156 = vextract.low.u32 %v3155
        %v3157 = vextract.high.u32 %v3155
        %v3158 = vmul.u32.u64.compose %v3154, %v3149
        %v3159 = vextract.low.u32 %v3158
        %v3160 = vextract.high.u32 %v3158
        %v3161 = vmul.u32 %v3154, %v3145
        %v3162 = vadd.s32 %v3157, %v3159
        %vm3163 = vc.u32 %v3157, %v3159
        %v3164 = vadd.s32 %v3160, 1
        %v3165 = vsel %vm3163, %v3164, %v3160
        %v3166 = vadd.s32 %v3161, %v3165
        %v3167 = vadd.s32 %v3166, 536870912
        %v3168 = vshrl.u32 %v3167, 30
        %v3169 = vshll.u32 %v3168, 30
        %v3170 = vsub.s32 %v3166, %v3169
        %vm3171 = vcmp.lt.s32.totalorder %v3170, 0
        %v3172 = vsub.s32 0, %v3170
        %v3173 = vsel %vm3171, %v3172, %v3170
        %v3174 = vclz %v3173
        %v3175 = vsub.s32 %v3174, 2
        %vm3176 = vcmp.gt.s32.totalorder 0, %v3175
        %v3177 = vsel %vm3176, 0, %v3175
        %v3178 = vsub.s32 32, %v3177
        %v3179 = vshll.u32 %v3170, %v3177
        %v3180 = vshrl.u32 %v3162, %v3178
        %v3181 = vor.u32 %v3179, %v3180
        %v3182 = vsub.s32 4294967266, %v3177
        %v3183 = vadd.s32 %v3182, 127
        %v3184 = vshll.u32 %v3183, 23
        %v3185 = vor.u32 4788187, %v3184
        %v3186 = vand.u32 2147483647, %v3185
        %v3188 = vcvt.s32.f32 %v3181
        %v3189 = vmul.f32 %v3188, %v3186
        %v3190 = vxor.u32 %v3189, 2147483648
        %v3191 = vsel %vm3108, %v3190, %v3189
        %v3192 = vsub.s32 4, %v3168
        %v3193 = vsel %vm3108, %v3192, %v3168
        %v3194 = vsel %vm3107, %v706, %v3191
        %v3195 = vsel %vm3107, 0, %v3193
        %v3196 = vcosq.f32.pop %v3194
        %v3197 = vsinq.f32.pop %v3194
        %vm3198 = vweird.f32 %v706
        %v3199 = vand.u32 %v3195, 3
        %vm3200 = vcmp.lt.s32.totalorder %v3199, 2
        %vm3201 = vcmp.eq.s32.totalorder %v3199, 0
        %v3202 = vxor.u32 %v3197, 2147483648
        %v3203 = vsel %vm3201, %v3196, %v3202
        %vm3204 = vcmp.eq.s32.totalorder %v3199, 2
        %v3205 = vxor.u32 %v3196, 2147483648
        %v3206 = vsel %vm3204, %v3205, %v3197
        %v3207 = vsel %vm3200, %v3203, %v3206
        %v3208 = vsel %vm3198, nan, %v3207
        %v3209 = vand.u32 2147483647, %v713
        %vm3210 = vcmp.le.f32.partialorder %v3209, 0.7853982
        %vm3211 = vcmp.lt.s32.totalorder %v713, 0
        %v3212 = vand.u32 %v713, 2139095040
        %v3213 = vshrl.u32 %v3212, 23
        %v3214 = vsub.s32 %v3213, 127
        %v3215 = vand.u32 2147483647, %v713
        %v3216 = vand.u32 %v3215, 8388607
        %v3217 = vor.u32 %v3216, 8388608
        %v3218 = vsub.s32 0, %v3217
        %v3219 = vadd.s32 %v3214, 1
        %vm3220 = vcmp.gt.s32.totalorder %v3219, 0
        %v3221 = vsel %vm3220, %v3219, 0
        %v3222 = vshrl.u32 %v3221, 5
        %v3223 = vand.u32 %v3221, 31
        %v3224 = vsub.s32 32, %v3223
        %v3225 = vshrl.u32 683565275, %v3224
        %v3226 = vshll.u32 683565275, %v3223
        %v3227 = vshrl.u32 2475754826, %v3224
        %v3228 = vor.u32 %v3226, %v3227
        %v3229 = vshll.u32 2475754826, %v3223
        %v3230 = vshrl.u32 2131351028, %v3224
        %v3231 = vor.u32 %v3229, %v3230
        %v3232 = vshll.u32 2131351028, %v3223
        %v3233 = vshrl.u32 2102212464, %v3224
        %v3234 = vor.u32 %v3232, %v3233
        %v3235 = vshll.u32 2102212464, %v3223
        %v3236 = vshrl.u32 920167782, %v3224
        %v3237 = vor.u32 %v3235, %v3236
        %v3238 = vshll.u32 920167782, %v3223
        %v3239 = vshrl.u32 1326507024, %v3224
        %v3240 = vor.u32 %v3238, %v3239
        %vm3241 = vcmp.lt.s32.totalorder %v3222, 1
        %vm3242 = vcmp.lt.s32.totalorder %v3222, 2
        %vm3243 = vcmp.lt.s32.totalorder %v3222, 3
        %vm3244 = vcmp.lt.s32.totalorder %v3222, 4
        %v3245 = vsel %vm3241, %v3225, %v3228
        %v3246 = vsel %vm3244, %v3234, 2102212464
        %v3247 = vsel %vm3243, %v3231, %v3246
        %v3248 = vsel %vm3242, %v3245, %v3247
        %v3249 = vsel %vm3241, %v3228, %v3231
        %v3250 = vsel %vm3244, %v3237, 920167782
        %v3251 = vsel %vm3243, %v3234, %v3250
        %v3252 = vsel %vm3242, %v3249, %v3251
        %v3253 = vsel %vm3241, %v3231, %v3234
        %v3254 = vsel %vm3244, %v3240, 1326507024
        %v3255 = vsel %vm3243, %v3237, %v3254
        %v3256 = vsel %vm3242, %v3253, %v3255
        %v3257 = vshll.u32 %v3217, 8
        %v3258 = vmul.u32.u64.compose %v3257, %v3256
        %v3259 = vextract.low.u32 %v3258
        %v3260 = vextract.high.u32 %v3258
        %v3261 = vmul.u32.u64.compose %v3257, %v3252
        %v3262 = vextract.low.u32 %v3261
        %v3263 = vextract.high.u32 %v3261
        %v3264 = vmul.u32 %v3257, %v3248
        %v3265 = vadd.s32 %v3260, %v3262
        %vm3266 = vc.u32 %v3260, %v3262
        %v3267 = vadd.s32 %v3263, 1
        %v3268 = vsel %vm3266, %v3267, %v3263
        %v3269 = vadd.s32 %v3264, %v3268
        %v3270 = vadd.s32 %v3269, 536870912
        %v3271 = vshrl.u32 %v3270, 30
        %v3272 = vshll.u32 %v3271, 30
        %v3273 = vsub.s32 %v3269, %v3272
        %vm3274 = vcmp.lt.s32.totalorder %v3273, 0
        %v3275 = vsub.s32 0, %v3273
        %v3276 = vsel %vm3274, %v3275, %v3273
        %v3277 = vclz %v3276
        %v3278 = vsub.s32 %v3277, 2
        %vm3279 = vcmp.gt.s32.totalorder 0, %v3278
        %v3280 = vsel %vm3279, 0, %v3278
        %v3281 = vsub.s32 32, %v3280
        %v3282 = vshll.u32 %v3273, %v3280
        %v3283 = vshrl.u32 %v3265, %v3281
        %v3284 = vor.u32 %v3282, %v3283
        %v3285 = vsub.s32 4294967266, %v3280
        %v3286 = vadd.s32 %v3285, 127
        %v3287 = vshll.u32 %v3286, 23
        %v3288 = vor.u32 4788187, %v3287
        %v3289 = vand.u32 2147483647, %v3288
        %v3291 = vcvt.s32.f32 %v3284
        %v3292 = vmul.f32 %v3291, %v3289
        %v3293 = vxor.u32 %v3292, 2147483648
        %v3294 = vsel %vm3211, %v3293, %v3292
        %v3295 = vsub.s32 4, %v3271
        %v3296 = vsel %vm3211, %v3295, %v3271
        %v3297 = vsel %vm3210, %v713, %v3294
        %v3298 = vsel %vm3210, 0, %v3296
        %v3299 = vcosq.f32.pop %v3297
        %v3300 = vsinq.f32.pop %v3297
        %vm3301 = vweird.f32 %v713
        %v3302 = vand.u32 %v3298, 3
        %vm3303 = vcmp.lt.s32.totalorder %v3302, 2
        %vm3304 = vcmp.eq.s32.totalorder %v3302, 0
        %v3305 = vxor.u32 %v3300, 2147483648
        %v3306 = vsel %vm3304, %v3299, %v3305
        %vm3307 = vcmp.eq.s32.totalorder %v3302, 2
        %v3308 = vxor.u32 %v3299, 2147483648
        %v3309 = vsel %vm3307, %v3308, %v3300
        %v3310 = vsel %vm3303, %v3306, %v3309
        %v3311 = vsel %vm3301, nan, %v3310
        %v3312 = vand.u32 2147483647, %v714
        %vm3313 = vcmp.le.f32.partialorder %v3312, 0.7853982
        %vm3314 = vcmp.lt.s32.totalorder %v714, 0
        %v3315 = vand.u32 %v714, 2139095040
        %v3316 = vshrl.u32 %v3315, 23
        %v3317 = vsub.s32 %v3316, 127
        %v3318 = vand.u32 2147483647, %v714
        %v3319 = vand.u32 %v3318, 8388607
        %v3320 = vor.u32 %v3319, 8388608
        %v3321 = vsub.s32 0, %v3320
        %v3322 = vadd.s32 %v3317, 1
        %vm3323 = vcmp.gt.s32.totalorder %v3322, 0
        %v3324 = vsel %vm3323, %v3322, 0
        %v3325 = vshrl.u32 %v3324, 5
        %v3326 = vand.u32 %v3324, 31
        %v3327 = vsub.s32 32, %v3326
        %v3328 = vshrl.u32 683565275, %v3327
        %v3329 = vshll.u32 683565275, %v3326
        %v3330 = vshrl.u32 2475754826, %v3327
        %v3331 = vor.u32 %v3329, %v3330
        %v3332 = vshll.u32 2475754826, %v3326
        %v3333 = vshrl.u32 2131351028, %v3327
        %v3334 = vor.u32 %v3332, %v3333
        %v3335 = vshll.u32 2131351028, %v3326
        %v3336 = vshrl.u32 2102212464, %v3327
        %v3337 = vor.u32 %v3335, %v3336
        %v3338 = vshll.u32 2102212464, %v3326
        %v3339 = vshrl.u32 920167782, %v3327
        %v3340 = vor.u32 %v3338, %v3339
        %v3341 = vshll.u32 920167782, %v3326
        %v3342 = vshrl.u32 1326507024, %v3327
        %v3343 = vor.u32 %v3341, %v3342
        %vm3344 = vcmp.lt.s32.totalorder %v3325, 1
        %vm3345 = vcmp.lt.s32.totalorder %v3325, 2
        %vm3346 = vcmp.lt.s32.totalorder %v3325, 3
        %vm3347 = vcmp.lt.s32.totalorder %v3325, 4
        %v3348 = vsel %vm3344, %v3328, %v3331
        %v3349 = vsel %vm3347, %v3337, 2102212464
        %v3350 = vsel %vm3346, %v3334, %v3349
        %v3351 = vsel %vm3345, %v3348, %v3350
        %v3352 = vsel %vm3344, %v3331, %v3334
        %v3353 = vsel %vm3347, %v3340, 920167782
        %v3354 = vsel %vm3346, %v3337, %v3353
        %v3355 = vsel %vm3345, %v3352, %v3354
        %v3356 = vsel %vm3344, %v3334, %v3337
        %v3357 = vsel %vm3347, %v3343, 1326507024
        %v3358 = vsel %vm3346, %v3340, %v3357
        %v3359 = vsel %vm3345, %v3356, %v3358
        %v3360 = vshll.u32 %v3320, 8
        %v3361 = vmul.u32.u64.compose %v3360, %v3359
        %v3362 = vextract.low.u32 %v3361
        %v3363 = vextract.high.u32 %v3361
        %v3364 = vmul.u32.u64.compose %v3360, %v3355
        %v3365 = vextract.low.u32 %v3364
        %v3366 = vextract.high.u32 %v3364
        %v3367 = vmul.u32 %v3360, %v3351
        %v3368 = vadd.s32 %v3363, %v3365
        %vm3369 = vc.u32 %v3363, %v3365
        %v3370 = vadd.s32 %v3366, 1
        %v3371 = vsel %vm3369, %v3370, %v3366
        %v3372 = vadd.s32 %v3367, %v3371
        %v3373 = vadd.s32 %v3372, 536870912
        %v3374 = vshrl.u32 %v3373, 30
        %v3375 = vshll.u32 %v3374, 30
        %v3376 = vsub.s32 %v3372, %v3375
        %vm3377 = vcmp.lt.s32.totalorder %v3376, 0
        %v3378 = vsub.s32 0, %v3376
        %v3379 = vsel %vm3377, %v3378, %v3376
        %v3380 = vclz %v3379
        %v3381 = vsub.s32 %v3380, 2
        %vm3382 = vcmp.gt.s32.totalorder 0, %v3381
        %v3383 = vsel %vm3382, 0, %v3381
        %v3384 = vsub.s32 32, %v3383
        %v3385 = vshll.u32 %v3376, %v3383
        %v3386 = vshrl.u32 %v3368, %v3384
        %v3387 = vor.u32 %v3385, %v3386
        %v3388 = vsub.s32 4294967266, %v3383
        %v3389 = vadd.s32 %v3388, 127
        %v3390 = vshll.u32 %v3389, 23
        %v3391 = vor.u32 4788187, %v3390
        %v3392 = vand.u32 2147483647, %v3391
        %v3394 = vcvt.s32.f32 %v3387
        %v3395 = vmul.f32 %v3394, %v3392
        %v3396 = vxor.u32 %v3395, 2147483648
        %v3397 = vsel %vm3314, %v3396, %v3395
        %v3398 = vsub.s32 4, %v3374
        %v3399 = vsel %vm3314, %v3398, %v3374
        %v3400 = vsel %vm3313, %v714, %v3397
        %v3401 = vsel %vm3313, 0, %v3399
        %v3402 = vcosq.f32.pop %v3400
        %v3403 = vsinq.f32.pop %v3400
        %vm3404 = vweird.f32 %v714
        %v3405 = vand.u32 %v3401, 3
        %vm3406 = vcmp.lt.s32.totalorder %v3405, 2
        %vm3407 = vcmp.eq.s32.totalorder %v3405, 0
        %v3408 = vxor.u32 %v3403, 2147483648
        %v3409 = vsel %vm3407, %v3402, %v3408
        %vm3410 = vcmp.eq.s32.totalorder %v3405, 2
        %v3411 = vxor.u32 %v3402, 2147483648
        %v3412 = vsel %vm3410, %v3411, %v3403
        %v3413 = vsel %vm3406, %v3409, %v3412
        %v3414 = vsel %vm3404, nan, %v3413
        %v3415 = vand.u32 2147483647, %v715
        %vm3416 = vcmp.le.f32.partialorder %v3415, 0.7853982
        %vm3417 = vcmp.lt.s32.totalorder %v715, 0
        %v3418 = vand.u32 %v715, 2139095040
        %v3419 = vshrl.u32 %v3418, 23
        %v3420 = vsub.s32 %v3419, 127
        %v3421 = vand.u32 2147483647, %v715
        %v3422 = vand.u32 %v3421, 8388607
        %v3423 = vor.u32 %v3422, 8388608
        %v3424 = vsub.s32 0, %v3423
        %v3425 = vadd.s32 %v3420, 1
        %vm3426 = vcmp.gt.s32.totalorder %v3425, 0
        %v3427 = vsel %vm3426, %v3425, 0
        %v3428 = vshrl.u32 %v3427, 5
        %v3429 = vand.u32 %v3427, 31
        %v3430 = vsub.s32 32, %v3429
        %v3431 = vshrl.u32 683565275, %v3430
        %v3432 = vshll.u32 683565275, %v3429
        %v3433 = vshrl.u32 2475754826, %v3430
        %v3434 = vor.u32 %v3432, %v3433
        %v3435 = vshll.u32 2475754826, %v3429
        %v3436 = vshrl.u32 2131351028, %v3430
        %v3437 = vor.u32 %v3435, %v3436
        %v3438 = vshll.u32 2131351028, %v3429
        %v3439 = vshrl.u32 2102212464, %v3430
        %v3440 = vor.u32 %v3438, %v3439
        %v3441 = vshll.u32 2102212464, %v3429
        %v3442 = vshrl.u32 920167782, %v3430
        %v3443 = vor.u32 %v3441, %v3442
        %v3444 = vshll.u32 920167782, %v3429
        %v3445 = vshrl.u32 1326507024, %v3430
        %v3446 = vor.u32 %v3444, %v3445
        %vm3447 = vcmp.lt.s32.totalorder %v3428, 1
        %vm3448 = vcmp.lt.s32.totalorder %v3428, 2
        %vm3449 = vcmp.lt.s32.totalorder %v3428, 3
        %vm3450 = vcmp.lt.s32.totalorder %v3428, 4
        %v3451 = vsel %vm3447, %v3431, %v3434
        %v3452 = vsel %vm3450, %v3440, 2102212464
        %v3453 = vsel %vm3449, %v3437, %v3452
        %v3454 = vsel %vm3448, %v3451, %v3453
        %v3455 = vsel %vm3447, %v3434, %v3437
        %v3456 = vsel %vm3450, %v3443, 920167782
        %v3457 = vsel %vm3449, %v3440, %v3456
        %v3458 = vsel %vm3448, %v3455, %v3457
        %v3459 = vsel %vm3447, %v3437, %v3440
        %v3460 = vsel %vm3450, %v3446, 1326507024
        %v3461 = vsel %vm3449, %v3443, %v3460
        %v3462 = vsel %vm3448, %v3459, %v3461
        %v3463 = vshll.u32 %v3423, 8
        %v3464 = vmul.u32.u64.compose %v3463, %v3462
        %v3465 = vextract.low.u32 %v3464
        %v3466 = vextract.high.u32 %v3464
        %v3467 = vmul.u32.u64.compose %v3463, %v3458
        %v3468 = vextract.low.u32 %v3467
        %v3469 = vextract.high.u32 %v3467
        %v3470 = vmul.u32 %v3463, %v3454
        %v3471 = vadd.s32 %v3466, %v3468
        %vm3472 = vc.u32 %v3466, %v3468
        %v3473 = vadd.s32 %v3469, 1
        %v3474 = vsel %vm3472, %v3473, %v3469
        %v3475 = vadd.s32 %v3470, %v3474
        %v3476 = vadd.s32 %v3475, 536870912
        %v3477 = vshrl.u32 %v3476, 30
        %v3478 = vshll.u32 %v3477, 30
        %v3479 = vsub.s32 %v3475, %v3478
        %vm3480 = vcmp.lt.s32.totalorder %v3479, 0
        %v3481 = vsub.s32 0, %v3479
        %v3482 = vsel %vm3480, %v3481, %v3479
        %v3483 = vclz %v3482
        %v3484 = vsub.s32 %v3483, 2
        %vm3485 = vcmp.gt.s32.totalorder 0, %v3484
        %v3486 = vsel %vm3485, 0, %v3484
        %v3487 = vsub.s32 32, %v3486
        %v3488 = vshll.u32 %v3479, %v3486
        %v3489 = vshrl.u32 %v3471, %v3487
        %v3490 = vor.u32 %v3488, %v3489
        %v3491 = vsub.s32 4294967266, %v3486
        %v3492 = vadd.s32 %v3491, 127
        %v3493 = vshll.u32 %v3492, 23
        %v3494 = vor.u32 4788187, %v3493
        %v3495 = vand.u32 2147483647, %v3494
        %v3497 = vcvt.s32.f32 %v3490
        %v3498 = vmul.f32 %v3497, %v3495
        %v3499 = vxor.u32 %v3498, 2147483648
        %v3500 = vsel %vm3417, %v3499, %v3498
        %v3501 = vsub.s32 4, %v3477
        %v3502 = vsel %vm3417, %v3501, %v3477
        %v3503 = vsel %vm3416, %v715, %v3500
        %v3504 = vsel %vm3416, 0, %v3502
        %v3505 = vcosq.f32.pop %v3503
        %v3506 = vsinq.f32.pop %v3503
        %vm3507 = vweird.f32 %v715
        %v3508 = vand.u32 %v3504, 3
        %vm3509 = vcmp.lt.s32.totalorder %v3508, 2
        %vm3510 = vcmp.eq.s32.totalorder %v3508, 0
        %v3511 = vxor.u32 %v3506, 2147483648
        %v3512 = vsel %vm3510, %v3505, %v3511
        %vm3513 = vcmp.eq.s32.totalorder %v3508, 2
        %v3514 = vxor.u32 %v3505, 2147483648
        %v3515 = vsel %vm3513, %v3514, %v3506
        %v3516 = vsel %vm3509, %v3512, %v3515
        %v3517 = vsel %vm3507, nan, %v3516
        %v3518 = vand.u32 2147483647, %v716
        %vm3519 = vcmp.le.f32.partialorder %v3518, 0.7853982
        %vm3520 = vcmp.lt.s32.totalorder %v716, 0
        %v3521 = vand.u32 %v716, 2139095040
        %v3522 = vshrl.u32 %v3521, 23
        %v3523 = vsub.s32 %v3522, 127
        %v3524 = vand.u32 2147483647, %v716
        %v3525 = vand.u32 %v3524, 8388607
        %v3526 = vor.u32 %v3525, 8388608
        %v3527 = vsub.s32 0, %v3526
        %v3528 = vadd.s32 %v3523, 1
        %vm3529 = vcmp.gt.s32.totalorder %v3528, 0
        %v3530 = vsel %vm3529, %v3528, 0
        %v3531 = vshrl.u32 %v3530, 5
        %v3532 = vand.u32 %v3530, 31
        %v3533 = vsub.s32 32, %v3532
        %v3534 = vshrl.u32 683565275, %v3533
        %v3535 = vshll.u32 683565275, %v3532
        %v3536 = vshrl.u32 2475754826, %v3533
        %v3537 = vor.u32 %v3535, %v3536
        %v3538 = vshll.u32 2475754826, %v3532
        %v3539 = vshrl.u32 2131351028, %v3533
        %v3540 = vor.u32 %v3538, %v3539
        %v3541 = vshll.u32 2131351028, %v3532
        %v3542 = vshrl.u32 2102212464, %v3533
        %v3543 = vor.u32 %v3541, %v3542
        %v3544 = vshll.u32 2102212464, %v3532
        %v3545 = vshrl.u32 920167782, %v3533
        %v3546 = vor.u32 %v3544, %v3545
        %v3547 = vshll.u32 920167782, %v3532
        %v3548 = vshrl.u32 1326507024, %v3533
        %v3549 = vor.u32 %v3547, %v3548
        %vm3550 = vcmp.lt.s32.totalorder %v3531, 1
        %vm3551 = vcmp.lt.s32.totalorder %v3531, 2
        %vm3552 = vcmp.lt.s32.totalorder %v3531, 3
        %vm3553 = vcmp.lt.s32.totalorder %v3531, 4
        %v3554 = vsel %vm3550, %v3534, %v3537
        %v3555 = vsel %vm3553, %v3543, 2102212464
        %v3556 = vsel %vm3552, %v3540, %v3555
        %v3557 = vsel %vm3551, %v3554, %v3556
        %v3558 = vsel %vm3550, %v3537, %v3540
        %v3559 = vsel %vm3553, %v3546, 920167782
        %v3560 = vsel %vm3552, %v3543, %v3559
        %v3561 = vsel %vm3551, %v3558, %v3560
        %v3562 = vsel %vm3550, %v3540, %v3543
        %v3563 = vsel %vm3553, %v3549, 1326507024
        %v3564 = vsel %vm3552, %v3546, %v3563
        %v3565 = vsel %vm3551, %v3562, %v3564
        %v3566 = vshll.u32 %v3526, 8
        %v3567 = vmul.u32.u64.compose %v3566, %v3565
        %v3568 = vextract.low.u32 %v3567
        %v3569 = vextract.high.u32 %v3567
        %v3570 = vmul.u32.u64.compose %v3566, %v3561
        %v3571 = vextract.low.u32 %v3570
        %v3572 = vextract.high.u32 %v3570
        %v3573 = vmul.u32 %v3566, %v3557
        %v3574 = vadd.s32 %v3569, %v3571
        %vm3575 = vc.u32 %v3569, %v3571
        %v3576 = vadd.s32 %v3572, 1
        %v3577 = vsel %vm3575, %v3576, %v3572
        %v3578 = vadd.s32 %v3573, %v3577
        %v3579 = vadd.s32 %v3578, 536870912
        %v3580 = vshrl.u32 %v3579, 30
        %v3581 = vshll.u32 %v3580, 30
        %v3582 = vsub.s32 %v3578, %v3581
        %vm3583 = vcmp.lt.s32.totalorder %v3582, 0
        %v3584 = vsub.s32 0, %v3582
        %v3585 = vsel %vm3583, %v3584, %v3582
        %v3586 = vclz %v3585
        %v3587 = vsub.s32 %v3586, 2
        %vm3588 = vcmp.gt.s32.totalorder 0, %v3587
        %v3589 = vsel %vm3588, 0, %v3587
        %v3590 = vsub.s32 32, %v3589
        %v3591 = vshll.u32 %v3582, %v3589
        %v3592 = vshrl.u32 %v3574, %v3590
        %v3593 = vor.u32 %v3591, %v3592
        %v3594 = vsub.s32 4294967266, %v3589
        %v3595 = vadd.s32 %v3594, 127
        %v3596 = vshll.u32 %v3595, 23
        %v3597 = vor.u32 4788187, %v3596
        %v3598 = vand.u32 2147483647, %v3597
        %v3600 = vcvt.s32.f32 %v3593
        %v3601 = vmul.f32 %v3600, %v3598
        %v3602 = vxor.u32 %v3601, 2147483648
        %v3603 = vsel %vm3520, %v3602, %v3601
        %v3604 = vsub.s32 4, %v3580
        %v3605 = vsel %vm3520, %v3604, %v3580
        %v3606 = vsel %vm3519, %v716, %v3603
        %v3607 = vsel %vm3519, 0, %v3605
        %v3608 = vcosq.f32.pop %v3606
        %v3609 = vsinq.f32.pop %v3606
        %vm3610 = vweird.f32 %v716
        %v3611 = vand.u32 %v3607, 3
        %vm3612 = vcmp.lt.s32.totalorder %v3611, 2
        %vm3613 = vcmp.eq.s32.totalorder %v3611, 0
        %v3614 = vxor.u32 %v3609, 2147483648
        %v3615 = vsel %vm3613, %v3608, %v3614
        %vm3616 = vcmp.eq.s32.totalorder %v3611, 2
        %v3617 = vxor.u32 %v3608, 2147483648
        %v3618 = vsel %vm3616, %v3617, %v3609
        %v3619 = vsel %vm3612, %v3615, %v3618
        %v3620 = vsel %vm3610, nan, %v3619
        %v3621 = vand.u32 2147483647, %v717
        %vm3622 = vcmp.le.f32.partialorder %v3621, 0.7853982
        %vm3623 = vcmp.lt.s32.totalorder %v717, 0
        %v3624 = vand.u32 %v717, 2139095040
        %v3625 = vshrl.u32 %v3624, 23
        %v3626 = vsub.s32 %v3625, 127
        %v3627 = vand.u32 2147483647, %v717
        %v3628 = vand.u32 %v3627, 8388607
        %v3629 = vor.u32 %v3628, 8388608
        %v3630 = vsub.s32 0, %v3629
        %v3631 = vadd.s32 %v3626, 1
        %vm3632 = vcmp.gt.s32.totalorder %v3631, 0
        %v3633 = vsel %vm3632, %v3631, 0
        %v3634 = vshrl.u32 %v3633, 5
        %v3635 = vand.u32 %v3633, 31
        %v3636 = vsub.s32 32, %v3635
        %v3637 = vshrl.u32 683565275, %v3636
        %v3638 = vshll.u32 683565275, %v3635
        %v3639 = vshrl.u32 2475754826, %v3636
        %v3640 = vor.u32 %v3638, %v3639
        %v3641 = vshll.u32 2475754826, %v3635
        %v3642 = vshrl.u32 2131351028, %v3636
        %v3643 = vor.u32 %v3641, %v3642
        %v3644 = vshll.u32 2131351028, %v3635
        %v3645 = vshrl.u32 2102212464, %v3636
        %v3646 = vor.u32 %v3644, %v3645
        %v3647 = vshll.u32 2102212464, %v3635
        %v3648 = vshrl.u32 920167782, %v3636
        %v3649 = vor.u32 %v3647, %v3648
        %v3650 = vshll.u32 920167782, %v3635
        %v3651 = vshrl.u32 1326507024, %v3636
        %v3652 = vor.u32 %v3650, %v3651
        %vm3653 = vcmp.lt.s32.totalorder %v3634, 1
        %vm3654 = vcmp.lt.s32.totalorder %v3634, 2
        %vm3655 = vcmp.lt.s32.totalorder %v3634, 3
        %vm3656 = vcmp.lt.s32.totalorder %v3634, 4
        %v3657 = vsel %vm3653, %v3637, %v3640
        %v3658 = vsel %vm3656, %v3646, 2102212464
        %v3659 = vsel %vm3655, %v3643, %v3658
        %v3660 = vsel %vm3654, %v3657, %v3659
        %v3661 = vsel %vm3653, %v3640, %v3643
        %v3662 = vsel %vm3656, %v3649, 920167782
        %v3663 = vsel %vm3655, %v3646, %v3662
        %v3664 = vsel %vm3654, %v3661, %v3663
        %v3665 = vsel %vm3653, %v3643, %v3646
        %v3666 = vsel %vm3656, %v3652, 1326507024
        %v3667 = vsel %vm3655, %v3649, %v3666
        %v3668 = vsel %vm3654, %v3665, %v3667
        %v3669 = vshll.u32 %v3629, 8
        %v3670 = vmul.u32.u64.compose %v3669, %v3668
        %v3671 = vextract.low.u32 %v3670
        %v3672 = vextract.high.u32 %v3670
        %v3673 = vmul.u32.u64.compose %v3669, %v3664
        %v3674 = vextract.low.u32 %v3673
        %v3675 = vextract.high.u32 %v3673
        %v3676 = vmul.u32 %v3669, %v3660
        %v3677 = vadd.s32 %v3672, %v3674
        %vm3678 = vc.u32 %v3672, %v3674
        %v3679 = vadd.s32 %v3675, 1
        %v3680 = vsel %vm3678, %v3679, %v3675
        %v3681 = vadd.s32 %v3676, %v3680
        %v3682 = vadd.s32 %v3681, 536870912
        %v3683 = vshrl.u32 %v3682, 30
        %v3684 = vshll.u32 %v3683, 30
        %v3685 = vsub.s32 %v3681, %v3684
        %vm3686 = vcmp.lt.s32.totalorder %v3685, 0
        %v3687 = vsub.s32 0, %v3685
        %v3688 = vsel %vm3686, %v3687, %v3685
        %v3689 = vclz %v3688
        %v3690 = vsub.s32 %v3689, 2
        %vm3691 = vcmp.gt.s32.totalorder 0, %v3690
        %v3692 = vsel %vm3691, 0, %v3690
        %v3693 = vsub.s32 32, %v3692
        %v3694 = vshll.u32 %v3685, %v3692
        %v3695 = vshrl.u32 %v3677, %v3693
        %v3696 = vor.u32 %v3694, %v3695
        %v3697 = vsub.s32 4294967266, %v3692
        %v3698 = vadd.s32 %v3697, 127
        %v3699 = vshll.u32 %v3698, 23
        %v3700 = vor.u32 4788187, %v3699
        %v3701 = vand.u32 2147483647, %v3700
        %v3703 = vcvt.s32.f32 %v3696
        %v3704 = vmul.f32 %v3703, %v3701
        %v3705 = vxor.u32 %v3704, 2147483648
        %v3706 = vsel %vm3623, %v3705, %v3704
        %v3707 = vsub.s32 4, %v3683
        %v3708 = vsel %vm3623, %v3707, %v3683
        %v3709 = vsel %vm3622, %v717, %v3706
        %v3710 = vsel %vm3622, 0, %v3708
        %v3711 = vcosq.f32.pop %v3709
        %v3712 = vsinq.f32.pop %v3709
        %vm3713 = vweird.f32 %v717
        %v3714 = vand.u32 %v3710, 3
        %vm3715 = vcmp.lt.s32.totalorder %v3714, 2
        %vm3716 = vcmp.eq.s32.totalorder %v3714, 0
        %v3717 = vxor.u32 %v3712, 2147483648
        %v3718 = vsel %vm3716, %v3711, %v3717
        %vm3719 = vcmp.eq.s32.totalorder %v3714, 2
        %v3720 = vxor.u32 %v3711, 2147483648
        %v3721 = vsel %vm3719, %v3720, %v3712
        %v3722 = vsel %vm3715, %v3718, %v3721
        %v3723 = vsel %vm3713, nan, %v3722
        %v3724 = vand.u32 2147483647, %v718
        %vm3725 = vcmp.le.f32.partialorder %v3724, 0.7853982
        %vm3726 = vcmp.lt.s32.totalorder %v718, 0
        %v3727 = vand.u32 %v718, 2139095040
        %v3728 = vshrl.u32 %v3727, 23
        %v3729 = vsub.s32 %v3728, 127
        %v3730 = vand.u32 2147483647, %v718
        %v3731 = vand.u32 %v3730, 8388607
        %v3732 = vor.u32 %v3731, 8388608
        %v3733 = vsub.s32 0, %v3732
        %v3734 = vadd.s32 %v3729, 1
        %vm3735 = vcmp.gt.s32.totalorder %v3734, 0
        %v3736 = vsel %vm3735, %v3734, 0
        %v3737 = vshrl.u32 %v3736, 5
        %v3738 = vand.u32 %v3736, 31
        %v3739 = vsub.s32 32, %v3738
        %v3740 = vshrl.u32 683565275, %v3739
        %v3741 = vshll.u32 683565275, %v3738
        %v3742 = vshrl.u32 2475754826, %v3739
        %v3743 = vor.u32 %v3741, %v3742
        %v3744 = vshll.u32 2475754826, %v3738
        %v3745 = vshrl.u32 2131351028, %v3739
        %v3746 = vor.u32 %v3744, %v3745
        %v3747 = vshll.u32 2131351028, %v3738
        %v3748 = vshrl.u32 2102212464, %v3739
        %v3749 = vor.u32 %v3747, %v3748
        %v3750 = vshll.u32 2102212464, %v3738
        %v3751 = vshrl.u32 920167782, %v3739
        %v3752 = vor.u32 %v3750, %v3751
        %v3753 = vshll.u32 920167782, %v3738
        %v3754 = vshrl.u32 1326507024, %v3739
        %v3755 = vor.u32 %v3753, %v3754
        %vm3756 = vcmp.lt.s32.totalorder %v3737, 1
        %vm3757 = vcmp.lt.s32.totalorder %v3737, 2
        %vm3758 = vcmp.lt.s32.totalorder %v3737, 3
        %vm3759 = vcmp.lt.s32.totalorder %v3737, 4
        %v3760 = vsel %vm3756, %v3740, %v3743
        %v3761 = vsel %vm3759, %v3749, 2102212464
        %v3762 = vsel %vm3758, %v3746, %v3761
        %v3763 = vsel %vm3757, %v3760, %v3762
        %v3764 = vsel %vm3756, %v3743, %v3746
        %v3765 = vsel %vm3759, %v3752, 920167782
        %v3766 = vsel %vm3758, %v3749, %v3765
        %v3767 = vsel %vm3757, %v3764, %v3766
        %v3768 = vsel %vm3756, %v3746, %v3749
        %v3769 = vsel %vm3759, %v3755, 1326507024
        %v3770 = vsel %vm3758, %v3752, %v3769
        %v3771 = vsel %vm3757, %v3768, %v3770
        %v3772 = vshll.u32 %v3732, 8
        %v3773 = vmul.u32.u64.compose %v3772, %v3771
        %v3774 = vextract.low.u32 %v3773
        %v3775 = vextract.high.u32 %v3773
        %v3776 = vmul.u32.u64.compose %v3772, %v3767
        %v3777 = vextract.low.u32 %v3776
        %v3778 = vextract.high.u32 %v3776
        %v3779 = vmul.u32 %v3772, %v3763
        %v3780 = vadd.s32 %v3775, %v3777
        %vm3781 = vc.u32 %v3775, %v3777
        %v3782 = vadd.s32 %v3778, 1
        %v3783 = vsel %vm3781, %v3782, %v3778
        %v3784 = vadd.s32 %v3779, %v3783
        %v3785 = vadd.s32 %v3784, 536870912
        %v3786 = vshrl.u32 %v3785, 30
        %v3787 = vshll.u32 %v3786, 30
        %v3788 = vsub.s32 %v3784, %v3787
        %vm3789 = vcmp.lt.s32.totalorder %v3788, 0
        %v3790 = vsub.s32 0, %v3788
        %v3791 = vsel %vm3789, %v3790, %v3788
        %v3792 = vclz %v3791
        %v3793 = vsub.s32 %v3792, 2
        %vm3794 = vcmp.gt.s32.totalorder 0, %v3793
        %v3795 = vsel %vm3794, 0, %v3793
        %v3796 = vsub.s32 32, %v3795
        %v3797 = vshll.u32 %v3788, %v3795
        %v3798 = vshrl.u32 %v3780, %v3796
        %v3799 = vor.u32 %v3797, %v3798
        %v3800 = vsub.s32 4294967266, %v3795
        %v3801 = vadd.s32 %v3800, 127
        %v3802 = vshll.u32 %v3801, 23
        %v3803 = vor.u32 4788187, %v3802
        %v3804 = vand.u32 2147483647, %v3803
        %v3806 = vcvt.s32.f32 %v3799
        %v3807 = vmul.f32 %v3806, %v3804
        %v3808 = vxor.u32 %v3807, 2147483648
        %v3809 = vsel %vm3726, %v3808, %v3807
        %v3810 = vsub.s32 4, %v3786
        %v3811 = vsel %vm3726, %v3810, %v3786
        %v3812 = vsel %vm3725, %v718, %v3809
        %v3813 = vsel %vm3725, 0, %v3811
        %v3814 = vcosq.f32.pop %v3812
        %v3815 = vsinq.f32.pop %v3812
        %vm3816 = vweird.f32 %v718
        %v3817 = vand.u32 %v3813, 3
        %vm3818 = vcmp.lt.s32.totalorder %v3817, 2
        %vm3819 = vcmp.eq.s32.totalorder %v3817, 0
        %v3820 = vxor.u32 %v3815, 2147483648
        %v3821 = vsel %vm3819, %v3814, %v3820
        %vm3822 = vcmp.eq.s32.totalorder %v3817, 2
        %v3823 = vxor.u32 %v3814, 2147483648
        %v3824 = vsel %vm3822, %v3823, %v3815
        %v3825 = vsel %vm3818, %v3821, %v3824
        %v3826 = vsel %vm3816, nan, %v3825
        %v3827 = vand.u32 2147483647, %v719
        %vm3828 = vcmp.le.f32.partialorder %v3827, 0.7853982
        %vm3829 = vcmp.lt.s32.totalorder %v719, 0
        %v3830 = vand.u32 %v719, 2139095040
        %v3831 = vshrl.u32 %v3830, 23
        %v3832 = vsub.s32 %v3831, 127
        %v3833 = vand.u32 2147483647, %v719
        %v3834 = vand.u32 %v3833, 8388607
        %v3835 = vor.u32 %v3834, 8388608
        %v3836 = vsub.s32 0, %v3835
        %v3837 = vadd.s32 %v3832, 1
        %vm3838 = vcmp.gt.s32.totalorder %v3837, 0
        %v3839 = vsel %vm3838, %v3837, 0
        %v3840 = vshrl.u32 %v3839, 5
        %v3841 = vand.u32 %v3839, 31
        %v3842 = vsub.s32 32, %v3841
        %v3843 = vshrl.u32 683565275, %v3842
        %v3844 = vshll.u32 683565275, %v3841
        %v3845 = vshrl.u32 2475754826, %v3842
        %v3846 = vor.u32 %v3844, %v3845
        %v3847 = vshll.u32 2475754826, %v3841
        %v3848 = vshrl.u32 2131351028, %v3842
        %v3849 = vor.u32 %v3847, %v3848
        %v3850 = vshll.u32 2131351028, %v3841
        %v3851 = vshrl.u32 2102212464, %v3842
        %v3852 = vor.u32 %v3850, %v3851
        %v3853 = vshll.u32 2102212464, %v3841
        %v3854 = vshrl.u32 920167782, %v3842
        %v3855 = vor.u32 %v3853, %v3854
        %v3856 = vshll.u32 920167782, %v3841
        %v3857 = vshrl.u32 1326507024, %v3842
        %v3858 = vor.u32 %v3856, %v3857
        %vm3859 = vcmp.lt.s32.totalorder %v3840, 1
        %vm3860 = vcmp.lt.s32.totalorder %v3840, 2
        %vm3861 = vcmp.lt.s32.totalorder %v3840, 3
        %vm3862 = vcmp.lt.s32.totalorder %v3840, 4
        %v3863 = vsel %vm3859, %v3843, %v3846
        %v3864 = vsel %vm3862, %v3852, 2102212464
        %v3865 = vsel %vm3861, %v3849, %v3864
        %v3866 = vsel %vm3860, %v3863, %v3865
        %v3867 = vsel %vm3859, %v3846, %v3849
        %v3868 = vsel %vm3862, %v3855, 920167782
        %v3869 = vsel %vm3861, %v3852, %v3868
        %v3870 = vsel %vm3860, %v3867, %v3869
        %v3871 = vsel %vm3859, %v3849, %v3852
        %v3872 = vsel %vm3862, %v3858, 1326507024
        %v3873 = vsel %vm3861, %v3855, %v3872
        %v3874 = vsel %vm3860, %v3871, %v3873
        %v3875 = vshll.u32 %v3835, 8
        %v3876 = vmul.u32.u64.compose %v3875, %v3874
        %v3877 = vextract.low.u32 %v3876
        %v3878 = vextract.high.u32 %v3876
        %v3879 = vmul.u32.u64.compose %v3875, %v3870
        %v3880 = vextract.low.u32 %v3879
        %v3881 = vextract.high.u32 %v3879
        %v3882 = vmul.u32 %v3875, %v3866
        %v3883 = vadd.s32 %v3878, %v3880
        %vm3884 = vc.u32 %v3878, %v3880
        %v3885 = vadd.s32 %v3881, 1
        %v3886 = vsel %vm3884, %v3885, %v3881
        %v3887 = vadd.s32 %v3882, %v3886
        %v3888 = vadd.s32 %v3887, 536870912
        %v3889 = vshrl.u32 %v3888, 30
        %v3890 = vshll.u32 %v3889, 30
        %v3891 = vsub.s32 %v3887, %v3890
        %vm3892 = vcmp.lt.s32.totalorder %v3891, 0
        %v3893 = vsub.s32 0, %v3891
        %v3894 = vsel %vm3892, %v3893, %v3891
        %v3895 = vclz %v3894
        %v3896 = vsub.s32 %v3895, 2
        %vm3897 = vcmp.gt.s32.totalorder 0, %v3896
        %v3898 = vsel %vm3897, 0, %v3896
        %v3899 = vsub.s32 32, %v3898
        %v3900 = vshll.u32 %v3891, %v3898
        %v3901 = vshrl.u32 %v3883, %v3899
        %v3902 = vor.u32 %v3900, %v3901
        %v3903 = vsub.s32 4294967266, %v3898
        %v3904 = vadd.s32 %v3903, 127
        %v3905 = vshll.u32 %v3904, 23
        %v3906 = vor.u32 4788187, %v3905
        %v3907 = vand.u32 2147483647, %v3906
        %v3909 = vcvt.s32.f32 %v3902
        %v3910 = vmul.f32 %v3909, %v3907
        %v3911 = vxor.u32 %v3910, 2147483648
        %v3912 = vsel %vm3829, %v3911, %v3910
        %v3913 = vsub.s32 4, %v3889
        %v3914 = vsel %vm3829, %v3913, %v3889
        %v3915 = vsel %vm3828, %v719, %v3912
        %v3916 = vsel %vm3828, 0, %v3914
        %v3917 = vcosq.f32.pop %v3915
        %v3918 = vsinq.f32.pop %v3915
        %vm3919 = vweird.f32 %v719
        %v3920 = vand.u32 %v3916, 3
        %vm3921 = vcmp.lt.s32.totalorder %v3920, 2
        %vm3922 = vcmp.eq.s32.totalorder %v3920, 0
        %v3923 = vxor.u32 %v3918, 2147483648
        %v3924 = vsel %vm3922, %v3917, %v3923
        %vm3925 = vcmp.eq.s32.totalorder %v3920, 2
        %v3926 = vxor.u32 %v3917, 2147483648
        %v3927 = vsel %vm3925, %v3926, %v3918
        %v3928 = vsel %vm3921, %v3924, %v3927
        %v3929 = vsel %vm3919, nan, %v3928
        %v3930 = vand.u32 2147483647, %v720
        %vm3931 = vcmp.le.f32.partialorder %v3930, 0.7853982
        %vm3932 = vcmp.lt.s32.totalorder %v720, 0
        %v3933 = vand.u32 %v720, 2139095040
        %v3934 = vshrl.u32 %v3933, 23
        %v3935 = vsub.s32 %v3934, 127
        %v3936 = vand.u32 2147483647, %v720
        %v3937 = vand.u32 %v3936, 8388607
        %v3938 = vor.u32 %v3937, 8388608
        %v3939 = vsub.s32 0, %v3938
        %v3940 = vadd.s32 %v3935, 1
        %vm3941 = vcmp.gt.s32.totalorder %v3940, 0
        %v3942 = vsel %vm3941, %v3940, 0
        %v3943 = vshrl.u32 %v3942, 5
        %v3944 = vand.u32 %v3942, 31
        %v3945 = vsub.s32 32, %v3944
        %v3946 = vshrl.u32 683565275, %v3945
        %v3947 = vshll.u32 683565275, %v3944
        %v3948 = vshrl.u32 2475754826, %v3945
        %v3949 = vor.u32 %v3947, %v3948
        %v3950 = vshll.u32 2475754826, %v3944
        %v3951 = vshrl.u32 2131351028, %v3945
        %v3952 = vor.u32 %v3950, %v3951
        %v3953 = vshll.u32 2131351028, %v3944
        %v3954 = vshrl.u32 2102212464, %v3945
        %v3955 = vor.u32 %v3953, %v3954
        %v3956 = vshll.u32 2102212464, %v3944
        %v3957 = vshrl.u32 920167782, %v3945
        %v3958 = vor.u32 %v3956, %v3957
        %v3959 = vshll.u32 920167782, %v3944
        %v3960 = vshrl.u32 1326507024, %v3945
        %v3961 = vor.u32 %v3959, %v3960
        %vm3962 = vcmp.lt.s32.totalorder %v3943, 1
        %vm3963 = vcmp.lt.s32.totalorder %v3943, 2
        %vm3964 = vcmp.lt.s32.totalorder %v3943, 3
        %vm3965 = vcmp.lt.s32.totalorder %v3943, 4
        %v3966 = vsel %vm3962, %v3946, %v3949
        %v3967 = vsel %vm3965, %v3955, 2102212464
        %v3968 = vsel %vm3964, %v3952, %v3967
        %v3969 = vsel %vm3963, %v3966, %v3968
        %v3970 = vsel %vm3962, %v3949, %v3952
        %v3971 = vsel %vm3965, %v3958, 920167782
        %v3972 = vsel %vm3964, %v3955, %v3971
        %v3973 = vsel %vm3963, %v3970, %v3972
        %v3974 = vsel %vm3962, %v3952, %v3955
        %v3975 = vsel %vm3965, %v3961, 1326507024
        %v3976 = vsel %vm3964, %v3958, %v3975
        %v3977 = vsel %vm3963, %v3974, %v3976
        %v3978 = vshll.u32 %v3938, 8
        %v3979 = vmul.u32.u64.compose %v3978, %v3977
        %v3980 = vextract.low.u32 %v3979
        %v3981 = vextract.high.u32 %v3979
        %v3982 = vmul.u32.u64.compose %v3978, %v3973
        %v3983 = vextract.low.u32 %v3982
        %v3984 = vextract.high.u32 %v3982
        %v3985 = vmul.u32 %v3978, %v3969
        %v3986 = vadd.s32 %v3981, %v3983
        %vm3987 = vc.u32 %v3981, %v3983
        %v3988 = vadd.s32 %v3984, 1
        %v3989 = vsel %vm3987, %v3988, %v3984
        %v3990 = vadd.s32 %v3985, %v3989
        %v3991 = vadd.s32 %v3990, 536870912
        %v3992 = vshrl.u32 %v3991, 30
        %v3993 = vshll.u32 %v3992, 30
        %v3994 = vsub.s32 %v3990, %v3993
        %vm3995 = vcmp.lt.s32.totalorder %v3994, 0
        %v3996 = vsub.s32 0, %v3994
        %v3997 = vsel %vm3995, %v3996, %v3994
        %v3998 = vclz %v3997
        %v3999 = vsub.s32 %v3998, 2
        %vm4000 = vcmp.gt.s32.totalorder 0, %v3999
        %v4001 = vsel %vm4000, 0, %v3999
        %v4002 = vsub.s32 32, %v4001
        %v4003 = vshll.u32 %v3994, %v4001
        %v4004 = vshrl.u32 %v3986, %v4002
        %v4005 = vor.u32 %v4003, %v4004
        %v4006 = vsub.s32 4294967266, %v4001
        %v4007 = vadd.s32 %v4006, 127
        %v4008 = vshll.u32 %v4007, 23
        %v4009 = vor.u32 4788187, %v4008
        %v4010 = vand.u32 2147483647, %v4009
        %v4012 = vcvt.s32.f32 %v4005
        %v4013 = vmul.f32 %v4012, %v4010
        %v4014 = vxor.u32 %v4013, 2147483648
        %v4015 = vsel %vm3932, %v4014, %v4013
        %v4016 = vsub.s32 4, %v3992
        %v4017 = vsel %vm3932, %v4016, %v3992
        %v4018 = vsel %vm3931, %v720, %v4015
        %v4019 = vsel %vm3931, 0, %v4017
        %v4020 = vcosq.f32.pop %v4018
        %v4021 = vsinq.f32.pop %v4018
        %vm4022 = vweird.f32 %v720
        %v4023 = vand.u32 %v4019, 3
        %vm4024 = vcmp.lt.s32.totalorder %v4023, 2
        %vm4025 = vcmp.eq.s32.totalorder %v4023, 0
        %v4026 = vxor.u32 %v4021, 2147483648
        %v4027 = vsel %vm4025, %v4020, %v4026
        %vm4028 = vcmp.eq.s32.totalorder %v4023, 2
        %v4029 = vxor.u32 %v4020, 2147483648
        %v4030 = vsel %vm4028, %v4029, %v4021
        %v4031 = vsel %vm4024, %v4027, %v4030
        %v4032 = vsel %vm4022, nan, %v4031
        %v4049 = vrot.slane %v824, 5
        %v4050 = vrot.slane %v928, 5
        %v4051 = vrot.slane %v1032, 5
        %v4052 = vrot.slane %v1136, 5
        %v4053 = vrot.slane %v1240, 5
        %v4054 = vsel %vm682, %v4049, %v4053
        %v4055 = vrot.slane %v1344, 5
        %v4056 = vsel %vm682, %v4050, %v4055
        %v4057 = vrot.slane %v1448, 5
        %v4058 = vsel %vm682, %v4051, %v4057
        %v4059 = vrot.slane %v1552, 5
        %v4060 = vsel %vm682, %v4052, %v4059
        %v4061 = vrot.slane %v1656, 5
        %v4062 = vsel %vm682, %v4053, %v4061
        %v4063 = vrot.slane %v1760, 5
        %v4064 = vsel %vm682, %v4055, %v4063
        %v4065 = vrot.slane %v1864, 5
        %v4066 = vsel %vm682, %v4057, %v4065
        %v4067 = vrot.slane %v1968, 5
        %v4068 = vsel %vm682, %v4059, %v4067
        %v4069 = vrot.slane %v2072, 5
        %v4070 = vsel %vm682, %v4061, %v4069
        %v4071 = vrot.slane %v2176, 5
        %v4072 = vsel %vm682, %v4063, %v4071
        %v4073 = vrot.slane %v2280, 5
        %v4074 = vsel %vm682, %v4065, %v4073
        %v4075 = vrot.slane %v2384, 5
        %v4076 = vsel %vm682, %v4067, %v4075
        %v4113 = vrot.slane %v2487, 7
        %v4114 = vrot.slane %v2590, 7
        %v4115 = vrot.slane %v2693, 7
        %v4116 = vrot.slane %v2796, 7
        %v4117 = vrot.slane %v2899, 7
        %v4118 = vsel %vm692, %v4113, %v4117
        %v4119 = vrot.slane %v3002, 7
        %v4120 = vsel %vm692, %v4114, %v4119
        %v4121 = vrot.slane %v3105, 7
        %v4122 = vsel %vm692, %v4115, %v4121
        %v4123 = vrot.slane %v3208, 7
        %v4124 = vsel %vm692, %v4116, %v4123
        %v4125 = vrot.slane %v3311, 7
        %v4126 = vsel %vm692, %v4117, %v4125
        %v4127 = vrot.slane %v3414, 7
        %v4128 = vsel %vm692, %v4119, %v4127
        %v4129 = vrot.slane %v3517, 7
        %v4130 = vsel %vm692, %v4121, %v4129
        %v4131 = vrot.slane %v3620, 7
        %v4132 = vsel %vm692, %v4123, %v4131
        %v4133 = vrot.slane %v3723, 7
        %v4134 = vsel %vm692, %v4125, %v4133
        %v4135 = vrot.slane %v3826, 7
        %v4136 = vsel %vm692, %v4127, %v4135
        %v4137 = vrot.slane %v3929, 7
        %v4138 = vsel %vm692, %v4129, %v4137
        %v4139 = vrot.slane %v4032, 7
        %v4140 = vsel %vm692, %v4131, %v4139
        %v4153 = vsel %vm682, %v530, %v4049
        %v4154 = vsel %vm682, %v531, %v4050
        %v4155 = vsel %vm682, %v532, %v4051
        %v4156 = vsel %vm682, %v533, %v4052
        %v4157 = vsel %vm692, %v4069, %v4113
        %v4158 = vsel %vm692, %v4071, %v4114
        %v4159 = vsel %vm692, %v4073, %v4115
        %v4160 = vsel %vm692, %v4075, %v4116
        %v4165 = vrot.slane %v530, 3
        %v4166 = vrot.slane %v531, 3
        %v4167 = vrot.slane %v532, 3
        %v4168 = vrot.slane %v533, 3
        %v4173 = vrot.slane %v554, 5
        %v4174 = vrot.slane %v555, 5
        %v4175 = vrot.slane %v556, 5
        %v4176 = vrot.slane %v557, 5
        %v4181 = vrot.slane %v558, 2
        %v4182 = vrot.slane %v559, 2
        %v4183 = vrot.slane %v560, 2
        %v4184 = vrot.slane %v561, 2
        %v4189 = vsel %vm682, %v4165, %v550
        %v4190 = vsel %vm682, %v4166, %v551
        %v4191 = vsel %vm682, %v4167, %v552
        %v4192 = vsel %vm682, %v4168, %v553
        %v4193 = vsel %vm687, %v4189, %v4173
        %v4194 = vsel %vm687, %v4190, %v4174
        %v4195 = vsel %vm687, %v4191, %v4175
        %v4196 = vsel %vm687, %v4192, %v4176
        %v4197 = vsel %vm692, %v4173, %v4181
        %v4198 = vsel %vm692, %v4174, %v4182
        %v4199 = vsel %vm692, %v4175, %v4183
        %v4200 = vsel %vm692, %v4176, %v4184
        %v4201 = vand.u32 2147483647, %v4193
        %vm4202 = vcmp.le.f32.partialorder %v4201, 0.7853982
        %vm4203 = vcmp.lt.s32.totalorder %v4193, 0
        %v4204 = vand.u32 %v4193, 2139095040
        %v4205 = vshrl.u32 %v4204, 23
        %v4206 = vsub.s32 %v4205, 127
        %v4207 = vand.u32 2147483647, %v4193
        %v4208 = vand.u32 %v4207, 8388607
        %v4209 = vor.u32 %v4208, 8388608
        %v4210 = vsub.s32 0, %v4209
        %v4211 = vadd.s32 %v4206, 1
        %vm4212 = vcmp.gt.s32.totalorder %v4211, 0
        %v4213 = vsel %vm4212, %v4211, 0
        %v4214 = vshrl.u32 %v4213, 5
        %v4215 = vand.u32 %v4213, 31
        %v4216 = vsub.s32 32, %v4215
        %v4217 = vshrl.u32 683565275, %v4216
        %v4218 = vshll.u32 683565275, %v4215
        %v4219 = vshrl.u32 2475754826, %v4216
        %v4220 = vor.u32 %v4218, %v4219
        %v4221 = vshll.u32 2475754826, %v4215
        %v4222 = vshrl.u32 2131351028, %v4216
        %v4223 = vor.u32 %v4221, %v4222
        %v4224 = vshll.u32 2131351028, %v4215
        %v4225 = vshrl.u32 2102212464, %v4216
        %v4226 = vor.u32 %v4224, %v4225
        %v4227 = vshll.u32 2102212464, %v4215
        %v4228 = vshrl.u32 920167782, %v4216
        %v4229 = vor.u32 %v4227, %v4228
        %v4230 = vshll.u32 920167782, %v4215
        %v4231 = vshrl.u32 1326507024, %v4216
        %v4232 = vor.u32 %v4230, %v4231
        %vm4233 = vcmp.lt.s32.totalorder %v4214, 1
        %vm4234 = vcmp.lt.s32.totalorder %v4214, 2
        %vm4235 = vcmp.lt.s32.totalorder %v4214, 3
        %vm4236 = vcmp.lt.s32.totalorder %v4214, 4
        %v4237 = vsel %vm4233, %v4217, %v4220
        %v4238 = vsel %vm4236, %v4226, 2102212464
        %v4239 = vsel %vm4235, %v4223, %v4238
        %v4240 = vsel %vm4234, %v4237, %v4239
        %v4241 = vsel %vm4233, %v4220, %v4223
        %v4242 = vsel %vm4236, %v4229, 920167782
        %v4243 = vsel %vm4235, %v4226, %v4242
        %v4244 = vsel %vm4234, %v4241, %v4243
        %v4245 = vsel %vm4233, %v4223, %v4226
        %v4246 = vsel %vm4236, %v4232, 1326507024
        %v4247 = vsel %vm4235, %v4229, %v4246
        %v4248 = vsel %vm4234, %v4245, %v4247
        %v4249 = vshll.u32 %v4209, 8
        %v4250 = vmul.u32.u64.compose %v4249, %v4248
        %v4251 = vextract.low.u32 %v4250
        %v4252 = vextract.high.u32 %v4250
        %v4253 = vmul.u32.u64.compose %v4249, %v4244
        %v4254 = vextract.low.u32 %v4253
        %v4255 = vextract.high.u32 %v4253
        %v4256 = vmul.u32 %v4249, %v4240
        %v4257 = vadd.s32 %v4252, %v4254
        %vm4258 = vc.u32 %v4252, %v4254
        %v4259 = vadd.s32 %v4255, 1
        %v4260 = vsel %vm4258, %v4259, %v4255
        %v4261 = vadd.s32 %v4256, %v4260
        %v4262 = vadd.s32 %v4261, 536870912
        %v4263 = vshrl.u32 %v4262, 30
        %v4264 = vshll.u32 %v4263, 30
        %v4265 = vsub.s32 %v4261, %v4264
        %vm4266 = vcmp.lt.s32.totalorder %v4265, 0
        %v4267 = vsub.s32 0, %v4265
        %v4268 = vsel %vm4266, %v4267, %v4265
        %v4269 = vclz %v4268
        %v4270 = vsub.s32 %v4269, 2
        %vm4271 = vcmp.gt.s32.totalorder 0, %v4270
        %v4272 = vsel %vm4271, 0, %v4270
        %v4273 = vsub.s32 32, %v4272
        %v4274 = vshll.u32 %v4265, %v4272
        %v4275 = vshrl.u32 %v4257, %v4273
        %v4276 = vor.u32 %v4274, %v4275
        %v4277 = vsub.s32 4294967266, %v4272
        %v4278 = vadd.s32 %v4277, 127
        %v4279 = vshll.u32 %v4278, 23
        %v4280 = vor.u32 4788187, %v4279
        %v4281 = vand.u32 2147483647, %v4280
        %v4283 = vcvt.s32.f32 %v4276
        %v4284 = vmul.f32 %v4283, %v4281
        %v4285 = vxor.u32 %v4284, 2147483648
        %v4286 = vsel %vm4203, %v4285, %v4284
        %v4287 = vsub.s32 4, %v4263
        %v4288 = vsel %vm4203, %v4287, %v4263
        %v4289 = vsel %vm4202, %v4193, %v4286
        %v4290 = vsel %vm4202, 0, %v4288
        %v4291 = vcosq.f32.pop %v4289
        %v4292 = vsinq.f32.pop %v4289
        %vm4293 = vweird.f32 %v4193
        %v4294 = vadd.s32 %v4290, 3
        %v4295 = vand.u32 %v4294, 3
        %vm4296 = vcmp.lt.s32.totalorder %v4295, 2
        %vm4297 = vcmp.eq.s32.totalorder %v4295, 0
        %v4298 = vxor.u32 %v4292, 2147483648
        %v4299 = vsel %vm4297, %v4291, %v4298
        %vm4300 = vcmp.eq.s32.totalorder %v4295, 2
        %v4301 = vxor.u32 %v4291, 2147483648
        %v4302 = vsel %vm4300, %v4301, %v4292
        %v4303 = vsel %vm4296, %v4299, %v4302
        %v4304 = vsel %vm4293, nan, %v4303
        %v4305 = vand.u32 2147483647, %v4194
        %vm4306 = vcmp.le.f32.partialorder %v4305, 0.7853982
        %vm4307 = vcmp.lt.s32.totalorder %v4194, 0
        %v4308 = vand.u32 %v4194, 2139095040
        %v4309 = vshrl.u32 %v4308, 23
        %v4310 = vsub.s32 %v4309, 127
        %v4311 = vand.u32 2147483647, %v4194
        %v4312 = vand.u32 %v4311, 8388607
        %v4313 = vor.u32 %v4312, 8388608
        %v4314 = vsub.s32 0, %v4313
        %v4315 = vadd.s32 %v4310, 1
        %vm4316 = vcmp.gt.s32.totalorder %v4315, 0
        %v4317 = vsel %vm4316, %v4315, 0
        %v4318 = vshrl.u32 %v4317, 5
        %v4319 = vand.u32 %v4317, 31
        %v4320 = vsub.s32 32, %v4319
        %v4321 = vshrl.u32 683565275, %v4320
        %v4322 = vshll.u32 683565275, %v4319
        %v4323 = vshrl.u32 2475754826, %v4320
        %v4324 = vor.u32 %v4322, %v4323
        %v4325 = vshll.u32 2475754826, %v4319
        %v4326 = vshrl.u32 2131351028, %v4320
        %v4327 = vor.u32 %v4325, %v4326
        %v4328 = vshll.u32 2131351028, %v4319
        %v4329 = vshrl.u32 2102212464, %v4320
        %v4330 = vor.u32 %v4328, %v4329
        %v4331 = vshll.u32 2102212464, %v4319
        %v4332 = vshrl.u32 920167782, %v4320
        %v4333 = vor.u32 %v4331, %v4332
        %v4334 = vshll.u32 920167782, %v4319
        %v4335 = vshrl.u32 1326507024, %v4320
        %v4336 = vor.u32 %v4334, %v4335
        %vm4337 = vcmp.lt.s32.totalorder %v4318, 1
        %vm4338 = vcmp.lt.s32.totalorder %v4318, 2
        %vm4339 = vcmp.lt.s32.totalorder %v4318, 3
        %vm4340 = vcmp.lt.s32.totalorder %v4318, 4
        %v4341 = vsel %vm4337, %v4321, %v4324
        %v4342 = vsel %vm4340, %v4330, 2102212464
        %v4343 = vsel %vm4339, %v4327, %v4342
        %v4344 = vsel %vm4338, %v4341, %v4343
        %v4345 = vsel %vm4337, %v4324, %v4327
        %v4346 = vsel %vm4340, %v4333, 920167782
        %v4347 = vsel %vm4339, %v4330, %v4346
        %v4348 = vsel %vm4338, %v4345, %v4347
        %v4349 = vsel %vm4337, %v4327, %v4330
        %v4350 = vsel %vm4340, %v4336, 1326507024
        %v4351 = vsel %vm4339, %v4333, %v4350
        %v4352 = vsel %vm4338, %v4349, %v4351
        %v4353 = vshll.u32 %v4313, 8
        %v4354 = vmul.u32.u64.compose %v4353, %v4352
        %v4355 = vextract.low.u32 %v4354
        %v4356 = vextract.high.u32 %v4354
        %v4357 = vmul.u32.u64.compose %v4353, %v4348
        %v4358 = vextract.low.u32 %v4357
        %v4359 = vextract.high.u32 %v4357
        %v4360 = vmul.u32 %v4353, %v4344
        %v4361 = vadd.s32 %v4356, %v4358
        %vm4362 = vc.u32 %v4356, %v4358
        %v4363 = vadd.s32 %v4359, 1
        %v4364 = vsel %vm4362, %v4363, %v4359
        %v4365 = vadd.s32 %v4360, %v4364
        %v4366 = vadd.s32 %v4365, 536870912
        %v4367 = vshrl.u32 %v4366, 30
        %v4368 = vshll.u32 %v4367, 30
        %v4369 = vsub.s32 %v4365, %v4368
        %vm4370 = vcmp.lt.s32.totalorder %v4369, 0
        %v4371 = vsub.s32 0, %v4369
        %v4372 = vsel %vm4370, %v4371, %v4369
        %v4373 = vclz %v4372
        %v4374 = vsub.s32 %v4373, 2
        %vm4375 = vcmp.gt.s32.totalorder 0, %v4374
        %v4376 = vsel %vm4375, 0, %v4374
        %v4377 = vsub.s32 32, %v4376
        %v4378 = vshll.u32 %v4369, %v4376
        %v4379 = vshrl.u32 %v4361, %v4377
        %v4380 = vor.u32 %v4378, %v4379
        %v4381 = vsub.s32 4294967266, %v4376
        %v4382 = vadd.s32 %v4381, 127
        %v4383 = vshll.u32 %v4382, 23
        %v4384 = vor.u32 4788187, %v4383
        %v4385 = vand.u32 2147483647, %v4384
        %v4387 = vcvt.s32.f32 %v4380
        %v4388 = vmul.f32 %v4387, %v4385
        %v4389 = vxor.u32 %v4388, 2147483648
        %v4390 = vsel %vm4307, %v4389, %v4388
        %v4391 = vsub.s32 4, %v4367
        %v4392 = vsel %vm4307, %v4391, %v4367
        %v4393 = vsel %vm4306, %v4194, %v4390
        %v4394 = vsel %vm4306, 0, %v4392
        %v4395 = vcosq.f32.pop %v4393
        %v4396 = vsinq.f32.pop %v4393
        %vm4397 = vweird.f32 %v4194
        %v4398 = vadd.s32 %v4394, 3
        %v4399 = vand.u32 %v4398, 3
        %vm4400 = vcmp.lt.s32.totalorder %v4399, 2
        %vm4401 = vcmp.eq.s32.totalorder %v4399, 0
        %v4402 = vxor.u32 %v4396, 2147483648
        %v4403 = vsel %vm4401, %v4395, %v4402
        %vm4404 = vcmp.eq.s32.totalorder %v4399, 2
        %v4405 = vxor.u32 %v4395, 2147483648
        %v4406 = vsel %vm4404, %v4405, %v4396
        %v4407 = vsel %vm4400, %v4403, %v4406
        %v4408 = vsel %vm4397, nan, %v4407
        %v4409 = vand.u32 2147483647, %v4195
        %vm4410 = vcmp.le.f32.partialorder %v4409, 0.7853982
        %vm4411 = vcmp.lt.s32.totalorder %v4195, 0
        %v4412 = vand.u32 %v4195, 2139095040
        %v4413 = vshrl.u32 %v4412, 23
        %v4414 = vsub.s32 %v4413, 127
        %v4415 = vand.u32 2147483647, %v4195
        %v4416 = vand.u32 %v4415, 8388607
        %v4417 = vor.u32 %v4416, 8388608
        %v4418 = vsub.s32 0, %v4417
        %v4419 = vadd.s32 %v4414, 1
        %vm4420 = vcmp.gt.s32.totalorder %v4419, 0
        %v4421 = vsel %vm4420, %v4419, 0
        %v4422 = vshrl.u32 %v4421, 5
        %v4423 = vand.u32 %v4421, 31
        %v4424 = vsub.s32 32, %v4423
        %v4425 = vshrl.u32 683565275, %v4424
        %v4426 = vshll.u32 683565275, %v4423
        %v4427 = vshrl.u32 2475754826, %v4424
        %v4428 = vor.u32 %v4426, %v4427
        %v4429 = vshll.u32 2475754826, %v4423
        %v4430 = vshrl.u32 2131351028, %v4424
        %v4431 = vor.u32 %v4429, %v4430
        %v4432 = vshll.u32 2131351028, %v4423
        %v4433 = vshrl.u32 2102212464, %v4424
        %v4434 = vor.u32 %v4432, %v4433
        %v4435 = vshll.u32 2102212464, %v4423
        %v4436 = vshrl.u32 920167782, %v4424
        %v4437 = vor.u32 %v4435, %v4436
        %v4438 = vshll.u32 920167782, %v4423
        %v4439 = vshrl.u32 1326507024, %v4424
        %v4440 = vor.u32 %v4438, %v4439
        %vm4441 = vcmp.lt.s32.totalorder %v4422, 1
        %vm4442 = vcmp.lt.s32.totalorder %v4422, 2
        %vm4443 = vcmp.lt.s32.totalorder %v4422, 3
        %vm4444 = vcmp.lt.s32.totalorder %v4422, 4
        %v4445 = vsel %vm4441, %v4425, %v4428
        %v4446 = vsel %vm4444, %v4434, 2102212464
        %v4447 = vsel %vm4443, %v4431, %v4446
        %v4448 = vsel %vm4442, %v4445, %v4447
        %v4449 = vsel %vm4441, %v4428, %v4431
        %v4450 = vsel %vm4444, %v4437, 920167782
        %v4451 = vsel %vm4443, %v4434, %v4450
        %v4452 = vsel %vm4442, %v4449, %v4451
        %v4453 = vsel %vm4441, %v4431, %v4434
        %v4454 = vsel %vm4444, %v4440, 1326507024
        %v4455 = vsel %vm4443, %v4437, %v4454
        %v4456 = vsel %vm4442, %v4453, %v4455
        %v4457 = vshll.u32 %v4417, 8
        %v4458 = vmul.u32.u64.compose %v4457, %v4456
        %v4459 = vextract.low.u32 %v4458
        %v4460 = vextract.high.u32 %v4458
        %v4461 = vmul.u32.u64.compose %v4457, %v4452
        %v4462 = vextract.low.u32 %v4461
        %v4463 = vextract.high.u32 %v4461
        %v4464 = vmul.u32 %v4457, %v4448
        %v4465 = vadd.s32 %v4460, %v4462
        %vm4466 = vc.u32 %v4460, %v4462
        %v4467 = vadd.s32 %v4463, 1
        %v4468 = vsel %vm4466, %v4467, %v4463
        %v4469 = vadd.s32 %v4464, %v4468
        %v4470 = vadd.s32 %v4469, 536870912
        %v4471 = vshrl.u32 %v4470, 30
        %v4472 = vshll.u32 %v4471, 30
        %v4473 = vsub.s32 %v4469, %v4472
        %vm4474 = vcmp.lt.s32.totalorder %v4473, 0
        %v4475 = vsub.s32 0, %v4473
        %v4476 = vsel %vm4474, %v4475, %v4473
        %v4477 = vclz %v4476
        %v4478 = vsub.s32 %v4477, 2
        %vm4479 = vcmp.gt.s32.totalorder 0, %v4478
        %v4480 = vsel %vm4479, 0, %v4478
        %v4481 = vsub.s32 32, %v4480
        %v4482 = vshll.u32 %v4473, %v4480
        %v4483 = vshrl.u32 %v4465, %v4481
        %v4484 = vor.u32 %v4482, %v4483
        %v4485 = vsub.s32 4294967266, %v4480
        %v4486 = vadd.s32 %v4485, 127
        %v4487 = vshll.u32 %v4486, 23
        %v4488 = vor.u32 4788187, %v4487
        %v4489 = vand.u32 2147483647, %v4488
        %v4491 = vcvt.s32.f32 %v4484
        %v4492 = vmul.f32 %v4491, %v4489
        %v4493 = vxor.u32 %v4492, 2147483648
        %v4494 = vsel %vm4411, %v4493, %v4492
        %v4495 = vsub.s32 4, %v4471
        %v4496 = vsel %vm4411, %v4495, %v4471
        %v4497 = vsel %vm4410, %v4195, %v4494
        %v4498 = vsel %vm4410, 0, %v4496
        %v4499 = vcosq.f32.pop %v4497
        %v4500 = vsinq.f32.pop %v4497
        %vm4501 = vweird.f32 %v4195
        %v4502 = vadd.s32 %v4498, 3
        %v4503 = vand.u32 %v4502, 3
        %vm4504 = vcmp.lt.s32.totalorder %v4503, 2
        %vm4505 = vcmp.eq.s32.totalorder %v4503, 0
        %v4506 = vxor.u32 %v4500, 2147483648
        %v4507 = vsel %vm4505, %v4499, %v4506
        %vm4508 = vcmp.eq.s32.totalorder %v4503, 2
        %v4509 = vxor.u32 %v4499, 2147483648
        %v4510 = vsel %vm4508, %v4509, %v4500
        %v4511 = vsel %vm4504, %v4507, %v4510
        %v4512 = vsel %vm4501, nan, %v4511
        %v4513 = vand.u32 2147483647, %v4196
        %vm4514 = vcmp.le.f32.partialorder %v4513, 0.7853982
        %vm4515 = vcmp.lt.s32.totalorder %v4196, 0
        %v4516 = vand.u32 %v4196, 2139095040
        %v4517 = vshrl.u32 %v4516, 23
        %v4518 = vsub.s32 %v4517, 127
        %v4519 = vand.u32 2147483647, %v4196
        %v4520 = vand.u32 %v4519, 8388607
        %v4521 = vor.u32 %v4520, 8388608
        %v4522 = vsub.s32 0, %v4521
        %v4523 = vadd.s32 %v4518, 1
        %vm4524 = vcmp.gt.s32.totalorder %v4523, 0
        %v4525 = vsel %vm4524, %v4523, 0
        %v4526 = vshrl.u32 %v4525, 5
        %v4527 = vand.u32 %v4525, 31
        %v4528 = vsub.s32 32, %v4527
        %v4529 = vshrl.u32 683565275, %v4528
        %v4530 = vshll.u32 683565275, %v4527
        %v4531 = vshrl.u32 2475754826, %v4528
        %v4532 = vor.u32 %v4530, %v4531
        %v4533 = vshll.u32 2475754826, %v4527
        %v4534 = vshrl.u32 2131351028, %v4528
        %v4535 = vor.u32 %v4533, %v4534
        %v4536 = vshll.u32 2131351028, %v4527
        %v4537 = vshrl.u32 2102212464, %v4528
        %v4538 = vor.u32 %v4536, %v4537
        %v4539 = vshll.u32 2102212464, %v4527
        %v4540 = vshrl.u32 920167782, %v4528
        %v4541 = vor.u32 %v4539, %v4540
        %v4542 = vshll.u32 920167782, %v4527
        %v4543 = vshrl.u32 1326507024, %v4528
        %v4544 = vor.u32 %v4542, %v4543
        %vm4545 = vcmp.lt.s32.totalorder %v4526, 1
        %vm4546 = vcmp.lt.s32.totalorder %v4526, 2
        %vm4547 = vcmp.lt.s32.totalorder %v4526, 3
        %vm4548 = vcmp.lt.s32.totalorder %v4526, 4
        %v4549 = vsel %vm4545, %v4529, %v4532
        %v4550 = vsel %vm4548, %v4538, 2102212464
        %v4551 = vsel %vm4547, %v4535, %v4550
        %v4552 = vsel %vm4546, %v4549, %v4551
        %v4553 = vsel %vm4545, %v4532, %v4535
        %v4554 = vsel %vm4548, %v4541, 920167782
        %v4555 = vsel %vm4547, %v4538, %v4554
        %v4556 = vsel %vm4546, %v4553, %v4555
        %v4557 = vsel %vm4545, %v4535, %v4538
        %v4558 = vsel %vm4548, %v4544, 1326507024
        %v4559 = vsel %vm4547, %v4541, %v4558
        %v4560 = vsel %vm4546, %v4557, %v4559
        %v4561 = vshll.u32 %v4521, 8
        %v4562 = vmul.u32.u64.compose %v4561, %v4560
        %v4563 = vextract.low.u32 %v4562
        %v4564 = vextract.high.u32 %v4562
        %v4565 = vmul.u32.u64.compose %v4561, %v4556
        %v4566 = vextract.low.u32 %v4565
        %v4567 = vextract.high.u32 %v4565
        %v4568 = vmul.u32 %v4561, %v4552
        %v4569 = vadd.s32 %v4564, %v4566
        %vm4570 = vc.u32 %v4564, %v4566
        %v4571 = vadd.s32 %v4567, 1
        %v4572 = vsel %vm4570, %v4571, %v4567
        %v4573 = vadd.s32 %v4568, %v4572
        %v4574 = vadd.s32 %v4573, 536870912
        %v4575 = vshrl.u32 %v4574, 30
        %v4576 = vshll.u32 %v4575, 30
        %v4577 = vsub.s32 %v4573, %v4576
        %vm4578 = vcmp.lt.s32.totalorder %v4577, 0
        %v4579 = vsub.s32 0, %v4577
        %v4580 = vsel %vm4578, %v4579, %v4577
        %v4581 = vclz %v4580
        %v4582 = vsub.s32 %v4581, 2
        %vm4583 = vcmp.gt.s32.totalorder 0, %v4582
        %v4584 = vsel %vm4583, 0, %v4582
        %v4585 = vsub.s32 32, %v4584
        %v4586 = vshll.u32 %v4577, %v4584
        %v4587 = vshrl.u32 %v4569, %v4585
        %v4588 = vor.u32 %v4586, %v4587
        %v4589 = vsub.s32 4294967266, %v4584
        %v4590 = vadd.s32 %v4589, 127
        %v4591 = vshll.u32 %v4590, 23
        %v4592 = vor.u32 4788187, %v4591
        %v4593 = vand.u32 2147483647, %v4592
        %v4595 = vcvt.s32.f32 %v4588
        %v4596 = vmul.f32 %v4595, %v4593
        %v4597 = vxor.u32 %v4596, 2147483648
        %v4598 = vsel %vm4515, %v4597, %v4596
        %v4599 = vsub.s32 4, %v4575
        %v4600 = vsel %vm4515, %v4599, %v4575
        %v4601 = vsel %vm4514, %v4196, %v4598
        %v4602 = vsel %vm4514, 0, %v4600
        %v4603 = vcosq.f32.pop %v4601
        %v4604 = vsinq.f32.pop %v4601
        %vm4605 = vweird.f32 %v4196
        %v4606 = vadd.s32 %v4602, 3
        %v4607 = vand.u32 %v4606, 3
        %vm4608 = vcmp.lt.s32.totalorder %v4607, 2
        %vm4609 = vcmp.eq.s32.totalorder %v4607, 0
        %v4610 = vxor.u32 %v4604, 2147483648
        %v4611 = vsel %vm4609, %v4603, %v4610
        %vm4612 = vcmp.eq.s32.totalorder %v4607, 2
        %v4613 = vxor.u32 %v4603, 2147483648
        %v4614 = vsel %vm4612, %v4613, %v4604
        %v4615 = vsel %vm4608, %v4611, %v4614
        %v4616 = vsel %vm4605, nan, %v4615
        %v4617 = vand.u32 2147483647, %v4197
        %vm4618 = vcmp.le.f32.partialorder %v4617, 0.7853982
        %vm4619 = vcmp.lt.s32.totalorder %v4197, 0
        %v4620 = vand.u32 %v4197, 2139095040
        %v4621 = vshrl.u32 %v4620, 23
        %v4622 = vsub.s32 %v4621, 127
        %v4623 = vand.u32 2147483647, %v4197
        %v4624 = vand.u32 %v4623, 8388607
        %v4625 = vor.u32 %v4624, 8388608
        %v4626 = vsub.s32 0, %v4625
        %v4627 = vadd.s32 %v4622, 1
        %vm4628 = vcmp.gt.s32.totalorder %v4627, 0
        %v4629 = vsel %vm4628, %v4627, 0
        %v4630 = vshrl.u32 %v4629, 5
        %v4631 = vand.u32 %v4629, 31
        %v4632 = vsub.s32 32, %v4631
        %v4633 = vshrl.u32 683565275, %v4632
        %v4634 = vshll.u32 683565275, %v4631
        %v4635 = vshrl.u32 2475754826, %v4632
        %v4636 = vor.u32 %v4634, %v4635
        %v4637 = vshll.u32 2475754826, %v4631
        %v4638 = vshrl.u32 2131351028, %v4632
        %v4639 = vor.u32 %v4637, %v4638
        %v4640 = vshll.u32 2131351028, %v4631
        %v4641 = vshrl.u32 2102212464, %v4632
        %v4642 = vor.u32 %v4640, %v4641
        %v4643 = vshll.u32 2102212464, %v4631
        %v4644 = vshrl.u32 920167782, %v4632
        %v4645 = vor.u32 %v4643, %v4644
        %v4646 = vshll.u32 920167782, %v4631
        %v4647 = vshrl.u32 1326507024, %v4632
        %v4648 = vor.u32 %v4646, %v4647
        %vm4649 = vcmp.lt.s32.totalorder %v4630, 1
        %vm4650 = vcmp.lt.s32.totalorder %v4630, 2
        %vm4651 = vcmp.lt.s32.totalorder %v4630, 3
        %vm4652 = vcmp.lt.s32.totalorder %v4630, 4
        %v4653 = vsel %vm4649, %v4633, %v4636
        %v4654 = vsel %vm4652, %v4642, 2102212464
        %v4655 = vsel %vm4651, %v4639, %v4654
        %v4656 = vsel %vm4650, %v4653, %v4655
        %v4657 = vsel %vm4649, %v4636, %v4639
        %v4658 = vsel %vm4652, %v4645, 920167782
        %v4659 = vsel %vm4651, %v4642, %v4658
        %v4660 = vsel %vm4650, %v4657, %v4659
        %v4661 = vsel %vm4649, %v4639, %v4642
        %v4662 = vsel %vm4652, %v4648, 1326507024
        %v4663 = vsel %vm4651, %v4645, %v4662
        %v4664 = vsel %vm4650, %v4661, %v4663
        %v4665 = vshll.u32 %v4625, 8
        %v4666 = vmul.u32.u64.compose %v4665, %v4664
        %v4667 = vextract.low.u32 %v4666
        %v4668 = vextract.high.u32 %v4666
        %v4669 = vmul.u32.u64.compose %v4665, %v4660
        %v4670 = vextract.low.u32 %v4669
        %v4671 = vextract.high.u32 %v4669
        %v4672 = vmul.u32 %v4665, %v4656
        %v4673 = vadd.s32 %v4668, %v4670
        %vm4674 = vc.u32 %v4668, %v4670
        %v4675 = vadd.s32 %v4671, 1
        %v4676 = vsel %vm4674, %v4675, %v4671
        %v4677 = vadd.s32 %v4672, %v4676
        %v4678 = vadd.s32 %v4677, 536870912
        %v4679 = vshrl.u32 %v4678, 30
        %v4680 = vshll.u32 %v4679, 30
        %v4681 = vsub.s32 %v4677, %v4680
        %vm4682 = vcmp.lt.s32.totalorder %v4681, 0
        %v4683 = vsub.s32 0, %v4681
        %v4684 = vsel %vm4682, %v4683, %v4681
        %v4685 = vclz %v4684
        %v4686 = vsub.s32 %v4685, 2
        %vm4687 = vcmp.gt.s32.totalorder 0, %v4686
        %v4688 = vsel %vm4687, 0, %v4686
        %v4689 = vsub.s32 32, %v4688
        %v4690 = vshll.u32 %v4681, %v4688
        %v4691 = vshrl.u32 %v4673, %v4689
        %v4692 = vor.u32 %v4690, %v4691
        %v4693 = vsub.s32 4294967266, %v4688
        %v4694 = vadd.s32 %v4693, 127
        %v4695 = vshll.u32 %v4694, 23
        %v4696 = vor.u32 4788187, %v4695
        %v4697 = vand.u32 2147483647, %v4696
        %v4699 = vcvt.s32.f32 %v4692
        %v4700 = vmul.f32 %v4699, %v4697
        %v4701 = vxor.u32 %v4700, 2147483648
        %v4702 = vsel %vm4619, %v4701, %v4700
        %v4703 = vsub.s32 4, %v4679
        %v4704 = vsel %vm4619, %v4703, %v4679
        %v4705 = vsel %vm4618, %v4197, %v4702
        %v4706 = vsel %vm4618, 0, %v4704
        %v4707 = vcosq.f32.pop %v4705
        %v4708 = vsinq.f32.pop %v4705
        %vm4709 = vweird.f32 %v4197
        %v4710 = vadd.s32 %v4706, 3
        %v4711 = vand.u32 %v4710, 3
        %vm4712 = vcmp.lt.s32.totalorder %v4711, 2
        %vm4713 = vcmp.eq.s32.totalorder %v4711, 0
        %v4714 = vxor.u32 %v4708, 2147483648
        %v4715 = vsel %vm4713, %v4707, %v4714
        %vm4716 = vcmp.eq.s32.totalorder %v4711, 2
        %v4717 = vxor.u32 %v4707, 2147483648
        %v4718 = vsel %vm4716, %v4717, %v4708
        %v4719 = vsel %vm4712, %v4715, %v4718
        %v4720 = vsel %vm4709, nan, %v4719
        %v4721 = vand.u32 2147483647, %v4198
        %vm4722 = vcmp.le.f32.partialorder %v4721, 0.7853982
        %vm4723 = vcmp.lt.s32.totalorder %v4198, 0
        %v4724 = vand.u32 %v4198, 2139095040
        %v4725 = vshrl.u32 %v4724, 23
        %v4726 = vsub.s32 %v4725, 127
        %v4727 = vand.u32 2147483647, %v4198
        %v4728 = vand.u32 %v4727, 8388607
        %v4729 = vor.u32 %v4728, 8388608
        %v4730 = vsub.s32 0, %v4729
        %v4731 = vadd.s32 %v4726, 1
        %vm4732 = vcmp.gt.s32.totalorder %v4731, 0
        %v4733 = vsel %vm4732, %v4731, 0
        %v4734 = vshrl.u32 %v4733, 5
        %v4735 = vand.u32 %v4733, 31
        %v4736 = vsub.s32 32, %v4735
        %v4737 = vshrl.u32 683565275, %v4736
        %v4738 = vshll.u32 683565275, %v4735
        %v4739 = vshrl.u32 2475754826, %v4736
        %v4740 = vor.u32 %v4738, %v4739
        %v4741 = vshll.u32 2475754826, %v4735
        %v4742 = vshrl.u32 2131351028, %v4736
        %v4743 = vor.u32 %v4741, %v4742
        %v4744 = vshll.u32 2131351028, %v4735
        %v4745 = vshrl.u32 2102212464, %v4736
        %v4746 = vor.u32 %v4744, %v4745
        %v4747 = vshll.u32 2102212464, %v4735
        %v4748 = vshrl.u32 920167782, %v4736
        %v4749 = vor.u32 %v4747, %v4748
        %v4750 = vshll.u32 920167782, %v4735
        %v4751 = vshrl.u32 1326507024, %v4736
        %v4752 = vor.u32 %v4750, %v4751
        %vm4753 = vcmp.lt.s32.totalorder %v4734, 1
        %vm4754 = vcmp.lt.s32.totalorder %v4734, 2
        %vm4755 = vcmp.lt.s32.totalorder %v4734, 3
        %vm4756 = vcmp.lt.s32.totalorder %v4734, 4
        %v4757 = vsel %vm4753, %v4737, %v4740
        %v4758 = vsel %vm4756, %v4746, 2102212464
        %v4759 = vsel %vm4755, %v4743, %v4758
        %v4760 = vsel %vm4754, %v4757, %v4759
        %v4761 = vsel %vm4753, %v4740, %v4743
        %v4762 = vsel %vm4756, %v4749, 920167782
        %v4763 = vsel %vm4755, %v4746, %v4762
        %v4764 = vsel %vm4754, %v4761, %v4763
        %v4765 = vsel %vm4753, %v4743, %v4746
        %v4766 = vsel %vm4756, %v4752, 1326507024
        %v4767 = vsel %vm4755, %v4749, %v4766
        %v4768 = vsel %vm4754, %v4765, %v4767
        %v4769 = vshll.u32 %v4729, 8
        %v4770 = vmul.u32.u64.compose %v4769, %v4768
        %v4771 = vextract.low.u32 %v4770
        %v4772 = vextract.high.u32 %v4770
        %v4773 = vmul.u32.u64.compose %v4769, %v4764
        %v4774 = vextract.low.u32 %v4773
        %v4775 = vextract.high.u32 %v4773
        %v4776 = vmul.u32 %v4769, %v4760
        %v4777 = vadd.s32 %v4772, %v4774
        %vm4778 = vc.u32 %v4772, %v4774
        %v4779 = vadd.s32 %v4775, 1
        %v4780 = vsel %vm4778, %v4779, %v4775
        %v4781 = vadd.s32 %v4776, %v4780
        %v4782 = vadd.s32 %v4781, 536870912
        %v4783 = vshrl.u32 %v4782, 30
        %v4784 = vshll.u32 %v4783, 30
        %v4785 = vsub.s32 %v4781, %v4784
        %vm4786 = vcmp.lt.s32.totalorder %v4785, 0
        %v4787 = vsub.s32 0, %v4785
        %v4788 = vsel %vm4786, %v4787, %v4785
        %v4789 = vclz %v4788
        %v4790 = vsub.s32 %v4789, 2
        %vm4791 = vcmp.gt.s32.totalorder 0, %v4790
        %v4792 = vsel %vm4791, 0, %v4790
        %v4793 = vsub.s32 32, %v4792
        %v4794 = vshll.u32 %v4785, %v4792
        %v4795 = vshrl.u32 %v4777, %v4793
        %v4796 = vor.u32 %v4794, %v4795
        %v4797 = vsub.s32 4294967266, %v4792
        %v4798 = vadd.s32 %v4797, 127
        %v4799 = vshll.u32 %v4798, 23
        %v4800 = vor.u32 4788187, %v4799
        %v4801 = vand.u32 2147483647, %v4800
        %v4803 = vcvt.s32.f32 %v4796
        %v4804 = vmul.f32 %v4803, %v4801
        %v4805 = vxor.u32 %v4804, 2147483648
        %v4806 = vsel %vm4723, %v4805, %v4804
        %v4807 = vsub.s32 4, %v4783
        %v4808 = vsel %vm4723, %v4807, %v4783
        %v4809 = vsel %vm4722, %v4198, %v4806
        %v4810 = vsel %vm4722, 0, %v4808
        %v4811 = vcosq.f32.pop %v4809
        %v4812 = vsinq.f32.pop %v4809
        %vm4813 = vweird.f32 %v4198
        %v4814 = vadd.s32 %v4810, 3
        %v4815 = vand.u32 %v4814, 3
        %vm4816 = vcmp.lt.s32.totalorder %v4815, 2
        %vm4817 = vcmp.eq.s32.totalorder %v4815, 0
        %v4818 = vxor.u32 %v4812, 2147483648
        %v4819 = vsel %vm4817, %v4811, %v4818
        %vm4820 = vcmp.eq.s32.totalorder %v4815, 2
        %v4821 = vxor.u32 %v4811, 2147483648
        %v4822 = vsel %vm4820, %v4821, %v4812
        %v4823 = vsel %vm4816, %v4819, %v4822
        %v4824 = vsel %vm4813, nan, %v4823
        %v4825 = vand.u32 2147483647, %v4199
        %vm4826 = vcmp.le.f32.partialorder %v4825, 0.7853982
        %vm4827 = vcmp.lt.s32.totalorder %v4199, 0
        %v4828 = vand.u32 %v4199, 2139095040
        %v4829 = vshrl.u32 %v4828, 23
        %v4830 = vsub.s32 %v4829, 127
        %v4831 = vand.u32 2147483647, %v4199
        %v4832 = vand.u32 %v4831, 8388607
        %v4833 = vor.u32 %v4832, 8388608
        %v4834 = vsub.s32 0, %v4833
        %v4835 = vadd.s32 %v4830, 1
        %vm4836 = vcmp.gt.s32.totalorder %v4835, 0
        %v4837 = vsel %vm4836, %v4835, 0
        %v4838 = vshrl.u32 %v4837, 5
        %v4839 = vand.u32 %v4837, 31
        %v4840 = vsub.s32 32, %v4839
        %v4841 = vshrl.u32 683565275, %v4840
        %v4842 = vshll.u32 683565275, %v4839
        %v4843 = vshrl.u32 2475754826, %v4840
        %v4844 = vor.u32 %v4842, %v4843
        %v4845 = vshll.u32 2475754826, %v4839
        %v4846 = vshrl.u32 2131351028, %v4840
        %v4847 = vor.u32 %v4845, %v4846
        %v4848 = vshll.u32 2131351028, %v4839
        %v4849 = vshrl.u32 2102212464, %v4840
        %v4850 = vor.u32 %v4848, %v4849
        %v4851 = vshll.u32 2102212464, %v4839
        %v4852 = vshrl.u32 920167782, %v4840
        %v4853 = vor.u32 %v4851, %v4852
        %v4854 = vshll.u32 920167782, %v4839
        %v4855 = vshrl.u32 1326507024, %v4840
        %v4856 = vor.u32 %v4854, %v4855
        %vm4857 = vcmp.lt.s32.totalorder %v4838, 1
        %vm4858 = vcmp.lt.s32.totalorder %v4838, 2
        %vm4859 = vcmp.lt.s32.totalorder %v4838, 3
        %vm4860 = vcmp.lt.s32.totalorder %v4838, 4
        %v4861 = vsel %vm4857, %v4841, %v4844
        %v4862 = vsel %vm4860, %v4850, 2102212464
        %v4863 = vsel %vm4859, %v4847, %v4862
        %v4864 = vsel %vm4858, %v4861, %v4863
        %v4865 = vsel %vm4857, %v4844, %v4847
        %v4866 = vsel %vm4860, %v4853, 920167782
        %v4867 = vsel %vm4859, %v4850, %v4866
        %v4868 = vsel %vm4858, %v4865, %v4867
        %v4869 = vsel %vm4857, %v4847, %v4850
        %v4870 = vsel %vm4860, %v4856, 1326507024
        %v4871 = vsel %vm4859, %v4853, %v4870
        %v4872 = vsel %vm4858, %v4869, %v4871
        %v4873 = vshll.u32 %v4833, 8
        %v4874 = vmul.u32.u64.compose %v4873, %v4872
        %v4875 = vextract.low.u32 %v4874
        %v4876 = vextract.high.u32 %v4874
        %v4877 = vmul.u32.u64.compose %v4873, %v4868
        %v4878 = vextract.low.u32 %v4877
        %v4879 = vextract.high.u32 %v4877
        %v4880 = vmul.u32 %v4873, %v4864
        %v4881 = vadd.s32 %v4876, %v4878
        %vm4882 = vc.u32 %v4876, %v4878
        %v4883 = vadd.s32 %v4879, 1
        %v4884 = vsel %vm4882, %v4883, %v4879
        %v4885 = vadd.s32 %v4880, %v4884
        %v4886 = vadd.s32 %v4885, 536870912
        %v4887 = vshrl.u32 %v4886, 30
        %v4888 = vshll.u32 %v4887, 30
        %v4889 = vsub.s32 %v4885, %v4888
        %vm4890 = vcmp.lt.s32.totalorder %v4889, 0
        %v4891 = vsub.s32 0, %v4889
        %v4892 = vsel %vm4890, %v4891, %v4889
        %v4893 = vclz %v4892
        %v4894 = vsub.s32 %v4893, 2
        %vm4895 = vcmp.gt.s32.totalorder 0, %v4894
        %v4896 = vsel %vm4895, 0, %v4894
        %v4897 = vsub.s32 32, %v4896
        %v4898 = vshll.u32 %v4889, %v4896
        %v4899 = vshrl.u32 %v4881, %v4897
        %v4900 = vor.u32 %v4898, %v4899
        %v4901 = vsub.s32 4294967266, %v4896
        %v4902 = vadd.s32 %v4901, 127
        %v4903 = vshll.u32 %v4902, 23
        %v4904 = vor.u32 4788187, %v4903
        %v4905 = vand.u32 2147483647, %v4904
        %v4907 = vcvt.s32.f32 %v4900
        %v4908 = vmul.f32 %v4907, %v4905
        %v4909 = vxor.u32 %v4908, 2147483648
        %v4910 = vsel %vm4827, %v4909, %v4908
        %v4911 = vsub.s32 4, %v4887
        %v4912 = vsel %vm4827, %v4911, %v4887
        %v4913 = vsel %vm4826, %v4199, %v4910
        %v4914 = vsel %vm4826, 0, %v4912
        %v4915 = vcosq.f32.pop %v4913
        %v4916 = vsinq.f32.pop %v4913
        %vm4917 = vweird.f32 %v4199
        %v4918 = vadd.s32 %v4914, 3
        %v4919 = vand.u32 %v4918, 3
        %vm4920 = vcmp.lt.s32.totalorder %v4919, 2
        %vm4921 = vcmp.eq.s32.totalorder %v4919, 0
        %v4922 = vxor.u32 %v4916, 2147483648
        %v4923 = vsel %vm4921, %v4915, %v4922
        %vm4924 = vcmp.eq.s32.totalorder %v4919, 2
        %v4925 = vxor.u32 %v4915, 2147483648
        %v4926 = vsel %vm4924, %v4925, %v4916
        %v4927 = vsel %vm4920, %v4923, %v4926
        %v4928 = vsel %vm4917, nan, %v4927
        %v4929 = vand.u32 2147483647, %v4200
        %vm4930 = vcmp.le.f32.partialorder %v4929, 0.7853982
        %vm4931 = vcmp.lt.s32.totalorder %v4200, 0
        %v4932 = vand.u32 %v4200, 2139095040
        %v4933 = vshrl.u32 %v4932, 23
        %v4934 = vsub.s32 %v4933, 127
        %v4935 = vand.u32 2147483647, %v4200
        %v4936 = vand.u32 %v4935, 8388607
        %v4937 = vor.u32 %v4936, 8388608
        %v4938 = vsub.s32 0, %v4937
        %v4939 = vadd.s32 %v4934, 1
        %vm4940 = vcmp.gt.s32.totalorder %v4939, 0
        %v4941 = vsel %vm4940, %v4939, 0
        %v4942 = vshrl.u32 %v4941, 5
        %v4943 = vand.u32 %v4941, 31
        %v4944 = vsub.s32 32, %v4943
        %v4945 = vshrl.u32 683565275, %v4944
        %v4946 = vshll.u32 683565275, %v4943
        %v4947 = vshrl.u32 2475754826, %v4944
        %v4948 = vor.u32 %v4946, %v4947
        %v4949 = vshll.u32 2475754826, %v4943
        %v4950 = vshrl.u32 2131351028, %v4944
        %v4951 = vor.u32 %v4949, %v4950
        %v4952 = vshll.u32 2131351028, %v4943
        %v4953 = vshrl.u32 2102212464, %v4944
        %v4954 = vor.u32 %v4952, %v4953
        %v4955 = vshll.u32 2102212464, %v4943
        %v4956 = vshrl.u32 920167782, %v4944
        %v4957 = vor.u32 %v4955, %v4956
        %v4958 = vshll.u32 920167782, %v4943
        %v4959 = vshrl.u32 1326507024, %v4944
        %v4960 = vor.u32 %v4958, %v4959
        %vm4961 = vcmp.lt.s32.totalorder %v4942, 1
        %vm4962 = vcmp.lt.s32.totalorder %v4942, 2
        %vm4963 = vcmp.lt.s32.totalorder %v4942, 3
        %vm4964 = vcmp.lt.s32.totalorder %v4942, 4
        %v4965 = vsel %vm4961, %v4945, %v4948
        %v4966 = vsel %vm4964, %v4954, 2102212464
        %v4967 = vsel %vm4963, %v4951, %v4966
        %v4968 = vsel %vm4962, %v4965, %v4967
        %v4969 = vsel %vm4961, %v4948, %v4951
        %v4970 = vsel %vm4964, %v4957, 920167782
        %v4971 = vsel %vm4963, %v4954, %v4970
        %v4972 = vsel %vm4962, %v4969, %v4971
        %v4973 = vsel %vm4961, %v4951, %v4954
        %v4974 = vsel %vm4964, %v4960, 1326507024
        %v4975 = vsel %vm4963, %v4957, %v4974
        %v4976 = vsel %vm4962, %v4973, %v4975
        %v4977 = vshll.u32 %v4937, 8
        %v4978 = vmul.u32.u64.compose %v4977, %v4976
        %v4979 = vextract.low.u32 %v4978
        %v4980 = vextract.high.u32 %v4978
        %v4981 = vmul.u32.u64.compose %v4977, %v4972
        %v4982 = vextract.low.u32 %v4981
        %v4983 = vextract.high.u32 %v4981
        %v4984 = vmul.u32 %v4977, %v4968
        %v4985 = vadd.s32 %v4980, %v4982
        %vm4986 = vc.u32 %v4980, %v4982
        %v4987 = vadd.s32 %v4983, 1
        %v4988 = vsel %vm4986, %v4987, %v4983
        %v4989 = vadd.s32 %v4984, %v4988
        %v4990 = vadd.s32 %v4989, 536870912
        %v4991 = vshrl.u32 %v4990, 30
        %v4992 = vshll.u32 %v4991, 30
        %v4993 = vsub.s32 %v4989, %v4992
        %vm4994 = vcmp.lt.s32.totalorder %v4993, 0
        %v4995 = vsub.s32 0, %v4993
        %v4996 = vsel %vm4994, %v4995, %v4993
        %v4997 = vclz %v4996
        %v4998 = vsub.s32 %v4997, 2
        %vm4999 = vcmp.gt.s32.totalorder 0, %v4998
        %v5000 = vsel %vm4999, 0, %v4998
        %v5001 = vsub.s32 32, %v5000
        %v5002 = vshll.u32 %v4993, %v5000
        %v5003 = vshrl.u32 %v4985, %v5001
        %v5004 = vor.u32 %v5002, %v5003
        %v5005 = vsub.s32 4294967266, %v5000
        %v5006 = vadd.s32 %v5005, 127
        %v5007 = vshll.u32 %v5006, 23
        %v5008 = vor.u32 4788187, %v5007
        %v5009 = vand.u32 2147483647, %v5008
        %v5011 = vcvt.s32.f32 %v5004
        %v5012 = vmul.f32 %v5011, %v5009
        %v5013 = vxor.u32 %v5012, 2147483648
        %v5014 = vsel %vm4931, %v5013, %v5012
        %v5015 = vsub.s32 4, %v4991
        %v5016 = vsel %vm4931, %v5015, %v4991
        %v5017 = vsel %vm4930, %v4200, %v5014
        %v5018 = vsel %vm4930, 0, %v5016
        %v5019 = vcosq.f32.pop %v5017
        %v5020 = vsinq.f32.pop %v5017
        %vm5021 = vweird.f32 %v4200
        %v5022 = vadd.s32 %v5018, 3
        %v5023 = vand.u32 %v5022, 3
        %vm5024 = vcmp.lt.s32.totalorder %v5023, 2
        %vm5025 = vcmp.eq.s32.totalorder %v5023, 0
        %v5026 = vxor.u32 %v5020, 2147483648
        %v5027 = vsel %vm5025, %v5019, %v5026
        %vm5028 = vcmp.eq.s32.totalorder %v5023, 2
        %v5029 = vxor.u32 %v5019, 2147483648
        %v5030 = vsel %vm5028, %v5029, %v5020
        %v5031 = vsel %vm5024, %v5027, %v5030
        %v5032 = vsel %vm5021, nan, %v5031
        %v5033 = vand.u32 2147483647, %v4193
        %vm5034 = vcmp.le.f32.partialorder %v5033, 0.7853982
        %vm5035 = vcmp.lt.s32.totalorder %v4193, 0
        %v5036 = vand.u32 %v4193, 2139095040
        %v5037 = vshrl.u32 %v5036, 23
        %v5038 = vsub.s32 %v5037, 127
        %v5039 = vand.u32 2147483647, %v4193
        %v5040 = vand.u32 %v5039, 8388607
        %v5041 = vor.u32 %v5040, 8388608
        %v5042 = vsub.s32 0, %v5041
        %v5043 = vadd.s32 %v5038, 1
        %vm5044 = vcmp.gt.s32.totalorder %v5043, 0
        %v5045 = vsel %vm5044, %v5043, 0
        %v5046 = vshrl.u32 %v5045, 5
        %v5047 = vand.u32 %v5045, 31
        %v5048 = vsub.s32 32, %v5047
        %v5049 = vshrl.u32 683565275, %v5048
        %v5050 = vshll.u32 683565275, %v5047
        %v5051 = vshrl.u32 2475754826, %v5048
        %v5052 = vor.u32 %v5050, %v5051
        %v5053 = vshll.u32 2475754826, %v5047
        %v5054 = vshrl.u32 2131351028, %v5048
        %v5055 = vor.u32 %v5053, %v5054
        %v5056 = vshll.u32 2131351028, %v5047
        %v5057 = vshrl.u32 2102212464, %v5048
        %v5058 = vor.u32 %v5056, %v5057
        %v5059 = vshll.u32 2102212464, %v5047
        %v5060 = vshrl.u32 920167782, %v5048
        %v5061 = vor.u32 %v5059, %v5060
        %v5062 = vshll.u32 920167782, %v5047
        %v5063 = vshrl.u32 1326507024, %v5048
        %v5064 = vor.u32 %v5062, %v5063
        %vm5065 = vcmp.lt.s32.totalorder %v5046, 1
        %vm5066 = vcmp.lt.s32.totalorder %v5046, 2
        %vm5067 = vcmp.lt.s32.totalorder %v5046, 3
        %vm5068 = vcmp.lt.s32.totalorder %v5046, 4
        %v5069 = vsel %vm5065, %v5049, %v5052
        %v5070 = vsel %vm5068, %v5058, 2102212464
        %v5071 = vsel %vm5067, %v5055, %v5070
        %v5072 = vsel %vm5066, %v5069, %v5071
        %v5073 = vsel %vm5065, %v5052, %v5055
        %v5074 = vsel %vm5068, %v5061, 920167782
        %v5075 = vsel %vm5067, %v5058, %v5074
        %v5076 = vsel %vm5066, %v5073, %v5075
        %v5077 = vsel %vm5065, %v5055, %v5058
        %v5078 = vsel %vm5068, %v5064, 1326507024
        %v5079 = vsel %vm5067, %v5061, %v5078
        %v5080 = vsel %vm5066, %v5077, %v5079
        %v5081 = vshll.u32 %v5041, 8
        %v5082 = vmul.u32.u64.compose %v5081, %v5080
        %v5083 = vextract.low.u32 %v5082
        %v5084 = vextract.high.u32 %v5082
        %v5085 = vmul.u32.u64.compose %v5081, %v5076
        %v5086 = vextract.low.u32 %v5085
        %v5087 = vextract.high.u32 %v5085
        %v5088 = vmul.u32 %v5081, %v5072
        %v5089 = vadd.s32 %v5084, %v5086
        %vm5090 = vc.u32 %v5084, %v5086
        %v5091 = vadd.s32 %v5087, 1
        %v5092 = vsel %vm5090, %v5091, %v5087
        %v5093 = vadd.s32 %v5088, %v5092
        %v5094 = vadd.s32 %v5093, 536870912
        %v5095 = vshrl.u32 %v5094, 30
        %v5096 = vshll.u32 %v5095, 30
        %v5097 = vsub.s32 %v5093, %v5096
        %vm5098 = vcmp.lt.s32.totalorder %v5097, 0
        %v5099 = vsub.s32 0, %v5097
        %v5100 = vsel %vm5098, %v5099, %v5097
        %v5101 = vclz %v5100
        %v5102 = vsub.s32 %v5101, 2
        %vm5103 = vcmp.gt.s32.totalorder 0, %v5102
        %v5104 = vsel %vm5103, 0, %v5102
        %v5105 = vsub.s32 32, %v5104
        %v5106 = vshll.u32 %v5097, %v5104
        %v5107 = vshrl.u32 %v5089, %v5105
        %v5108 = vor.u32 %v5106, %v5107
        %v5109 = vsub.s32 4294967266, %v5104
        %v5110 = vadd.s32 %v5109, 127
        %v5111 = vshll.u32 %v5110, 23
        %v5112 = vor.u32 4788187, %v5111
        %v5113 = vand.u32 2147483647, %v5112
        %v5115 = vcvt.s32.f32 %v5108
        %v5116 = vmul.f32 %v5115, %v5113
        %v5117 = vxor.u32 %v5116, 2147483648
        %v5118 = vsel %vm5035, %v5117, %v5116
        %v5119 = vsub.s32 4, %v5095
        %v5120 = vsel %vm5035, %v5119, %v5095
        %v5121 = vsel %vm5034, %v4193, %v5118
        %v5122 = vsel %vm5034, 0, %v5120
        %v5123 = vcosq.f32.pop %v5121
        %v5124 = vsinq.f32.pop %v5121
        %vm5125 = vweird.f32 %v4193
        %v5126 = vand.u32 %v5122, 3
        %vm5127 = vcmp.lt.s32.totalorder %v5126, 2
        %vm5128 = vcmp.eq.s32.totalorder %v5126, 0
        %v5129 = vxor.u32 %v5124, 2147483648
        %v5130 = vsel %vm5128, %v5123, %v5129
        %vm5131 = vcmp.eq.s32.totalorder %v5126, 2
        %v5132 = vxor.u32 %v5123, 2147483648
        %v5133 = vsel %vm5131, %v5132, %v5124
        %v5134 = vsel %vm5127, %v5130, %v5133
        %v5135 = vsel %vm5125, nan, %v5134
        %v5136 = vand.u32 2147483647, %v4194
        %vm5137 = vcmp.le.f32.partialorder %v5136, 0.7853982
        %vm5138 = vcmp.lt.s32.totalorder %v4194, 0
        %v5139 = vand.u32 %v4194, 2139095040
        %v5140 = vshrl.u32 %v5139, 23
        %v5141 = vsub.s32 %v5140, 127
        %v5142 = vand.u32 2147483647, %v4194
        %v5143 = vand.u32 %v5142, 8388607
        %v5144 = vor.u32 %v5143, 8388608
        %v5145 = vsub.s32 0, %v5144
        %v5146 = vadd.s32 %v5141, 1
        %vm5147 = vcmp.gt.s32.totalorder %v5146, 0
        %v5148 = vsel %vm5147, %v5146, 0
        %v5149 = vshrl.u32 %v5148, 5
        %v5150 = vand.u32 %v5148, 31
        %v5151 = vsub.s32 32, %v5150
        %v5152 = vshrl.u32 683565275, %v5151
        %v5153 = vshll.u32 683565275, %v5150
        %v5154 = vshrl.u32 2475754826, %v5151
        %v5155 = vor.u32 %v5153, %v5154
        %v5156 = vshll.u32 2475754826, %v5150
        %v5157 = vshrl.u32 2131351028, %v5151
        %v5158 = vor.u32 %v5156, %v5157
        %v5159 = vshll.u32 2131351028, %v5150
        %v5160 = vshrl.u32 2102212464, %v5151
        %v5161 = vor.u32 %v5159, %v5160
        %v5162 = vshll.u32 2102212464, %v5150
        %v5163 = vshrl.u32 920167782, %v5151
        %v5164 = vor.u32 %v5162, %v5163
        %v5165 = vshll.u32 920167782, %v5150
        %v5166 = vshrl.u32 1326507024, %v5151
        %v5167 = vor.u32 %v5165, %v5166
        %vm5168 = vcmp.lt.s32.totalorder %v5149, 1
        %vm5169 = vcmp.lt.s32.totalorder %v5149, 2
        %vm5170 = vcmp.lt.s32.totalorder %v5149, 3
        %vm5171 = vcmp.lt.s32.totalorder %v5149, 4
        %v5172 = vsel %vm5168, %v5152, %v5155
        %v5173 = vsel %vm5171, %v5161, 2102212464
        %v5174 = vsel %vm5170, %v5158, %v5173
        %v5175 = vsel %vm5169, %v5172, %v5174
        %v5176 = vsel %vm5168, %v5155, %v5158
        %v5177 = vsel %vm5171, %v5164, 920167782
        %v5178 = vsel %vm5170, %v5161, %v5177
        %v5179 = vsel %vm5169, %v5176, %v5178
        %v5180 = vsel %vm5168, %v5158, %v5161
        %v5181 = vsel %vm5171, %v5167, 1326507024
        %v5182 = vsel %vm5170, %v5164, %v5181
        %v5183 = vsel %vm5169, %v5180, %v5182
        %v5184 = vshll.u32 %v5144, 8
        %v5185 = vmul.u32.u64.compose %v5184, %v5183
        %v5186 = vextract.low.u32 %v5185
        %v5187 = vextract.high.u32 %v5185
        %v5188 = vmul.u32.u64.compose %v5184, %v5179
        %v5189 = vextract.low.u32 %v5188
        %v5190 = vextract.high.u32 %v5188
        %v5191 = vmul.u32 %v5184, %v5175
        %v5192 = vadd.s32 %v5187, %v5189
        %vm5193 = vc.u32 %v5187, %v5189
        %v5194 = vadd.s32 %v5190, 1
        %v5195 = vsel %vm5193, %v5194, %v5190
        %v5196 = vadd.s32 %v5191, %v5195
        %v5197 = vadd.s32 %v5196, 536870912
        %v5198 = vshrl.u32 %v5197, 30
        %v5199 = vshll.u32 %v5198, 30
        %v5200 = vsub.s32 %v5196, %v5199
        %vm5201 = vcmp.lt.s32.totalorder %v5200, 0
        %v5202 = vsub.s32 0, %v5200
        %v5203 = vsel %vm5201, %v5202, %v5200
        %v5204 = vclz %v5203
        %v5205 = vsub.s32 %v5204, 2
        %vm5206 = vcmp.gt.s32.totalorder 0, %v5205
        %v5207 = vsel %vm5206, 0, %v5205
        %v5208 = vsub.s32 32, %v5207
        %v5209 = vshll.u32 %v5200, %v5207
        %v5210 = vshrl.u32 %v5192, %v5208
        %v5211 = vor.u32 %v5209, %v5210
        %v5212 = vsub.s32 4294967266, %v5207
        %v5213 = vadd.s32 %v5212, 127
        %v5214 = vshll.u32 %v5213, 23
        %v5215 = vor.u32 4788187, %v5214
        %v5216 = vand.u32 2147483647, %v5215
        %v5218 = vcvt.s32.f32 %v5211
        %v5219 = vmul.f32 %v5218, %v5216
        %v5220 = vxor.u32 %v5219, 2147483648
        %v5221 = vsel %vm5138, %v5220, %v5219
        %v5222 = vsub.s32 4, %v5198
        %v5223 = vsel %vm5138, %v5222, %v5198
        %v5224 = vsel %vm5137, %v4194, %v5221
        %v5225 = vsel %vm5137, 0, %v5223
        %v5226 = vcosq.f32.pop %v5224
        %v5227 = vsinq.f32.pop %v5224
        %vm5228 = vweird.f32 %v4194
        %v5229 = vand.u32 %v5225, 3
        %vm5230 = vcmp.lt.s32.totalorder %v5229, 2
        %vm5231 = vcmp.eq.s32.totalorder %v5229, 0
        %v5232 = vxor.u32 %v5227, 2147483648
        %v5233 = vsel %vm5231, %v5226, %v5232
        %vm5234 = vcmp.eq.s32.totalorder %v5229, 2
        %v5235 = vxor.u32 %v5226, 2147483648
        %v5236 = vsel %vm5234, %v5235, %v5227
        %v5237 = vsel %vm5230, %v5233, %v5236
        %v5238 = vsel %vm5228, nan, %v5237
        %v5239 = vand.u32 2147483647, %v4195
        %vm5240 = vcmp.le.f32.partialorder %v5239, 0.7853982
        %vm5241 = vcmp.lt.s32.totalorder %v4195, 0
        %v5242 = vand.u32 %v4195, 2139095040
        %v5243 = vshrl.u32 %v5242, 23
        %v5244 = vsub.s32 %v5243, 127
        %v5245 = vand.u32 2147483647, %v4195
        %v5246 = vand.u32 %v5245, 8388607
        %v5247 = vor.u32 %v5246, 8388608
        %v5248 = vsub.s32 0, %v5247
        %v5249 = vadd.s32 %v5244, 1
        %vm5250 = vcmp.gt.s32.totalorder %v5249, 0
        %v5251 = vsel %vm5250, %v5249, 0
        %v5252 = vshrl.u32 %v5251, 5
        %v5253 = vand.u32 %v5251, 31
        %v5254 = vsub.s32 32, %v5253
        %v5255 = vshrl.u32 683565275, %v5254
        %v5256 = vshll.u32 683565275, %v5253
        %v5257 = vshrl.u32 2475754826, %v5254
        %v5258 = vor.u32 %v5256, %v5257
        %v5259 = vshll.u32 2475754826, %v5253
        %v5260 = vshrl.u32 2131351028, %v5254
        %v5261 = vor.u32 %v5259, %v5260
        %v5262 = vshll.u32 2131351028, %v5253
        %v5263 = vshrl.u32 2102212464, %v5254
        %v5264 = vor.u32 %v5262, %v5263
        %v5265 = vshll.u32 2102212464, %v5253
        %v5266 = vshrl.u32 920167782, %v5254
        %v5267 = vor.u32 %v5265, %v5266
        %v5268 = vshll.u32 920167782, %v5253
        %v5269 = vshrl.u32 1326507024, %v5254
        %v5270 = vor.u32 %v5268, %v5269
        %vm5271 = vcmp.lt.s32.totalorder %v5252, 1
        %vm5272 = vcmp.lt.s32.totalorder %v5252, 2
        %vm5273 = vcmp.lt.s32.totalorder %v5252, 3
        %vm5274 = vcmp.lt.s32.totalorder %v5252, 4
        %v5275 = vsel %vm5271, %v5255, %v5258
        %v5276 = vsel %vm5274, %v5264, 2102212464
        %v5277 = vsel %vm5273, %v5261, %v5276
        %v5278 = vsel %vm5272, %v5275, %v5277
        %v5279 = vsel %vm5271, %v5258, %v5261
        %v5280 = vsel %vm5274, %v5267, 920167782
        %v5281 = vsel %vm5273, %v5264, %v5280
        %v5282 = vsel %vm5272, %v5279, %v5281
        %v5283 = vsel %vm5271, %v5261, %v5264
        %v5284 = vsel %vm5274, %v5270, 1326507024
        %v5285 = vsel %vm5273, %v5267, %v5284
        %v5286 = vsel %vm5272, %v5283, %v5285
        %v5287 = vshll.u32 %v5247, 8
        %v5288 = vmul.u32.u64.compose %v5287, %v5286
        %v5289 = vextract.low.u32 %v5288
        %v5290 = vextract.high.u32 %v5288
        %v5291 = vmul.u32.u64.compose %v5287, %v5282
        %v5292 = vextract.low.u32 %v5291
        %v5293 = vextract.high.u32 %v5291
        %v5294 = vmul.u32 %v5287, %v5278
        %v5295 = vadd.s32 %v5290, %v5292
        %vm5296 = vc.u32 %v5290, %v5292
        %v5297 = vadd.s32 %v5293, 1
        %v5298 = vsel %vm5296, %v5297, %v5293
        %v5299 = vadd.s32 %v5294, %v5298
        %v5300 = vadd.s32 %v5299, 536870912
        %v5301 = vshrl.u32 %v5300, 30
        %v5302 = vshll.u32 %v5301, 30
        %v5303 = vsub.s32 %v5299, %v5302
        %vm5304 = vcmp.lt.s32.totalorder %v5303, 0
        %v5305 = vsub.s32 0, %v5303
        %v5306 = vsel %vm5304, %v5305, %v5303
        %v5307 = vclz %v5306
        %v5308 = vsub.s32 %v5307, 2
        %vm5309 = vcmp.gt.s32.totalorder 0, %v5308
        %v5310 = vsel %vm5309, 0, %v5308
        %v5311 = vsub.s32 32, %v5310
        %v5312 = vshll.u32 %v5303, %v5310
        %v5313 = vshrl.u32 %v5295, %v5311
        %v5314 = vor.u32 %v5312, %v5313
        %v5315 = vsub.s32 4294967266, %v5310
        %v5316 = vadd.s32 %v5315, 127
        %v5317 = vshll.u32 %v5316, 23
        %v5318 = vor.u32 4788187, %v5317
        %v5319 = vand.u32 2147483647, %v5318
        %v5321 = vcvt.s32.f32 %v5314
        %v5322 = vmul.f32 %v5321, %v5319
        %v5323 = vxor.u32 %v5322, 2147483648
        %v5324 = vsel %vm5241, %v5323, %v5322
        %v5325 = vsub.s32 4, %v5301
        %v5326 = vsel %vm5241, %v5325, %v5301
        %v5327 = vsel %vm5240, %v4195, %v5324
        %v5328 = vsel %vm5240, 0, %v5326
        %v5329 = vcosq.f32.pop %v5327
        %v5330 = vsinq.f32.pop %v5327
        %vm5331 = vweird.f32 %v4195
        %v5332 = vand.u32 %v5328, 3
        %vm5333 = vcmp.lt.s32.totalorder %v5332, 2
        %vm5334 = vcmp.eq.s32.totalorder %v5332, 0
        %v5335 = vxor.u32 %v5330, 2147483648
        %v5336 = vsel %vm5334, %v5329, %v5335
        %vm5337 = vcmp.eq.s32.totalorder %v5332, 2
        %v5338 = vxor.u32 %v5329, 2147483648
        %v5339 = vsel %vm5337, %v5338, %v5330
        %v5340 = vsel %vm5333, %v5336, %v5339
        %v5341 = vsel %vm5331, nan, %v5340
        %v5342 = vand.u32 2147483647, %v4196
        %vm5343 = vcmp.le.f32.partialorder %v5342, 0.7853982
        %vm5344 = vcmp.lt.s32.totalorder %v4196, 0
        %v5345 = vand.u32 %v4196, 2139095040
        %v5346 = vshrl.u32 %v5345, 23
        %v5347 = vsub.s32 %v5346, 127
        %v5348 = vand.u32 2147483647, %v4196
        %v5349 = vand.u32 %v5348, 8388607
        %v5350 = vor.u32 %v5349, 8388608
        %v5351 = vsub.s32 0, %v5350
        %v5352 = vadd.s32 %v5347, 1
        %vm5353 = vcmp.gt.s32.totalorder %v5352, 0
        %v5354 = vsel %vm5353, %v5352, 0
        %v5355 = vshrl.u32 %v5354, 5
        %v5356 = vand.u32 %v5354, 31
        %v5357 = vsub.s32 32, %v5356
        %v5358 = vshrl.u32 683565275, %v5357
        %v5359 = vshll.u32 683565275, %v5356
        %v5360 = vshrl.u32 2475754826, %v5357
        %v5361 = vor.u32 %v5359, %v5360
        %v5362 = vshll.u32 2475754826, %v5356
        %v5363 = vshrl.u32 2131351028, %v5357
        %v5364 = vor.u32 %v5362, %v5363
        %v5365 = vshll.u32 2131351028, %v5356
        %v5366 = vshrl.u32 2102212464, %v5357
        %v5367 = vor.u32 %v5365, %v5366
        %v5368 = vshll.u32 2102212464, %v5356
        %v5369 = vshrl.u32 920167782, %v5357
        %v5370 = vor.u32 %v5368, %v5369
        %v5371 = vshll.u32 920167782, %v5356
        %v5372 = vshrl.u32 1326507024, %v5357
        %v5373 = vor.u32 %v5371, %v5372
        %vm5374 = vcmp.lt.s32.totalorder %v5355, 1
        %vm5375 = vcmp.lt.s32.totalorder %v5355, 2
        %vm5376 = vcmp.lt.s32.totalorder %v5355, 3
        %vm5377 = vcmp.lt.s32.totalorder %v5355, 4
        %v5378 = vsel %vm5374, %v5358, %v5361
        %v5379 = vsel %vm5377, %v5367, 2102212464
        %v5380 = vsel %vm5376, %v5364, %v5379
        %v5381 = vsel %vm5375, %v5378, %v5380
        %v5382 = vsel %vm5374, %v5361, %v5364
        %v5383 = vsel %vm5377, %v5370, 920167782
        %v5384 = vsel %vm5376, %v5367, %v5383
        %v5385 = vsel %vm5375, %v5382, %v5384
        %v5386 = vsel %vm5374, %v5364, %v5367
        %v5387 = vsel %vm5377, %v5373, 1326507024
        %v5388 = vsel %vm5376, %v5370, %v5387
        %v5389 = vsel %vm5375, %v5386, %v5388
        %v5390 = vshll.u32 %v5350, 8
        %v5391 = vmul.u32.u64.compose %v5390, %v5389
        %v5392 = vextract.low.u32 %v5391
        %v5393 = vextract.high.u32 %v5391
        %v5394 = vmul.u32.u64.compose %v5390, %v5385
        %v5395 = vextract.low.u32 %v5394
        %v5396 = vextract.high.u32 %v5394
        %v5397 = vmul.u32 %v5390, %v5381
        %v5398 = vadd.s32 %v5393, %v5395
        %vm5399 = vc.u32 %v5393, %v5395
        %v5400 = vadd.s32 %v5396, 1
        %v5401 = vsel %vm5399, %v5400, %v5396
        %v5402 = vadd.s32 %v5397, %v5401
        %v5403 = vadd.s32 %v5402, 536870912
        %v5404 = vshrl.u32 %v5403, 30
        %v5405 = vshll.u32 %v5404, 30
        %v5406 = vsub.s32 %v5402, %v5405
        %vm5407 = vcmp.lt.s32.totalorder %v5406, 0
        %v5408 = vsub.s32 0, %v5406
        %v5409 = vsel %vm5407, %v5408, %v5406
        %v5410 = vclz %v5409
        %v5411 = vsub.s32 %v5410, 2
        %vm5412 = vcmp.gt.s32.totalorder 0, %v5411
        %v5413 = vsel %vm5412, 0, %v5411
        %v5414 = vsub.s32 32, %v5413
        %v5415 = vshll.u32 %v5406, %v5413
        %v5416 = vshrl.u32 %v5398, %v5414
        %v5417 = vor.u32 %v5415, %v5416
        %v5418 = vsub.s32 4294967266, %v5413
        %v5419 = vadd.s32 %v5418, 127
        %v5420 = vshll.u32 %v5419, 23
        %v5421 = vor.u32 4788187, %v5420
        %v5422 = vand.u32 2147483647, %v5421
        %v5424 = vcvt.s32.f32 %v5417
        %v5425 = vmul.f32 %v5424, %v5422
        %v5426 = vxor.u32 %v5425, 2147483648
        %v5427 = vsel %vm5344, %v5426, %v5425
        %v5428 = vsub.s32 4, %v5404
        %v5429 = vsel %vm5344, %v5428, %v5404
        %v5430 = vsel %vm5343, %v4196, %v5427
        %v5431 = vsel %vm5343, 0, %v5429
        %v5432 = vcosq.f32.pop %v5430
        %v5433 = vsinq.f32.pop %v5430
        %vm5434 = vweird.f32 %v4196
        %v5435 = vand.u32 %v5431, 3
        %vm5436 = vcmp.lt.s32.totalorder %v5435, 2
        %vm5437 = vcmp.eq.s32.totalorder %v5435, 0
        %v5438 = vxor.u32 %v5433, 2147483648
        %v5439 = vsel %vm5437, %v5432, %v5438
        %vm5440 = vcmp.eq.s32.totalorder %v5435, 2
        %v5441 = vxor.u32 %v5432, 2147483648
        %v5442 = vsel %vm5440, %v5441, %v5433
        %v5443 = vsel %vm5436, %v5439, %v5442
        %v5444 = vsel %vm5434, nan, %v5443
        %v5445 = vand.u32 2147483647, %v4197
        %vm5446 = vcmp.le.f32.partialorder %v5445, 0.7853982
        %vm5447 = vcmp.lt.s32.totalorder %v4197, 0
        %v5448 = vand.u32 %v4197, 2139095040
        %v5449 = vshrl.u32 %v5448, 23
        %v5450 = vsub.s32 %v5449, 127
        %v5451 = vand.u32 2147483647, %v4197
        %v5452 = vand.u32 %v5451, 8388607
        %v5453 = vor.u32 %v5452, 8388608
        %v5454 = vsub.s32 0, %v5453
        %v5455 = vadd.s32 %v5450, 1
        %vm5456 = vcmp.gt.s32.totalorder %v5455, 0
        %v5457 = vsel %vm5456, %v5455, 0
        %v5458 = vshrl.u32 %v5457, 5
        %v5459 = vand.u32 %v5457, 31
        %v5460 = vsub.s32 32, %v5459
        %v5461 = vshrl.u32 683565275, %v5460
        %v5462 = vshll.u32 683565275, %v5459
        %v5463 = vshrl.u32 2475754826, %v5460
        %v5464 = vor.u32 %v5462, %v5463
        %v5465 = vshll.u32 2475754826, %v5459
        %v5466 = vshrl.u32 2131351028, %v5460
        %v5467 = vor.u32 %v5465, %v5466
        %v5468 = vshll.u32 2131351028, %v5459
        %v5469 = vshrl.u32 2102212464, %v5460
        %v5470 = vor.u32 %v5468, %v5469
        %v5471 = vshll.u32 2102212464, %v5459
        %v5472 = vshrl.u32 920167782, %v5460
        %v5473 = vor.u32 %v5471, %v5472
        %v5474 = vshll.u32 920167782, %v5459
        %v5475 = vshrl.u32 1326507024, %v5460
        %v5476 = vor.u32 %v5474, %v5475
        %vm5477 = vcmp.lt.s32.totalorder %v5458, 1
        %vm5478 = vcmp.lt.s32.totalorder %v5458, 2
        %vm5479 = vcmp.lt.s32.totalorder %v5458, 3
        %vm5480 = vcmp.lt.s32.totalorder %v5458, 4
        %v5481 = vsel %vm5477, %v5461, %v5464
        %v5482 = vsel %vm5480, %v5470, 2102212464
        %v5483 = vsel %vm5479, %v5467, %v5482
        %v5484 = vsel %vm5478, %v5481, %v5483
        %v5485 = vsel %vm5477, %v5464, %v5467
        %v5486 = vsel %vm5480, %v5473, 920167782
        %v5487 = vsel %vm5479, %v5470, %v5486
        %v5488 = vsel %vm5478, %v5485, %v5487
        %v5489 = vsel %vm5477, %v5467, %v5470
        %v5490 = vsel %vm5480, %v5476, 1326507024
        %v5491 = vsel %vm5479, %v5473, %v5490
        %v5492 = vsel %vm5478, %v5489, %v5491
        %v5493 = vshll.u32 %v5453, 8
        %v5494 = vmul.u32.u64.compose %v5493, %v5492
        %v5495 = vextract.low.u32 %v5494
        %v5496 = vextract.high.u32 %v5494
        %v5497 = vmul.u32.u64.compose %v5493, %v5488
        %v5498 = vextract.low.u32 %v5497
        %v5499 = vextract.high.u32 %v5497
        %v5500 = vmul.u32 %v5493, %v5484
        %v5501 = vadd.s32 %v5496, %v5498
        %vm5502 = vc.u32 %v5496, %v5498
        %v5503 = vadd.s32 %v5499, 1
        %v5504 = vsel %vm5502, %v5503, %v5499
        %v5505 = vadd.s32 %v5500, %v5504
        %v5506 = vadd.s32 %v5505, 536870912
        %v5507 = vshrl.u32 %v5506, 30
        %v5508 = vshll.u32 %v5507, 30
        %v5509 = vsub.s32 %v5505, %v5508
        %vm5510 = vcmp.lt.s32.totalorder %v5509, 0
        %v5511 = vsub.s32 0, %v5509
        %v5512 = vsel %vm5510, %v5511, %v5509
        %v5513 = vclz %v5512
        %v5514 = vsub.s32 %v5513, 2
        %vm5515 = vcmp.gt.s32.totalorder 0, %v5514
        %v5516 = vsel %vm5515, 0, %v5514
        %v5517 = vsub.s32 32, %v5516
        %v5518 = vshll.u32 %v5509, %v5516
        %v5519 = vshrl.u32 %v5501, %v5517
        %v5520 = vor.u32 %v5518, %v5519
        %v5521 = vsub.s32 4294967266, %v5516
        %v5522 = vadd.s32 %v5521, 127
        %v5523 = vshll.u32 %v5522, 23
        %v5524 = vor.u32 4788187, %v5523
        %v5525 = vand.u32 2147483647, %v5524
        %v5527 = vcvt.s32.f32 %v5520
        %v5528 = vmul.f32 %v5527, %v5525
        %v5529 = vxor.u32 %v5528, 2147483648
        %v5530 = vsel %vm5447, %v5529, %v5528
        %v5531 = vsub.s32 4, %v5507
        %v5532 = vsel %vm5447, %v5531, %v5507
        %v5533 = vsel %vm5446, %v4197, %v5530
        %v5534 = vsel %vm5446, 0, %v5532
        %v5535 = vcosq.f32.pop %v5533
        %v5536 = vsinq.f32.pop %v5533
        %vm5537 = vweird.f32 %v4197
        %v5538 = vand.u32 %v5534, 3
        %vm5539 = vcmp.lt.s32.totalorder %v5538, 2
        %vm5540 = vcmp.eq.s32.totalorder %v5538, 0
        %v5541 = vxor.u32 %v5536, 2147483648
        %v5542 = vsel %vm5540, %v5535, %v5541
        %vm5543 = vcmp.eq.s32.totalorder %v5538, 2
        %v5544 = vxor.u32 %v5535, 2147483648
        %v5545 = vsel %vm5543, %v5544, %v5536
        %v5546 = vsel %vm5539, %v5542, %v5545
        %v5547 = vsel %vm5537, nan, %v5546
        %v5548 = vand.u32 2147483647, %v4198
        %vm5549 = vcmp.le.f32.partialorder %v5548, 0.7853982
        %vm5550 = vcmp.lt.s32.totalorder %v4198, 0
        %v5551 = vand.u32 %v4198, 2139095040
        %v5552 = vshrl.u32 %v5551, 23
        %v5553 = vsub.s32 %v5552, 127
        %v5554 = vand.u32 2147483647, %v4198
        %v5555 = vand.u32 %v5554, 8388607
        %v5556 = vor.u32 %v5555, 8388608
        %v5557 = vsub.s32 0, %v5556
        %v5558 = vadd.s32 %v5553, 1
        %vm5559 = vcmp.gt.s32.totalorder %v5558, 0
        %v5560 = vsel %vm5559, %v5558, 0
        %v5561 = vshrl.u32 %v5560, 5
        %v5562 = vand.u32 %v5560, 31
        %v5563 = vsub.s32 32, %v5562
        %v5564 = vshrl.u32 683565275, %v5563
        %v5565 = vshll.u32 683565275, %v5562
        %v5566 = vshrl.u32 2475754826, %v5563
        %v5567 = vor.u32 %v5565, %v5566
        %v5568 = vshll.u32 2475754826, %v5562
        %v5569 = vshrl.u32 2131351028, %v5563
        %v5570 = vor.u32 %v5568, %v5569
        %v5571 = vshll.u32 2131351028, %v5562
        %v5572 = vshrl.u32 2102212464, %v5563
        %v5573 = vor.u32 %v5571, %v5572
        %v5574 = vshll.u32 2102212464, %v5562
        %v5575 = vshrl.u32 920167782, %v5563
        %v5576 = vor.u32 %v5574, %v5575
        %v5577 = vshll.u32 920167782, %v5562
        %v5578 = vshrl.u32 1326507024, %v5563
        %v5579 = vor.u32 %v5577, %v5578
        %vm5580 = vcmp.lt.s32.totalorder %v5561, 1
        %vm5581 = vcmp.lt.s32.totalorder %v5561, 2
        %vm5582 = vcmp.lt.s32.totalorder %v5561, 3
        %vm5583 = vcmp.lt.s32.totalorder %v5561, 4
        %v5584 = vsel %vm5580, %v5564, %v5567
        %v5585 = vsel %vm5583, %v5573, 2102212464
        %v5586 = vsel %vm5582, %v5570, %v5585
        %v5587 = vsel %vm5581, %v5584, %v5586
        %v5588 = vsel %vm5580, %v5567, %v5570
        %v5589 = vsel %vm5583, %v5576, 920167782
        %v5590 = vsel %vm5582, %v5573, %v5589
        %v5591 = vsel %vm5581, %v5588, %v5590
        %v5592 = vsel %vm5580, %v5570, %v5573
        %v5593 = vsel %vm5583, %v5579, 1326507024
        %v5594 = vsel %vm5582, %v5576, %v5593
        %v5595 = vsel %vm5581, %v5592, %v5594
        %v5596 = vshll.u32 %v5556, 8
        %v5597 = vmul.u32.u64.compose %v5596, %v5595
        %v5598 = vextract.low.u32 %v5597
        %v5599 = vextract.high.u32 %v5597
        %v5600 = vmul.u32.u64.compose %v5596, %v5591
        %v5601 = vextract.low.u32 %v5600
        %v5602 = vextract.high.u32 %v5600
        %v5603 = vmul.u32 %v5596, %v5587
        %v5604 = vadd.s32 %v5599, %v5601
        %vm5605 = vc.u32 %v5599, %v5601
        %v5606 = vadd.s32 %v5602, 1
        %v5607 = vsel %vm5605, %v5606, %v5602
        %v5608 = vadd.s32 %v5603, %v5607
        %v5609 = vadd.s32 %v5608, 536870912
        %v5610 = vshrl.u32 %v5609, 30
        %v5611 = vshll.u32 %v5610, 30
        %v5612 = vsub.s32 %v5608, %v5611
        %vm5613 = vcmp.lt.s32.totalorder %v5612, 0
        %v5614 = vsub.s32 0, %v5612
        %v5615 = vsel %vm5613, %v5614, %v5612
        %v5616 = vclz %v5615
        %v5617 = vsub.s32 %v5616, 2
        %vm5618 = vcmp.gt.s32.totalorder 0, %v5617
        %v5619 = vsel %vm5618, 0, %v5617
        %v5620 = vsub.s32 32, %v5619
        %v5621 = vshll.u32 %v5612, %v5619
        %v5622 = vshrl.u32 %v5604, %v5620
        %v5623 = vor.u32 %v5621, %v5622
        %v5624 = vsub.s32 4294967266, %v5619
        %v5625 = vadd.s32 %v5624, 127
        %v5626 = vshll.u32 %v5625, 23
        %v5627 = vor.u32 4788187, %v5626
        %v5628 = vand.u32 2147483647, %v5627
        %v5630 = vcvt.s32.f32 %v5623
        %v5631 = vmul.f32 %v5630, %v5628
        %v5632 = vxor.u32 %v5631, 2147483648
        %v5633 = vsel %vm5550, %v5632, %v5631
        %v5634 = vsub.s32 4, %v5610
        %v5635 = vsel %vm5550, %v5634, %v5610
        %v5636 = vsel %vm5549, %v4198, %v5633
        %v5637 = vsel %vm5549, 0, %v5635
        %v5638 = vcosq.f32.pop %v5636
        %v5639 = vsinq.f32.pop %v5636
        %vm5640 = vweird.f32 %v4198
        %v5641 = vand.u32 %v5637, 3
        %vm5642 = vcmp.lt.s32.totalorder %v5641, 2
        %vm5643 = vcmp.eq.s32.totalorder %v5641, 0
        %v5644 = vxor.u32 %v5639, 2147483648
        %v5645 = vsel %vm5643, %v5638, %v5644
        %vm5646 = vcmp.eq.s32.totalorder %v5641, 2
        %v5647 = vxor.u32 %v5638, 2147483648
        %v5648 = vsel %vm5646, %v5647, %v5639
        %v5649 = vsel %vm5642, %v5645, %v5648
        %v5650 = vsel %vm5640, nan, %v5649
        %v5651 = vand.u32 2147483647, %v4199
        %vm5652 = vcmp.le.f32.partialorder %v5651, 0.7853982
        %vm5653 = vcmp.lt.s32.totalorder %v4199, 0
        %v5654 = vand.u32 %v4199, 2139095040
        %v5655 = vshrl.u32 %v5654, 23
        %v5656 = vsub.s32 %v5655, 127
        %v5657 = vand.u32 2147483647, %v4199
        %v5658 = vand.u32 %v5657, 8388607
        %v5659 = vor.u32 %v5658, 8388608
        %v5660 = vsub.s32 0, %v5659
        %v5661 = vadd.s32 %v5656, 1
        %vm5662 = vcmp.gt.s32.totalorder %v5661, 0
        %v5663 = vsel %vm5662, %v5661, 0
        %v5664 = vshrl.u32 %v5663, 5
        %v5665 = vand.u32 %v5663, 31
        %v5666 = vsub.s32 32, %v5665
        %v5667 = vshrl.u32 683565275, %v5666
        %v5668 = vshll.u32 683565275, %v5665
        %v5669 = vshrl.u32 2475754826, %v5666
        %v5670 = vor.u32 %v5668, %v5669
        %v5671 = vshll.u32 2475754826, %v5665
        %v5672 = vshrl.u32 2131351028, %v5666
        %v5673 = vor.u32 %v5671, %v5672
        %v5674 = vshll.u32 2131351028, %v5665
        %v5675 = vshrl.u32 2102212464, %v5666
        %v5676 = vor.u32 %v5674, %v5675
        %v5677 = vshll.u32 2102212464, %v5665
        %v5678 = vshrl.u32 920167782, %v5666
        %v5679 = vor.u32 %v5677, %v5678
        %v5680 = vshll.u32 920167782, %v5665
        %v5681 = vshrl.u32 1326507024, %v5666
        %v5682 = vor.u32 %v5680, %v5681
        %vm5683 = vcmp.lt.s32.totalorder %v5664, 1
        %vm5684 = vcmp.lt.s32.totalorder %v5664, 2
        %vm5685 = vcmp.lt.s32.totalorder %v5664, 3
        %vm5686 = vcmp.lt.s32.totalorder %v5664, 4
        %v5687 = vsel %vm5683, %v5667, %v5670
        %v5688 = vsel %vm5686, %v5676, 2102212464
        %v5689 = vsel %vm5685, %v5673, %v5688
        %v5690 = vsel %vm5684, %v5687, %v5689
        %v5691 = vsel %vm5683, %v5670, %v5673
        %v5692 = vsel %vm5686, %v5679, 920167782
        %v5693 = vsel %vm5685, %v5676, %v5692
        %v5694 = vsel %vm5684, %v5691, %v5693
        %v5695 = vsel %vm5683, %v5673, %v5676
        %v5696 = vsel %vm5686, %v5682, 1326507024
        %v5697 = vsel %vm5685, %v5679, %v5696
        %v5698 = vsel %vm5684, %v5695, %v5697
        %v5699 = vshll.u32 %v5659, 8
        %v5700 = vmul.u32.u64.compose %v5699, %v5698
        %v5701 = vextract.low.u32 %v5700
        %v5702 = vextract.high.u32 %v5700
        %v5703 = vmul.u32.u64.compose %v5699, %v5694
        %v5704 = vextract.low.u32 %v5703
        %v5705 = vextract.high.u32 %v5703
        %v5706 = vmul.u32 %v5699, %v5690
        %v5707 = vadd.s32 %v5702, %v5704
        %vm5708 = vc.u32 %v5702, %v5704
        %v5709 = vadd.s32 %v5705, 1
        %v5710 = vsel %vm5708, %v5709, %v5705
        %v5711 = vadd.s32 %v5706, %v5710
        %v5712 = vadd.s32 %v5711, 536870912
        %v5713 = vshrl.u32 %v5712, 30
        %v5714 = vshll.u32 %v5713, 30
        %v5715 = vsub.s32 %v5711, %v5714
        %vm5716 = vcmp.lt.s32.totalorder %v5715, 0
        %v5717 = vsub.s32 0, %v5715
        %v5718 = vsel %vm5716, %v5717, %v5715
        %v5719 = vclz %v5718
        %v5720 = vsub.s32 %v5719, 2
        %vm5721 = vcmp.gt.s32.totalorder 0, %v5720
        %v5722 = vsel %vm5721, 0, %v5720
        %v5723 = vsub.s32 32, %v5722
        %v5724 = vshll.u32 %v5715, %v5722
        %v5725 = vshrl.u32 %v5707, %v5723
        %v5726 = vor.u32 %v5724, %v5725
        %v5727 = vsub.s32 4294967266, %v5722
        %v5728 = vadd.s32 %v5727, 127
        %v5729 = vshll.u32 %v5728, 23
        %v5730 = vor.u32 4788187, %v5729
        %v5731 = vand.u32 2147483647, %v5730
        %v5733 = vcvt.s32.f32 %v5726
        %v5734 = vmul.f32 %v5733, %v5731
        %v5735 = vxor.u32 %v5734, 2147483648
        %v5736 = vsel %vm5653, %v5735, %v5734
        %v5737 = vsub.s32 4, %v5713
        %v5738 = vsel %vm5653, %v5737, %v5713
        %v5739 = vsel %vm5652, %v4199, %v5736
        %v5740 = vsel %vm5652, 0, %v5738
        %v5741 = vcosq.f32.pop %v5739
        %v5742 = vsinq.f32.pop %v5739
        %vm5743 = vweird.f32 %v4199
        %v5744 = vand.u32 %v5740, 3
        %vm5745 = vcmp.lt.s32.totalorder %v5744, 2
        %vm5746 = vcmp.eq.s32.totalorder %v5744, 0
        %v5747 = vxor.u32 %v5742, 2147483648
        %v5748 = vsel %vm5746, %v5741, %v5747
        %vm5749 = vcmp.eq.s32.totalorder %v5744, 2
        %v5750 = vxor.u32 %v5741, 2147483648
        %v5751 = vsel %vm5749, %v5750, %v5742
        %v5752 = vsel %vm5745, %v5748, %v5751
        %v5753 = vsel %vm5743, nan, %v5752
        %v5754 = vand.u32 2147483647, %v4200
        %vm5755 = vcmp.le.f32.partialorder %v5754, 0.7853982
        %vm5756 = vcmp.lt.s32.totalorder %v4200, 0
        %v5757 = vand.u32 %v4200, 2139095040
        %v5758 = vshrl.u32 %v5757, 23
        %v5759 = vsub.s32 %v5758, 127
        %v5760 = vand.u32 2147483647, %v4200
        %v5761 = vand.u32 %v5760, 8388607
        %v5762 = vor.u32 %v5761, 8388608
        %v5763 = vsub.s32 0, %v5762
        %v5764 = vadd.s32 %v5759, 1
        %vm5765 = vcmp.gt.s32.totalorder %v5764, 0
        %v5766 = vsel %vm5765, %v5764, 0
        %v5767 = vshrl.u32 %v5766, 5
        %v5768 = vand.u32 %v5766, 31
        %v5769 = vsub.s32 32, %v5768
        %v5770 = vshrl.u32 683565275, %v5769
        %v5771 = vshll.u32 683565275, %v5768
        %v5772 = vshrl.u32 2475754826, %v5769
        %v5773 = vor.u32 %v5771, %v5772
        %v5774 = vshll.u32 2475754826, %v5768
        %v5775 = vshrl.u32 2131351028, %v5769
        %v5776 = vor.u32 %v5774, %v5775
        %v5777 = vshll.u32 2131351028, %v5768
        %v5778 = vshrl.u32 2102212464, %v5769
        %v5779 = vor.u32 %v5777, %v5778
        %v5780 = vshll.u32 2102212464, %v5768
        %v5781 = vshrl.u32 920167782, %v5769
        %v5782 = vor.u32 %v5780, %v5781
        %v5783 = vshll.u32 920167782, %v5768
        %v5784 = vshrl.u32 1326507024, %v5769
        %v5785 = vor.u32 %v5783, %v5784
        %vm5786 = vcmp.lt.s32.totalorder %v5767, 1
        %vm5787 = vcmp.lt.s32.totalorder %v5767, 2
        %vm5788 = vcmp.lt.s32.totalorder %v5767, 3
        %vm5789 = vcmp.lt.s32.totalorder %v5767, 4
        %v5790 = vsel %vm5786, %v5770, %v5773
        %v5791 = vsel %vm5789, %v5779, 2102212464
        %v5792 = vsel %vm5788, %v5776, %v5791
        %v5793 = vsel %vm5787, %v5790, %v5792
        %v5794 = vsel %vm5786, %v5773, %v5776
        %v5795 = vsel %vm5789, %v5782, 920167782
        %v5796 = vsel %vm5788, %v5779, %v5795
        %v5797 = vsel %vm5787, %v5794, %v5796
        %v5798 = vsel %vm5786, %v5776, %v5779
        %v5799 = vsel %vm5789, %v5785, 1326507024
        %v5800 = vsel %vm5788, %v5782, %v5799
        %v5801 = vsel %vm5787, %v5798, %v5800
        %v5802 = vshll.u32 %v5762, 8
        %v5803 = vmul.u32.u64.compose %v5802, %v5801
        %v5804 = vextract.low.u32 %v5803
        %v5805 = vextract.high.u32 %v5803
        %v5806 = vmul.u32.u64.compose %v5802, %v5797
        %v5807 = vextract.low.u32 %v5806
        %v5808 = vextract.high.u32 %v5806
        %v5809 = vmul.u32 %v5802, %v5793
        %v5810 = vadd.s32 %v5805, %v5807
        %vm5811 = vc.u32 %v5805, %v5807
        %v5812 = vadd.s32 %v5808, 1
        %v5813 = vsel %vm5811, %v5812, %v5808
        %v5814 = vadd.s32 %v5809, %v5813
        %v5815 = vadd.s32 %v5814, 536870912
        %v5816 = vshrl.u32 %v5815, 30
        %v5817 = vshll.u32 %v5816, 30
        %v5818 = vsub.s32 %v5814, %v5817
        %vm5819 = vcmp.lt.s32.totalorder %v5818, 0
        %v5820 = vsub.s32 0, %v5818
        %v5821 = vsel %vm5819, %v5820, %v5818
        %v5822 = vclz %v5821
        %v5823 = vsub.s32 %v5822, 2
        %vm5824 = vcmp.gt.s32.totalorder 0, %v5823
        %v5825 = vsel %vm5824, 0, %v5823
        %v5826 = vsub.s32 32, %v5825
        %v5827 = vshll.u32 %v5818, %v5825
        %v5828 = vshrl.u32 %v5810, %v5826
        %v5829 = vor.u32 %v5827, %v5828
        %v5830 = vsub.s32 4294967266, %v5825
        %v5831 = vadd.s32 %v5830, 127
        %v5832 = vshll.u32 %v5831, 23
        %v5833 = vor.u32 4788187, %v5832
        %v5834 = vand.u32 2147483647, %v5833
        %v5836 = vcvt.s32.f32 %v5829
        %v5837 = vmul.f32 %v5836, %v5834
        %v5838 = vxor.u32 %v5837, 2147483648
        %v5839 = vsel %vm5756, %v5838, %v5837
        %v5840 = vsub.s32 4, %v5816
        %v5841 = vsel %vm5756, %v5840, %v5816
        %v5842 = vsel %vm5755, %v4200, %v5839
        %v5843 = vsel %vm5755, 0, %v5841
        %v5844 = vcosq.f32.pop %v5842
        %v5845 = vsinq.f32.pop %v5842
        %vm5846 = vweird.f32 %v4200
        %v5847 = vand.u32 %v5843, 3
        %vm5848 = vcmp.lt.s32.totalorder %v5847, 2
        %vm5849 = vcmp.eq.s32.totalorder %v5847, 0
        %v5850 = vxor.u32 %v5845, 2147483648
        %v5851 = vsel %vm5849, %v5844, %v5850
        %vm5852 = vcmp.eq.s32.totalorder %v5847, 2
        %v5853 = vxor.u32 %v5844, 2147483648
        %v5854 = vsel %vm5852, %v5853, %v5845
        %v5855 = vsel %vm5848, %v5851, %v5854
        %v5856 = vsel %vm5846, nan, %v5855
        %v5865 = vrot.slane %v4304, 5
        %v5866 = vrot.slane %v4408, 5
        %v5867 = vrot.slane %v4512, 5
        %v5868 = vrot.slane %v4616, 5
        %v5869 = vrot.slane %v4720, 5
        %v5870 = vsel %vm682, %v5865, %v5869
        %v5871 = vrot.slane %v4824, 5
        %v5872 = vsel %vm682, %v5866, %v5871
        %v5873 = vrot.slane %v4928, 5
        %v5874 = vsel %vm682, %v5867, %v5873
        %v5875 = vrot.slane %v5032, 5
        %v5876 = vsel %vm682, %v5868, %v5875
        %v5893 = vrot.slane %v5135, 1
        %v5894 = vrot.slane %v5238, 1
        %v5895 = vrot.slane %v5341, 1
        %v5896 = vrot.slane %v5444, 1
        %v5897 = vrot.slane %v5547, 1
        %v5898 = vsel %vm702, %v5893, %v5897
        %v5899 = vrot.slane %v5650, 1
        %v5900 = vsel %vm702, %v5894, %v5899
        %v5901 = vrot.slane %v5753, 1
        %v5902 = vsel %vm702, %v5895, %v5901
        %v5903 = vrot.slane %v5856, 1
        %v5904 = vsel %vm702, %v5896, %v5903
        %v5913 = vsel %vm682, %v4165, %v5865
        %v5914 = vsel %vm682, %v4166, %v5866
        %v5915 = vsel %vm682, %v4167, %v5867
        %v5916 = vsel %vm682, %v4168, %v5868
        %v5917 = vsel %vm702, %v5870, %v5893
        %v5918 = vsel %vm702, %v5872, %v5894
        %v5919 = vsel %vm702, %v5874, %v5895
        %v5920 = vsel %vm702, %v5876, %v5896
        %v5921 = vld [vmem:[%s1] sm:$0xff]
        %v5922 = vld [vmem:[%s1 + $0x8] sm:$0xff]
        %v5923 = vld [vmem:[%s1 + $0x10] sm:$0xff]
        %v5924 = vld [vmem:[%s1 + $0x18] sm:$0xff]
        %v5925 = vld [vmem:[%s1 + $0x20] sm:$0xff]
        %v5926 = vld [vmem:[%s1 + $0x28] sm:$0xff]
        %v5927 = vld [vmem:[%s1 + $0x30] sm:$0xff]
        %v5928 = vld [vmem:[%s1 + $0x38] sm:$0xff]
        %v5929 = vld [vmem:[%s2] sm:$0xff]
        %v5930 = vld [vmem:[%s2 + $0x8] sm:$0xff]
        %v5931 = vld [vmem:[%s2 + $0x10] sm:$0xff]
        %v5932 = vld [vmem:[%s2 + $0x18] sm:$0xff]
        %v5933 = vld [vmem:[%s2 + $0x20] sm:$0xff]
        %v5934 = vld [vmem:[%s2 + $0x28] sm:$0xff]
        %v5935 = vld [vmem:[%s2 + $0x30] sm:$0xff]
        %v5936 = vld [vmem:[%s2 + $0x38] sm:$0xff]
        %5938 = vset.pattern.permute.xlu0 0
        %5939 = vperm.xlu0 %5938, %v5929
        %v5940 = vpop.permute.xlu0 %5939
        %5943 = vset.pattern.permute.xlu0 0
        %5944 = vperm.xlu0 %5943, %v5930
        %v5945 = vpop.permute.xlu0 %5944
        %5948 = vset.pattern.permute.xlu0 0
        %5949 = vperm.xlu0 %5948, %v5931
        %v5950 = vpop.permute.xlu0 %5949
        %5953 = vset.pattern.permute.xlu0 0
        %5954 = vperm.xlu0 %5953, %v5932
        %v5955 = vpop.permute.xlu0 %5954
        %5958 = vset.pattern.permute.xlu0 0
        %5959 = vperm.xlu0 %5958, %v5933
        %v5960 = vpop.permute.xlu0 %5959
        %5963 = vset.pattern.permute.xlu0 0
        %5964 = vperm.xlu0 %5963, %v5934
        %v5965 = vpop.permute.xlu0 %5964
        %5968 = vset.pattern.permute.xlu0 0
        %5969 = vperm.xlu0 %5968, %v5935
        %v5970 = vpop.permute.xlu0 %5969
        %5973 = vset.pattern.permute.xlu0 0
        %5974 = vperm.xlu0 %5973, %v5936
        %v5975 = vpop.permute.xlu0 %5974
        %v5993 = vrot.slane %v530, 6
        %v5994 = vrot.slane %v534, 6
        %v5995 = vsel %vm707, %v5993, %v5994
        %v5996 = vrot.slane %v531, 6
        %v5997 = vrot.slane %v535, 6
        %v5998 = vsel %vm707, %v5996, %v5997
        %v5999 = vrot.slane %v532, 6
        %v6000 = vrot.slane %v536, 6
        %v6001 = vsel %vm707, %v5999, %v6000
        %v6002 = vrot.slane %v533, 6
        %v6003 = vrot.slane %v537, 6
        %v6004 = vsel %vm707, %v6002, %v6003
        %v6005 = vrot.slane %v538, 6
        %v6006 = vsel %vm707, %v5994, %v6005
        %v6007 = vrot.slane %v539, 6
        %v6008 = vsel %vm707, %v5997, %v6007
        %v6009 = vrot.slane %v540, 6
        %v6010 = vsel %vm707, %v6000, %v6009
        %v6011 = vrot.slane %v541, 6
        %v6012 = vsel %vm707, %v6003, %v6011
        %v6013 = vrot.slane %v542, 6
        %v6014 = vsel %vm707, %v6005, %v6013
        %v6015 = vrot.slane %v543, 6
        %v6016 = vsel %vm707, %v6007, %v6015
        %v6017 = vrot.slane %v544, 6
        %v6018 = vsel %vm707, %v6009, %v6017
        %v6019 = vrot.slane %v545, 6
        %v6020 = vsel %vm707, %v6011, %v6019
        %v6021 = vrot.slane %v546, 6
        %v6022 = vsel %vm707, %v6013, %v6021
        %v6023 = vrot.slane %v547, 6
        %v6024 = vsel %vm707, %v6015, %v6023
        %v6025 = vrot.slane %v548, 6
        %v6026 = vsel %vm707, %v6017, %v6025
        %v6027 = vrot.slane %v549, 6
        %v6028 = vsel %vm707, %v6019, %v6027
        %vm6041 = vcmask 228352
        %v6043 = vsel %vm6041, %v5921, 0
        %v6046 = vsel %vm6041, %v5922, 0
        %v6049 = vsel %vm6041, %v5923, 0
        %v6052 = vsel %vm6041, %v5924, 0
        %v6055 = vsel %vm6041, %v5925, 0
        %v6058 = vsel %vm6041, %v5926, 0
        %v6061 = vsel %vm6041, %v5927, 0
        %v6064 = vsel %vm6041, %v5928, 0
        %v6066 = vsel %vm697, %v6022, 0
        %v6068 = vsel %vm697, %v6024, 0
        %v6070 = vsel %vm697, %v6026, 0
        %v6072 = vsel %vm697, %v6028, 0
        %6074 = vmatprep.subr.mxu0 %v5998
        %6075 = vmatpush1.msra.mxu0 %v5995
        %6076 = vmatprep.subr.mxu0 %v6008
        %6077 = vmatpush1.msra.mxu0 %v6006
        %6078 = vmatprep.subr.mxu0 %v6016
        %6079 = vmatpush1.msra.mxu0 %v6014
        %6080 = vmatprep.subr.mxu0 %v6068
        %6081 = vmatpush1.msra.mxu0 %v6066
        %6082 = vmatprep.subr.mxu0 0.0
        %6083 = vmatpush1.msra.mxu0 0.0
        %6084 = vmatprep.subr.mxu0 0.0
        %6085 = vmatpush1.msra.mxu0 0.0
        %6086 = vmatprep.subr.mxu0 0.0
        %6087 = vmatpush1.msra.mxu0 0.0
        %6088 = vmatprep.subr.mxu0 0.0
        %6089 = vmatpush1.msra.mxu0 0.0
        %6090 = vmatprep.subr.mxu0 0.0
        %6091 = vmatpush1.msra.mxu0 0.0
        %6092 = vmatprep.subr.mxu0 0.0
        %6093 = vmatpush1.msra.mxu0 0.0
        %6094 = vmatprep.subr.mxu0 0.0
        %6095 = vmatpush1.msra.mxu0 0.0
        %6096 = vmatprep.subr.mxu0 0.0
        %6097 = vmatpush1.msra.mxu0 0.0
        %6098 = vmatprep.subr.mxu0 0.0
        %6099 = vmatpush1.msra.mxu0 0.0
        %6100 = vmatprep.subr.mxu0 0.0
        %6101 = vmatpush1.msra.mxu0 0.0
        %6102 = vmatprep.subr.mxu0 0.0
        %6103 = vmatpush1.msra.mxu0 0.0
        %6104 = vmatprep.subr.mxu0 0.0
        %6105 = vmatpush1.msra.mxu0 0.0
        %6106 = vmatprep.subr.mxu0 0.0
        %6107 = vmatpush1.msra.mxu0 0.0
        %6108 = vmatprep.subr.mxu0 0.0
        %6109 = vmatpush1.msra.mxu0 0.0
        %6110 = vmatprep.subr.mxu0 0.0
        %6111 = vmatpush1.msra.mxu0 0.0
        %6112 = vmatprep.subr.mxu0 0.0
        %6113 = vmatpush1.msra.mxu0 0.0
        %6114 = vmatprep.subr.mxu0 0.0
        %6115 = vmatpush1.msra.mxu0 0.0
        %6116 = vmatprep.subr.mxu0 0.0
        %6117 = vmatpush1.msra.mxu0 0.0
        %6118 = vmatprep.subr.mxu0 0.0
        %6119 = vmatpush1.msra.mxu0 0.0
        %6120 = vmatprep.subr.mxu0 0.0
        %6121 = vmatpush1.msra.mxu0 0.0
        %6122 = vmatprep.subr.mxu0 0.0
        %6123 = vmatpush1.msra.mxu0 0.0
        %6124 = vmatprep.subr.mxu0 0.0
        %6125 = vmatpush1.msra.mxu0 0.0
        %6126 = vmatprep.subr.mxu0 0.0
        %6127 = vmatpush1.msra.mxu0 0.0
        %6128 = vmatprep.subr.mxu0 0.0
        %6129 = vmatpush1.msra.mxu0 0.0
        %6130 = vmatprep.subr.mxu0 0.0
        %6131 = vmatpush1.msra.mxu0 0.0
        %6132 = vmatprep.subr.mxu0 0.0
        %6133 = vmatpush1.msra.mxu0 0.0
        %6134 = vmatprep.subr.mxu0 0.0
        %6135 = vmatpush1.msra.mxu0 0.0
        %6136 = vmatprep.subr.mxu0 0.0
        %6137 = vmatpush1.msra.mxu0 0.0
        %6138 = vmatprep.mubr.f32.mxu0 0.0
        %6139 = vmatmul.mubr.f32.gmra.mrb[0].mxu0 %v6043
        %v6140 = vpop.f32.mrb[0].mxu0
        %v6141 = vadd.f32 %v5940, %v6140
        %v6142 = vpop.f32.mrb[0].mxu0
        %v6143 = vadd.f32 %v5940, %v6142
        %6144 = vmatprep.mubr.f32.mxu0 0.0
        %6145 = vmatmul.mubr.f32.gmra.mrb[0].mxu0 %v6046
        %v6146 = vpop.f32.mrb[0].mxu0
        %v6147 = vadd.f32 %v5945, %v6146
        %v6148 = vpop.f32.mrb[0].mxu0
        %v6149 = vadd.f32 %v5945, %v6148
        %6150 = vmatprep.mubr.f32.mxu0 0.0
        %6151 = vmatmul.mubr.f32.gmra.mrb[0].mxu0 %v6049
        %v6152 = vpop.f32.mrb[0].mxu0
        %v6153 = vadd.f32 %v5950, %v6152
        %v6154 = vpop.f32.mrb[0].mxu0
        %v6155 = vadd.f32 %v5950, %v6154
        %6156 = vmatprep.mubr.f32.mxu0 0.0
        %6157 = vmatmul.mubr.f32.gmra.mrb[0].mxu0 %v6052
        %v6158 = vpop.f32.mrb[0].mxu0
        %v6159 = vadd.f32 %v5955, %v6158
        %v6160 = vpop.f32.mrb[0].mxu0
        %v6161 = vadd.f32 %v5955, %v6160
        %6162 = vmatprep.mubr.f32.mxu0 0.0
        %6163 = vmatmul.mubr.f32.gmra.mrb[0].mxu0 %v6055
        %v6164 = vpop.f32.mrb[0].mxu0
        %v6165 = vadd.f32 %v5960, %v6164
        %v6166 = vpop.f32.mrb[0].mxu0
        %v6167 = vadd.f32 %v5960, %v6166
        %6168 = vmatprep.mubr.f32.mxu0 0.0
        %6169 = vmatmul.mubr.f32.gmra.mrb[0].mxu0 %v6058
        %v6170 = vpop.f32.mrb[0].mxu0
        %v6171 = vadd.f32 %v5965, %v6170
        %v6172 = vpop.f32.mrb[0].mxu0
        %v6173 = vadd.f32 %v5965, %v6172
        %6174 = vmatprep.mubr.f32.mxu0 0.0
        %6175 = vmatmul.mubr.f32.gmra.mrb[0].mxu0 %v6061
        %v6176 = vpop.f32.mrb[0].mxu0
        %v6177 = vadd.f32 %v5970, %v6176
        %v6178 = vpop.f32.mrb[0].mxu0
        %v6179 = vadd.f32 %v5970, %v6178
        %6180 = vmatprep.mubr.f32.mxu0 0.0
        %6181 = vmatmul.mubr.f32.gmra.mrb[0].mxu0 %v6064
        %v6182 = vpop.f32.mrb[0].mxu0
        %v6183 = vadd.f32 %v5975, %v6182
        %v6184 = vpop.f32.mrb[0].mxu0
        %v6185 = vadd.f32 %v5975, %v6184
        %6186 = vdwg.mxu0
        %6187 = vmatprep.subr.mxu0 %v6004
        %6188 = vmatpush1.msra.mxu0 %v6001
        %6189 = vmatprep.subr.mxu0 %v6012
        %6190 = vmatpush1.msra.mxu0 %v6010
        %6191 = vmatprep.subr.mxu0 %v6020
        %6192 = vmatpush1.msra.mxu0 %v6018
        %6193 = vmatprep.subr.mxu0 %v6072
        %6194 = vmatpush1.msra.mxu0 %v6070
        %6195 = vmatprep.subr.mxu0 0.0
        %6196 = vmatpush1.msra.mxu0 0.0
        %6197 = vmatprep.subr.mxu0 0.0
        %6198 = vmatpush1.msra.mxu0 0.0
        %6199 = vmatprep.subr.mxu0 0.0
        %6200 = vmatpush1.msra.mxu0 0.0
        %6201 = vmatprep.subr.mxu0 0.0
        %6202 = vmatpush1.msra.mxu0 0.0
        %6203 = vmatprep.subr.mxu0 0.0
        %6204 = vmatpush1.msra.mxu0 0.0
        %6205 = vmatprep.subr.mxu0 0.0
        %6206 = vmatpush1.msra.mxu0 0.0
        %6207 = vmatprep.subr.mxu0 0.0
        %6208 = vmatpush1.msra.mxu0 0.0
        %6209 = vmatprep.subr.mxu0 0.0
        %6210 = vmatpush1.msra.mxu0 0.0
        %6211 = vmatprep.subr.mxu0 0.0
        %6212 = vmatpush1.msra.mxu0 0.0
        %6213 = vmatprep.subr.mxu0 0.0
        %6214 = vmatpush1.msra.mxu0 0.0
        %6215 = vmatprep.subr.mxu0 0.0
        %6216 = vmatpush1.msra.mxu0 0.0
        %6217 = vmatprep.subr.mxu0 0.0
        %6218 = vmatpush1.msra.mxu0 0.0
        %6219 = vmatprep.subr.mxu0 0.0
        %6220 = vmatpush1.msra.mxu0 0.0
        %6221 = vmatprep.subr.mxu0 0.0
        %6222 = vmatpush1.msra.mxu0 0.0
        %6223 = vmatprep.subr.mxu0 0.0
        %6224 = vmatpush1.msra.mxu0 0.0
        %6225 = vmatprep.subr.mxu0 0.0
        %6226 = vmatpush1.msra.mxu0 0.0
        %6227 = vmatprep.subr.mxu0 0.0
        %6228 = vmatpush1.msra.mxu0 0.0
        %6229 = vmatprep.subr.mxu0 0.0
        %6230 = vmatpush1.msra.mxu0 0.0
        %6231 = vmatprep.subr.mxu0 0.0
        %6232 = vmatpush1.msra.mxu0 0.0
        %6233 = vmatprep.subr.mxu0 0.0
        %6234 = vmatpush1.msra.mxu0 0.0
        %6235 = vmatprep.subr.mxu0 0.0
        %6236 = vmatpush1.msra.mxu0 0.0
        %6237 = vmatprep.subr.mxu0 0.0
        %6238 = vmatpush1.msra.mxu0 0.0
        %6239 = vmatprep.subr.mxu0 0.0
        %6240 = vmatpush1.msra.mxu0 0.0
        %6241 = vmatprep.subr.mxu0 0.0
        %6242 = vmatpush1.msra.mxu0 0.0
        %6243 = vmatprep.subr.mxu0 0.0
        %6244 = vmatpush1.msra.mxu0 0.0
        %6245 = vmatprep.subr.mxu0 0.0
        %6246 = vmatpush1.msra.mxu0 0.0
        %6247 = vmatprep.subr.mxu0 0.0
        %6248 = vmatpush1.msra.mxu0 0.0
        %6249 = vmatprep.subr.mxu0 0.0
        %6250 = vmatpush1.msra.mxu0 0.0
        %6251 = vmatprep.mubr.f32.mxu0 0.0
        %6252 = vmatmul.mubr.f32.gmra.mrb[0].mxu0 %v6043
        %v6253 = vpop.f32.mrb[0].mxu0
        %v6254 = vadd.f32 %v5940, %v6253
        %v6255 = vpop.f32.mrb[0].mxu0
        %v6256 = vadd.f32 %v5940, %v6255
        %6257 = vmatprep.mubr.f32.mxu0 0.0
        %6258 = vmatmul.mubr.f32.gmra.mrb[0].mxu0 %v6046
        %v6259 = vpop.f32.mrb[0].mxu0
        %v6260 = vadd.f32 %v5945, %v6259
        %v6261 = vpop.f32.mrb[0].mxu0
        %v6262 = vadd.f32 %v5945, %v6261
        %6263 = vmatprep.mubr.f32.mxu0 0.0
        %6264 = vmatmul.mubr.f32.gmra.mrb[0].mxu0 %v6049
        %v6265 = vpop.f32.mrb[0].mxu0
        %v6266 = vadd.f32 %v5950, %v6265
        %v6267 = vpop.f32.mrb[0].mxu0
        %v6268 = vadd.f32 %v5950, %v6267
        %6269 = vmatprep.mubr.f32.mxu0 0.0
        %6270 = vmatmul.mubr.f32.gmra.mrb[0].mxu0 %v6052
        %v6271 = vpop.f32.mrb[0].mxu0
        %v6272 = vadd.f32 %v5955, %v6271
        %v6273 = vpop.f32.mrb[0].mxu0
        %v6274 = vadd.f32 %v5955, %v6273
        %6275 = vmatprep.mubr.f32.mxu0 0.0
        %6276 = vmatmul.mubr.f32.gmra.mrb[0].mxu0 %v6055
        %v6277 = vpop.f32.mrb[0].mxu0
        %v6278 = vadd.f32 %v5960, %v6277
        %v6279 = vpop.f32.mrb[0].mxu0
        %v6280 = vadd.f32 %v5960, %v6279
        %6281 = vmatprep.mubr.f32.mxu0 0.0
        %6282 = vmatmul.mubr.f32.gmra.mrb[0].mxu0 %v6058
        %v6283 = vpop.f32.mrb[0].mxu0
        %v6284 = vadd.f32 %v5965, %v6283
        %v6285 = vpop.f32.mrb[0].mxu0
        %v6286 = vadd.f32 %v5965, %v6285
        %6287 = vmatprep.mubr.f32.mxu0 0.0
        %6288 = vmatmul.mubr.f32.gmra.mrb[0].mxu0 %v6061
        %v6289 = vpop.f32.mrb[0].mxu0
        %v6290 = vadd.f32 %v5970, %v6289
        %v6291 = vpop.f32.mrb[0].mxu0
        %v6292 = vadd.f32 %v5970, %v6291
        %6293 = vmatprep.mubr.f32.mxu0 0.0
        %6294 = vmatmul.mubr.f32.gmra.mrb[0].mxu0 %v6064
        %v6295 = vpop.f32.mrb[0].mxu0
        %v6296 = vadd.f32 %v5975, %v6295
        %v6297 = vpop.f32.mrb[0].mxu0
        %v6298 = vadd.f32 %v5975, %v6297
        %6299 = vdwg.mxu0
        %v6300 = vld [vmem:[%s3] sm:$0xff]
        %v6301 = vld [vmem:[%s3 + $0x8] sm:$0xff]
        %v6302 = vld [vmem:[%s3 + $0x10] sm:$0xff]
        %v6303 = vld [vmem:[%s3 + $0x18] sm:$0xff]
        %v6304 = vld [vmem:[%s3 + $0x20] sm:$0xff]
        %v6305 = vld [vmem:[%s3 + $0x28] sm:$0xff]
        %v6306 = vld [vmem:[%s3 + $0x30] sm:$0xff]
        %v6307 = vld [vmem:[%s3 + $0x38] sm:$0xff]
        %v6308 = vld [vmem:[%s3 + $0x40] sm:$0xff]
        %v6309 = vld [vmem:[%s3 + $0x48] sm:$0xff]
        %v6310 = vld [vmem:[%s3 + $0x50] sm:$0xff]
        %v6311 = vld [vmem:[%s3 + $0x58] sm:$0xff]
        %v6312 = vld [vmem:[%s3 + $0x60] sm:$0xff]
        %v6313 = vld [vmem:[%s3 + $0x68] sm:$0xff]
        %v6314 = vld [vmem:[%s3 + $0x70] sm:$0xff]
        %v6315 = vld [vmem:[%s3 + $0x78] sm:$0xff]
        %vm6316 = vcmask 515072
        %v6318 = vsel %vm6316, %v6300, 0
        %v6321 = vsel %vm6316, %v6301, 0
        %v6324 = vsel %vm6316, %v6302, 0
        %v6327 = vsel %vm6316, %v6303, 0
        %v6330 = vsel %vm6316, %v6304, 0
        %v6333 = vsel %vm6316, %v6305, 0
        %v6336 = vsel %vm6316, %v6306, 0
        %v6339 = vsel %vm6316, %v6307, 0
        %v6342 = vsel %vm6316, %v6308, 0
        %v6345 = vsel %vm6316, %v6309, 0
        %v6348 = vsel %vm6316, %v6310, 0
        %v6351 = vsel %vm6316, %v6311, 0
        %v6354 = vsel %vm6316, %v6312, 0
        %v6357 = vsel %vm6316, %v6313, 0
        %v6360 = vsel %vm6316, %v6314, 0
        %v6363 = vsel %vm6316, %v6315, 0
        %v6365 = vsel %vm702, %v4134, 0
        %v6367 = vsel %vm702, %v4136, 0
        %v6369 = vsel %vm702, %v4138, 0
        %v6371 = vsel %vm702, %v4140, 0
        %6373 = vmatprep.subr.mxu0 %v4154
        %6374 = vmatpush1.msra.mxu0 %v4153
        %6375 = vmatprep.subr.mxu0 %v4056
        %6376 = vmatpush1.msra.mxu0 %v4054
        %6377 = vmatprep.subr.mxu0 %v4064
        %6378 = vmatpush1.msra.mxu0 %v4062
        %6379 = vmatprep.subr.mxu0 %v4072
        %6380 = vmatpush1.msra.mxu0 %v4070
        %6381 = vmatprep.subr.mxu0 %v4158
        %6382 = vmatpush1.msra.mxu0 %v4157
        %6383 = vmatprep.subr.mxu0 %v4120
        %6384 = vmatpush1.msra.mxu0 %v4118
        %6385 = vmatprep.subr.mxu0 %v4128
        %6386 = vmatpush1.msra.mxu0 %v4126
        %6387 = vmatprep.subr.mxu0 %v6367
        %6388 = vmatpush1.msra.mxu0 %v6365
        %6389 = vmatprep.subr.mxu0 0.0
        %6390 = vmatpush1.msra.mxu0 0.0
        %6391 = vmatprep.subr.mxu0 0.0
        %6392 = vmatpush1.msra.mxu0 0.0
        %6393 = vmatprep.subr.mxu0 0.0
        %6394 = vmatpush1.msra.mxu0 0.0
        %6395 = vmatprep.subr.mxu0 0.0
        %6396 = vmatpush1.msra.mxu0 0.0
        %6397 = vmatprep.subr.mxu0 0.0
        %6398 = vmatpush1.msra.mxu0 0.0
        %6399 = vmatprep.subr.mxu0 0.0
        %6400 = vmatpush1.msra.mxu0 0.0
        %6401 = vmatprep.subr.mxu0 0.0
        %6402 = vmatpush1.msra.mxu0 0.0
        %6403 = vmatprep.subr.mxu0 0.0
        %6404 = vmatpush1.msra.mxu0 0.0
        %6405 = vmatprep.subr.mxu0 0.0
        %6406 = vmatpush1.msra.mxu0 0.0
        %6407 = vmatprep.subr.mxu0 0.0
        %6408 = vmatpush1.msra.mxu0 0.0
        %6409 = vmatprep.subr.mxu0 0.0
        %6410 = vmatpush1.msra.mxu0 0.0
        %6411 = vmatprep.subr.mxu0 0.0
        %6412 = vmatpush1.msra.mxu0 0.0
        %6413 = vmatprep.subr.mxu0 0.0
        %6414 = vmatpush1.msra.mxu0 0.0
        %6415 = vmatprep.subr.mxu0 0.0
        %6416 = vmatpush1.msra.mxu0 0.0
        %6417 = vmatprep.subr.mxu0 0.0
        %6418 = vmatpush1.msra.mxu0 0.0
        %6419 = vmatprep.subr.mxu0 0.0
        %6420 = vmatpush1.msra.mxu0 0.0
        %6421 = vmatprep.subr.mxu0 0.0
        %6422 = vmatpush1.msra.mxu0 0.0
        %6423 = vmatprep.subr.mxu0 0.0
        %6424 = vmatpush1.msra.mxu0 0.0
        %6425 = vmatprep.subr.mxu0 0.0
        %6426 = vmatpush1.msra.mxu0 0.0
        %6427 = vmatprep.subr.mxu0 0.0
        %6428 = vmatpush1.msra.mxu0 0.0
        %6429 = vmatprep.subr.mxu0 0.0
        %6430 = vmatpush1.msra.mxu0 0.0
        %6431 = vmatprep.subr.mxu0 0.0
        %6432 = vmatpush1.msra.mxu0 0.0
        %6433 = vmatprep.subr.mxu0 0.0
        %6434 = vmatpush1.msra.mxu0 0.0
        %6435 = vmatprep.subr.mxu0 0.0
        %6436 = vmatpush1.msra.mxu0 0.0
        %6437 = vmatprep.mubr.f32.mxu0 0.0
        %6438 = vmatmul.mubr.f32.gmra.mrb[0].mxu0 %v6318
        %v6439 = vpop.f32.mrb[0].mxu0
        %v6440 = vadd.f32 0.0, %v6439
        %v6441 = vpop.f32.mrb[0].mxu0
        %v6442 = vadd.f32 0.0, %v6441
        %6443 = vmatprep.mubr.f32.mxu0 0.0
        %6444 = vmatmul.mubr.f32.gmra.mrb[0].mxu0 %v6321
        %v6445 = vpop.f32.mrb[0].mxu0
        %v6446 = vadd.f32 0.0, %v6445
        %v6447 = vpop.f32.mrb[0].mxu0
        %v6448 = vadd.f32 0.0, %v6447
        %6449 = vmatprep.mubr.f32.mxu0 0.0
        %6450 = vmatmul.mubr.f32.gmra.mrb[0].mxu0 %v6324
        %v6451 = vpop.f32.mrb[0].mxu0
        %v6452 = vadd.f32 0.0, %v6451
        %v6453 = vpop.f32.mrb[0].mxu0
        %v6454 = vadd.f32 0.0, %v6453
        %6455 = vmatprep.mubr.f32.mxu0 0.0
        %6456 = vmatmul.mubr.f32.gmra.mrb[0].mxu0 %v6327
        %v6457 = vpop.f32.mrb[0].mxu0
        %v6458 = vadd.f32 0.0, %v6457
        %v6459 = vpop.f32.mrb[0].mxu0
        %v6460 = vadd.f32 0.0, %v6459
        %6461 = vmatprep.mubr.f32.mxu0 0.0
        %6462 = vmatmul.mubr.f32.gmra.mrb[0].mxu0 %v6330
        %v6463 = vpop.f32.mrb[0].mxu0
        %v6464 = vadd.f32 0.0, %v6463
        %v6465 = vpop.f32.mrb[0].mxu0
        %v6466 = vadd.f32 0.0, %v6465
        %6467 = vmatprep.mubr.f32.mxu0 0.0
        %6468 = vmatmul.mubr.f32.gmra.mrb[0].mxu0 %v6333
        %v6469 = vpop.f32.mrb[0].mxu0
        %v6470 = vadd.f32 0.0, %v6469
        %v6471 = vpop.f32.mrb[0].mxu0
        %v6472 = vadd.f32 0.0, %v6471
        %6473 = vmatprep.mubr.f32.mxu0 0.0
        %6474 = vmatmul.mubr.f32.gmra.mrb[0].mxu0 %v6336
        %v6475 = vpop.f32.mrb[0].mxu0
        %v6476 = vadd.f32 0.0, %v6475
        %v6477 = vpop.f32.mrb[0].mxu0
        %v6478 = vadd.f32 0.0, %v6477
        %6479 = vmatprep.mubr.f32.mxu0 0.0
        %6480 = vmatmul.mubr.f32.gmra.mrb[0].mxu0 %v6339
        %v6481 = vpop.f32.mrb[0].mxu0
        %v6482 = vadd.f32 0.0, %v6481
        %v6483 = vpop.f32.mrb[0].mxu0
        %v6484 = vadd.f32 0.0, %v6483
        %6485 = vmatprep.mubr.f32.mxu0 0.0
        %6486 = vmatmul.mubr.f32.gmra.mrb[0].mxu0 %v6342
        %v6487 = vpop.f32.mrb[0].mxu0
        %v6488 = vadd.f32 0.0, %v6487
        %v6489 = vpop.f32.mrb[0].mxu0
        %v6490 = vadd.f32 0.0, %v6489
        %6491 = vmatprep.mubr.f32.mxu0 0.0
        %6492 = vmatmul.mubr.f32.gmra.mrb[0].mxu0 %v6345
        %v6493 = vpop.f32.mrb[0].mxu0
        %v6494 = vadd.f32 0.0, %v6493
        %v6495 = vpop.f32.mrb[0].mxu0
        %v6496 = vadd.f32 0.0, %v6495
        %6497 = vmatprep.mubr.f32.mxu0 0.0
        %6498 = vmatmul.mubr.f32.gmra.mrb[0].mxu0 %v6348
        %v6499 = vpop.f32.mrb[0].mxu0
        %v6500 = vadd.f32 0.0, %v6499
        %v6501 = vpop.f32.mrb[0].mxu0
        %v6502 = vadd.f32 0.0, %v6501
        %6503 = vmatprep.mubr.f32.mxu0 0.0
        %6504 = vmatmul.mubr.f32.gmra.mrb[0].mxu0 %v6351
        %v6505 = vpop.f32.mrb[0].mxu0
        %v6506 = vadd.f32 0.0, %v6505
        %v6507 = vpop.f32.mrb[0].mxu0
        %v6508 = vadd.f32 0.0, %v6507
        %6509 = vmatprep.mubr.f32.mxu0 0.0
        %6510 = vmatmul.mubr.f32.gmra.mrb[0].mxu0 %v6354
        %v6511 = vpop.f32.mrb[0].mxu0
        %v6512 = vadd.f32 0.0, %v6511
        %v6513 = vpop.f32.mrb[0].mxu0
        %v6514 = vadd.f32 0.0, %v6513
        %6515 = vmatprep.mubr.f32.mxu0 0.0
        %6516 = vmatmul.mubr.f32.gmra.mrb[0].mxu0 %v6357
        %v6517 = vpop.f32.mrb[0].mxu0
        %v6518 = vadd.f32 0.0, %v6517
        %v6519 = vpop.f32.mrb[0].mxu0
        %v6520 = vadd.f32 0.0, %v6519
        %6521 = vmatprep.mubr.f32.mxu0 0.0
        %6522 = vmatmul.mubr.f32.gmra.mrb[0].mxu0 %v6360
        %v6523 = vpop.f32.mrb[0].mxu0
        %v6524 = vadd.f32 0.0, %v6523
        %v6525 = vpop.f32.mrb[0].mxu0
        %v6526 = vadd.f32 0.0, %v6525
        %6527 = vmatprep.mubr.f32.mxu0 0.0
        %6528 = vmatmul.mubr.f32.gmra.mrb[0].mxu0 %v6363
        %v6529 = vpop.f32.mrb[0].mxu0
        %v6530 = vadd.f32 0.0, %v6529
        %v6531 = vpop.f32.mrb[0].mxu0
        %v6532 = vadd.f32 0.0, %v6531
        %6533 = vdwg.mxu0
        %6534 = vmatprep.subr.mxu0 %v4156
        %6535 = vmatpush1.msra.mxu0 %v4155
        %6536 = vmatprep.subr.mxu0 %v4060
        %6537 = vmatpush1.msra.mxu0 %v4058
        %6538 = vmatprep.subr.mxu0 %v4068
        %6539 = vmatpush1.msra.mxu0 %v4066
        %6540 = vmatprep.subr.mxu0 %v4076
        %6541 = vmatpush1.msra.mxu0 %v4074
        %6542 = vmatprep.subr.mxu0 %v4160
        %6543 = vmatpush1.msra.mxu0 %v4159
        %6544 = vmatprep.subr.mxu0 %v4124
        %6545 = vmatpush1.msra.mxu0 %v4122
        %6546 = vmatprep.subr.mxu0 %v4132
        %6547 = vmatpush1.msra.mxu0 %v4130
        %6548 = vmatprep.subr.mxu0 %v6371
        %6549 = vmatpush1.msra.mxu0 %v6369
        %6550 = vmatprep.subr.mxu0 0.0
        %6551 = vmatpush1.msra.mxu0 0.0
        %6552 = vmatprep.subr.mxu0 0.0
        %6553 = vmatpush1.msra.mxu0 0.0
        %6554 = vmatprep.subr.mxu0 0.0
        %6555 = vmatpush1.msra.mxu0 0.0
        %6556 = vmatprep.subr.mxu0 0.0
        %6557 = vmatpush1.msra.mxu0 0.0
        %6558 = vmatprep.subr.mxu0 0.0
        %6559 = vmatpush1.msra.mxu0 0.0
        %6560 = vmatprep.subr.mxu0 0.0
        %6561 = vmatpush1.msra.mxu0 0.0
        %6562 = vmatprep.subr.mxu0 0.0
        %6563 = vmatpush1.msra.mxu0 0.0
        %6564 = vmatprep.subr.mxu0 0.0
        %6565 = vmatpush1.msra.mxu0 0.0
        %6566 = vmatprep.subr.mxu0 0.0
        %6567 = vmatpush1.msra.mxu0 0.0
        %6568 = vmatprep.subr.mxu0 0.0
        %6569 = vmatpush1.msra.mxu0 0.0
        %6570 = vmatprep.subr.mxu0 0.0
        %6571 = vmatpush1.msra.mxu0 0.0
        %6572 = vmatprep.subr.mxu0 0.0
        %6573 = vmatpush1.msra.mxu0 0.0
        %6574 = vmatprep.subr.mxu0 0.0
        %6575 = vmatpush1.msra.mxu0 0.0
        %6576 = vmatprep.subr.mxu0 0.0
        %6577 = vmatpush1.msra.mxu0 0.0
        %6578 = vmatprep.subr.mxu0 0.0
        %6579 = vmatpush1.msra.mxu0 0.0
        %6580 = vmatprep.subr.mxu0 0.0
        %6581 = vmatpush1.msra.mxu0 0.0
        %6582 = vmatprep.subr.mxu0 0.0
        %6583 = vmatpush1.msra.mxu0 0.0
        %6584 = vmatprep.subr.mxu0 0.0
        %6585 = vmatpush1.msra.mxu0 0.0
        %6586 = vmatprep.subr.mxu0 0.0
        %6587 = vmatpush1.msra.mxu0 0.0
        %6588 = vmatprep.subr.mxu0 0.0
        %6589 = vmatpush1.msra.mxu0 0.0
        %6590 = vmatprep.subr.mxu0 0.0
        %6591 = vmatpush1.msra.mxu0 0.0
        %6592 = vmatprep.subr.mxu0 0.0
        %6593 = vmatpush1.msra.mxu0 0.0
        %6594 = vmatprep.subr.mxu0 0.0
        %6595 = vmatpush1.msra.mxu0 0.0
        %6596 = vmatprep.subr.mxu0 0.0
        %6597 = vmatpush1.msra.mxu0 0.0
        %6598 = vmatprep.mubr.f32.mxu0 0.0
        %6599 = vmatmul.mubr.f32.gmra.mrb[0].mxu0 %v6318
        %v6600 = vpop.f32.mrb[0].mxu0
        %v6601 = vadd.f32 0.0, %v6600
        %v6602 = vpop.f32.mrb[0].mxu0
        %v6603 = vadd.f32 0.0, %v6602
        %6604 = vmatprep.mubr.f32.mxu0 0.0
        %6605 = vmatmul.mubr.f32.gmra.mrb[0].mxu0 %v6321
        %v6606 = vpop.f32.mrb[0].mxu0
        %v6607 = vadd.f32 0.0, %v6606
        %v6608 = vpop.f32.mrb[0].mxu0
        %v6609 = vadd.f32 0.0, %v6608
        %6610 = vmatprep.mubr.f32.mxu0 0.0
        %6611 = vmatmul.mubr.f32.gmra.mrb[0].mxu0 %v6324
        %v6612 = vpop.f32.mrb[0].mxu0
        %v6613 = vadd.f32 0.0, %v6612
        %v6614 = vpop.f32.mrb[0].mxu0
        %v6615 = vadd.f32 0.0, %v6614
        %6616 = vmatprep.mubr.f32.mxu0 0.0
        %6617 = vmatmul.mubr.f32.gmra.mrb[0].mxu0 %v6327
        %v6618 = vpop.f32.mrb[0].mxu0
        %v6619 = vadd.f32 0.0, %v6618
        %v6620 = vpop.f32.mrb[0].mxu0
        %v6621 = vadd.f32 0.0, %v6620
        %6622 = vmatprep.mubr.f32.mxu0 0.0
        %6623 = vmatmul.mubr.f32.gmra.mrb[0].mxu0 %v6330
        %v6624 = vpop.f32.mrb[0].mxu0
        %v6625 = vadd.f32 0.0, %v6624
        %v6626 = vpop.f32.mrb[0].mxu0
        %v6627 = vadd.f32 0.0, %v6626
        %6628 = vmatprep.mubr.f32.mxu0 0.0
        %6629 = vmatmul.mubr.f32.gmra.mrb[0].mxu0 %v6333
        %v6630 = vpop.f32.mrb[0].mxu0
        %v6631 = vadd.f32 0.0, %v6630
        %v6632 = vpop.f32.mrb[0].mxu0
        %v6633 = vadd.f32 0.0, %v6632
        %6634 = vmatprep.mubr.f32.mxu0 0.0
        %6635 = vmatmul.mubr.f32.gmra.mrb[0].mxu0 %v6336
        %v6636 = vpop.f32.mrb[0].mxu0
        %v6637 = vadd.f32 0.0, %v6636
        %v6638 = vpop.f32.mrb[0].mxu0
        %v6639 = vadd.f32 0.0, %v6638
        %6640 = vmatprep.mubr.f32.mxu0 0.0
        %6641 = vmatmul.mubr.f32.gmra.mrb[0].mxu0 %v6339
        %v6642 = vpop.f32.mrb[0].mxu0
        %v6643 = vadd.f32 0.0, %v6642
        %v6644 = vpop.f32.mrb[0].mxu0
        %v6645 = vadd.f32 0.0, %v6644
        %6646 = vmatprep.mubr.f32.mxu0 0.0
        %6647 = vmatmul.mubr.f32.gmra.mrb[0].mxu0 %v6342
        %v6648 = vpop.f32.mrb[0].mxu0
        %v6649 = vadd.f32 0.0, %v6648
        %v6650 = vpop.f32.mrb[0].mxu0
        %v6651 = vadd.f32 0.0, %v6650
        %6652 = vmatprep.mubr.f32.mxu0 0.0
        %6653 = vmatmul.mubr.f32.gmra.mrb[0].mxu0 %v6345
        %v6654 = vpop.f32.mrb[0].mxu0
        %v6655 = vadd.f32 0.0, %v6654
        %v6656 = vpop.f32.mrb[0].mxu0
        %v6657 = vadd.f32 0.0, %v6656
        %6658 = vmatprep.mubr.f32.mxu0 0.0
        %6659 = vmatmul.mubr.f32.gmra.mrb[0].mxu0 %v6348
        %v6660 = vpop.f32.mrb[0].mxu0
        %v6661 = vadd.f32 0.0, %v6660
        %v6662 = vpop.f32.mrb[0].mxu0
        %v6663 = vadd.f32 0.0, %v6662
        %6664 = vmatprep.mubr.f32.mxu0 0.0
        %6665 = vmatmul.mubr.f32.gmra.mrb[0].mxu0 %v6351
        %v6666 = vpop.f32.mrb[0].mxu0
        %v6667 = vadd.f32 0.0, %v6666
        %v6668 = vpop.f32.mrb[0].mxu0
        %v6669 = vadd.f32 0.0, %v6668
        %6670 = vmatprep.mubr.f32.mxu0 0.0
        %6671 = vmatmul.mubr.f32.gmra.mrb[0].mxu0 %v6354
        %v6672 = vpop.f32.mrb[0].mxu0
        %v6673 = vadd.f32 0.0, %v6672
        %v6674 = vpop.f32.mrb[0].mxu0
        %v6675 = vadd.f32 0.0, %v6674
        %6676 = vmatprep.mubr.f32.mxu0 0.0
        %6677 = vmatmul.mubr.f32.gmra.mrb[0].mxu0 %v6357
        %v6678 = vpop.f32.mrb[0].mxu0
        %v6679 = vadd.f32 0.0, %v6678
        %v6680 = vpop.f32.mrb[0].mxu0
        %v6681 = vadd.f32 0.0, %v6680
        %6682 = vmatprep.mubr.f32.mxu0 0.0
        %6683 = vmatmul.mubr.f32.gmra.mrb[0].mxu0 %v6360
        %v6684 = vpop.f32.mrb[0].mxu0
        %v6685 = vadd.f32 0.0, %v6684
        %v6686 = vpop.f32.mrb[0].mxu0
        %v6687 = vadd.f32 0.0, %v6686
        %6688 = vmatprep.mubr.f32.mxu0 0.0
        %6689 = vmatmul.mubr.f32.gmra.mrb[0].mxu0 %v6363
        %v6690 = vpop.f32.mrb[0].mxu0
        %v6691 = vadd.f32 0.0, %v6690
        %v6692 = vpop.f32.mrb[0].mxu0
        %v6693 = vadd.f32 0.0, %v6692
        %6694 = vdwg.mxu0
        %v6695 = vld [vmem:[%s4] sm:$0xff]
        %v6696 = vld [vmem:[%s4 + $0x8] sm:$0xff]
        %v6697 = vld [vmem:[%s4 + $0x10] sm:$0xff]
        %v6698 = vld [vmem:[%s4 + $0x18] sm:$0xff]
        %v6699 = vld [vmem:[%s4 + $0x20] sm:$0xff]
        %v6700 = vld [vmem:[%s4 + $0x28] sm:$0xff]
        %v6701 = vld [vmem:[%s4 + $0x30] sm:$0xff]
        %v6702 = vld [vmem:[%s4 + $0x38] sm:$0xff]
        %6704 = vset.pattern.permute.xlu0 0
        %6705 = vperm.xlu0 %6704, %v6695
        %v6706 = vpop.permute.xlu0 %6705
        %6709 = vset.pattern.permute.xlu0 0
        %6710 = vperm.xlu0 %6709, %v6696
        %v6711 = vpop.permute.xlu0 %6710
        %6714 = vset.pattern.permute.xlu0 0
        %6715 = vperm.xlu0 %6714, %v6697
        %v6716 = vpop.permute.xlu0 %6715
        %6719 = vset.pattern.permute.xlu0 0
        %6720 = vperm.xlu0 %6719, %v6698
        %v6721 = vpop.permute.xlu0 %6720
        %6724 = vset.pattern.permute.xlu0 0
        %6725 = vperm.xlu0 %6724, %v6699
        %v6726 = vpop.permute.xlu0 %6725
        %6729 = vset.pattern.permute.xlu0 0
        %6730 = vperm.xlu0 %6729, %v6700
        %v6731 = vpop.permute.xlu0 %6730
        %6734 = vset.pattern.permute.xlu0 0
        %6735 = vperm.xlu0 %6734, %v6701
        %v6736 = vpop.permute.xlu0 %6735
        %6739 = vset.pattern.permute.xlu0 0
        %6740 = vperm.xlu0 %6739, %v6702
        %v6741 = vpop.permute.xlu0 %6740
        %v6743 = vadd.f32 %v6440, %v6706
        %v6744 = vadd.f32 %v6442, %v6706
        %v6745 = vadd.f32 %v6601, %v6706
        %v6746 = vadd.f32 %v6603, %v6706
        %v6747 = vadd.f32 %v6446, %v6711
        %v6748 = vadd.f32 %v6448, %v6711
        %v6749 = vadd.f32 %v6607, %v6711
        %v6750 = vadd.f32 %v6609, %v6711
        %v6751 = vadd.f32 %v6452, %v6716
        %v6752 = vadd.f32 %v6454, %v6716
        %v6753 = vadd.f32 %v6613, %v6716
        %v6754 = vadd.f32 %v6615, %v6716
        %v6755 = vadd.f32 %v6458, %v6721
        %v6756 = vadd.f32 %v6460, %v6721
        %v6757 = vadd.f32 %v6619, %v6721
        %v6758 = vadd.f32 %v6621, %v6721
        %v6759 = vadd.f32 %v6464, %v6726
        %v6760 = vadd.f32 %v6466, %v6726
        %v6761 = vadd.f32 %v6625, %v6726
        %v6762 = vadd.f32 %v6627, %v6726
        %v6763 = vadd.f32 %v6470, %v6731
        %v6764 = vadd.f32 %v6472, %v6731
        %v6765 = vadd.f32 %v6631, %v6731
        %v6766 = vadd.f32 %v6633, %v6731
        %v6767 = vadd.f32 %v6476, %v6736
        %v6768 = vadd.f32 %v6478, %v6736
        %v6769 = vadd.f32 %v6637, %v6736
        %v6770 = vadd.f32 %v6639, %v6736
        %v6771 = vadd.f32 %v6482, %v6741
        %v6772 = vadd.f32 %v6484, %v6741
        %v6773 = vadd.f32 %v6643, %v6741
        %v6774 = vadd.f32 %v6645, %v6741
        %v6775 = vmax.f32 %v6743, 0.0
        %v6776 = vmax.f32 %v6744, 0.0
        %v6777 = vmax.f32 %v6745, 0.0
        %v6778 = vmax.f32 %v6746, 0.0
        %v6779 = vmax.f32 %v6747, 0.0
        %v6780 = vmax.f32 %v6748, 0.0
        %v6781 = vmax.f32 %v6749, 0.0
        %v6782 = vmax.f32 %v6750, 0.0
        %v6783 = vmax.f32 %v6751, 0.0
        %v6784 = vmax.f32 %v6752, 0.0
        %v6785 = vmax.f32 %v6753, 0.0
        %v6786 = vmax.f32 %v6754, 0.0
        %v6787 = vmax.f32 %v6755, 0.0
        %v6788 = vmax.f32 %v6756, 0.0
        %v6789 = vmax.f32 %v6757, 0.0
        %v6790 = vmax.f32 %v6758, 0.0
        %v6791 = vmax.f32 %v6759, 0.0
        %v6792 = vmax.f32 %v6760, 0.0
        %v6793 = vmax.f32 %v6761, 0.0
        %v6794 = vmax.f32 %v6762, 0.0
        %v6795 = vmax.f32 %v6763, 0.0
        %v6796 = vmax.f32 %v6764, 0.0
        %v6797 = vmax.f32 %v6765, 0.0
        %v6798 = vmax.f32 %v6766, 0.0
        %v6799 = vmax.f32 %v6767, 0.0
        %v6800 = vmax.f32 %v6768, 0.0
        %v6801 = vmax.f32 %v6769, 0.0
        %v6802 = vmax.f32 %v6770, 0.0
        %v6803 = vmax.f32 %v6771, 0.0
        %v6804 = vmax.f32 %v6772, 0.0
        %v6805 = vmax.f32 %v6773, 0.0
        %v6806 = vmax.f32 %v6774, 0.0
        %v6807 = vmul.f32 %v6775, %v6141
        %v6808 = vmul.f32 %v6776, %v6143
        %v6809 = vmul.f32 %v6777, %v6254
        %v6810 = vmul.f32 %v6778, %v6256
        %v6811 = vmul.f32 %v6779, %v6147
        %v6812 = vmul.f32 %v6780, %v6149
        %v6813 = vmul.f32 %v6781, %v6260
        %v6814 = vmul.f32 %v6782, %v6262
        %v6815 = vmul.f32 %v6783, %v6153
        %v6816 = vmul.f32 %v6784, %v6155
        %v6817 = vmul.f32 %v6785, %v6266
        %v6818 = vmul.f32 %v6786, %v6268
        %v6819 = vmul.f32 %v6787, %v6159
        %v6820 = vmul.f32 %v6788, %v6161
        %v6821 = vmul.f32 %v6789, %v6272
        %v6822 = vmul.f32 %v6790, %v6274
        %v6823 = vmul.f32 %v6791, %v6165
        %v6824 = vmul.f32 %v6792, %v6167
        %v6825 = vmul.f32 %v6793, %v6278
        %v6826 = vmul.f32 %v6794, %v6280
        %v6827 = vmul.f32 %v6795, %v6171
        %v6828 = vmul.f32 %v6796, %v6173
        %v6829 = vmul.f32 %v6797, %v6284
        %v6830 = vmul.f32 %v6798, %v6286
        %v6831 = vmul.f32 %v6799, %v6177
        %v6832 = vmul.f32 %v6800, %v6179
        %v6833 = vmul.f32 %v6801, %v6290
        %v6834 = vmul.f32 %v6802, %v6292
        %v6835 = vmul.f32 %v6803, %v6183
        %v6836 = vmul.f32 %v6804, %v6185
        %v6837 = vmul.f32 %v6805, %v6296
        %v6838 = vmul.f32 %v6806, %v6298
        %v6839 = vld [vmem:[%s6] sm:$0xff]
        %v6840 = vld [vmem:[%s6 + $0x8] sm:$0xff]
        %v6841 = vld [vmem:[%s6 + $0x10] sm:$0xff]
        %v6842 = vld [vmem:[%s6 + $0x18] sm:$0xff]
        %v6843 = vld [vmem:[%s6 + $0x20] sm:$0xff]
        %v6844 = vld [vmem:[%s6 + $0x28] sm:$0xff]
        %v6845 = vld [vmem:[%s6 + $0x30] sm:$0xff]
        %v6846 = vld [vmem:[%s6 + $0x38] sm:$0xff]
        %vm6847 = vcmask 523264
        %v6849 = vsel %vm6847, %v6839, 0
        %v6852 = vsel %vm6847, %v6840, 0
        %v6855 = vsel %vm6847, %v6841, 0
        %v6858 = vsel %vm6847, %v6842, 0
        %v6861 = vsel %vm6847, %v6843, 0
        %v6864 = vsel %vm6847, %v6844, 0
        %v6867 = vsel %vm6847, %v6845, 0
        %v6870 = vsel %vm6847, %v6846, 0
        %6872 = vmatprep.subr.mxu0 %v6808
        %6873 = vmatpush1.msra.mxu0 %v6807
        %6874 = vmatprep.subr.mxu0 %v6812
        %6875 = vmatpush1.msra.mxu0 %v6811
        %6876 = vmatprep.subr.mxu0 %v6816
        %6877 = vmatpush1.msra.mxu0 %v6815
        %6878 = vmatprep.subr.mxu0 %v6820
        %6879 = vmatpush1.msra.mxu0 %v6819
        %6880 = vmatprep.subr.mxu0 %v6824
        %6881 = vmatpush1.msra.mxu0 %v6823
        %6882 = vmatprep.subr.mxu0 %v6828
        %6883 = vmatpush1.msra.mxu0 %v6827
        %6884 = vmatprep.subr.mxu0 %v6832
        %6885 = vmatpush1.msra.mxu0 %v6831
        %6886 = vmatprep.subr.mxu0 %v6836
        %6887 = vmatpush1.msra.mxu0 %v6835
        %6888 = vmatprep.subr.mxu0 0.0
        %6889 = vmatpush1.msra.mxu0 0.0
        %6890 = vmatprep.subr.mxu0 0.0
        %6891 = vmatpush1.msra.mxu0 0.0
        %6892 = vmatprep.subr.mxu0 0.0
        %6893 = vmatpush1.msra.mxu0 0.0
        %6894 = vmatprep.subr.mxu0 0.0
        %6895 = vmatpush1.msra.mxu0 0.0
        %6896 = vmatprep.subr.mxu0 0.0
        %6897 = vmatpush1.msra.mxu0 0.0
        %6898 = vmatprep.subr.mxu0 0.0
        %6899 = vmatpush1.msra.mxu0 0.0
        %6900 = vmatprep.subr.mxu0 0.0
        %6901 = vmatpush1.msra.mxu0 0.0
        %6902 = vmatprep.subr.mxu0 0.0
        %6903 = vmatpush1.msra.mxu0 0.0
        %6904 = vmatprep.subr.mxu0 0.0
        %6905 = vmatpush1.msra.mxu0 0.0
        %6906 = vmatprep.subr.mxu0 0.0
        %6907 = vmatpush1.msra.mxu0 0.0
        %6908 = vmatprep.subr.mxu0 0.0
        %6909 = vmatpush1.msra.mxu0 0.0
        %6910 = vmatprep.subr.mxu0 0.0
        %6911 = vmatpush1.msra.mxu0 0.0
        %6912 = vmatprep.subr.mxu0 0.0
        %6913 = vmatpush1.msra.mxu0 0.0
        %6914 = vmatprep.subr.mxu0 0.0
        %6915 = vmatpush1.msra.mxu0 0.0
        %6916 = vmatprep.subr.mxu0 0.0
        %6917 = vmatpush1.msra.mxu0 0.0
        %6918 = vmatprep.subr.mxu0 0.0
        %6919 = vmatpush1.msra.mxu0 0.0
        %6920 = vmatprep.subr.mxu0 0.0
        %6921 = vmatpush1.msra.mxu0 0.0
        %6922 = vmatprep.subr.mxu0 0.0
        %6923 = vmatpush1.msra.mxu0 0.0
        %6924 = vmatprep.subr.mxu0 0.0
        %6925 = vmatpush1.msra.mxu0 0.0
        %6926 = vmatprep.subr.mxu0 0.0
        %6927 = vmatpush1.msra.mxu0 0.0
        %6928 = vmatprep.subr.mxu0 0.0
        %6929 = vmatpush1.msra.mxu0 0.0
        %6930 = vmatprep.subr.mxu0 0.0
        %6931 = vmatpush1.msra.mxu0 0.0
        %6932 = vmatprep.subr.mxu0 0.0
        %6933 = vmatpush1.msra.mxu0 0.0
        %6934 = vmatprep.subr.mxu0 0.0
        %6935 = vmatpush1.msra.mxu0 0.0
        %6936 = vmatprep.mubr.f32.mxu0 0.0
        %6937 = vmatmul.mubr.f32.gmra.mrb[0].mxu0 %v6849
        %v6938 = vpop.f32.mrb[0].mxu0
        %v6939 = vadd.f32 0.0, %v6938
        %v6940 = vpop.f32.mrb[0].mxu0
        %v6941 = vadd.f32 0.0, %v6940
        %6942 = vmatprep.mubr.f32.mxu0 0.0
        %6943 = vmatmul.mubr.f32.gmra.mrb[0].mxu0 %v6852
        %v6944 = vpop.f32.mrb[0].mxu0
        %v6945 = vadd.f32 0.0, %v6944
        %v6946 = vpop.f32.mrb[0].mxu0
        %v6947 = vadd.f32 0.0, %v6946
        %6948 = vmatprep.mubr.f32.mxu0 0.0
        %6949 = vmatmul.mubr.f32.gmra.mrb[0].mxu0 %v6855
        %v6950 = vpop.f32.mrb[0].mxu0
        %v6951 = vadd.f32 0.0, %v6950
        %v6952 = vpop.f32.mrb[0].mxu0
        %v6953 = vadd.f32 0.0, %v6952
        %6954 = vmatprep.mubr.f32.mxu0 0.0
        %6955 = vmatmul.mubr.f32.gmra.mrb[0].mxu0 %v6858
        %v6956 = vpop.f32.mrb[0].mxu0
        %v6957 = vadd.f32 0.0, %v6956
        %v6958 = vpop.f32.mrb[0].mxu0
        %v6959 = vadd.f32 0.0, %v6958
        %6960 = vmatprep.mubr.f32.mxu0 0.0
        %6961 = vmatmul.mubr.f32.gmra.mrb[0].mxu0 %v6861
        %v6962 = vpop.f32.mrb[0].mxu0
        %v6963 = vadd.f32 0.0, %v6962
        %v6964 = vpop.f32.mrb[0].mxu0
        %v6965 = vadd.f32 0.0, %v6964
        %6966 = vmatprep.mubr.f32.mxu0 0.0
        %6967 = vmatmul.mubr.f32.gmra.mrb[0].mxu0 %v6864
        %v6968 = vpop.f32.mrb[0].mxu0
        %v6969 = vadd.f32 0.0, %v6968
        %v6970 = vpop.f32.mrb[0].mxu0
        %v6971 = vadd.f32 0.0, %v6970
        %6972 = vmatprep.mubr.f32.mxu0 0.0
        %6973 = vmatmul.mubr.f32.gmra.mrb[0].mxu0 %v6867
        %v6974 = vpop.f32.mrb[0].mxu0
        %v6975 = vadd.f32 0.0, %v6974
        %v6976 = vpop.f32.mrb[0].mxu0
        %v6977 = vadd.f32 0.0, %v6976
        %6978 = vmatprep.mubr.f32.mxu0 0.0
        %6979 = vmatmul.mubr.f32.gmra.mrb[0].mxu0 %v6870
        %v6980 = vpop.f32.mrb[0].mxu0
        %v6981 = vadd.f32 0.0, %v6980
        %v6982 = vpop.f32.mrb[0].mxu0
        %v6983 = vadd.f32 0.0, %v6982
        %6984 = vdwg.mxu0
        %6985 = vmatprep.subr.mxu0 %v6810
        %6986 = vmatpush1.msra.mxu0 %v6809
        %6987 = vmatprep.subr.mxu0 %v6814
        %6988 = vmatpush1.msra.mxu0 %v6813
        %6989 = vmatprep.subr.mxu0 %v6818
        %6990 = vmatpush1.msra.mxu0 %v6817
        %6991 = vmatprep.subr.mxu0 %v6822
        %6992 = vmatpush1.msra.mxu0 %v6821
        %6993 = vmatprep.subr.mxu0 %v6826
        %6994 = vmatpush1.msra.mxu0 %v6825
        %6995 = vmatprep.subr.mxu0 %v6830
        %6996 = vmatpush1.msra.mxu0 %v6829
        %6997 = vmatprep.subr.mxu0 %v6834
        %6998 = vmatpush1.msra.mxu0 %v6833
        %6999 = vmatprep.subr.mxu0 %v6838
        %7000 = vmatpush1.msra.mxu0 %v6837
        %7001 = vmatprep.subr.mxu0 0.0
        %7002 = vmatpush1.msra.mxu0 0.0
        %7003 = vmatprep.subr.mxu0 0.0
        %7004 = vmatpush1.msra.mxu0 0.0
        %7005 = vmatprep.subr.mxu0 0.0
        %7006 = vmatpush1.msra.mxu0 0.0
        %7007 = vmatprep.subr.mxu0 0.0
        %7008 = vmatpush1.msra.mxu0 0.0
        %7009 = vmatprep.subr.mxu0 0.0
        %7010 = vmatpush1.msra.mxu0 0.0
        %7011 = vmatprep.subr.mxu0 0.0
        %7012 = vmatpush1.msra.mxu0 0.0
        %7013 = vmatprep.subr.mxu0 0.0
        %7014 = vmatpush1.msra.mxu0 0.0
        %7015 = vmatprep.subr.mxu0 0.0
        %7016 = vmatpush1.msra.mxu0 0.0
        %7017 = vmatprep.subr.mxu0 0.0
        %7018 = vmatpush1.msra.mxu0 0.0
        %7019 = vmatprep.subr.mxu0 0.0
        %7020 = vmatpush1.msra.mxu0 0.0
        %7021 = vmatprep.subr.mxu0 0.0
        %7022 = vmatpush1.msra.mxu0 0.0
        %7023 = vmatprep.subr.mxu0 0.0
        %7024 = vmatpush1.msra.mxu0 0.0
        %7025 = vmatprep.subr.mxu0 0.0
        %7026 = vmatpush1.msra.mxu0 0.0
        %7027 = vmatprep.subr.mxu0 0.0
        %7028 = vmatpush1.msra.mxu0 0.0
        %7029 = vmatprep.subr.mxu0 0.0
        %7030 = vmatpush1.msra.mxu0 0.0
        %7031 = vmatprep.subr.mxu0 0.0
        %7032 = vmatpush1.msra.mxu0 0.0
        %7033 = vmatprep.subr.mxu0 0.0
        %7034 = vmatpush1.msra.mxu0 0.0
        %7035 = vmatprep.subr.mxu0 0.0
        %7036 = vmatpush1.msra.mxu0 0.0
        %7037 = vmatprep.subr.mxu0 0.0
        %7038 = vmatpush1.msra.mxu0 0.0
        %7039 = vmatprep.subr.mxu0 0.0
        %7040 = vmatpush1.msra.mxu0 0.0
        %7041 = vmatprep.subr.mxu0 0.0
        %7042 = vmatpush1.msra.mxu0 0.0
        %7043 = vmatprep.subr.mxu0 0.0
        %7044 = vmatpush1.msra.mxu0 0.0
        %7045 = vmatprep.subr.mxu0 0.0
        %7046 = vmatpush1.msra.mxu0 0.0
        %7047 = vmatprep.subr.mxu0 0.0
        %7048 = vmatpush1.msra.mxu0 0.0
        %7049 = vmatprep.mubr.f32.mxu0 0.0
        %7050 = vmatmul.mubr.f32.gmra.mrb[0].mxu0 %v6849
        %v7051 = vpop.f32.mrb[0].mxu0
        %v7052 = vadd.f32 0.0, %v7051
        %v7053 = vpop.f32.mrb[0].mxu0
        %v7054 = vadd.f32 0.0, %v7053
        %7055 = vmatprep.mubr.f32.mxu0 0.0
        %7056 = vmatmul.mubr.f32.gmra.mrb[0].mxu0 %v6852
        %v7057 = vpop.f32.mrb[0].mxu0
        %v7058 = vadd.f32 0.0, %v7057
        %v7059 = vpop.f32.mrb[0].mxu0
        %v7060 = vadd.f32 0.0, %v7059
        %7061 = vmatprep.mubr.f32.mxu0 0.0
        %7062 = vmatmul.mubr.f32.gmra.mrb[0].mxu0 %v6855
        %v7063 = vpop.f32.mrb[0].mxu0
        %v7064 = vadd.f32 0.0, %v7063
        %v7065 = vpop.f32.mrb[0].mxu0
        %v7066 = vadd.f32 0.0, %v7065
        %7067 = vmatprep.mubr.f32.mxu0 0.0
        %7068 = vmatmul.mubr.f32.gmra.mrb[0].mxu0 %v6858
        %v7069 = vpop.f32.mrb[0].mxu0
        %v7070 = vadd.f32 0.0, %v7069
        %v7071 = vpop.f32.mrb[0].mxu0
        %v7072 = vadd.f32 0.0, %v7071
        %7073 = vmatprep.mubr.f32.mxu0 0.0
        %7074 = vmatmul.mubr.f32.gmra.mrb[0].mxu0 %v6861
        %v7075 = vpop.f32.mrb[0].mxu0
        %v7076 = vadd.f32 0.0, %v7075
        %v7077 = vpop.f32.mrb[0].mxu0
        %v7078 = vadd.f32 0.0, %v7077
        %7079 = vmatprep.mubr.f32.mxu0 0.0
        %7080 = vmatmul.mubr.f32.gmra.mrb[0].mxu0 %v6864
        %v7081 = vpop.f32.mrb[0].mxu0
        %v7082 = vadd.f32 0.0, %v7081
        %v7083 = vpop.f32.mrb[0].mxu0
        %v7084 = vadd.f32 0.0, %v7083
        %7085 = vmatprep.mubr.f32.mxu0 0.0
        %7086 = vmatmul.mubr.f32.gmra.mrb[0].mxu0 %v6867
        %v7087 = vpop.f32.mrb[0].mxu0
        %v7088 = vadd.f32 0.0, %v7087
        %v7089 = vpop.f32.mrb[0].mxu0
        %v7090 = vadd.f32 0.0, %v7089
        %7091 = vmatprep.mubr.f32.mxu0 0.0
        %7092 = vmatmul.mubr.f32.gmra.mrb[0].mxu0 %v6870
        %v7093 = vpop.f32.mrb[0].mxu0
        %v7094 = vadd.f32 0.0, %v7093
        %v7095 = vpop.f32.mrb[0].mxu0
        %v7096 = vadd.f32 0.0, %v7095
        %7097 = vdwg.mxu0
        %v7098 = vadd.f32 %v6488, %v6939
        %v7099 = vadd.f32 %v6490, %v6941
        %v7100 = vadd.f32 %v6649, %v7052
        %v7101 = vadd.f32 %v6651, %v7054
        %v7102 = vadd.f32 %v6494, %v6945
        %v7103 = vadd.f32 %v6496, %v6947
        %v7104 = vadd.f32 %v6655, %v7058
        %v7105 = vadd.f32 %v6657, %v7060
        %v7106 = vadd.f32 %v6500, %v6951
        %v7107 = vadd.f32 %v6502, %v6953
        %v7108 = vadd.f32 %v6661, %v7064
        %v7109 = vadd.f32 %v6663, %v7066
        %v7110 = vadd.f32 %v6506, %v6957
        %v7111 = vadd.f32 %v6508, %v6959
        %v7112 = vadd.f32 %v6667, %v7070
        %v7113 = vadd.f32 %v6669, %v7072
        %v7114 = vadd.f32 %v6512, %v6963
        %v7115 = vadd.f32 %v6514, %v6965
        %v7116 = vadd.f32 %v6673, %v7076
        %v7117 = vadd.f32 %v6675, %v7078
        %v7118 = vadd.f32 %v6518, %v6969
        %v7119 = vadd.f32 %v6520, %v6971
        %v7120 = vadd.f32 %v6679, %v7082
        %v7121 = vadd.f32 %v6681, %v7084
        %v7122 = vadd.f32 %v6524, %v6975
        %v7123 = vadd.f32 %v6526, %v6977
        %v7124 = vadd.f32 %v6685, %v7088
        %v7125 = vadd.f32 %v6687, %v7090
        %v7126 = vadd.f32 %v6530, %v6981
        %v7127 = vadd.f32 %v6532, %v6983
        %v7128 = vadd.f32 %v6691, %v7094
        %v7129 = vadd.f32 %v6693, %v7096
        %v7130 = vld [vmem:[%s5] sm:$0xff]
        %v7131 = vld [vmem:[%s5 + $0x8] sm:$0xff]
        %v7132 = vld [vmem:[%s5 + $0x10] sm:$0xff]
        %v7133 = vld [vmem:[%s5 + $0x18] sm:$0xff]
        %v7134 = vld [vmem:[%s5 + $0x20] sm:$0xff]
        %v7135 = vld [vmem:[%s5 + $0x28] sm:$0xff]
        %v7136 = vld [vmem:[%s5 + $0x30] sm:$0xff]
        %v7137 = vld [vmem:[%s5 + $0x38] sm:$0xff]
        %7139 = vset.pattern.permute.xlu0 0
        %7140 = vperm.xlu0 %7139, %v7130
        %v7141 = vpop.permute.xlu0 %7140
        %7144 = vset.pattern.permute.xlu0 0
        %7145 = vperm.xlu0 %7144, %v7131
        %v7146 = vpop.permute.xlu0 %7145
        %7149 = vset.pattern.permute.xlu0 0
        %7150 = vperm.xlu0 %7149, %v7132
        %v7151 = vpop.permute.xlu0 %7150
        %7154 = vset.pattern.permute.xlu0 0
        %7155 = vperm.xlu0 %7154, %v7133
        %v7156 = vpop.permute.xlu0 %7155
        %7159 = vset.pattern.permute.xlu0 0
        %7160 = vperm.xlu0 %7159, %v7134
        %v7161 = vpop.permute.xlu0 %7160
        %7164 = vset.pattern.permute.xlu0 0
        %7165 = vperm.xlu0 %7164, %v7135
        %v7166 = vpop.permute.xlu0 %7165
        %7169 = vset.pattern.permute.xlu0 0
        %7170 = vperm.xlu0 %7169, %v7136
        %v7171 = vpop.permute.xlu0 %7170
        %7174 = vset.pattern.permute.xlu0 0
        %7175 = vperm.xlu0 %7174, %v7137
        %v7176 = vpop.permute.xlu0 %7175
        %v7178 = vadd.f32 %v7098, %v7141
        %v7179 = vadd.f32 %v7099, %v7141
        %v7180 = vadd.f32 %v7100, %v7141
        %v7181 = vadd.f32 %v7101, %v7141
        %v7182 = vadd.f32 %v7102, %v7146
        %v7183 = vadd.f32 %v7103, %v7146
        %v7184 = vadd.f32 %v7104, %v7146
        %v7185 = vadd.f32 %v7105, %v7146
        %v7186 = vadd.f32 %v7106, %v7151
        %v7187 = vadd.f32 %v7107, %v7151
        %v7188 = vadd.f32 %v7108, %v7151
        %v7189 = vadd.f32 %v7109, %v7151
        %v7190 = vadd.f32 %v7110, %v7156
        %v7191 = vadd.f32 %v7111, %v7156
        %v7192 = vadd.f32 %v7112, %v7156
        %v7193 = vadd.f32 %v7113, %v7156
        %v7194 = vadd.f32 %v7114, %v7161
        %v7195 = vadd.f32 %v7115, %v7161
        %v7196 = vadd.f32 %v7116, %v7161
        %v7197 = vadd.f32 %v7117, %v7161
        %v7198 = vadd.f32 %v7118, %v7166
        %v7199 = vadd.f32 %v7119, %v7166
        %v7200 = vadd.f32 %v7120, %v7166
        %v7201 = vadd.f32 %v7121, %v7166
        %v7202 = vadd.f32 %v7122, %v7171
        %v7203 = vadd.f32 %v7123, %v7171
        %v7204 = vadd.f32 %v7124, %v7171
        %v7205 = vadd.f32 %v7125, %v7171
        %v7206 = vadd.f32 %v7126, %v7176
        %v7207 = vadd.f32 %v7127, %v7176
        %v7208 = vadd.f32 %v7128, %v7176
        %v7209 = vadd.f32 %v7129, %v7176
        %v7210 = vmax.f32 %v7178, 0.0
        %v7211 = vmax.f32 %v7179, 0.0
        %v7212 = vmax.f32 %v7180, 0.0
        %v7213 = vmax.f32 %v7181, 0.0
        %v7214 = vmax.f32 %v7182, 0.0
        %v7215 = vmax.f32 %v7183, 0.0
        %v7216 = vmax.f32 %v7184, 0.0
        %v7217 = vmax.f32 %v7185, 0.0
        %v7218 = vmax.f32 %v7186, 0.0
        %v7219 = vmax.f32 %v7187, 0.0
        %v7220 = vmax.f32 %v7188, 0.0
        %v7221 = vmax.f32 %v7189, 0.0
        %v7222 = vmax.f32 %v7190, 0.0
        %v7223 = vmax.f32 %v7191, 0.0
        %v7224 = vmax.f32 %v7192, 0.0
        %v7225 = vmax.f32 %v7193, 0.0
        %v7226 = vmax.f32 %v7194, 0.0
        %v7227 = vmax.f32 %v7195, 0.0
        %v7228 = vmax.f32 %v7196, 0.0
        %v7229 = vmax.f32 %v7197, 0.0
        %v7230 = vmax.f32 %v7198, 0.0
        %v7231 = vmax.f32 %v7199, 0.0
        %v7232 = vmax.f32 %v7200, 0.0
        %v7233 = vmax.f32 %v7201, 0.0
        %v7234 = vmax.f32 %v7202, 0.0
        %v7235 = vmax.f32 %v7203, 0.0
        %v7236 = vmax.f32 %v7204, 0.0
        %v7237 = vmax.f32 %v7205, 0.0
        %v7238 = vmax.f32 %v7206, 0.0
        %v7239 = vmax.f32 %v7207, 0.0
        %v7240 = vmax.f32 %v7208, 0.0
        %v7241 = vmax.f32 %v7209, 0.0
        %v7242 = vmul.f32 %v7210, %v6141
        %v7243 = vmul.f32 %v7211, %v6143
        %v7244 = vmul.f32 %v7212, %v6254
        %v7245 = vmul.f32 %v7213, %v6256
        %v7246 = vmul.f32 %v7214, %v6147
        %v7247 = vmul.f32 %v7215, %v6149
        %v7248 = vmul.f32 %v7216, %v6260
        %v7249 = vmul.f32 %v7217, %v6262
        %v7250 = vmul.f32 %v7218, %v6153
        %v7251 = vmul.f32 %v7219, %v6155
        %v7252 = vmul.f32 %v7220, %v6266
        %v7253 = vmul.f32 %v7221, %v6268
        %v7254 = vmul.f32 %v7222, %v6159
        %v7255 = vmul.f32 %v7223, %v6161
        %v7256 = vmul.f32 %v7224, %v6272
        %v7257 = vmul.f32 %v7225, %v6274
        %v7258 = vmul.f32 %v7226, %v6165
        %v7259 = vmul.f32 %v7227, %v6167
        %v7260 = vmul.f32 %v7228, %v6278
        %v7261 = vmul.f32 %v7229, %v6280
        %v7262 = vmul.f32 %v7230, %v6171
        %v7263 = vmul.f32 %v7231, %v6173
        %v7264 = vmul.f32 %v7232, %v6284
        %v7265 = vmul.f32 %v7233, %v6286
        %v7266 = vmul.f32 %v7234, %v6177
        %v7267 = vmul.f32 %v7235, %v6179
        %v7268 = vmul.f32 %v7236, %v6290
        %v7269 = vmul.f32 %v7237, %v6292
        %v7270 = vmul.f32 %v7238, %v6183
        %v7271 = vmul.f32 %v7239, %v6185
        %v7272 = vmul.f32 %v7240, %v6296
        %v7273 = vmul.f32 %v7241, %v6298
        %v7274 = vld [vmem:[%s7] sm:$0xff]
        %v7275 = vld [vmem:[%s7 + $0x8] sm:$0xff]
        %v7276 = vld [vmem:[%s7 + $0x10] sm:$0xff]
        %v7277 = vld [vmem:[%s7 + $0x18] sm:$0xff]
        %v7278 = vld [vmem:[%s7 + $0x20] sm:$0xff]
        %v7279 = vld [vmem:[%s7 + $0x28] sm:$0xff]
        %v7280 = vld [vmem:[%s7 + $0x30] sm:$0xff]
        %v7281 = vld [vmem:[%s7 + $0x38] sm:$0xff]
        %7283 = vset.pattern.permute.xlu0 0
        %7284 = vperm.xlu0 %7283, %v7274
        %v7285 = vpop.permute.xlu0 %7284
        %7288 = vset.pattern.permute.xlu0 0
        %7289 = vperm.xlu0 %7288, %v7275
        %v7290 = vpop.permute.xlu0 %7289
        %7293 = vset.pattern.permute.xlu0 0
        %7294 = vperm.xlu0 %7293, %v7276
        %v7295 = vpop.permute.xlu0 %7294
        %7298 = vset.pattern.permute.xlu0 0
        %7299 = vperm.xlu0 %7298, %v7277
        %v7300 = vpop.permute.xlu0 %7299
        %7303 = vset.pattern.permute.xlu0 0
        %7304 = vperm.xlu0 %7303, %v7278
        %v7305 = vpop.permute.xlu0 %7304
        %7308 = vset.pattern.permute.xlu0 0
        %7309 = vperm.xlu0 %7308, %v7279
        %v7310 = vpop.permute.xlu0 %7309
        %7313 = vset.pattern.permute.xlu0 0
        %7314 = vperm.xlu0 %7313, %v7280
        %v7315 = vpop.permute.xlu0 %7314
        %7318 = vset.pattern.permute.xlu0 0
        %7319 = vperm.xlu0 %7318, %v7281
        %v7320 = vpop.permute.xlu0 %7319
        %v7322 = vmul.f32 %v7242, %v7285
        %v7323 = vmul.f32 %v7243, %v7285
        %v7324 = vmul.f32 %v7244, %v7285
        %v7325 = vmul.f32 %v7245, %v7285
        %v7326 = vmul.f32 %v7246, %v7290
        %v7327 = vmul.f32 %v7247, %v7290
        %v7328 = vmul.f32 %v7248, %v7290
        %v7329 = vmul.f32 %v7249, %v7290
        %v7330 = vmul.f32 %v7250, %v7295
        %v7331 = vmul.f32 %v7251, %v7295
        %v7332 = vmul.f32 %v7252, %v7295
        %v7333 = vmul.f32 %v7253, %v7295
        %v7334 = vmul.f32 %v7254, %v7300
        %v7335 = vmul.f32 %v7255, %v7300
        %v7336 = vmul.f32 %v7256, %v7300
        %v7337 = vmul.f32 %v7257, %v7300
        %v7338 = vmul.f32 %v7258, %v7305
        %v7339 = vmul.f32 %v7259, %v7305
        %v7340 = vmul.f32 %v7260, %v7305
        %v7341 = vmul.f32 %v7261, %v7305
        %v7342 = vmul.f32 %v7262, %v7310
        %v7343 = vmul.f32 %v7263, %v7310
        %v7344 = vmul.f32 %v7264, %v7310
        %v7345 = vmul.f32 %v7265, %v7310
        %v7346 = vmul.f32 %v7266, %v7315
        %v7347 = vmul.f32 %v7267, %v7315
        %v7348 = vmul.f32 %v7268, %v7315
        %v7349 = vmul.f32 %v7269, %v7315
        %v7350 = vmul.f32 %v7270, %v7320
        %v7351 = vmul.f32 %v7271, %v7320
        %v7352 = vmul.f32 %v7272, %v7320
        %v7353 = vmul.f32 %v7273, %v7320
        %v7354 = vadd.f32 %v7322, %v7326
        %v7355 = vadd.f32 %v7354, %v7330
        %v7356 = vadd.f32 %v7355, %v7334
        %v7357 = vadd.f32 %v7356, %v7338
        %v7358 = vadd.f32 %v7357, %v7342
        %v7359 = vadd.f32 %v7358, %v7346
        %v7360 = vadd.f32 %v7359, %v7350
        %v7361 = vrot.slane %v7360, 4
        %v7362 = vadd.f32 %v7360, %v7361
        %v7363 = vrot.slane %v7362, 2
        %v7364 = vadd.f32 %v7362, %v7363
        %v7365 = vrot.slane %v7364, 1
        %v7366 = vadd.f32 %v7364, %v7365
        %v7367 = vadd.f32 %v7323, %v7327
        %v7368 = vadd.f32 %v7367, %v7331
        %v7369 = vadd.f32 %v7368, %v7335
        %v7370 = vadd.f32 %v7369, %v7339
        %v7371 = vadd.f32 %v7370, %v7343
        %v7372 = vadd.f32 %v7371, %v7347
        %v7373 = vadd.f32 %v7372, %v7351
        %v7374 = vrot.slane %v7373, 4
        %v7375 = vadd.f32 %v7373, %v7374
        %v7376 = vrot.slane %v7375, 2
        %v7377 = vadd.f32 %v7375, %v7376
        %v7378 = vrot.slane %v7377, 1
        %v7379 = vadd.f32 %v7377, %v7378
        %v7380 = vadd.f32 %v7324, %v7328
        %v7381 = vadd.f32 %v7380, %v7332
        %v7382 = vadd.f32 %v7381, %v7336
        %v7383 = vadd.f32 %v7382, %v7340
        %v7384 = vadd.f32 %v7383, %v7344
        %v7385 = vadd.f32 %v7384, %v7348
        %v7386 = vadd.f32 %v7385, %v7352
        %v7387 = vrot.slane %v7386, 4
        %v7388 = vadd.f32 %v7386, %v7387
        %v7389 = vrot.slane %v7388, 2
        %v7390 = vadd.f32 %v7388, %v7389
        %v7391 = vrot.slane %v7390, 1
        %v7392 = vadd.f32 %v7390, %v7391
        %v7393 = vadd.f32 %v7325, %v7329
        %v7394 = vadd.f32 %v7393, %v7333
        %v7395 = vadd.f32 %v7394, %v7337
        %v7396 = vadd.f32 %v7395, %v7341
        %v7397 = vadd.f32 %v7396, %v7345
        %v7398 = vadd.f32 %v7397, %v7349
        %v7399 = vadd.f32 %v7398, %v7353
        %v7400 = vrot.slane %v7399, 4
        %v7401 = vadd.f32 %v7399, %v7400
        %v7402 = vrot.slane %v7401, 2
        %v7403 = vadd.f32 %v7401, %v7402
        %v7404 = vrot.slane %v7403, 1
        %v7405 = vadd.f32 %v7403, %v7404
        %v7406 = vld [vmem:[#allocation2] sm:$0x1]
        %7408 = vset.pattern.permute.xlu0 0
        %7409 = vperm.xlu0 %7408, %v7406
        %v7410 = vpop.permute.xlu0 %7409
        %v7412 = vlaneseq
        %v7413 = vshrl.u32 %v7412, 7
        %v7414 = vsub.s32 0, %v7413
        %v7415 = vrot.slane %v7410, %v7414
        %v7416 = vadd.f32 %v7366, %v7415
        %v7417 = vadd.f32 %v7379, %v7415
        %v7418 = vadd.f32 %v7392, %v7415
        %v7419 = vadd.f32 %v7405, %v7415
        %v7420 = vmul.f32 %v7242, %v6141
        %v7421 = vmul.f32 %v7243, %v6143
        %v7422 = vmul.f32 %v7244, %v6254
        %v7423 = vmul.f32 %v7245, %v6256
        %v7424 = vmul.f32 %v7246, %v6147
        %v7425 = vmul.f32 %v7247, %v6149
        %v7426 = vmul.f32 %v7248, %v6260
        %v7427 = vmul.f32 %v7249, %v6262
        %v7428 = vmul.f32 %v7250, %v6153
        %v7429 = vmul.f32 %v7251, %v6155
        %v7430 = vmul.f32 %v7252, %v6266
        %v7431 = vmul.f32 %v7253, %v6268
        %v7432 = vmul.f32 %v7254, %v6159
        %v7433 = vmul.f32 %v7255, %v6161
        %v7434 = vmul.f32 %v7256, %v6272
        %v7435 = vmul.f32 %v7257, %v6274
        %v7436 = vmul.f32 %v7258, %v6165
        %v7437 = vmul.f32 %v7259, %v6167
        %v7438 = vmul.f32 %v7260, %v6278
        %v7439 = vmul.f32 %v7261, %v6280
        %v7440 = vmul.f32 %v7262, %v6171
        %v7441 = vmul.f32 %v7263, %v6173
        %v7442 = vmul.f32 %v7264, %v6284
        %v7443 = vmul.f32 %v7265, %v6286
        %v7444 = vmul.f32 %v7266, %v6177
        %v7445 = vmul.f32 %v7267, %v6179
        %v7446 = vmul.f32 %v7268, %v6290
        %v7447 = vmul.f32 %v7269, %v6292
        %v7448 = vmul.f32 %v7270, %v6183
        %v7449 = vmul.f32 %v7271, %v6185
        %v7450 = vmul.f32 %v7272, %v6296
        %v7451 = vmul.f32 %v7273, %v6298
        %v7452 = vld [vmem:[%s9] sm:$0xff]
        %v7453 = vld [vmem:[%s9 + $0x8] sm:$0xff]
        %v7454 = vld [vmem:[%s9 + $0x10] sm:$0xff]
        %v7455 = vld [vmem:[%s9 + $0x18] sm:$0xff]
        %v7456 = vld [vmem:[%s9 + $0x20] sm:$0xff]
        %v7457 = vld [vmem:[%s9 + $0x28] sm:$0xff]
        %v7458 = vld [vmem:[%s9 + $0x30] sm:$0xff]
        %v7459 = vld [vmem:[%s9 + $0x38] sm:$0xff]
        %v7460 = vld [vmem:[%s10] sm:$0xff]
        %v7461 = vld [vmem:[%s10 + $0x8] sm:$0xff]
        %v7462 = vld [vmem:[%s10 + $0x10] sm:$0xff]
        %v7463 = vld [vmem:[%s10 + $0x18] sm:$0xff]
        %v7464 = vld [vmem:[%s10 + $0x20] sm:$0xff]
        %v7465 = vld [vmem:[%s10 + $0x28] sm:$0xff]
        %v7466 = vld [vmem:[%s10 + $0x30] sm:$0xff]
        %v7467 = vld [vmem:[%s10 + $0x38] sm:$0xff]
        %v7469 = vsel %vm6847, %v7460, 0
        %v7472 = vsel %vm6847, %v7461, 0
        %v7475 = vsel %vm6847, %v7462, 0
        %v7478 = vsel %vm6847, %v7463, 0
        %v7481 = vsel %vm6847, %v7464, 0
        %v7484 = vsel %vm6847, %v7465, 0
        %v7487 = vsel %vm6847, %v7466, 0
        %v7490 = vsel %vm6847, %v7467, 0
        %7492 = vmatprep.subr.mxu0 %v7421
        %7493 = vmatpush1.msra.mxu0 %v7420
        %7494 = vmatprep.subr.mxu0 %v7425
        %7495 = vmatpush1.msra.mxu0 %v7424
        %7496 = vmatprep.subr.mxu0 %v7429
        %7497 = vmatpush1.msra.mxu0 %v7428
        %7498 = vmatprep.subr.mxu0 %v7433
        %7499 = vmatpush1.msra.mxu0 %v7432
        %7500 = vmatprep.subr.mxu0 %v7437
        %7501 = vmatpush1.msra.mxu0 %v7436
        %7502 = vmatprep.subr.mxu0 %v7441
        %7503 = vmatpush1.msra.mxu0 %v7440
        %7504 = vmatprep.subr.mxu0 %v7445
        %7505 = vmatpush1.msra.mxu0 %v7444
        %7506 = vmatprep.subr.mxu0 %v7449
        %7507 = vmatpush1.msra.mxu0 %v7448
        %7508 = vmatprep.subr.mxu0 0.0
        %7509 = vmatpush1.msra.mxu0 0.0
        %7510 = vmatprep.subr.mxu0 0.0
        %7511 = vmatpush1.msra.mxu0 0.0
        %7512 = vmatprep.subr.mxu0 0.0
        %7513 = vmatpush1.msra.mxu0 0.0
        %7514 = vmatprep.subr.mxu0 0.0
        %7515 = vmatpush1.msra.mxu0 0.0
        %7516 = vmatprep.subr.mxu0 0.0
        %7517 = vmatpush1.msra.mxu0 0.0
        %7518 = vmatprep.subr.mxu0 0.0
        %7519 = vmatpush1.msra.mxu0 0.0
        %7520 = vmatprep.subr.mxu0 0.0
        %7521 = vmatpush1.msra.mxu0 0.0
        %7522 = vmatprep.subr.mxu0 0.0
        %7523 = vmatpush1.msra.mxu0 0.0
        %7524 = vmatprep.subr.mxu0 0.0
        %7525 = vmatpush1.msra.mxu0 0.0
        %7526 = vmatprep.subr.mxu0 0.0
        %7527 = vmatpush1.msra.mxu0 0.0
        %7528 = vmatprep.subr.mxu0 0.0
        %7529 = vmatpush1.msra.mxu0 0.0
        %7530 = vmatprep.subr.mxu0 0.0
        %7531 = vmatpush1.msra.mxu0 0.0
        %7532 = vmatprep.subr.mxu0 0.0
        %7533 = vmatpush1.msra.mxu0 0.0
        %7534 = vmatprep.subr.mxu0 0.0
        %7535 = vmatpush1.msra.mxu0 0.0
        %7536 = vmatprep.subr.mxu0 0.0
        %7537 = vmatpush1.msra.mxu0 0.0
        %7538 = vmatprep.subr.mxu0 0.0
        %7539 = vmatpush1.msra.mxu0 0.0
        %7540 = vmatprep.subr.mxu0 0.0
        %7541 = vmatpush1.msra.mxu0 0.0
        %7542 = vmatprep.subr.mxu0 0.0
        %7543 = vmatpush1.msra.mxu0 0.0
        %7544 = vmatprep.subr.mxu0 0.0
        %7545 = vmatpush1.msra.mxu0 0.0
        %7546 = vmatprep.subr.mxu0 0.0
        %7547 = vmatpush1.msra.mxu0 0.0
        %7548 = vmatprep.subr.mxu0 0.0
        %7549 = vmatpush1.msra.mxu0 0.0
        %7550 = vmatprep.subr.mxu0 0.0
        %7551 = vmatpush1.msra.mxu0 0.0
        %7552 = vmatprep.subr.mxu0 0.0
        %7553 = vmatpush1.msra.mxu0 0.0
        %7554 = vmatprep.subr.mxu0 0.0
        %7555 = vmatpush1.msra.mxu0 0.0
        %7556 = vmatprep.mubr.f32.mxu0 0.0
        %7557 = vmatmul.mubr.f32.gmra.mrb[0].mxu0 %v7469
        %v7558 = vpop.f32.mrb[0].mxu0
        %v7559 = vadd.f32 0.0, %v7558
        %v7560 = vpop.f32.mrb[0].mxu0
        %v7561 = vadd.f32 0.0, %v7560
        %7562 = vmatprep.mubr.f32.mxu0 0.0
        %7563 = vmatmul.mubr.f32.gmra.mrb[0].mxu0 %v7472
        %v7564 = vpop.f32.mrb[0].mxu0
        %v7565 = vadd.f32 0.0, %v7564
        %v7566 = vpop.f32.mrb[0].mxu0
        %v7567 = vadd.f32 0.0, %v7566
        %7568 = vmatprep.mubr.f32.mxu0 0.0
        %7569 = vmatmul.mubr.f32.gmra.mrb[0].mxu0 %v7475
        %v7570 = vpop.f32.mrb[0].mxu0
        %v7571 = vadd.f32 0.0, %v7570
        %v7572 = vpop.f32.mrb[0].mxu0
        %v7573 = vadd.f32 0.0, %v7572
        %7574 = vmatprep.mubr.f32.mxu0 0.0
        %7575 = vmatmul.mubr.f32.gmra.mrb[0].mxu0 %v7478
        %v7576 = vpop.f32.mrb[0].mxu0
        %v7577 = vadd.f32 0.0, %v7576
        %v7578 = vpop.f32.mrb[0].mxu0
        %v7579 = vadd.f32 0.0, %v7578
        %7580 = vmatprep.mubr.f32.mxu0 0.0
        %7581 = vmatmul.mubr.f32.gmra.mrb[0].mxu0 %v7481
        %v7582 = vpop.f32.mrb[0].mxu0
        %v7583 = vadd.f32 0.0, %v7582
        %v7584 = vpop.f32.mrb[0].mxu0
        %v7585 = vadd.f32 0.0, %v7584
        %7586 = vmatprep.mubr.f32.mxu0 0.0
        %7587 = vmatmul.mubr.f32.gmra.mrb[0].mxu0 %v7484
        %v7588 = vpop.f32.mrb[0].mxu0
        %v7589 = vadd.f32 0.0, %v7588
        %v7590 = vpop.f32.mrb[0].mxu0
        %v7591 = vadd.f32 0.0, %v7590
        %7592 = vmatprep.mubr.f32.mxu0 0.0
        %7593 = vmatmul.mubr.f32.gmra.mrb[0].mxu0 %v7487
        %v7594 = vpop.f32.mrb[0].mxu0
        %v7595 = vadd.f32 0.0, %v7594
        %v7596 = vpop.f32.mrb[0].mxu0
        %v7597 = vadd.f32 0.0, %v7596
        %7598 = vmatprep.mubr.f32.mxu0 0.0
        %7599 = vmatmul.mubr.f32.gmra.mrb[0].mxu0 %v7490
        %v7600 = vpop.f32.mrb[0].mxu0
        %v7601 = vadd.f32 0.0, %v7600
        %v7602 = vpop.f32.mrb[0].mxu0
        %v7603 = vadd.f32 0.0, %v7602
        %7604 = vdwg.mxu0
        %7605 = vmatprep.subr.mxu0 %v7423
        %7606 = vmatpush1.msra.mxu0 %v7422
        %7607 = vmatprep.subr.mxu0 %v7427
        %7608 = vmatpush1.msra.mxu0 %v7426
        %7609 = vmatprep.subr.mxu0 %v7431
        %7610 = vmatpush1.msra.mxu0 %v7430
        %7611 = vmatprep.subr.mxu0 %v7435
        %7612 = vmatpush1.msra.mxu0 %v7434
        %7613 = vmatprep.subr.mxu0 %v7439
        %7614 = vmatpush1.msra.mxu0 %v7438
        %7615 = vmatprep.subr.mxu0 %v7443
        %7616 = vmatpush1.msra.mxu0 %v7442
        %7617 = vmatprep.subr.mxu0 %v7447
        %7618 = vmatpush1.msra.mxu0 %v7446
        %7619 = vmatprep.subr.mxu0 %v7451
        %7620 = vmatpush1.msra.mxu0 %v7450
        %7621 = vmatprep.subr.mxu0 0.0
        %7622 = vmatpush1.msra.mxu0 0.0
        %7623 = vmatprep.subr.mxu0 0.0
        %7624 = vmatpush1.msra.mxu0 0.0
        %7625 = vmatprep.subr.mxu0 0.0
        %7626 = vmatpush1.msra.mxu0 0.0
        %7627 = vmatprep.subr.mxu0 0.0
        %7628 = vmatpush1.msra.mxu0 0.0
        %7629 = vmatprep.subr.mxu0 0.0
        %7630 = vmatpush1.msra.mxu0 0.0
        %7631 = vmatprep.subr.mxu0 0.0
        %7632 = vmatpush1.msra.mxu0 0.0
        %7633 = vmatprep.subr.mxu0 0.0
        %7634 = vmatpush1.msra.mxu0 0.0
        %7635 = vmatprep.subr.mxu0 0.0
        %7636 = vmatpush1.msra.mxu0 0.0
        %7637 = vmatprep.subr.mxu0 0.0
        %7638 = vmatpush1.msra.mxu0 0.0
        %7639 = vmatprep.subr.mxu0 0.0
        %7640 = vmatpush1.msra.mxu0 0.0
        %7641 = vmatprep.subr.mxu0 0.0
        %7642 = vmatpush1.msra.mxu0 0.0
        %7643 = vmatprep.subr.mxu0 0.0
        %7644 = vmatpush1.msra.mxu0 0.0
        %7645 = vmatprep.subr.mxu0 0.0
        %7646 = vmatpush1.msra.mxu0 0.0
        %7647 = vmatprep.subr.mxu0 0.0
        %7648 = vmatpush1.msra.mxu0 0.0
        %7649 = vmatprep.subr.mxu0 0.0
        %7650 = vmatpush1.msra.mxu0 0.0
        %7651 = vmatprep.subr.mxu0 0.0
        %7652 = vmatpush1.msra.mxu0 0.0
        %7653 = vmatprep.subr.mxu0 0.0
        %7654 = vmatpush1.msra.mxu0 0.0
        %7655 = vmatprep.subr.mxu0 0.0
        %7656 = vmatpush1.msra.mxu0 0.0
        %7657 = vmatprep.subr.mxu0 0.0
        %7658 = vmatpush1.msra.mxu0 0.0
        %7659 = vmatprep.subr.mxu0 0.0
        %7660 = vmatpush1.msra.mxu0 0.0
        %7661 = vmatprep.subr.mxu0 0.0
        %7662 = vmatpush1.msra.mxu0 0.0
        %7663 = vmatprep.subr.mxu0 0.0
        %7664 = vmatpush1.msra.mxu0 0.0
        %7665 = vmatprep.subr.mxu0 0.0
        %7666 = vmatpush1.msra.mxu0 0.0
        %7667 = vmatprep.subr.mxu0 0.0
        %7668 = vmatpush1.msra.mxu0 0.0
        %7669 = vmatprep.mubr.f32.mxu0 0.0
        %7670 = vmatmul.mubr.f32.gmra.mrb[0].mxu0 %v7469
        %v7671 = vpop.f32.mrb[0].mxu0
        %v7672 = vadd.f32 0.0, %v7671
        %v7673 = vpop.f32.mrb[0].mxu0
        %v7674 = vadd.f32 0.0, %v7673
        %7675 = vmatprep.mubr.f32.mxu0 0.0
        %7676 = vmatmul.mubr.f32.gmra.mrb[0].mxu0 %v7472
        %v7677 = vpop.f32.mrb[0].mxu0
        %v7678 = vadd.f32 0.0, %v7677
        %v7679 = vpop.f32.mrb[0].mxu0
        %v7680 = vadd.f32 0.0, %v7679
        %7681 = vmatprep.mubr.f32.mxu0 0.0
        %7682 = vmatmul.mubr.f32.gmra.mrb[0].mxu0 %v7475
        %v7683 = vpop.f32.mrb[0].mxu0
        %v7684 = vadd.f32 0.0, %v7683
        %v7685 = vpop.f32.mrb[0].mxu0
        %v7686 = vadd.f32 0.0, %v7685
        %7687 = vmatprep.mubr.f32.mxu0 0.0
        %7688 = vmatmul.mubr.f32.gmra.mrb[0].mxu0 %v7478
        %v7689 = vpop.f32.mrb[0].mxu0
        %v7690 = vadd.f32 0.0, %v7689
        %v7691 = vpop.f32.mrb[0].mxu0
        %v7692 = vadd.f32 0.0, %v7691
        %7693 = vmatprep.mubr.f32.mxu0 0.0
        %7694 = vmatmul.mubr.f32.gmra.mrb[0].mxu0 %v7481
        %v7695 = vpop.f32.mrb[0].mxu0
        %v7696 = vadd.f32 0.0, %v7695
        %v7697 = vpop.f32.mrb[0].mxu0
        %v7698 = vadd.f32 0.0, %v7697
        %7699 = vmatprep.mubr.f32.mxu0 0.0
        %7700 = vmatmul.mubr.f32.gmra.mrb[0].mxu0 %v7484
        %v7701 = vpop.f32.mrb[0].mxu0
        %v7702 = vadd.f32 0.0, %v7701
        %v7703 = vpop.f32.mrb[0].mxu0
        %v7704 = vadd.f32 0.0, %v7703
        %7705 = vmatprep.mubr.f32.mxu0 0.0
        %7706 = vmatmul.mubr.f32.gmra.mrb[0].mxu0 %v7487
        %v7707 = vpop.f32.mrb[0].mxu0
        %v7708 = vadd.f32 0.0, %v7707
        %v7709 = vpop.f32.mrb[0].mxu0
        %v7710 = vadd.f32 0.0, %v7709
        %7711 = vmatprep.mubr.f32.mxu0 0.0
        %7712 = vmatmul.mubr.f32.gmra.mrb[0].mxu0 %v7490
        %v7713 = vpop.f32.mrb[0].mxu0
        %v7714 = vadd.f32 0.0, %v7713
        %v7715 = vpop.f32.mrb[0].mxu0
        %v7716 = vadd.f32 0.0, %v7715
        %7717 = vdwg.mxu0
        %vm7718 = vcmask 220160
        %v7720 = vsel %vm7718, %v7452, 0
        %v7723 = vsel %vm7718, %v7453, 0
        %v7726 = vsel %vm7718, %v7454, 0
        %v7729 = vsel %vm7718, %v7455, 0
        %v7732 = vsel %vm7718, %v7456, 0
        %v7735 = vsel %vm7718, %v7457, 0
        %v7738 = vsel %vm7718, %v7458, 0
        %v7741 = vsel %vm7718, %v7459, 0
        %v7743 = vsel %vm682, %v5897, 0
        %v7745 = vsel %vm682, %v5899, 0
        %v7747 = vsel %vm682, %v5901, 0
        %v7749 = vsel %vm682, %v5903, 0
        %7751 = vmatprep.subr.mxu0 %v5914
        %7752 = vmatpush1.msra.mxu0 %v5913
        %7753 = vmatprep.subr.mxu0 %v5918
        %7754 = vmatpush1.msra.mxu0 %v5917
        %7755 = vmatprep.subr.mxu0 %v5900
        %7756 = vmatpush1.msra.mxu0 %v5898
        %7757 = vmatprep.subr.mxu0 %v7745
        %7758 = vmatpush1.msra.mxu0 %v7743
        %7759 = vmatprep.subr.mxu0 0.0
        %7760 = vmatpush1.msra.mxu0 0.0
        %7761 = vmatprep.subr.mxu0 0.0
        %7762 = vmatpush1.msra.mxu0 0.0
        %7763 = vmatprep.subr.mxu0 0.0
        %7764 = vmatpush1.msra.mxu0 0.0
        %7765 = vmatprep.subr.mxu0 0.0
        %7766 = vmatpush1.msra.mxu0 0.0
        %7767 = vmatprep.subr.mxu0 0.0
        %7768 = vmatpush1.msra.mxu0 0.0
        %7769 = vmatprep.subr.mxu0 0.0
        %7770 = vmatpush1.msra.mxu0 0.0
        %7771 = vmatprep.subr.mxu0 0.0
        %7772 = vmatpush1.msra.mxu0 0.0
        %7773 = vmatprep.subr.mxu0 0.0
        %7774 = vmatpush1.msra.mxu0 0.0
        %7775 = vmatprep.subr.mxu0 0.0
        %7776 = vmatpush1.msra.mxu0 0.0
        %7777 = vmatprep.subr.mxu0 0.0
        %7778 = vmatpush1.msra.mxu0 0.0
        %7779 = vmatprep.subr.mxu0 0.0
        %7780 = vmatpush1.msra.mxu0 0.0
        %7781 = vmatprep.subr.mxu0 0.0
        %7782 = vmatpush1.msra.mxu0 0.0
        %7783 = vmatprep.subr.mxu0 0.0
        %7784 = vmatpush1.msra.mxu0 0.0
        %7785 = vmatprep.subr.mxu0 0.0
        %7786 = vmatpush1.msra.mxu0 0.0
        %7787 = vmatprep.subr.mxu0 0.0
        %7788 = vmatpush1.msra.mxu0 0.0
        %7789 = vmatprep.subr.mxu0 0.0
        %7790 = vmatpush1.msra.mxu0 0.0
        %7791 = vmatprep.subr.mxu0 0.0
        %7792 = vmatpush1.msra.mxu0 0.0
        %7793 = vmatprep.subr.mxu0 0.0
        %7794 = vmatpush1.msra.mxu0 0.0
        %7795 = vmatprep.subr.mxu0 0.0
        %7796 = vmatpush1.msra.mxu0 0.0
        %7797 = vmatprep.subr.mxu0 0.0
        %7798 = vmatpush1.msra.mxu0 0.0
        %7799 = vmatprep.subr.mxu0 0.0
        %7800 = vmatpush1.msra.mxu0 0.0
        %7801 = vmatprep.subr.mxu0 0.0
        %7802 = vmatpush1.msra.mxu0 0.0
        %7803 = vmatprep.subr.mxu0 0.0
        %7804 = vmatpush1.msra.mxu0 0.0
        %7805 = vmatprep.subr.mxu0 0.0
        %7806 = vmatpush1.msra.mxu0 0.0
        %7807 = vmatprep.subr.mxu0 0.0
        %7808 = vmatpush1.msra.mxu0 0.0
        %7809 = vmatprep.subr.mxu0 0.0
        %7810 = vmatpush1.msra.mxu0 0.0
        %7811 = vmatprep.subr.mxu0 0.0
        %7812 = vmatpush1.msra.mxu0 0.0
        %7813 = vmatprep.subr.mxu0 0.0
        %7814 = vmatpush1.msra.mxu0 0.0
        %7815 = vmatprep.mubr.f32.mxu0 0.0
        %7816 = vmatmul.mubr.f32.gmra.mrb[0].mxu0 %v7720
        %v7817 = vpop.f32.mrb[0].mxu0
        %v7818 = vadd.f32 %v7559, %v7817
        %v7819 = vpop.f32.mrb[0].mxu0
        %v7820 = vadd.f32 %v7561, %v7819
        %7821 = vmatprep.mubr.f32.mxu0 0.0
        %7822 = vmatmul.mubr.f32.gmra.mrb[0].mxu0 %v7723
        %v7823 = vpop.f32.mrb[0].mxu0
        %v7824 = vadd.f32 %v7565, %v7823
        %v7825 = vpop.f32.mrb[0].mxu0
        %v7826 = vadd.f32 %v7567, %v7825
        %7827 = vmatprep.mubr.f32.mxu0 0.0
        %7828 = vmatmul.mubr.f32.gmra.mrb[0].mxu0 %v7726
        %v7829 = vpop.f32.mrb[0].mxu0
        %v7830 = vadd.f32 %v7571, %v7829
        %v7831 = vpop.f32.mrb[0].mxu0
        %v7832 = vadd.f32 %v7573, %v7831
        %7833 = vmatprep.mubr.f32.mxu0 0.0
        %7834 = vmatmul.mubr.f32.gmra.mrb[0].mxu0 %v7729
        %v7835 = vpop.f32.mrb[0].mxu0
        %v7836 = vadd.f32 %v7577, %v7835
        %v7837 = vpop.f32.mrb[0].mxu0
        %v7838 = vadd.f32 %v7579, %v7837
        %7839 = vmatprep.mubr.f32.mxu0 0.0
        %7840 = vmatmul.mubr.f32.gmra.mrb[0].mxu0 %v7732
        %v7841 = vpop.f32.mrb[0].mxu0
        %v7842 = vadd.f32 %v7583, %v7841
        %v7843 = vpop.f32.mrb[0].mxu0
        %v7844 = vadd.f32 %v7585, %v7843
        %7845 = vmatprep.mubr.f32.mxu0 0.0
        %7846 = vmatmul.mubr.f32.gmra.mrb[0].mxu0 %v7735
        %v7847 = vpop.f32.mrb[0].mxu0
        %v7848 = vadd.f32 %v7589, %v7847
        %v7849 = vpop.f32.mrb[0].mxu0
        %v7850 = vadd.f32 %v7591, %v7849
        %7851 = vmatprep.mubr.f32.mxu0 0.0
        %7852 = vmatmul.mubr.f32.gmra.mrb[0].mxu0 %v7738
        %v7853 = vpop.f32.mrb[0].mxu0
        %v7854 = vadd.f32 %v7595, %v7853
        %v7855 = vpop.f32.mrb[0].mxu0
        %v7856 = vadd.f32 %v7597, %v7855
        %7857 = vmatprep.mubr.f32.mxu0 0.0
        %7858 = vmatmul.mubr.f32.gmra.mrb[0].mxu0 %v7741
        %v7859 = vpop.f32.mrb[0].mxu0
        %v7860 = vadd.f32 %v7601, %v7859
        %v7861 = vpop.f32.mrb[0].mxu0
        %v7862 = vadd.f32 %v7603, %v7861
        %7863 = vdwg.mxu0
        %7864 = vmatprep.subr.mxu0 %v5916
        %7865 = vmatpush1.msra.mxu0 %v5915
        %7866 = vmatprep.subr.mxu0 %v5920
        %7867 = vmatpush1.msra.mxu0 %v5919
        %7868 = vmatprep.subr.mxu0 %v5904
        %7869 = vmatpush1.msra.mxu0 %v5902
        %7870 = vmatprep.subr.mxu0 %v7749
        %7871 = vmatpush1.msra.mxu0 %v7747
        %7872 = vmatprep.subr.mxu0 0.0
        %7873 = vmatpush1.msra.mxu0 0.0
        %7874 = vmatprep.subr.mxu0 0.0
        %7875 = vmatpush1.msra.mxu0 0.0
        %7876 = vmatprep.subr.mxu0 0.0
        %7877 = vmatpush1.msra.mxu0 0.0
        %7878 = vmatprep.subr.mxu0 0.0
        %7879 = vmatpush1.msra.mxu0 0.0
        %7880 = vmatprep.subr.mxu0 0.0
        %7881 = vmatpush1.msra.mxu0 0.0
        %7882 = vmatprep.subr.mxu0 0.0
        %7883 = vmatpush1.msra.mxu0 0.0
        %7884 = vmatprep.subr.mxu0 0.0
        %7885 = vmatpush1.msra.mxu0 0.0
        %7886 = vmatprep.subr.mxu0 0.0
        %7887 = vmatpush1.msra.mxu0 0.0
        %7888 = vmatprep.subr.mxu0 0.0
        %7889 = vmatpush1.msra.mxu0 0.0
        %7890 = vmatprep.subr.mxu0 0.0
        %7891 = vmatpush1.msra.mxu0 0.0
        %7892 = vmatprep.subr.mxu0 0.0
        %7893 = vmatpush1.msra.mxu0 0.0
        %7894 = vmatprep.subr.mxu0 0.0
        %7895 = vmatpush1.msra.mxu0 0.0
        %7896 = vmatprep.subr.mxu0 0.0
        %7897 = vmatpush1.msra.mxu0 0.0
        %7898 = vmatprep.subr.mxu0 0.0
        %7899 = vmatpush1.msra.mxu0 0.0
        %7900 = vmatprep.subr.mxu0 0.0
        %7901 = vmatpush1.msra.mxu0 0.0
        %7902 = vmatprep.subr.mxu0 0.0
        %7903 = vmatpush1.msra.mxu0 0.0
        %7904 = vmatprep.subr.mxu0 0.0
        %7905 = vmatpush1.msra.mxu0 0.0
        %7906 = vmatprep.subr.mxu0 0.0
        %7907 = vmatpush1.msra.mxu0 0.0
        %7908 = vmatprep.subr.mxu0 0.0
        %7909 = vmatpush1.msra.mxu0 0.0
        %7910 = vmatprep.subr.mxu0 0.0
        %7911 = vmatpush1.msra.mxu0 0.0
        %7912 = vmatprep.subr.mxu0 0.0
        %7913 = vmatpush1.msra.mxu0 0.0
        %7914 = vmatprep.subr.mxu0 0.0
        %7915 = vmatpush1.msra.mxu0 0.0
        %7916 = vmatprep.subr.mxu0 0.0
        %7917 = vmatpush1.msra.mxu0 0.0
        %7918 = vmatprep.subr.mxu0 0.0
        %7919 = vmatpush1.msra.mxu0 0.0
        %7920 = vmatprep.subr.mxu0 0.0
        %7921 = vmatpush1.msra.mxu0 0.0
        %7922 = vmatprep.subr.mxu0 0.0
        %7923 = vmatpush1.msra.mxu0 0.0
        %7924 = vmatprep.subr.mxu0 0.0
        %7925 = vmatpush1.msra.mxu0 0.0
        %7926 = vmatprep.subr.mxu0 0.0
        %7927 = vmatpush1.msra.mxu0 0.0
        %7928 = vmatprep.mubr.f32.mxu0 0.0
        %7929 = vmatmul.mubr.f32.gmra.mrb[0].mxu0 %v7720
        %v7930 = vpop.f32.mrb[0].mxu0
        %v7931 = vadd.f32 %v7672, %v7930
        %v7932 = vpop.f32.mrb[0].mxu0
        %v7933 = vadd.f32 %v7674, %v7932
        %7934 = vmatprep.mubr.f32.mxu0 0.0
        %7935 = vmatmul.mubr.f32.gmra.mrb[0].mxu0 %v7723
        %v7936 = vpop.f32.mrb[0].mxu0
        %v7937 = vadd.f32 %v7678, %v7936
        %v7938 = vpop.f32.mrb[0].mxu0
        %v7939 = vadd.f32 %v7680, %v7938
        %7940 = vmatprep.mubr.f32.mxu0 0.0
        %7941 = vmatmul.mubr.f32.gmra.mrb[0].mxu0 %v7726
        %v7942 = vpop.f32.mrb[0].mxu0
        %v7943 = vadd.f32 %v7684, %v7942
        %v7944 = vpop.f32.mrb[0].mxu0
        %v7945 = vadd.f32 %v7686, %v7944
        %7946 = vmatprep.mubr.f32.mxu0 0.0
        %7947 = vmatmul.mubr.f32.gmra.mrb[0].mxu0 %v7729
        %v7948 = vpop.f32.mrb[0].mxu0
        %v7949 = vadd.f32 %v7690, %v7948
        %v7950 = vpop.f32.mrb[0].mxu0
        %v7951 = vadd.f32 %v7692, %v7950
        %7952 = vmatprep.mubr.f32.mxu0 0.0
        %7953 = vmatmul.mubr.f32.gmra.mrb[0].mxu0 %v7732
        %v7954 = vpop.f32.mrb[0].mxu0
        %v7955 = vadd.f32 %v7696, %v7954
        %v7956 = vpop.f32.mrb[0].mxu0
        %v7957 = vadd.f32 %v7698, %v7956
        %7958 = vmatprep.mubr.f32.mxu0 0.0
        %7959 = vmatmul.mubr.f32.gmra.mrb[0].mxu0 %v7735
        %v7960 = vpop.f32.mrb[0].mxu0
        %v7961 = vadd.f32 %v7702, %v7960
        %v7962 = vpop.f32.mrb[0].mxu0
        %v7963 = vadd.f32 %v7704, %v7962
        %7964 = vmatprep.mubr.f32.mxu0 0.0
        %7965 = vmatmul.mubr.f32.gmra.mrb[0].mxu0 %v7738
        %v7966 = vpop.f32.mrb[0].mxu0
        %v7967 = vadd.f32 %v7708, %v7966
        %v7968 = vpop.f32.mrb[0].mxu0
        %v7969 = vadd.f32 %v7710, %v7968
        %7970 = vmatprep.mubr.f32.mxu0 0.0
        %7971 = vmatmul.mubr.f32.gmra.mrb[0].mxu0 %v7741
        %v7972 = vpop.f32.mrb[0].mxu0
        %v7973 = vadd.f32 %v7714, %v7972
        %v7974 = vpop.f32.mrb[0].mxu0
        %v7975 = vadd.f32 %v7716, %v7974
        %7976 = vdwg.mxu0
        %v7977 = vld [vmem:[%s11] sm:$0xff]
        %v7978 = vld [vmem:[%s11 + $0x8] sm:$0xff]
        %v7979 = vld [vmem:[%s11 + $0x10] sm:$0xff]
        %v7980 = vld [vmem:[%s11 + $0x18] sm:$0xff]
        %v7981 = vld [vmem:[%s11 + $0x20] sm:$0xff]
        %v7982 = vld [vmem:[%s11 + $0x28] sm:$0xff]
        %v7983 = vld [vmem:[%s11 + $0x30] sm:$0xff]
        %v7984 = vld [vmem:[%s11 + $0x38] sm:$0xff]
        %7986 = vset.pattern.permute.xlu0 0
        %7987 = vperm.xlu0 %7986, %v7977
        %v7988 = vpop.permute.xlu0 %7987
        %7991 = vset.pattern.permute.xlu0 0
        %7992 = vperm.xlu0 %7991, %v7978
        %v7993 = vpop.permute.xlu0 %7992
        %7996 = vset.pattern.permute.xlu0 0
        %7997 = vperm.xlu0 %7996, %v7979
        %v7998 = vpop.permute.xlu0 %7997
        %8001 = vset.pattern.permute.xlu0 0
        %8002 = vperm.xlu0 %8001, %v7980
        %v8003 = vpop.permute.xlu0 %8002
        %8006 = vset.pattern.permute.xlu0 0
        %8007 = vperm.xlu0 %8006, %v7981
        %v8008 = vpop.permute.xlu0 %8007
        %8011 = vset.pattern.permute.xlu0 0
        %8012 = vperm.xlu0 %8011, %v7982
        %v8013 = vpop.permute.xlu0 %8012
        %8016 = vset.pattern.permute.xlu0 0
        %8017 = vperm.xlu0 %8016, %v7983
        %v8018 = vpop.permute.xlu0 %8017
        %8021 = vset.pattern.permute.xlu0 0
        %8022 = vperm.xlu0 %8021, %v7984
        %v8023 = vpop.permute.xlu0 %8022
        %v8025 = vadd.f32 %v7818, %v7988
        %v8026 = vadd.f32 %v7820, %v7988
        %v8027 = vadd.f32 %v7931, %v7988
        %v8028 = vadd.f32 %v7933, %v7988
        %v8029 = vadd.f32 %v7824, %v7993
        %v8030 = vadd.f32 %v7826, %v7993
        %v8031 = vadd.f32 %v7937, %v7993
        %v8032 = vadd.f32 %v7939, %v7993
        %v8033 = vadd.f32 %v7830, %v7998
        %v8034 = vadd.f32 %v7832, %v7998
        %v8035 = vadd.f32 %v7943, %v7998
        %v8036 = vadd.f32 %v7945, %v7998
        %v8037 = vadd.f32 %v7836, %v8003
        %v8038 = vadd.f32 %v7838, %v8003
        %v8039 = vadd.f32 %v7949, %v8003
        %v8040 = vadd.f32 %v7951, %v8003
        %v8041 = vadd.f32 %v7842, %v8008
        %v8042 = vadd.f32 %v7844, %v8008
        %v8043 = vadd.f32 %v7955, %v8008
        %v8044 = vadd.f32 %v7957, %v8008
        %v8045 = vadd.f32 %v7848, %v8013
        %v8046 = vadd.f32 %v7850, %v8013
        %v8047 = vadd.f32 %v7961, %v8013
        %v8048 = vadd.f32 %v7963, %v8013
        %v8049 = vadd.f32 %v7854, %v8018
        %v8050 = vadd.f32 %v7856, %v8018
        %v8051 = vadd.f32 %v7967, %v8018
        %v8052 = vadd.f32 %v7969, %v8018
        %v8053 = vadd.f32 %v7860, %v8023
        %v8054 = vadd.f32 %v7862, %v8023
        %v8055 = vadd.f32 %v7973, %v8023
        %v8056 = vadd.f32 %v7975, %v8023
        %v8057 = vld [vmem:[%s12] sm:$0xff]
        %v8058 = vld [vmem:[%s12 + $0x8] sm:$0xff]
        %v8059 = vld [vmem:[%s12 + $0x10] sm:$0xff]
        %v8060 = vld [vmem:[%s12 + $0x18] sm:$0xff]
        %v8061 = vld [vmem:[%s12 + $0x20] sm:$0xff]
        %v8062 = vld [vmem:[%s12 + $0x28] sm:$0xff]
        %v8063 = vld [vmem:[%s12 + $0x30] sm:$0xff]
        %v8064 = vld [vmem:[%s12 + $0x38] sm:$0xff]
        %8066 = vset.pattern.permute.xlu0 0
        %8067 = vperm.xlu0 %8066, %v8057
        %v8068 = vpop.permute.xlu0 %8067
        %8071 = vset.pattern.permute.xlu0 0
        %8072 = vperm.xlu0 %8071, %v8058
        %v8073 = vpop.permute.xlu0 %8072
        %8076 = vset.pattern.permute.xlu0 0
        %8077 = vperm.xlu0 %8076, %v8059
        %v8078 = vpop.permute.xlu0 %8077
        %8081 = vset.pattern.permute.xlu0 0
        %8082 = vperm.xlu0 %8081, %v8060
        %v8083 = vpop.permute.xlu0 %8082
        %8086 = vset.pattern.permute.xlu0 0
        %8087 = vperm.xlu0 %8086, %v8061
        %v8088 = vpop.permute.xlu0 %8087
        %8091 = vset.pattern.permute.xlu0 0
        %8092 = vperm.xlu0 %8091, %v8062
        %v8093 = vpop.permute.xlu0 %8092
        %8096 = vset.pattern.permute.xlu0 0
        %8097 = vperm.xlu0 %8096, %v8063
        %v8098 = vpop.permute.xlu0 %8097
        %8101 = vset.pattern.permute.xlu0 0
        %8102 = vperm.xlu0 %8101, %v8064
        %v8103 = vpop.permute.xlu0 %8102
        %v8105 = vmul.f32 %v8025, %v8068
        %v8106 = vmul.f32 %v8026, %v8068
        %v8107 = vmul.f32 %v8027, %v8068
        %v8108 = vmul.f32 %v8028, %v8068
        %v8109 = vmul.f32 %v8029, %v8073
        %v8110 = vmul.f32 %v8030, %v8073
        %v8111 = vmul.f32 %v8031, %v8073
        %v8112 = vmul.f32 %v8032, %v8073
        %v8113 = vmul.f32 %v8033, %v8078
        %v8114 = vmul.f32 %v8034, %v8078
        %v8115 = vmul.f32 %v8035, %v8078
        %v8116 = vmul.f32 %v8036, %v8078
        %v8117 = vmul.f32 %v8037, %v8083
        %v8118 = vmul.f32 %v8038, %v8083
        %v8119 = vmul.f32 %v8039, %v8083
        %v8120 = vmul.f32 %v8040, %v8083
        %v8121 = vmul.f32 %v8041, %v8088
        %v8122 = vmul.f32 %v8042, %v8088
        %v8123 = vmul.f32 %v8043, %v8088
        %v8124 = vmul.f32 %v8044, %v8088
        %v8125 = vmul.f32 %v8045, %v8093
        %v8126 = vmul.f32 %v8046, %v8093
        %v8127 = vmul.f32 %v8047, %v8093
        %v8128 = vmul.f32 %v8048, %v8093
        %v8129 = vmul.f32 %v8049, %v8098
        %v8130 = vmul.f32 %v8050, %v8098
        %v8131 = vmul.f32 %v8051, %v8098
        %v8132 = vmul.f32 %v8052, %v8098
        %v8133 = vmul.f32 %v8053, %v8103
        %v8134 = vmul.f32 %v8054, %v8103
        %v8135 = vmul.f32 %v8055, %v8103
        %v8136 = vmul.f32 %v8056, %v8103
        %v8137 = vadd.f32 %v8105, %v8109
        %v8138 = vadd.f32 %v8137, %v8113
        %v8139 = vadd.f32 %v8138, %v8117
        %v8140 = vadd.f32 %v8139, %v8121
        %v8141 = vadd.f32 %v8140, %v8125
        %v8142 = vadd.f32 %v8141, %v8129
        %v8143 = vadd.f32 %v8142, %v8133
        %v8144 = vrot.slane %v8143, 4
        %v8145 = vadd.f32 %v8143, %v8144
        %v8146 = vrot.slane %v8145, 2
        %v8147 = vadd.f32 %v8145, %v8146
        %v8148 = vrot.slane %v8147, 1
        %v8149 = vadd.f32 %v8147, %v8148
        %v8150 = vadd.f32 %v8106, %v8110
        %v8151 = vadd.f32 %v8150, %v8114
        %v8152 = vadd.f32 %v8151, %v8118
        %v8153 = vadd.f32 %v8152, %v8122
        %v8154 = vadd.f32 %v8153, %v8126
        %v8155 = vadd.f32 %v8154, %v8130
        %v8156 = vadd.f32 %v8155, %v8134
        %v8157 = vrot.slane %v8156, 4
        %v8158 = vadd.f32 %v8156, %v8157
        %v8159 = vrot.slane %v8158, 2
        %v8160 = vadd.f32 %v8158, %v8159
        %v8161 = vrot.slane %v8160, 1
        %v8162 = vadd.f32 %v8160, %v8161
        %v8163 = vadd.f32 %v8107, %v8111
        %v8164 = vadd.f32 %v8163, %v8115
        %v8165 = vadd.f32 %v8164, %v8119
        %v8166 = vadd.f32 %v8165, %v8123
        %v8167 = vadd.f32 %v8166, %v8127
        %v8168 = vadd.f32 %v8167, %v8131
        %v8169 = vadd.f32 %v8168, %v8135
        %v8170 = vrot.slane %v8169, 4
        %v8171 = vadd.f32 %v8169, %v8170
        %v8172 = vrot.slane %v8171, 2
        %v8173 = vadd.f32 %v8171, %v8172
        %v8174 = vrot.slane %v8173, 1
        %v8175 = vadd.f32 %v8173, %v8174
        %v8176 = vadd.f32 %v8108, %v8112
        %v8177 = vadd.f32 %v8176, %v8116
        %v8178 = vadd.f32 %v8177, %v8120
        %v8179 = vadd.f32 %v8178, %v8124
        %v8180 = vadd.f32 %v8179, %v8128
        %v8181 = vadd.f32 %v8180, %v8132
        %v8182 = vadd.f32 %v8181, %v8136
        %v8183 = vrot.slane %v8182, 4
        %v8184 = vadd.f32 %v8182, %v8183
        %v8185 = vrot.slane %v8184, 2
        %v8186 = vadd.f32 %v8184, %v8185
        %v8187 = vrot.slane %v8186, 1
        %v8188 = vadd.f32 %v8186, %v8187
        %8189 = vset.pattern.permute.xlu0 1
        %8190 = vperm.xlu0 %8189, %v8057
        %v8191 = vpop.permute.xlu0 %8190
        %8193 = vset.pattern.permute.xlu0 1
        %8194 = vperm.xlu0 %8193, %v8058
        %v8195 = vpop.permute.xlu0 %8194
        %8197 = vset.pattern.permute.xlu0 1
        %8198 = vperm.xlu0 %8197, %v8059
        %v8199 = vpop.permute.xlu0 %8198
        %8201 = vset.pattern.permute.xlu0 1
        %8202 = vperm.xlu0 %8201, %v8060
        %v8203 = vpop.permute.xlu0 %8202
        %8205 = vset.pattern.permute.xlu0 1
        %8206 = vperm.xlu0 %8205, %v8061
        %v8207 = vpop.permute.xlu0 %8206
        %8209 = vset.pattern.permute.xlu0 1
        %8210 = vperm.xlu0 %8209, %v8062
        %v8211 = vpop.permute.xlu0 %8210
        %8213 = vset.pattern.permute.xlu0 1
        %8214 = vperm.xlu0 %8213, %v8063
        %v8215 = vpop.permute.xlu0 %8214
        %8217 = vset.pattern.permute.xlu0 1
        %8218 = vperm.xlu0 %8217, %v8064
        %v8219 = vpop.permute.xlu0 %8218
        %v8221 = vmul.f32 %v8025, %v8191
        %v8222 = vmul.f32 %v8026, %v8191
        %v8223 = vmul.f32 %v8027, %v8191
        %v8224 = vmul.f32 %v8028, %v8191
        %v8225 = vmul.f32 %v8029, %v8195
        %v8226 = vmul.f32 %v8030, %v8195
        %v8227 = vmul.f32 %v8031, %v8195
        %v8228 = vmul.f32 %v8032, %v8195
        %v8229 = vmul.f32 %v8033, %v8199
        %v8230 = vmul.f32 %v8034, %v8199
        %v8231 = vmul.f32 %v8035, %v8199
        %v8232 = vmul.f32 %v8036, %v8199
        %v8233 = vmul.f32 %v8037, %v8203
        %v8234 = vmul.f32 %v8038, %v8203
        %v8235 = vmul.f32 %v8039, %v8203
        %v8236 = vmul.f32 %v8040, %v8203
        %v8237 = vmul.f32 %v8041, %v8207
        %v8238 = vmul.f32 %v8042, %v8207
        %v8239 = vmul.f32 %v8043, %v8207
        %v8240 = vmul.f32 %v8044, %v8207
        %v8241 = vmul.f32 %v8045, %v8211
        %v8242 = vmul.f32 %v8046, %v8211
        %v8243 = vmul.f32 %v8047, %v8211
        %v8244 = vmul.f32 %v8048, %v8211
        %v8245 = vmul.f32 %v8049, %v8215
        %v8246 = vmul.f32 %v8050, %v8215
        %v8247 = vmul.f32 %v8051, %v8215
        %v8248 = vmul.f32 %v8052, %v8215
        %v8249 = vmul.f32 %v8053, %v8219
        %v8250 = vmul.f32 %v8054, %v8219
        %v8251 = vmul.f32 %v8055, %v8219
        %v8252 = vmul.f32 %v8056, %v8219
        %v8253 = vadd.f32 %v8221, %v8225
        %v8254 = vadd.f32 %v8253, %v8229
        %v8255 = vadd.f32 %v8254, %v8233
        %v8256 = vadd.f32 %v8255, %v8237
        %v8257 = vadd.f32 %v8256, %v8241
        %v8258 = vadd.f32 %v8257, %v8245
        %v8259 = vadd.f32 %v8258, %v8249
        %v8260 = vrot.slane %v8259, 4
        %v8261 = vadd.f32 %v8259, %v8260
        %v8262 = vrot.slane %v8261, 2
        %v8263 = vadd.f32 %v8261, %v8262
        %v8264 = vrot.slane %v8263, 1
        %v8265 = vadd.f32 %v8263, %v8264
        %v8266 = vadd.f32 %v8222, %v8226
        %v8267 = vadd.f32 %v8266, %v8230
        %v8268 = vadd.f32 %v8267, %v8234
        %v8269 = vadd.f32 %v8268, %v8238
        %v8270 = vadd.f32 %v8269, %v8242
        %v8271 = vadd.f32 %v8270, %v8246
        %v8272 = vadd.f32 %v8271, %v8250
        %v8273 = vrot.slane %v8272, 4
        %v8274 = vadd.f32 %v8272, %v8273
        %v8275 = vrot.slane %v8274, 2
        %v8276 = vadd.f32 %v8274, %v8275
        %v8277 = vrot.slane %v8276, 1
        %v8278 = vadd.f32 %v8276, %v8277
        %v8279 = vadd.f32 %v8223, %v8227
        %v8280 = vadd.f32 %v8279, %v8231
        %v8281 = vadd.f32 %v8280, %v8235
        %v8282 = vadd.f32 %v8281, %v8239
        %v8283 = vadd.f32 %v8282, %v8243
        %v8284 = vadd.f32 %v8283, %v8247
        %v8285 = vadd.f32 %v8284, %v8251
        %v8286 = vrot.slane %v8285, 4
        %v8287 = vadd.f32 %v8285, %v8286
        %v8288 = vrot.slane %v8287, 2
        %v8289 = vadd.f32 %v8287, %v8288
        %v8290 = vrot.slane %v8289, 1
        %v8291 = vadd.f32 %v8289, %v8290
        %v8292 = vadd.f32 %v8224, %v8228
        %v8293 = vadd.f32 %v8292, %v8232
        %v8294 = vadd.f32 %v8293, %v8236
        %v8295 = vadd.f32 %v8294, %v8240
        %v8296 = vadd.f32 %v8295, %v8244
        %v8297 = vadd.f32 %v8296, %v8248
        %v8298 = vadd.f32 %v8297, %v8252
        %v8299 = vrot.slane %v8298, 4
        %v8300 = vadd.f32 %v8298, %v8299
        %v8301 = vrot.slane %v8300, 2
        %v8302 = vadd.f32 %v8300, %v8301
        %v8303 = vrot.slane %v8302, 1
        %v8304 = vadd.f32 %v8302, %v8303
        %8305 = vset.pattern.permute.xlu0 2
        %8306 = vperm.xlu0 %8305, %v8057
        %v8307 = vpop.permute.xlu0 %8306
        %8309 = vset.pattern.permute.xlu0 2
        %8310 = vperm.xlu0 %8309, %v8058
        %v8311 = vpop.permute.xlu0 %8310
        %8313 = vset.pattern.permute.xlu0 2
        %8314 = vperm.xlu0 %8313, %v8059
        %v8315 = vpop.permute.xlu0 %8314
        %8317 = vset.pattern.permute.xlu0 2
        %8318 = vperm.xlu0 %8317, %v8060
        %v8319 = vpop.permute.xlu0 %8318
        %8321 = vset.pattern.permute.xlu0 2
        %8322 = vperm.xlu0 %8321, %v8061
        %v8323 = vpop.permute.xlu0 %8322
        %8325 = vset.pattern.permute.xlu0 2
        %8326 = vperm.xlu0 %8325, %v8062
        %v8327 = vpop.permute.xlu0 %8326
        %8329 = vset.pattern.permute.xlu0 2
        %8330 = vperm.xlu0 %8329, %v8063
        %v8331 = vpop.permute.xlu0 %8330
        %8333 = vset.pattern.permute.xlu0 2
        %8334 = vperm.xlu0 %8333, %v8064
        %v8335 = vpop.permute.xlu0 %8334
        %v8337 = vmul.f32 %v8025, %v8307
        %v8338 = vmul.f32 %v8026, %v8307
        %v8339 = vmul.f32 %v8027, %v8307
        %v8340 = vmul.f32 %v8028, %v8307
        %v8341 = vmul.f32 %v8029, %v8311
        %v8342 = vmul.f32 %v8030, %v8311
        %v8343 = vmul.f32 %v8031, %v8311
        %v8344 = vmul.f32 %v8032, %v8311
        %v8345 = vmul.f32 %v8033, %v8315
        %v8346 = vmul.f32 %v8034, %v8315
        %v8347 = vmul.f32 %v8035, %v8315
        %v8348 = vmul.f32 %v8036, %v8315
        %v8349 = vmul.f32 %v8037, %v8319
        %v8350 = vmul.f32 %v8038, %v8319
        %v8351 = vmul.f32 %v8039, %v8319
        %v8352 = vmul.f32 %v8040, %v8319
        %v8353 = vmul.f32 %v8041, %v8323
        %v8354 = vmul.f32 %v8042, %v8323
        %v8355 = vmul.f32 %v8043, %v8323
        %v8356 = vmul.f32 %v8044, %v8323
        %v8357 = vmul.f32 %v8045, %v8327
        %v8358 = vmul.f32 %v8046, %v8327
        %v8359 = vmul.f32 %v8047, %v8327
        %v8360 = vmul.f32 %v8048, %v8327
        %v8361 = vmul.f32 %v8049, %v8331
        %v8362 = vmul.f32 %v8050, %v8331
        %v8363 = vmul.f32 %v8051, %v8331
        %v8364 = vmul.f32 %v8052, %v8331
        %v8365 = vmul.f32 %v8053, %v8335
        %v8366 = vmul.f32 %v8054, %v8335
        %v8367 = vmul.f32 %v8055, %v8335
        %v8368 = vmul.f32 %v8056, %v8335
        %v8369 = vadd.f32 %v8337, %v8341
        %v8370 = vadd.f32 %v8369, %v8345
        %v8371 = vadd.f32 %v8370, %v8349
        %v8372 = vadd.f32 %v8371, %v8353
        %v8373 = vadd.f32 %v8372, %v8357
        %v8374 = vadd.f32 %v8373, %v8361
        %v8375 = vadd.f32 %v8374, %v8365
        %v8376 = vrot.slane %v8375, 4
        %v8377 = vadd.f32 %v8375, %v8376
        %v8378 = vrot.slane %v8377, 2
        %v8379 = vadd.f32 %v8377, %v8378
        %v8380 = vrot.slane %v8379, 1
        %v8381 = vadd.f32 %v8379, %v8380
        %v8382 = vadd.f32 %v8338, %v8342
        %v8383 = vadd.f32 %v8382, %v8346
        %v8384 = vadd.f32 %v8383, %v8350
        %v8385 = vadd.f32 %v8384, %v8354
        %v8386 = vadd.f32 %v8385, %v8358
        %v8387 = vadd.f32 %v8386, %v8362
        %v8388 = vadd.f32 %v8387, %v8366
        %v8389 = vrot.slane %v8388, 4
        %v8390 = vadd.f32 %v8388, %v8389
        %v8391 = vrot.slane %v8390, 2
        %v8392 = vadd.f32 %v8390, %v8391
        %v8393 = vrot.slane %v8392, 1
        %v8394 = vadd.f32 %v8392, %v8393
        %v8395 = vadd.f32 %v8339, %v8343
        %v8396 = vadd.f32 %v8395, %v8347
        %v8397 = vadd.f32 %v8396, %v8351
        %v8398 = vadd.f32 %v8397, %v8355
        %v8399 = vadd.f32 %v8398, %v8359
        %v8400 = vadd.f32 %v8399, %v8363
        %v8401 = vadd.f32 %v8400, %v8367
        %v8402 = vrot.slane %v8401, 4
        %v8403 = vadd.f32 %v8401, %v8402
        %v8404 = vrot.slane %v8403, 2
        %v8405 = vadd.f32 %v8403, %v8404
        %v8406 = vrot.slane %v8405, 1
        %v8407 = vadd.f32 %v8405, %v8406
        %v8408 = vadd.f32 %v8340, %v8344
        %v8409 = vadd.f32 %v8408, %v8348
        %v8410 = vadd.f32 %v8409, %v8352
        %v8411 = vadd.f32 %v8410, %v8356
        %v8412 = vadd.f32 %v8411, %v8360
        %v8413 = vadd.f32 %v8412, %v8364
        %v8414 = vadd.f32 %v8413, %v8368
        %v8415 = vrot.slane %v8414, 4
        %v8416 = vadd.f32 %v8414, %v8415
        %v8417 = vrot.slane %v8416, 2
        %v8418 = vadd.f32 %v8416, %v8417
        %v8419 = vrot.slane %v8418, 1
        %v8420 = vadd.f32 %v8418, %v8419
        %v8421 = vsel %vm692, %v8149, %v8265
        %v8422 = vsel %vm692, %v8162, %v8278
        %v8423 = vsel %vm692, %v8175, %v8291
        %v8424 = vsel %vm692, %v8188, %v8304
        %v8425 = vsel %vm707, %v8421, %v8381
        %v8426 = vsel %vm707, %v8422, %v8394
        %v8427 = vsel %vm707, %v8423, %v8407
        %v8428 = vsel %vm707, %v8424, %v8420
        %v8429 = vld [vmem:[%s13] sm:$0x7]
        %8431 = vset.pattern.permute.xlu0 0
        %8432 = vperm.xlu0 %8431, %v8429
        %v8433 = vpop.permute.xlu0 %8432
        %v8435 = vadd.f32 %v8425, %v8433
        %v8436 = vadd.f32 %v8426, %v8433
        %v8437 = vadd.f32 %v8427, %v8433
        %v8438 = vadd.f32 %v8428, %v8433
        %v8439 = vxor.u32 %v8435, 2147483648
        %v8440 = vxor.u32 %v8436, 2147483648
        %v8441 = vxor.u32 %v8437, 2147483648
        %v8442 = vxor.u32 %v8438, 2147483648
        %v8443 = vmul.f32 %v8439, 1.442695
        %v8444 = vpow.pop %v8443
        %v8445 = vmul.f32 %v8440, 1.442695
        %v8446 = vpow.pop %v8445
        %v8447 = vmul.f32 %v8441, 1.442695
        %v8448 = vpow.pop %v8447
        %v8449 = vmul.f32 %v8442, 1.442695
        %v8450 = vpow.pop %v8449
        %v8451 = vadd.f32 %v8444, 1.0
        %v8452 = vadd.f32 %v8446, 1.0
        %v8453 = vadd.f32 %v8448, 1.0
        %v8454 = vadd.f32 %v8450, 1.0
        %v8455 = vrcp.pop %v8451
        %v8456 = vmul.f32 1.0, %v8455
        %v8457 = vrcp.pop %v8452
        %v8458 = vmul.f32 1.0, %v8457
        %v8459 = vrcp.pop %v8453
        %v8460 = vmul.f32 1.0, %v8459
        %v8461 = vrcp.pop %v8454
        %v8462 = vmul.f32 1.0, %v8461
        %v8467 = vcombine.low %v7416, %v7417
        %v8468 = vcombine.low %v7418, %v7419
        %v8470 = vunpack.c.l.s4 1966171168
        %v8471 = vunpack.c.0.s8 %v8470
        %v8472 = vlaneseq
        %v8473 = vshrl.u32 %v8472, 7
        %v8474 = vsub.s32 %v8471, %v8473
        %v8475 = vrot.slane %v8467, %v8474
        %v8477 = vunpack.c.l.s4 1966171168
        %v8478 = vunpack.c.0.s8 %v8477
        %v8479 = vlaneseq
        %v8480 = vshrl.u32 %v8479, 7
        %v8481 = vsub.s32 %v8478, %v8480
        %v8482 = vrot.slane %v8468, %v8481
        %v8483 = vcombine.low %v8475, %v8482
        %v8485 = vunpack.c.l.s4 1966171168
        %v8486 = vunpack.c.0.s8 %v8485
        %v8487 = vlaneseq
        %v8488 = vshrl.u32 %v8487, 7
        %v8489 = vsub.s32 %v8486, %v8488
        %v8490 = vrot.slane %v8483, %v8489
        %v8492 = vlaneseq
        %vm8493 = vcmp.ge.s32.totalorder %v8492, 0
        %vm8494 = vcmp.lt.s32.totalorder %v8492, 512
        %vm8495 = vmand %vm8493, %vm8494
        %8496 = vst.msk [vmem:[%s528] ss:$4 sm:$0xf] %vm8495, %v8490
        %v8501 = vcombine.low %v8456, %v8458
        %v8502 = vcombine.low %v8460, %v8462
        %v8503 = vrot.slane %v8501, 7
        %v8504 = vrot.slane %v8502, 7
        %8507 = vst [vmem:[%s528] sm:$0xee] %v8503
        %8508 = vst [vmem:[%s528 + $0x8] sm:$0xee] %v8504
        %s8509 = smul.u32 4, %s27
        %p8510 = scmp.lt.s32.totalorder %s8509, 7
        %s8511 = scalar_select %p8510, %s8509, 7
        %s8512 = smul.addr %s8511, 4
        %s8513 = scalar_lea.vmem %s14, %s8512
        // Predicated region
        $region100: #{nerf_forward.1} parent=94 // pred_check
          %p8514 = pneg %p344
        $region101: #{nerf_forward.1} parent=94 // pred_check_branch
          %8516 = sbr.rel (%p8514) target = $region103
        $region102: #{nerf_forward.1} parent=94 // pred_region
          %s8517 = smul.u32 4, %s27
        $region103: #{nerf_forward.1} parent=94 // pred_fallthru
          _
      $region95: #{nerf_forward.1} parent=5 // pred_fallthru
        _
      %p8518 = scmp.le.s32.totalorder 2, %s22
      // Predicated region
      $region104: #{nerf_forward.1} parent=5 // pred_check
        %p8519 = pneg %p8518
      $region105: #{nerf_forward.1} parent=5 // pred_check_branch
        %8521 = sbr.rel (%p8519) target = $region107
      $region106: #{nerf_forward.1} parent=5 // pred_region
        %s8522 = ssub.s32 %s22, 2
        // Predicated region
        $region108: #{nerf_forward.1} parent=106 // pred_check
          %p8523 = pneg %p350
        $region109: #{nerf_forward.1} parent=106 // pred_check_branch
          %8525 = sbr.rel (%p8523) target = $region111
        $region110: #{nerf_forward.1} parent=106 // pred_region
          %s8526 = smul.u32 4, %s28
          %p8527 = scmp.lt.s32.totalorder %s8526, 7
          %s8528 = scalar_select %p8527, %s8526, 7
          %s8529 = smul.addr %s8528, 4
          %s8530 = scalar_lea.vmem %s14, %s8529
        $region111: #{nerf_forward.1} parent=106 // pred_fallthru
          _
      $region107: #{nerf_forward.1} parent=5 // pred_fallthru
        _
    $region6: #{nerf_forward.1} parent=1 // loop_footer
      %s26 = sadd.s32 1, %s22
    $region7: #{nerf_forward.1} parent=1 // loop_footer_branch
      %21 = sbr.rel target = $region3
    $region8: #{nerf_forward.1} parent=1 // loop_exit
      _

</llo_original>
